<compile_context>
chip_gen: v7x
topology: tpu7x:2x2x1
jax: 0.10.0
libtpu: 0.0.40
codegen_flags: <defaults>
</compile_context>

<pallas_src>
import jax
import jax.numpy as jnp
from jax import lax
from jax.experimental import pallas as pl
from jax.experimental.pallas import tpu as pltpu


def _make_kernel(H, W, C):
    HW = H * W

    def kernel(x_ref, pre_s_ref, pre_b_ref, w1_ref, bn1_s_ref, bn1_b_ref,
               w2_ref, out_ref, pad_ref):
        cdt = pad_ref.dtype                       # matmul operand dtype (bf16 or f32)

        x = x_ref[0].astype(jnp.float32)                              # (H, W, C)

        # pre_bn (folded per-channel scale/bias) + pre_relu, f32 on the VPU.
        preact = jnp.maximum(x * pre_s_ref[...] + pre_b_ref[...], 0.0)

        # Zero ONLY the 1-pixel halo of the padded scratch (2 rows + 2 cols).
        # The interior is rewritten before each conv, so the halo stays zero
        # and is shared by both convs.  Done per image (not program_id==0) so
        # it is correct when the "parallel" batch axis is sharded across
        # TensorCores, each with its own uninitialized scratch.
        pad_ref[0:1, :, :] = jnp.zeros((1, W + 2, C), cdt)
        pad_ref[H + 1:H + 2, :, :] = jnp.zeros((1, W + 2, C), cdt)
        pad_ref[:, 0:1, :] = jnp.zeros((H + 2, 1, C), cdt)
        pad_ref[:, W + 1:W + 2, :] = jnp.zeros((H + 2, 1, C), cdt)

        def conv3x3(w_ref):
            # 9 accumulating MXU dots over the shifted (H, W, C) windows of the
            # zero-halo padded scratch; f32 accumulation.  No im2col slab:
            # no extra VMEM scratch, no 9x-tile write/re-read traffic, no
            # misaligned (non-128-lane-offset) tap stores.
            acc = jnp.zeros((HW, C), jnp.float32)
            for kh in range(3):
                for kw in range(3):
                    win = pad_ref[kh:kh + H, kw:kw + W, :]            # (H, W, C)
                    acc = acc + jnp.dot(win.reshape(HW, C),
                                        w_ref[kh * 3 + kw],           # (C, C)
                                        preferred_element_type=jnp.float32)
            return acc                                                # (H*W, C) f32

        # conv1: 3x3, stride 1, padding 1 (SAME)
        pad_ref[1:H + 1, 1:W + 1, :] = preact.astype(cdt)
        out1 = conv3x3(w1_ref)

        # bn1 (folded) + relu in f32, then conv2 reuses the SAME padded scratch.
        out1 = jnp.maximum(out1 * bn1_s_ref[...] + bn1_b_ref[...], 0.0)
        pad_ref[1:H + 1, 1:W + 1, :] = out1.reshape(H, W, C).astype(cdt)
        out2 = conv3x3(w2_ref)

        # residual: downsample is None -> residual = x (original block input, f32)
        out_ref[0] = (out2.reshape(H, W, C) + x).astype(out_ref.dtype)

    return kernel


def preact_basic_block_nhwc(x_nhwc, params, *, eps=1e-5,
                            compute_dtype=jnp.bfloat16,
                            out_dtype=jnp.float32,
                            batch_dim_semantics="parallel"):
    """Fused PreactBasicBlock on NHWC activations (channels-last = lane-dense).

    compute_dtype: dtype of the conv operands fed to the MXU (bf16 default,
                   f32 accumulation).  Use jnp.float32 for PyTorch parity.
    out_dtype:     dtype of the HBM output (use bf16 when stacking blocks).
    batch_dim_semantics: "parallel" (default) or pltpu.CORE_PARALLEL on v7x.
    """
    x = x_nhwc.astype(jnp.float32)
    N, H, W, Cin = x.shape
    w1, w2 = params["w1"], params["w2"]                   # HWIO (3, 3, Ci, Co)
    Cout = w2.shape[-1]
    assert Cin == Cout, "downsample=None requires inplanes == planes"
    C = Cin

    # Fold inference-mode BatchNorm (running stats) into per-channel scale/bias.
    pre_s = params["pre_gamma"] * lax.rsqrt(params["pre_var"] + eps)
    pre_b = params["pre_beta"] - params["pre_mean"] * pre_s
    bn1_s = params["bn1_gamma"] * lax.rsqrt(params["bn1_var"] + eps)
    bn1_b = params["bn1_beta"] - params["bn1_mean"] * bn1_s

    # Per-tap weight blocks (9, C, C), cast to the MXU operand dtype (bf16).
    w1_k = w1.reshape(9, C, C).astype(compute_dtype)
    w2_k = w2.reshape(9, C, C).astype(compute_dtype)

    csz = jnp.dtype(compute_dtype).itemsize
    osz = jnp.dtype(out_dtype).itemsize
    # VMEM budget: double-buffered x/out blocks, double-buffered weight AND
    # scale/bias blocks (Pallas double-buffers every input by default), the
    # shared padded scratch, plus an allowance for the f32 intermediates
    # (preact / bn1 output / accumulator / window temps); headroom on top for
    # Mosaic internal scratch.
    need = (2 * H * W * C * 4                 # x block (f32), double-buffered
            + 2 * H * W * C * osz             # out block, double-buffered
            + 2 * 2 * 9 * C * C * csz         # both weight blocks, double-buffered
            + 2 * 4 * C * 4                   # scale/bias vectors, double-buffered
            + (H + 2) * (W + 2) * C * csz     # padded scratch (shared by both convs)
            + 4 * H * W * C * 4)              # f32 intermediates
    vmem_limit = int(min(max(need + (8 << 20), 16 << 20), 100 << 20))
    # TODO(synk): on v7x (64 MiB/core) large feature maps need strip tiling
    # before this budget is meaningful there.

    grid_spec = pltpu.PrefetchScalarGridSpec(
        num_scalar_prefetch=0,
        grid=(N,),                                        # one image per grid step
        in_specs=[
            pl.BlockSpec((1, H, W, C), lambda n: (n, 0, 0, 0)),
            pl.BlockSpec((1, C), lambda n: (0, 0)),
            pl.BlockSpec((1, C), lambda n: (0, 0)),
            pl.BlockSpec((9, C, C), lambda n: (0, 0, 0)),
            pl.BlockSpec((1, C), lambda n: (0, 0)),
            pl.BlockSpec((1, C), lambda n: (0, 0)),
            pl.BlockSpec((9, C, C), lambda n: (0, 0, 0)),
        ],
        out_specs=pl.BlockSpec((1, H, W, C), lambda n: (n, 0, 0, 0)),
        scratch_shapes=[
            pltpu.VMEM((H + 2, W + 2, C), compute_dtype),   # padded buffer (both convs)
        ],
    )
    out_nhwc = pl.pallas_call(
        _make_kernel(H, W, C),
        out_shape=jax.ShapeDtypeStruct((N, H, W, C), out_dtype),
        grid_spec=grid_spec,
        compiler_params=pltpu.CompilerParams(
            dimension_semantics=(batch_dim_semantics,),   # images shard across TCs
            vmem_limit_bytes=vmem_limit,
        ),
    )(x,
      pre_s.reshape(1, C).astype(jnp.float32),
      pre_b.reshape(1, C).astype(jnp.float32),
      w1_k,
      bn1_s.reshape(1, C).astype(jnp.float32),
      bn1_b.reshape(1, C).astype(jnp.float32),
      w2_k)
    return out_nhwc


def preact_basic_block(x_nchw, params, *, eps=1e-5,
                       compute_dtype=jnp.bfloat16, out_dtype=jnp.float32,
                       batch_dim_semantics="parallel"):
    # PyTorch-facing NCHW wrapper.  When stacking blocks, prefer the NHWC
    # entry point above (and out_dtype=bf16) to avoid a transpose per block.
    x = jnp.transpose(x_nchw, (0, 2, 3, 1))               # NCHW -> NHWC
    out = preact_basic_block_nhwc(
        x, params, eps=eps, compute_dtype=compute_dtype, out_dtype=out_dtype,
        batch_dim_semantics=batch_dim_semantics)
    return jnp.transpose(out, (0, 3, 1, 2))               # NHWC -> NCHW


def reference_forward(x_nchw, params, eps=1e-5):
    # Pure-JAX reference of the PyTorch forward (inference-mode BN), NHWC inside.
    x = jnp.transpose(x_nchw, (0, 2, 3, 1)).astype(jnp.float32)
    pre_s = params["pre_gamma"] * lax.rsqrt(params["pre_var"] + eps)
    pre_b = params["pre_beta"] - params["pre_mean"] * pre_s
    preact = jnp.maximum(x * pre_s + pre_b, 0.0)
    dn = ("NHWC", "HWIO", "NHWC")
    out = lax.conv_general_dilated(preact, params["w1"], (1, 1), "SAME",
                                   dimension_numbers=dn,
                                   precision=lax.Precision.HIGHEST)
    bn1_s = params["bn1_gamma"] * lax.rsqrt(params["bn1_var"] + eps)
    bn1_b = params["bn1_beta"] - params["bn1_mean"] * bn1_s
    out = jnp.maximum(out * bn1_s + bn1_b, 0.0)
    out = lax.conv_general_dilated(out, params["w2"], (1, 1), "SAME",
                                   dimension_numbers=dn,
                                   precision=lax.Precision.HIGHEST)
    out = out + x
    return jnp.transpose(out, (0, 3, 1, 2))


def _make_params(key, C):
    ks = jax.random.split(key, 10)
    fan_in = 9 * C
    return {
        "pre_gamma": jax.random.uniform(ks[0], (C,), jnp.float32, 0.5, 1.5),
        "pre_beta": 0.1 * jax.random.normal(ks[1], (C,), jnp.float32),
        "pre_mean": 0.1 * jax.random.normal(ks[2], (C,), jnp.float32),
        "pre_var": jax.random.uniform(ks[3], (C,), jnp.float32, 0.5, 1.5),
        "w1": jax.random.normal(ks[4], (3, 3, C, C), jnp.float32) * jnp.sqrt(2.0 / fan_in),
        "bn1_gamma": jax.random.uniform(ks[5], (C,), jnp.float32, 0.5, 1.5),
        "bn1_beta": 0.1 * jax.random.normal(ks[6], (C,), jnp.float32),
        "bn1_mean": 0.1 * jax.random.normal(ks[7], (C,), jnp.float32),
        "bn1_var": jax.random.uniform(ks[8], (C,), jnp.float32, 0.5, 1.5),
        "w2": jax.random.normal(ks[9], (3, 3, C, C), jnp.float32) * jnp.sqrt(2.0 / fan_in),
    }


if __name__ == "__main__":
    root = jax.random.PRNGKey(0)

    # Two small correctness cases:
    #  - (2, 8, 16, 16): narrow-channel smoke test (sub-128-lane blocks).
    #  - (2, 128, 8, 8): lane-full C=128 case, exercising the fully-fed MXU path
    #    that matters at real ResNet widths.
    # f32 tolerance is tight at narrow C (previously validated); slightly looser
    # at C=128 where the MXU reduction is 1152 terms.  bf16 (default compute
    # dtype) uses a bf16-appropriate tolerance.
    cases = [
        (2, 8, 16, 16, 2e-3, 2e-3),
        (2, 128, 8, 8, 2e-2, 2e-2),
    ]
    keys = jax.random.split(root, 2 * len(cases))
    for idx, (N, C, H, W, f32_rtol, f32_atol) in enumerate(cases):
        kx, kp = keys[2 * idx], keys[2 * idx + 1]
        x = jax.random.normal(kx, (N, C, H, W), jnp.float32)     # PyTorch NCHW input
        params = _make_params(kp, C)

        ref = reference_forward(x, params)
        out_f32 = preact_basic_block(x, params, compute_dtype=jnp.float32)
        out_bf16 = preact_basic_block(x, params)                 # bf16 default
        jax.block_until_ready((ref, out_f32, out_bf16))

        assert out_f32.shape == (N, C, H, W), out_f32.shape
        assert out_bf16.shape == (N, C, H, W), out_bf16.shape

        if not jnp.allclose(out_f32, ref, rtol=f32_rtol, atol=f32_atol):
            raise AssertionError(
                f"[C={C}] f32 mismatch vs reference, "
                f"max abs err={jnp.max(jnp.abs(out_f32 - ref))}")
        if not jnp.allclose(out_bf16, ref, rtol=5e-2, atol=1e-1):
            raise AssertionError(
                f"[C={C}] bf16 mismatch vs reference, "
                f"max abs err={jnp.max(jnp.abs(out_bf16 - ref))}")
    print("KERNEL_OK")
</pallas_src>

<mosaic_0001>
module attributes {stable_mosaic.version = 11 : i64} {
  func.func @kernel(%arg0: i32, %arg1: memref<1x16x16x8xf32, #tpu.memory_space<vmem>>, %arg2: memref<1x8xf32, #tpu.memory_space<vmem>>, %arg3: memref<1x8xf32, #tpu.memory_space<vmem>>, %arg4: memref<9x8x8xf32, #tpu.memory_space<vmem>>, %arg5: memref<1x8xf32, #tpu.memory_space<vmem>>, %arg6: memref<1x8xf32, #tpu.memory_space<vmem>>, %arg7: memref<9x8x8xf32, #tpu.memory_space<vmem>>, %arg8: memref<1x16x16x8xf32, #tpu.memory_space<vmem>>, %arg9: memref<18x18x8xf32, #tpu.memory_space<vmem>>) attributes {dimension_semantics = [#tpu.dimension_semantics<parallel>], iteration_bounds = array<i64: 2>, scalar_prefetch = 0 : i64, scratch_operands = 1 : i64, tpu.core_type = #tpu.core_type<tc>, window_params = [{transform_indices = @transform_0, window_bounds = array<i64: 1, 16, 16, 8>}, {pipeline_mode = #tpu.pipeline_mode<synchronous>, transform_indices = @transform_1, window_bounds = array<i64: 1, 8>}, {pipeline_mode = #tpu.pipeline_mode<synchronous>, transform_indices = @transform_2, window_bounds = array<i64: 1, 8>}, {pipeline_mode = #tpu.pipeline_mode<synchronous>, transform_indices = @transform_3, window_bounds = array<i64: 9, 8, 8>}, {pipeline_mode = #tpu.pipeline_mode<synchronous>, transform_indices = @transform_4, window_bounds = array<i64: 1, 8>}, {pipeline_mode = #tpu.pipeline_mode<synchronous>, transform_indices = @transform_5, window_bounds = array<i64: 1, 8>}, {pipeline_mode = #tpu.pipeline_mode<synchronous>, transform_indices = @transform_6, window_bounds = array<i64: 9, 8, 8>}, {transform_indices = @transform_7, window_bounds = array<i64: 1, 16, 16, 8>}]} {
    %c0 = arith.constant 0 : index
    %c0_0 = arith.constant 0 : index
    %c0_1 = arith.constant 0 : index
    %c0_2 = arith.constant 0 : index
    %0 = vector.load %arg1[%c0, %c0_0, %c0_1, %c0_2] : memref<1x16x16x8xf32, #tpu.memory_space<vmem>>, vector<1x16x16x8xf32>
    %1 = vector.shape_cast %0 : vector<1x16x16x8xf32> to vector<16x16x8xf32>
    %c0_3 = arith.constant 0 : index
    %c0_4 = arith.constant 0 : index
    %2 = vector.load %arg2[%c0_3, %c0_4] : memref<1x8xf32, #tpu.memory_space<vmem>>, vector<1x8xf32>
    %3 = vector.shape_cast %2 : vector<1x8xf32> to vector<1x1x8xf32>
    %4 = vector.broadcast %3 : vector<1x1x8xf32> to vector<16x16x8xf32>
    %5 = arith.mulf %1, %4 : vector<16x16x8xf32>
    %c0_5 = arith.constant 0 : index
    %c0_6 = arith.constant 0 : index
    %6 = vector.load %arg3[%c0_5, %c0_6] : memref<1x8xf32, #tpu.memory_space<vmem>>, vector<1x8xf32>
    %7 = vector.shape_cast %6 : vector<1x8xf32> to vector<1x1x8xf32>
    %8 = vector.broadcast %7 : vector<1x1x8xf32> to vector<16x16x8xf32>
    %9 = arith.addf %5, %8 : vector<16x16x8xf32>
    %cst = arith.constant 0.000000e+00 : f32
    %10 = vector.broadcast %cst : f32 to vector<16x16x8xf32>
    %11 = arith.maximumf %9, %10 : vector<16x16x8xf32>
    %cst_7 = arith.constant 0.000000e+00 : f32
    %12 = vector.broadcast %cst_7 : f32 to vector<1x18x8xf32>
    %c0_8 = arith.constant 0 : index
    %c0_9 = arith.constant 0 : index
    %c0_10 = arith.constant 0 : index
    %13 = vector.load %arg9[%c0_8, %c0_9, %c0_10] : memref<18x18x8xf32, #tpu.memory_space<vmem>>, vector<1x18x8xf32>
    tpu.vector_store %arg9[%c0_8, %c0_9, %c0_10], %12 {strides = array<i32>} : memref<18x18x8xf32, #tpu.memory_space<vmem>>, vector<1x18x8xf32>,
    %cst_11 = arith.constant 0.000000e+00 : f32
    %14 = vector.broadcast %cst_11 : f32 to vector<1x18x8xf32>
    %c17 = arith.constant 17 : index
    %c0_12 = arith.constant 0 : index
    %c0_13 = arith.constant 0 : index
    %15 = vector.load %arg9[%c17, %c0_12, %c0_13] : memref<18x18x8xf32, #tpu.memory_space<vmem>>, vector<1x18x8xf32>
    tpu.vector_store %arg9[%c17, %c0_12, %c0_13], %14 {strides = array<i32>} : memref<18x18x8xf32, #tpu.memory_space<vmem>>, vector<1x18x8xf32>,
    %cst_14 = arith.constant 0.000000e+00 : f32
    %16 = vector.broadcast %cst_14 : f32 to vector<18x1x8xf32>
    %c0_15 = arith.constant 0 : index
    %c0_16 = arith.constant 0 : index
    %c0_17 = arith.constant 0 : index
    %17 = vector.load %arg9[%c0_15, %c0_16, %c0_17] : memref<18x18x8xf32, #tpu.memory_space<vmem>>, vector<18x1x8xf32>
    tpu.vector_store %arg9[%c0_15, %c0_16, %c0_17], %16 {strides = array<i32>} : memref<18x18x8xf32, #tpu.memory_space<vmem>>, vector<18x1x8xf32>,
    %cst_18 = arith.constant 0.000000e+00 : f32
    %18 = vector.broadcast %cst_18 : f32 to vector<18x1x8xf32>
    %c0_19 = arith.constant 0 : index
    %c17_20 = arith.constant 17 : index
    %c0_21 = arith.constant 0 : index
    %19 = vector.load %arg9[%c0_19, %c17_20, %c0_21] : memref<18x18x8xf32, #tpu.memory_space<vmem>>, vector<18x1x8xf32>
    tpu.vector_store %arg9[%c0_19, %c17_20, %c0_21], %18 {strides = array<i32>} : memref<18x18x8xf32, #tpu.memory_space<vmem>>, vector<18x1x8xf32>,
    %c1 = arith.constant 1 : index
    %c1_22 = arith.constant 1 : index
    %c0_23 = arith.constant 0 : index
    %20 = vector.load %arg9[%c1, %c1_22, %c0_23] : memref<18x18x8xf32, #tpu.memory_space<vmem>>, vector<16x16x8xf32>
    tpu.vector_store %arg9[%c1, %c1_22, %c0_23], %11 {strides = array<i32>} : memref<18x18x8xf32, #tpu.memory_space<vmem>>, vector<16x16x8xf32>,
    %cst_24 = arith.constant 0.000000e+00 : f32
    %21 = vector.broadcast %cst_24 : f32 to vector<256x8xf32>
    %c0_25 = arith.constant 0 : index
    %c0_26 = arith.constant 0 : index
    %c0_27 = arith.constant 0 : index
    %22 = vector.load %arg9[%c0_25, %c0_26, %c0_27] : memref<18x18x8xf32, #tpu.memory_space<vmem>>, vector<16x16x8xf32>
    %23 = vector.shape_cast %22 : vector<16x16x8xf32> to vector<256x8xf32>
    %c0_28 = arith.constant 0 : index
    %c0_29 = arith.constant 0 : index
    %c0_30 = arith.constant 0 : index
    %24 = vector.load %arg4[%c0_28, %c0_29, %c0_30] : memref<9x8x8xf32, #tpu.memory_space<vmem>>, vector<1x8x8xf32>
    %25 = vector.shape_cast %24 : vector<1x8x8xf32> to vector<8x8xf32>
    %cst_31 = arith.constant dense<0.000000e+00> : vector<256x8xf32>
    %26 = tpu.matmul %23, %25, %cst_31 {dimension_numbers = #tpu.dot_dimension_numbers<[1], [0], [0], [1], [0, 0, 1, 1], [], []>} : vector<256x8xf32>, vector<8x8xf32>, vector<256x8xf32> -> vector<256x8xf32>
    %27 = arith.addf %21, %26 : vector<256x8xf32>
    %c0_32 = arith.constant 0 : index
    %c1_33 = arith.constant 1 : index
    %c0_34 = arith.constant 0 : index
    %28 = vector.load %arg9[%c0_32, %c1_33, %c0_34] : memref<18x18x8xf32, #tpu.memory_space<vmem>>, vector<16x16x8xf32>
    %29 = vector.shape_cast %28 : vector<16x16x8xf32> to vector<256x8xf32>
    %c1_35 = arith.constant 1 : index
    %c0_36 = arith.constant 0 : index
    %c0_37 = arith.constant 0 : index
    %30 = vector.load %arg4[%c1_35, %c0_36, %c0_37] : memref<9x8x8xf32, #tpu.memory_space<vmem>>, vector<1x8x8xf32>
    %31 = vector.shape_cast %30 : vector<1x8x8xf32> to vector<8x8xf32>
    %cst_38 = arith.constant dense<0.000000e+00> : vector<256x8xf32>
    %32 = tpu.matmul %29, %31, %cst_38 {dimension_numbers = #tpu.dot_dimension_numbers<[1], [0], [0], [1], [0, 0, 1, 1], [], []>} : vector<256x8xf32>, vector<8x8xf32>, vector<256x8xf32> -> vector<256x8xf32>
    %33 = arith.addf %27, %32 : vector<256x8xf32>
    %c0_39 = arith.constant 0 : index
    %c2 = arith.constant 2 : index
    %c0_40 = arith.constant 0 : index
    %34 = vector.load %arg9[%c0_39, %c2, %c0_40] : memref<18x18x8xf32, #tpu.memory_space<vmem>>, vector<16x16x8xf32>
    %35 = vector.shape_cast %34 : vector<16x16x8xf32> to vector<256x8xf32>
    %c2_41 = arith.constant 2 : index
    %c0_42 = arith.constant 0 : index
    %c0_43 = arith.constant 0 : index
    %36 = vector.load %arg4[%c2_41, %c0_42, %c0_43] : memref<9x8x8xf32, #tpu.memory_space<vmem>>, vector<1x8x8xf32>
    %37 = vector.shape_cast %36 : vector<1x8x8xf32> to vector<8x8xf32>
    %cst_44 = arith.constant dense<0.000000e+00> : vector<256x8xf32>
    %38 = tpu.matmul %35, %37, %cst_44 {dimension_numbers = #tpu.dot_dimension_numbers<[1], [0], [0], [1], [0, 0, 1, 1], [], []>} : vector<256x8xf32>, vector<8x8xf32>, vector<256x8xf32> -> vector<256x8xf32>
    %39 = arith.addf %33, %38 : vector<256x8xf32>
    %c1_45 = arith.constant 1 : index
    %c0_46 = arith.constant 0 : index
    %c0_47 = arith.constant 0 : index
    %40 = vector.load %arg9[%c1_45, %c0_46, %c0_47] : memref<18x18x8xf32, #tpu.memory_space<vmem>>, vector<16x16x8xf32>
    %41 = vector.shape_cast %40 : vector<16x16x8xf32> to vector<256x8xf32>
    %c3 = arith.constant 3 : index
    %c0_48 = arith.constant 0 : index
    %c0_49 = arith.constant 0 : index
    %42 = vector.load %arg4[%c3, %c0_48, %c0_49] : memref<9x8x8xf32, #tpu.memory_space<vmem>>, vector<1x8x8xf32>
    %43 = vector.shape_cast %42 : vector<1x8x8xf32> to vector<8x8xf32>
    %cst_50 = arith.constant dense<0.000000e+00> : vector<256x8xf32>
    %44 = tpu.matmul %41, %43, %cst_50 {dimension_numbers = #tpu.dot_dimension_numbers<[1], [0], [0], [1], [0, 0, 1, 1], [], []>} : vector<256x8xf32>, vector<8x8xf32>, vector<256x8xf32> -> vector<256x8xf32>
    %45 = arith.addf %39, %44 : vector<256x8xf32>
    %c1_51 = arith.constant 1 : index
    %c1_52 = arith.constant 1 : index
    %c0_53 = arith.constant 0 : index
    %46 = vector.load %arg9[%c1_51, %c1_52, %c0_53] : memref<18x18x8xf32, #tpu.memory_space<vmem>>, vector<16x16x8xf32>
    %47 = vector.shape_cast %46 : vector<16x16x8xf32> to vector<256x8xf32>
    %c4 = arith.constant 4 : index
    %c0_54 = arith.constant 0 : index
    %c0_55 = arith.constant 0 : index
    %48 = vector.load %arg4[%c4, %c0_54, %c0_55] : memref<9x8x8xf32, #tpu.memory_space<vmem>>, vector<1x8x8xf32>
    %49 = vector.shape_cast %48 : vector<1x8x8xf32> to vector<8x8xf32>
    %cst_56 = arith.constant dense<0.000000e+00> : vector<256x8xf32>
    %50 = tpu.matmul %47, %49, %cst_56 {dimension_numbers = #tpu.dot_dimension_numbers<[1], [0], [0], [1], [0, 0, 1, 1], [], []>} : vector<256x8xf32>, vector<8x8xf32>, vector<256x8xf32> -> vector<256x8xf32>
    %51 = arith.addf %45, %50 : vector<256x8xf32>
    %c1_57 = arith.constant 1 : index
    %c2_58 = arith.constant 2 : index
    %c0_59 = arith.constant 0 : index
    %52 = vector.load %arg9[%c1_57, %c2_58, %c0_59] : memref<18x18x8xf32, #tpu.memory_space<vmem>>, vector<16x16x8xf32>
    %53 = vector.shape_cast %52 : vector<16x16x8xf32> to vector<256x8xf32>
    %c5 = arith.constant 5 : index
    %c0_60 = arith.constant 0 : index
    %c0_61 = arith.constant 0 : index
    %54 = vector.load %arg4[%c5, %c0_60, %c0_61] : memref<9x8x8xf32, #tpu.memory_space<vmem>>, vector<1x8x8xf32>
    %55 = vector.shape_cast %54 : vector<1x8x8xf32> to vector<8x8xf32>
    %cst_62 = arith.constant dense<0.000000e+00> : vector<256x8xf32>
    %56 = tpu.matmul %53, %55, %cst_62 {dimension_numbers = #tpu.dot_dimension_numbers<[1], [0], [0], [1], [0, 0, 1, 1], [], []>} : vector<256x8xf32>, vector<8x8xf32>, vector<256x8xf32> -> vector<256x8xf32>
    %57 = arith.addf %51, %56 : vector<256x8xf32>
    %c2_63 = arith.constant 2 : index
    %c0_64 = arith.constant 0 : index
    %c0_65 = arith.constant 0 : index
    %58 = vector.load %arg9[%c2_63, %c0_64, %c0_65] : memref<18x18x8xf32, #tpu.memory_space<vmem>>, vector<16x16x8xf32>
    %59 = vector.shape_cast %58 : vector<16x16x8xf32> to vector<256x8xf32>
    %c6 = arith.constant 6 : index
    %c0_66 = arith.constant 0 : index
    %c0_67 = arith.constant 0 : index
    %60 = vector.load %arg4[%c6, %c0_66, %c0_67] : memref<9x8x8xf32, #tpu.memory_space<vmem>>, vector<1x8x8xf32>
    %61 = vector.shape_cast %60 : vector<1x8x8xf32> to vector<8x8xf32>
    %cst_68 = arith.constant dense<0.000000e+00> : vector<256x8xf32>
    %62 = tpu.matmul %59, %61, %cst_68 {dimension_numbers = #tpu.dot_dimension_numbers<[1], [0], [0], [1], [0, 0, 1, 1], [], []>} : vector<256x8xf32>, vector<8x8xf32>, vector<256x8xf32> -> vector<256x8xf32>
    %63 = arith.addf %57, %62 : vector<256x8xf32>
    %c2_69 = arith.constant 2 : index
    %c1_70 = arith.constant 1 : index
    %c0_71 = arith.constant 0 : index
    %64 = vector.load %arg9[%c2_69, %c1_70, %c0_71] : memref<18x18x8xf32, #tpu.memory_space<vmem>>, vector<16x16x8xf32>
    %65 = vector.shape_cast %64 : vector<16x16x8xf32> to vector<256x8xf32>
    %c7 = arith.constant 7 : index
    %c0_72 = arith.constant 0 : index
    %c0_73 = arith.constant 0 : index
    %66 = vector.load %arg4[%c7, %c0_72, %c0_73] : memref<9x8x8xf32, #tpu.memory_space<vmem>>, vector<1x8x8xf32>
    %67 = vector.shape_cast %66 : vector<1x8x8xf32> to vector<8x8xf32>
    %cst_74 = arith.constant dense<0.000000e+00> : vector<256x8xf32>
    %68 = tpu.matmul %65, %67, %cst_74 {dimension_numbers = #tpu.dot_dimension_numbers<[1], [0], [0], [1], [0, 0, 1, 1], [], []>} : vector<256x8xf32>, vector<8x8xf32>, vector<256x8xf32> -> vector<256x8xf32>
    %69 = arith.addf %63, %68 : vector<256x8xf32>
    %c2_75 = arith.constant 2 : index
    %c2_76 = arith.constant 2 : index
    %c0_77 = arith.constant 0 : index
    %70 = vector.load %arg9[%c2_75, %c2_76, %c0_77] : memref<18x18x8xf32, #tpu.memory_space<vmem>>, vector<16x16x8xf32>
    %71 = vector.shape_cast %70 : vector<16x16x8xf32> to vector<256x8xf32>
    %c8 = arith.constant 8 : index
    %c0_78 = arith.constant 0 : index
    %c0_79 = arith.constant 0 : index
    %72 = vector.load %arg4[%c8, %c0_78, %c0_79] : memref<9x8x8xf32, #tpu.memory_space<vmem>>, vector<1x8x8xf32>
    %73 = vector.shape_cast %72 : vector<1x8x8xf32> to vector<8x8xf32>
    %cst_80 = arith.constant dense<0.000000e+00> : vector<256x8xf32>
    %74 = tpu.matmul %71, %73, %cst_80 {dimension_numbers = #tpu.dot_dimension_numbers<[1], [0], [0], [1], [0, 0, 1, 1], [], []>} : vector<256x8xf32>, vector<8x8xf32>, vector<256x8xf32> -> vector<256x8xf32>
    %75 = arith.addf %69, %74 : vector<256x8xf32>
    %c0_81 = arith.constant 0 : index
    %c0_82 = arith.constant 0 : index
    %76 = vector.load %arg5[%c0_81, %c0_82] : memref<1x8xf32, #tpu.memory_space<vmem>>, vector<1x8xf32>
    %77 = vector.broadcast %76 : vector<1x8xf32> to vector<256x8xf32>
    %78 = arith.mulf %75, %77 : vector<256x8xf32>
    %c0_83 = arith.constant 0 : index
    %c0_84 = arith.constant 0 : index
    %79 = vector.load %arg6[%c0_83, %c0_84] : memref<1x8xf32, #tpu.memory_space<vmem>>, vector<1x8xf32>
    %80 = vector.broadcast %79 : vector<1x8xf32> to vector<256x8xf32>
    %81 = arith.addf %78, %80 : vector<256x8xf32>
    %cst_85 = arith.constant 0.000000e+00 : f32
    %82 = vector.broadcast %cst_85 : f32 to vector<256x8xf32>
    %83 = arith.maximumf %81, %82 : vector<256x8xf32>
    %84 = vector.shape_cast %83 : vector<256x8xf32> to vector<16x16x8xf32>
    %c1_86 = arith.constant 1 : index
    %c1_87 = arith.constant 1 : index
    %c0_88 = arith.constant 0 : index
    %85 = vector.load %arg9[%c1_86, %c1_87, %c0_88] : memref<18x18x8xf32, #tpu.memory_space<vmem>>, vector<16x16x8xf32>
    tpu.vector_store %arg9[%c1_86, %c1_87, %c0_88], %84 {strides = array<i32>} : memref<18x18x8xf32, #tpu.memory_space<vmem>>, vector<16x16x8xf32>,
    %cst_89 = arith.constant 0.000000e+00 : f32
    %86 = vector.broadcast %cst_89 : f32 to vector<256x8xf32>
    %c0_90 = arith.constant 0 : index
    %c0_91 = arith.constant 0 : index
    %c0_92 = arith.constant 0 : index
    %87 = vector.load %arg9[%c0_90, %c0_91, %c0_92] : memref<18x18x8xf32, #tpu.memory_space<vmem>>, vector<16x16x8xf32>
    %88 = vector.shape_cast %87 : vector<16x16x8xf32> to vector<256x8xf32>
    %c0_93 = arith.constant 0 : index
    %c0_94 = arith.constant 0 : index
    %c0_95 = arith.constant 0 : index
    %89 = vector.load %arg7[%c0_93, %c0_94, %c0_95] : memref<9x8x8xf32, #tpu.memory_space<vmem>>, vector<1x8x8xf32>
    %90 = vector.shape_cast %89 : vector<1x8x8xf32> to vector<8x8xf32>
    %cst_96 = arith.constant dense<0.000000e+00> : vector<256x8xf32>
    %91 = tpu.matmul %88, %90, %cst_96 {dimension_numbers = #tpu.dot_dimension_numbers<[1], [0], [0], [1], [0, 0, 1, 1], [], []>} : vector<256x8xf32>, vector<8x8xf32>, vector<256x8xf32> -> vector<256x8xf32>
    %92 = arith.addf %86, %91 : vector<256x8xf32>
    %c0_97 = arith.constant 0 : index
    %c1_98 = arith.constant 1 : index
    %c0_99 = arith.constant 0 : index
    %93 = vector.load %arg9[%c0_97, %c1_98, %c0_99] : memref<18x18x8xf32, #tpu.memory_space<vmem>>, vector<16x16x8xf32>
    %94 = vector.shape_cast %93 : vector<16x16x8xf32> to vector<256x8xf32>
    %c1_100 = arith.constant 1 : index
    %c0_101 = arith.constant 0 : index
    %c0_102 = arith.constant 0 : index
    %95 = vector.load %arg7[%c1_100, %c0_101, %c0_102] : memref<9x8x8xf32, #tpu.memory_space<vmem>>, vector<1x8x8xf32>
    %96 = vector.shape_cast %95 : vector<1x8x8xf32> to vector<8x8xf32>
    %cst_103 = arith.constant dense<0.000000e+00> : vector<256x8xf32>
    %97 = tpu.matmul %94, %96, %cst_103 {dimension_numbers = #tpu.dot_dimension_numbers<[1], [0], [0], [1], [0, 0, 1, 1], [], []>} : vector<256x8xf32>, vector<8x8xf32>, vector<256x8xf32> -> vector<256x8xf32>
    %98 = arith.addf %92, %97 : vector<256x8xf32>
    %c0_104 = arith.constant 0 : index
    %c2_105 = arith.constant 2 : index
    %c0_106 = arith.constant 0 : index
    %99 = vector.load %arg9[%c0_104, %c2_105, %c0_106] : memref<18x18x8xf32, #tpu.memory_space<vmem>>, vector<16x16x8xf32>
    %100 = vector.shape_cast %99 : vector<16x16x8xf32> to vector<256x8xf32>
    %c2_107 = arith.constant 2 : index
    %c0_108 = arith.constant 0 : index
    %c0_109 = arith.constant 0 : index
    %101 = vector.load %arg7[%c2_107, %c0_108, %c0_109] : memref<9x8x8xf32, #tpu.memory_space<vmem>>, vector<1x8x8xf32>
    %102 = vector.shape_cast %101 : vector<1x8x8xf32> to vector<8x8xf32>
    %cst_110 = arith.constant dense<0.000000e+00> : vector<256x8xf32>
    %103 = tpu.matmul %100, %102, %cst_110 {dimension_numbers = #tpu.dot_dimension_numbers<[1], [0], [0], [1], [0, 0, 1, 1], [], []>} : vector<256x8xf32>, vector<8x8xf32>, vector<256x8xf32> -> vector<256x8xf32>
    %104 = arith.addf %98, %103 : vector<256x8xf32>
    %c1_111 = arith.constant 1 : index
    %c0_112 = arith.constant 0 : index
    %c0_113 = arith.constant 0 : index
    %105 = vector.load %arg9[%c1_111, %c0_112, %c0_113] : memref<18x18x8xf32, #tpu.memory_space<vmem>>, vector<16x16x8xf32>
    %106 = vector.shape_cast %105 : vector<16x16x8xf32> to vector<256x8xf32>
    %c3_114 = arith.constant 3 : index
    %c0_115 = arith.constant 0 : index
    %c0_116 = arith.constant 0 : index
    %107 = vector.load %arg7[%c3_114, %c0_115, %c0_116] : memref<9x8x8xf32, #tpu.memory_space<vmem>>, vector<1x8x8xf32>
    %108 = vector.shape_cast %107 : vector<1x8x8xf32> to vector<8x8xf32>
    %cst_117 = arith.constant dense<0.000000e+00> : vector<256x8xf32>
    %109 = tpu.matmul %106, %108, %cst_117 {dimension_numbers = #tpu.dot_dimension_numbers<[1], [0], [0], [1], [0, 0, 1, 1], [], []>} : vector<256x8xf32>, vector<8x8xf32>, vector<256x8xf32> -> vector<256x8xf32>
    %110 = arith.addf %104, %109 : vector<256x8xf32>
    %c1_118 = arith.constant 1 : index
    %c1_119 = arith.constant 1 : index
    %c0_120 = arith.constant 0 : index
    %111 = vector.load %arg9[%c1_118, %c1_119, %c0_120] : memref<18x18x8xf32, #tpu.memory_space<vmem>>, vector<16x16x8xf32>
    %112 = vector.shape_cast %111 : vector<16x16x8xf32> to vector<256x8xf32>
    %c4_121 = arith.constant 4 : index
    %c0_122 = arith.constant 0 : index
    %c0_123 = arith.constant 0 : index
    %113 = vector.load %arg7[%c4_121, %c0_122, %c0_123] : memref<9x8x8xf32, #tpu.memory_space<vmem>>, vector<1x8x8xf32>
    %114 = vector.shape_cast %113 : vector<1x8x8xf32> to vector<8x8xf32>
    %cst_124 = arith.constant dense<0.000000e+00> : vector<256x8xf32>
    %115 = tpu.matmul %112, %114, %cst_124 {dimension_numbers = #tpu.dot_dimension_numbers<[1], [0], [0], [1], [0, 0, 1, 1], [], []>} : vector<256x8xf32>, vector<8x8xf32>, vector<256x8xf32> -> vector<256x8xf32>
    %116 = arith.addf %110, %115 : vector<256x8xf32>
    %c1_125 = arith.constant 1 : index
    %c2_126 = arith.constant 2 : index
    %c0_127 = arith.constant 0 : index
    %117 = vector.load %arg9[%c1_125, %c2_126, %c0_127] : memref<18x18x8xf32, #tpu.memory_space<vmem>>, vector<16x16x8xf32>
    %118 = vector.shape_cast %117 : vector<16x16x8xf32> to vector<256x8xf32>
    %c5_128 = arith.constant 5 : index
    %c0_129 = arith.constant 0 : index
    %c0_130 = arith.constant 0 : index
    %119 = vector.load %arg7[%c5_128, %c0_129, %c0_130] : memref<9x8x8xf32, #tpu.memory_space<vmem>>, vector<1x8x8xf32>
    %120 = vector.shape_cast %119 : vector<1x8x8xf32> to vector<8x8xf32>
    %cst_131 = arith.constant dense<0.000000e+00> : vector<256x8xf32>
    %121 = tpu.matmul %118, %120, %cst_131 {dimension_numbers = #tpu.dot_dimension_numbers<[1], [0], [0], [1], [0, 0, 1, 1], [], []>} : vector<256x8xf32>, vector<8x8xf32>, vector<256x8xf32> -> vector<256x8xf32>
    %122 = arith.addf %116, %121 : vector<256x8xf32>
    %c2_132 = arith.constant 2 : index
    %c0_133 = arith.constant 0 : index
    %c0_134 = arith.constant 0 : index
    %123 = vector.load %arg9[%c2_132, %c0_133, %c0_134] : memref<18x18x8xf32, #tpu.memory_space<vmem>>, vector<16x16x8xf32>
    %124 = vector.shape_cast %123 : vector<16x16x8xf32> to vector<256x8xf32>
    %c6_135 = arith.constant 6 : index
    %c0_136 = arith.constant 0 : index
    %c0_137 = arith.constant 0 : index
    %125 = vector.load %arg7[%c6_135, %c0_136, %c0_137] : memref<9x8x8xf32, #tpu.memory_space<vmem>>, vector<1x8x8xf32>
    %126 = vector.shape_cast %125 : vector<1x8x8xf32> to vector<8x8xf32>
    %cst_138 = arith.constant dense<0.000000e+00> : vector<256x8xf32>
    %127 = tpu.matmul %124, %126, %cst_138 {dimension_numbers = #tpu.dot_dimension_numbers<[1], [0], [0], [1], [0, 0, 1, 1], [], []>} : vector<256x8xf32>, vector<8x8xf32>, vector<256x8xf32> -> vector<256x8xf32>
    %128 = arith.addf %122, %127 : vector<256x8xf32>
    %c2_139 = arith.constant 2 : index
    %c1_140 = arith.constant 1 : index
    %c0_141 = arith.constant 0 : index
    %129 = vector.load %arg9[%c2_139, %c1_140, %c0_141] : memref<18x18x8xf32, #tpu.memory_space<vmem>>, vector<16x16x8xf32>
    %130 = vector.shape_cast %129 : vector<16x16x8xf32> to vector<256x8xf32>
    %c7_142 = arith.constant 7 : index
    %c0_143 = arith.constant 0 : index
    %c0_144 = arith.constant 0 : index
    %131 = vector.load %arg7[%c7_142, %c0_143, %c0_144] : memref<9x8x8xf32, #tpu.memory_space<vmem>>, vector<1x8x8xf32>
    %132 = vector.shape_cast %131 : vector<1x8x8xf32> to vector<8x8xf32>
    %cst_145 = arith.constant dense<0.000000e+00> : vector<256x8xf32>
    %133 = tpu.matmul %130, %132, %cst_145 {dimension_numbers = #tpu.dot_dimension_numbers<[1], [0], [0], [1], [0, 0, 1, 1], [], []>} : vector<256x8xf32>, vector<8x8xf32>, vector<256x8xf32> -> vector<256x8xf32>
    %134 = arith.addf %128, %133 : vector<256x8xf32>
    %c2_146 = arith.constant 2 : index
    %c2_147 = arith.constant 2 : index
    %c0_148 = arith.constant 0 : index
    %135 = vector.load %arg9[%c2_146, %c2_147, %c0_148] : memref<18x18x8xf32, #tpu.memory_space<vmem>>, vector<16x16x8xf32>
    %136 = vector.shape_cast %135 : vector<16x16x8xf32> to vector<256x8xf32>
    %c8_149 = arith.constant 8 : index
    %c0_150 = arith.constant 0 : index
    %c0_151 = arith.constant 0 : index
    %137 = vector.load %arg7[%c8_149, %c0_150, %c0_151] : memref<9x8x8xf32, #tpu.memory_space<vmem>>, vector<1x8x8xf32>
    %138 = vector.shape_cast %137 : vector<1x8x8xf32> to vector<8x8xf32>
    %cst_152 = arith.constant dense<0.000000e+00> : vector<256x8xf32>
    %139 = tpu.matmul %136, %138, %cst_152 {dimension_numbers = #tpu.dot_dimension_numbers<[1], [0], [0], [1], [0, 0, 1, 1], [], []>} : vector<256x8xf32>, vector<8x8xf32>, vector<256x8xf32> -> vector<256x8xf32>
    %140 = arith.addf %134, %139 : vector<256x8xf32>
    %141 = vector.shape_cast %140 : vector<256x8xf32> to vector<16x16x8xf32>
    %142 = arith.addf %141, %1 : vector<16x16x8xf32>
    %c0_153 = arith.constant 0 : index
    %c0_154 = arith.constant 0 : index
    %c0_155 = arith.constant 0 : index
    %c0_156 = arith.constant 0 : index
    %143 = vector.load %arg8[%c0_153, %c0_154, %c0_155, %c0_156] : memref<1x16x16x8xf32, #tpu.memory_space<vmem>>, vector<1x16x16x8xf32>
    %144 = vector.shape_cast %143 : vector<1x16x16x8xf32> to vector<16x16x8xf32>
    %145 = vector.shape_cast %142 : vector<16x16x8xf32> to vector<1x16x16x8xf32>
    tpu.vector_store %arg8[%c0_153, %c0_154, %c0_155, %c0_156], %145 {strides = array<i32>} : memref<1x16x16x8xf32, #tpu.memory_space<vmem>>, vector<1x16x16x8xf32>,
    return
  }
  func.func @transform_0(%arg0: i32) -> (i32, i32, i32, i32) {
    %c0_i32 = arith.constant 0 : i32
    %c0_i32_0 = arith.constant 0 : i32
    %c0_i32_1 = arith.constant 0 : i32
    %c0_i32_2 = arith.constant 0 : i32
    return %arg0, %c0_i32, %c0_i32_0, %c0_i32_1 : i32, i32, i32, i32
  }
  func.func @transform_1(%arg0: i32) -> (i32, i32) {
    %c0_i32 = arith.constant 0 : i32
    %c0_i32_0 = arith.constant 0 : i32
    %c0_i32_1 = arith.constant 0 : i32
    return %c0_i32, %c0_i32_0 : i32, i32
  }
  func.func @transform_2(%arg0: i32) -> (i32, i32) {
    %c0_i32 = arith.constant 0 : i32
    %c0_i32_0 = arith.constant 0 : i32
    %c0_i32_1 = arith.constant 0 : i32
    return %c0_i32, %c0_i32_0 : i32, i32
  }
  func.func @transform_3(%arg0: i32) -> (i32, i32, i32) {
    %c0_i32 = arith.constant 0 : i32
    %c0_i32_0 = arith.constant 0 : i32
    %c0_i32_1 = arith.constant 0 : i32
    %c0_i32_2 = arith.constant 0 : i32
    return %c0_i32, %c0_i32_0, %c0_i32_1 : i32, i32, i32
  }
  func.func @transform_4(%arg0: i32) -> (i32, i32) {
    %c0_i32 = arith.constant 0 : i32
    %c0_i32_0 = arith.constant 0 : i32
    %c0_i32_1 = arith.constant 0 : i32
    return %c0_i32, %c0_i32_0 : i32, i32
  }
  func.func @transform_5(%arg0: i32) -> (i32, i32) {
    %c0_i32 = arith.constant 0 : i32
    %c0_i32_0 = arith.constant 0 : i32
    %c0_i32_1 = arith.constant 0 : i32
    return %c0_i32, %c0_i32_0 : i32, i32
  }
  func.func @transform_6(%arg0: i32) -> (i32, i32, i32) {
    %c0_i32 = arith.constant 0 : i32
    %c0_i32_0 = arith.constant 0 : i32
    %c0_i32_1 = arith.constant 0 : i32
    %c0_i32_2 = arith.constant 0 : i32
    return %c0_i32, %c0_i32_0, %c0_i32_1 : i32, i32, i32
  }
  func.func @transform_7(%arg0: i32) -> (i32, i32, i32, i32) {
    %c0_i32 = arith.constant 0 : i32
    %c0_i32_0 = arith.constant 0 : i32
    %c0_i32_1 = arith.constant 0 : i32
    %c0_i32_2 = arith.constant 0 : i32
    return %arg0, %c0_i32, %c0_i32_0, %c0_i32_1 : i32, i32, i32, i32
  }
}

</mosaic_0001>

<llo_original>
// kernel: tpu_custom_call.1
$region0: #{tpu_custom_call.1}
  #allocation0 [shape = 'u32[]', space=smem, size = 0x4, offset = 0x4, fixed_abs, tag = 'smem constant byte address 0x4 - core index']
  #allocation1 [shape = 'u32[144,128]{1,0:T(1,128)}', space=vmem, size = 0x12000, scoped, tag = 'internal scratch']
  #allocation2 [shape = 'f32[18,18,8]{2,1,0:T(8,128)}', space=vmem, size = 0x36000, scoped, tag = 'scratch operand']
  %s0 = inlined_call_operand.vmem [shape: f32[2,16,16,8], index: 0, kind: input, shape index: {}]
  %s1 = inlined_call_operand.vmem [shape: f32[1,8], index: 1, kind: input, shape index: {}]
  %s2 = inlined_call_operand.vmem [shape: f32[1,8], index: 2, kind: input, shape index: {}]
  %s3 = inlined_call_operand.vmem [shape: f32[9,8,8], index: 3, kind: input, shape index: {}]
  %s4 = inlined_call_operand.vmem [shape: f32[1,8], index: 4, kind: input, shape index: {}]
  %s5 = inlined_call_operand.vmem [shape: f32[1,8], index: 5, kind: input, shape index: {}]
  %s6 = inlined_call_operand.vmem [shape: f32[9,8,8], index: 6, kind: input, shape index: {}]
  %s7 = inlined_call_operand.vmem [shape: f32[2,16,16,8], index: 7, kind: output, shape index: {}]
  %s8 = sld [smem:[#allocation0]]
  $region61: #{tpu_custom_call.1} parent=0
    _
  %s10 = ssub.s32 1, %s8
  %s11 = scalar_select 0, %s10, %s8
  loop: start=0, step=1, limit=4
  $region2: #{tpu_custom_call.1} parent=0 // loop_pre_header
    _
  $region3: #{tpu_custom_call.1} parent=0 // loop_header
    %s13 = sphi 0, %s17
    %p14 = scmp.ge.s32.totalorder %s13, 4
    %s23 = sphi 0, %s25
    %s26 = sphi 0, %s23
    %s27 = sphi 0, %s26
    %s43 = sphi 0, %s27
    %s47 = sphi 0, %s47
    %s49 = sphi 0, %s47
    %s50 = sphi 0, %s49
    %s64 = sphi 0, %s50
    %s68 = sphi 0, %s68
    %s70 = sphi 0, %s68
    %s71 = sphi 0, %s70
    %s85 = sphi 0, %s71
    %s89 = sphi 0, %s89
    %s91 = sphi 0, %s89
    %s92 = sphi 0, %s91
    %s106 = sphi 0, %s92
    %s110 = sphi 0, %s110
    %s112 = sphi 0, %s110
    %s113 = sphi 0, %s112
    %s127 = sphi 0, %s113
    %s131 = sphi 0, %s131
    %s133 = sphi 0, %s131
    %s134 = sphi 0, %s133
    %s148 = sphi 0, %s134
    %s152 = sphi 0, %s152
    %s154 = sphi 0, %s152
    %s155 = sphi 0, %s154
    %s169 = sphi 0, %s155
    %s175 = sphi 0, %s177
    %s178 = sphi 0, %s175
    %s179 = sphi 0, %s178
    %s195 = sphi 0, %s179
  $region4: #{tpu_custom_call.1} parent=0 // loop_header_branch
    %16 = sbr.rel (%p14) target = $region8
  $region5: #{tpu_custom_call.1} parent=0 // loop_body
    %s18 = ssub.s32 %s13, 1
    %s19 = ssub.s32 %s13, 2
    %s20 = sadd.s32 %s13, 1
    %s21 = ssub.s32 %s13, %s20
    %p22 = scmp.eq.s32.totalorder %s21, 0
    %s24 = sadd.s32 %s23, 1
    %s25 = scalar_select %p22, %s23, %s24
    %p28 = pneg %p22
    %p29 = scmp.eq.s32.totalorder %s13, 1
    %p30 = por %p28, %p29
    %p31 = scmp.ne.s32.totalorder %s23, %s26
    %p32 = scmp.eq.s32.totalorder %s13, 0
    %p33 = por %p31, %p32
    %p34 = scmp.ne.s32.totalorder %s23, %s26
    %p35 = scmp.eq.s32.totalorder %s18, 1
    %p36 = por %p34, %p35
    %p37 = scmp.ne.s32.totalorder %s26, %s27
    %p38 = scmp.eq.s32.totalorder %s18, 0
    %p39 = por %p37, %p38
    %p40 = scmp.ne.s32.totalorder %s26, %s27
    %p41 = scmp.eq.s32.totalorder %s19, 1
    %p42 = por %p40, %p41
    %p44 = scmp.ne.s32.totalorder %s27, %s43
    %p45 = scmp.eq.s32.totalorder %s19, 0
    %p46 = por %p44, %p45
    %s48 = sadd.s32 %s47, 1
    %p51 = scmp.eq.s32.totalorder %s13, 1
    %p52 = scmp.ne.s32.totalorder %s47, %s49
    %p53 = scmp.eq.s32.totalorder %s13, 0
    %p54 = por %p52, %p53
    %p55 = scmp.ne.s32.totalorder %s47, %s49
    %p56 = scmp.eq.s32.totalorder %s18, 1
    %p57 = por %p55, %p56
    %p58 = scmp.ne.s32.totalorder %s49, %s50
    %p59 = scmp.eq.s32.totalorder %s18, 0
    %p60 = por %p58, %p59
    %p61 = scmp.ne.s32.totalorder %s49, %s50
    %p62 = scmp.eq.s32.totalorder %s19, 1
    %p63 = por %p61, %p62
    %p65 = scmp.ne.s32.totalorder %s50, %s64
    %p66 = scmp.eq.s32.totalorder %s19, 0
    %p67 = por %p65, %p66
    %s69 = sadd.s32 %s68, 1
    %p72 = scmp.eq.s32.totalorder %s13, 1
    %p73 = scmp.ne.s32.totalorder %s68, %s70
    %p74 = scmp.eq.s32.totalorder %s13, 0
    %p75 = por %p73, %p74
    %p76 = scmp.ne.s32.totalorder %s68, %s70
    %p77 = scmp.eq.s32.totalorder %s18, 1
    %p78 = por %p76, %p77
    %p79 = scmp.ne.s32.totalorder %s70, %s71
    %p80 = scmp.eq.s32.totalorder %s18, 0
    %p81 = por %p79, %p80
    %p82 = scmp.ne.s32.totalorder %s70, %s71
    %p83 = scmp.eq.s32.totalorder %s19, 1
    %p84 = por %p82, %p83
    %p86 = scmp.ne.s32.totalorder %s71, %s85
    %p87 = scmp.eq.s32.totalorder %s19, 0
    %p88 = por %p86, %p87
    %s90 = sadd.s32 %s89, 1
    %p93 = scmp.eq.s32.totalorder %s13, 1
    %p94 = scmp.ne.s32.totalorder %s89, %s91
    %p95 = scmp.eq.s32.totalorder %s13, 0
    %p96 = por %p94, %p95
    %p97 = scmp.ne.s32.totalorder %s89, %s91
    %p98 = scmp.eq.s32.totalorder %s18, 1
    %p99 = por %p97, %p98
    %p100 = scmp.ne.s32.totalorder %s91, %s92
    %p101 = scmp.eq.s32.totalorder %s18, 0
    %p102 = por %p100, %p101
    %p103 = scmp.ne.s32.totalorder %s91, %s92
    %p104 = scmp.eq.s32.totalorder %s19, 1
    %p105 = por %p103, %p104
    %p107 = scmp.ne.s32.totalorder %s92, %s106
    %p108 = scmp.eq.s32.totalorder %s19, 0
    %p109 = por %p107, %p108
    %s111 = sadd.s32 %s110, 1
    %p114 = scmp.eq.s32.totalorder %s13, 1
    %p115 = scmp.ne.s32.totalorder %s110, %s112
    %p116 = scmp.eq.s32.totalorder %s13, 0
    %p117 = por %p115, %p116
    %p118 = scmp.ne.s32.totalorder %s110, %s112
    %p119 = scmp.eq.s32.totalorder %s18, 1
    %p120 = por %p118, %p119
    %p121 = scmp.ne.s32.totalorder %s112, %s113
    %p122 = scmp.eq.s32.totalorder %s18, 0
    %p123 = por %p121, %p122
    %p124 = scmp.ne.s32.totalorder %s112, %s113
    %p125 = scmp.eq.s32.totalorder %s19, 1
    %p126 = por %p124, %p125
    %p128 = scmp.ne.s32.totalorder %s113, %s127
    %p129 = scmp.eq.s32.totalorder %s19, 0
    %p130 = por %p128, %p129
    %s132 = sadd.s32 %s131, 1
    %p135 = scmp.eq.s32.totalorder %s13, 1
    %p136 = scmp.ne.s32.totalorder %s131, %s133
    %p137 = scmp.eq.s32.totalorder %s13, 0
    %p138 = por %p136, %p137
    %p139 = scmp.ne.s32.totalorder %s131, %s133
    %p140 = scmp.eq.s32.totalorder %s18, 1
    %p141 = por %p139, %p140
    %p142 = scmp.ne.s32.totalorder %s133, %s134
    %p143 = scmp.eq.s32.totalorder %s18, 0
    %p144 = por %p142, %p143
    %p145 = scmp.ne.s32.totalorder %s133, %s134
    %p146 = scmp.eq.s32.totalorder %s19, 1
    %p147 = por %p145, %p146
    %p149 = scmp.ne.s32.totalorder %s134, %s148
    %p150 = scmp.eq.s32.totalorder %s19, 0
    %p151 = por %p149, %p150
    %s153 = sadd.s32 %s152, 1
    %p156 = scmp.eq.s32.totalorder %s13, 1
    %p157 = scmp.ne.s32.totalorder %s152, %s154
    %p158 = scmp.eq.s32.totalorder %s13, 0
    %p159 = por %p157, %p158
    %p160 = scmp.ne.s32.totalorder %s152, %s154
    %p161 = scmp.eq.s32.totalorder %s18, 1
    %p162 = por %p160, %p161
    %p163 = scmp.ne.s32.totalorder %s154, %s155
    %p164 = scmp.eq.s32.totalorder %s18, 0
    %p165 = por %p163, %p164
    %p166 = scmp.ne.s32.totalorder %s154, %s155
    %p167 = scmp.eq.s32.totalorder %s19, 1
    %p168 = por %p166, %p167
    %p170 = scmp.ne.s32.totalorder %s155, %s169
    %p171 = scmp.eq.s32.totalorder %s19, 0
    %p172 = por %p170, %p171
    %s173 = ssub.s32 %s13, %s20
    %p174 = scmp.eq.s32.totalorder %s173, 0
    %s176 = sadd.s32 %s175, 1
    %s177 = scalar_select %p174, %s175, %s176
    %p180 = pneg %p174
    %p181 = scmp.eq.s32.totalorder %s13, 1
    %p182 = por %p180, %p181
    %p183 = scmp.ne.s32.totalorder %s175, %s178
    %p184 = scmp.eq.s32.totalorder %s13, 0
    %p185 = por %p183, %p184
    %p186 = scmp.ne.s32.totalorder %s175, %s178
    %p187 = scmp.eq.s32.totalorder %s18, 1
    %p188 = por %p186, %p187
    %p189 = scmp.ne.s32.totalorder %s178, %s179
    %p190 = scmp.eq.s32.totalorder %s18, 0
    %p191 = por %p189, %p190
    %p192 = scmp.ne.s32.totalorder %s178, %s179
    %p193 = scmp.eq.s32.totalorder %s19, 1
    %p194 = por %p192, %p193
    %p196 = scmp.ne.s32.totalorder %s179, %s195
    %p197 = scmp.eq.s32.totalorder %s19, 0
    %p198 = por %p196, %p197
    %p199 = scmp.le.s32.totalorder 1, %s13
    %p200 = scmp.lt.s32.totalorder %s13, 3
    %p201 = pnand %p199, %p200
    %p202 = pneg %p201
    // Predicated region
    $region9: #{tpu_custom_call.1} parent=5 // pred_check
      _
    $region10: #{tpu_custom_call.1} parent=5 // pred_check_branch
      %204 = sbr.rel (%p201) target = $region12
    $region11: #{tpu_custom_call.1} parent=5 // pred_region
      %s205 = ssub.s32 %s13, 1
      // Predicated region
      $region13: #{tpu_custom_call.1} parent=11 // pred_check
        %p206 = pneg %p60
      $region14: #{tpu_custom_call.1} parent=11 // pred_check_branch
        %208 = sbr.rel (%p206) target = $region16
      $region15: #{tpu_custom_call.1} parent=11 // pred_region
        _
      $region16: #{tpu_custom_call.1} parent=11 // pred_fallthru
        _
      // Predicated region
      $region17: #{tpu_custom_call.1} parent=11 // pred_check
        %p209 = pneg %p81
      $region18: #{tpu_custom_call.1} parent=11 // pred_check_branch
        %211 = sbr.rel (%p209) target = $region20
      $region19: #{tpu_custom_call.1} parent=11 // pred_region
        _
      $region20: #{tpu_custom_call.1} parent=11 // pred_fallthru
        _
      // Predicated region
      $region21: #{tpu_custom_call.1} parent=11 // pred_check
        %p212 = pneg %p102
      $region22: #{tpu_custom_call.1} parent=11 // pred_check_branch
        %214 = sbr.rel (%p212) target = $region24
      $region23: #{tpu_custom_call.1} parent=11 // pred_region
        _
      $region24: #{tpu_custom_call.1} parent=11 // pred_fallthru
        _
      // Predicated region
      $region25: #{tpu_custom_call.1} parent=11 // pred_check
        %p215 = pneg %p123
      $region26: #{tpu_custom_call.1} parent=11 // pred_check_branch
        %217 = sbr.rel (%p215) target = $region28
      $region27: #{tpu_custom_call.1} parent=11 // pred_region
        _
      $region28: #{tpu_custom_call.1} parent=11 // pred_fallthru
        _
      // Predicated region
      $region29: #{tpu_custom_call.1} parent=11 // pred_check
        %p218 = pneg %p144
      $region30: #{tpu_custom_call.1} parent=11 // pred_check_branch
        %220 = sbr.rel (%p218) target = $region32
      $region31: #{tpu_custom_call.1} parent=11 // pred_region
        _
      $region32: #{tpu_custom_call.1} parent=11 // pred_fallthru
        _
      // Predicated region
      $region33: #{tpu_custom_call.1} parent=11 // pred_check
        %p221 = pneg %p165
      $region34: #{tpu_custom_call.1} parent=11 // pred_check_branch
        %223 = sbr.rel (%p221) target = $region36
      $region35: #{tpu_custom_call.1} parent=11 // pred_region
        _
      $region36: #{tpu_custom_call.1} parent=11 // pred_fallthru
        _
    $region12: #{tpu_custom_call.1} parent=5 // pred_fallthru
      _
    %p224 = scmp.lt.s32.totalorder %s13, 2
    // Predicated region
    $region37: #{tpu_custom_call.1} parent=5 // pred_check
      %p225 = pneg %p224
    $region38: #{tpu_custom_call.1} parent=5 // pred_check_branch
      %227 = sbr.rel (%p225) target = $region40
    $region39: #{tpu_custom_call.1} parent=5 // pred_region
      // Predicated region
      $region41: #{tpu_custom_call.1} parent=39 // pred_check
        %p228 = pneg %p33
      $region42: #{tpu_custom_call.1} parent=39 // pred_check_branch
        %230 = sbr.rel (%p228) target = $region44
      $region43: #{tpu_custom_call.1} parent=39 // pred_region
        %p231 = scmp.lt.s32.totalorder %s13, 1
        %s232 = scalar_select %p231, %s13, 1
        %s233 = smul.addr %s232, 32
        %s234 = smul.addr %s233, 8
        %s235 = scalar_lea.vmem %s0, %s234
      $region44: #{tpu_custom_call.1} parent=39 // pred_fallthru
        _
    $region40: #{tpu_custom_call.1} parent=5 // pred_fallthru
      _
    %p236 = scmp.le.s32.totalorder 1, %s13
    %p237 = scmp.lt.s32.totalorder %s13, 3
    %p238 = pnand %p236, %p237
    %p239 = pneg %p238
    // Predicated region
    $region45: #{tpu_custom_call.1} parent=5 // pred_check
      _
    $region46: #{tpu_custom_call.1} parent=5 // pred_check_branch
      %241 = sbr.rel (%p238) target = $region48
    $region47: #{tpu_custom_call.1} parent=5 // pred_region
      %s242 = ssub.s32 %s13, 1
      %p243 = scmp.lt.s32.totalorder %s18, 1
      %s244 = scalar_select %p243, %s18, 1
      %s245 = smul.addr %s244, 32
      %s246 = smul.addr %s245, 8
      %s247 = scalar_lea.vmem %s0, %s246
      %p248 = pneg %p39
      %p249 = pneg %p36
      %p250 = pneg %p60
      %p251 = pneg %p57
      %p252 = pneg %p81
      %p253 = pneg %p78
      %p254 = pneg %p102
      %p255 = pneg %p99
      %p256 = pneg %p123
      %p257 = pneg %p120
      %p258 = pneg %p144
      %p259 = pneg %p141
      %p260 = pneg %p165
      %p261 = pneg %p162
      %p262 = pneg %p191
      %p263 = pneg %p188
      %p264 = scmp.lt.s32.totalorder %s18, 1
      %s265 = scalar_select %p264, %s18, 1
      %s266 = smul.addr %s265, 32
      %s267 = smul.addr %s266, 8
      %s268 = scalar_lea.vmem %s7, %s267
      %p269 = scmp.lt.s32.totalorder %s18, 1
      %s270 = scalar_select %p269, %s18, 1
      %s271 = smul.addr %s270, 32
      %s272 = smul.addr %s271, 8
      %s273 = scalar_lea.vmem %s0, %s272
      %p274 = scmp.lt.s32.totalorder %s18, 1
      %s275 = scalar_select %p274, %s18, 1
      %s276 = smul.addr %s275, 32
      %s277 = smul.addr %s276, 8
      %s278 = scalar_lea.vmem %s7, %s277
      %v279 = vld [vmem:[%s273] sm:$0xff]
      %v280 = vld [vmem:[%s273 + $0x8] sm:$0xff]
      %v281 = vld [vmem:[%s273 + $0x10] sm:$0xff]
      %v282 = vld [vmem:[%s273 + $0x18] sm:$0xff]
      %v283 = vld [vmem:[%s273 + $0x20] sm:$0xff]
      %v284 = vld [vmem:[%s273 + $0x28] sm:$0xff]
      %v285 = vld [vmem:[%s273 + $0x30] sm:$0xff]
      %v286 = vld [vmem:[%s273 + $0x38] sm:$0xff]
      %v287 = vld [vmem:[%s273 + $0x40] sm:$0xff]
      %v288 = vld [vmem:[%s273 + $0x48] sm:$0xff]
      %v289 = vld [vmem:[%s273 + $0x50] sm:$0xff]
      %v290 = vld [vmem:[%s273 + $0x58] sm:$0xff]
      %v291 = vld [vmem:[%s273 + $0x60] sm:$0xff]
      %v292 = vld [vmem:[%s273 + $0x68] sm:$0xff]
      %v293 = vld [vmem:[%s273 + $0x70] sm:$0xff]
      %v294 = vld [vmem:[%s273 + $0x78] sm:$0xff]
      %v295 = vld [vmem:[%s273 + $0x80] sm:$0xff]
      %v296 = vld [vmem:[%s273 + $0x88] sm:$0xff]
      %v297 = vld [vmem:[%s273 + $0x90] sm:$0xff]
      %v298 = vld [vmem:[%s273 + $0x98] sm:$0xff]
      %v299 = vld [vmem:[%s273 + $0xa0] sm:$0xff]
      %v300 = vld [vmem:[%s273 + $0xa8] sm:$0xff]
      %v301 = vld [vmem:[%s273 + $0xb0] sm:$0xff]
      %v302 = vld [vmem:[%s273 + $0xb8] sm:$0xff]
      %v303 = vld [vmem:[%s273 + $0xc0] sm:$0xff]
      %v304 = vld [vmem:[%s273 + $0xc8] sm:$0xff]
      %v305 = vld [vmem:[%s273 + $0xd0] sm:$0xff]
      %v306 = vld [vmem:[%s273 + $0xd8] sm:$0xff]
      %v307 = vld [vmem:[%s273 + $0xe0] sm:$0xff]
      %v308 = vld [vmem:[%s273 + $0xe8] sm:$0xff]
      %v309 = vld [vmem:[%s273 + $0xf0] sm:$0xff]
      %v310 = vld [vmem:[%s273 + $0xf8] sm:$0xff]
      %v311 = vld [vmem:[%s1] sm:$0x1]
      %v313 = vlaneseq
      %v314 = vshrl.u32 %v313, 7
      %v315 = vsub.s32 0, %v314
      %v316 = vrot.slane %v311, %v315
      %v318 = vmul.f32 %v279, %v316
      %v319 = vmul.f32 %v280, %v316
      %v320 = vmul.f32 %v281, %v316
      %v321 = vmul.f32 %v282, %v316
      %v322 = vmul.f32 %v283, %v316
      %v323 = vmul.f32 %v284, %v316
      %v324 = vmul.f32 %v285, %v316
      %v325 = vmul.f32 %v286, %v316
      %v326 = vmul.f32 %v287, %v316
      %v327 = vmul.f32 %v288, %v316
      %v328 = vmul.f32 %v289, %v316
      %v329 = vmul.f32 %v290, %v316
      %v330 = vmul.f32 %v291, %v316
      %v331 = vmul.f32 %v292, %v316
      %v332 = vmul.f32 %v293, %v316
      %v333 = vmul.f32 %v294, %v316
      %v334 = vmul.f32 %v295, %v316
      %v335 = vmul.f32 %v296, %v316
      %v336 = vmul.f32 %v297, %v316
      %v337 = vmul.f32 %v298, %v316
      %v338 = vmul.f32 %v299, %v316
      %v339 = vmul.f32 %v300, %v316
      %v340 = vmul.f32 %v301, %v316
      %v341 = vmul.f32 %v302, %v316
      %v342 = vmul.f32 %v303, %v316
      %v343 = vmul.f32 %v304, %v316
      %v344 = vmul.f32 %v305, %v316
      %v345 = vmul.f32 %v306, %v316
      %v346 = vmul.f32 %v307, %v316
      %v347 = vmul.f32 %v308, %v316
      %v348 = vmul.f32 %v309, %v316
      %v349 = vmul.f32 %v310, %v316
      %v350 = vld [vmem:[%s2] sm:$0x1]
      %v352 = vlaneseq
      %v353 = vshrl.u32 %v352, 7
      %v354 = vsub.s32 0, %v353
      %v355 = vrot.slane %v350, %v354
      %v357 = vadd.f32 %v318, %v355
      %v358 = vadd.f32 %v319, %v355
      %v359 = vadd.f32 %v320, %v355
      %v360 = vadd.f32 %v321, %v355
      %v361 = vadd.f32 %v322, %v355
      %v362 = vadd.f32 %v323, %v355
      %v363 = vadd.f32 %v324, %v355
      %v364 = vadd.f32 %v325, %v355
      %v365 = vadd.f32 %v326, %v355
      %v366 = vadd.f32 %v327, %v355
      %v367 = vadd.f32 %v328, %v355
      %v368 = vadd.f32 %v329, %v355
      %v369 = vadd.f32 %v330, %v355
      %v370 = vadd.f32 %v331, %v355
      %v371 = vadd.f32 %v332, %v355
      %v372 = vadd.f32 %v333, %v355
      %v373 = vadd.f32 %v334, %v355
      %v374 = vadd.f32 %v335, %v355
      %v375 = vadd.f32 %v336, %v355
      %v376 = vadd.f32 %v337, %v355
      %v377 = vadd.f32 %v338, %v355
      %v378 = vadd.f32 %v339, %v355
      %v379 = vadd.f32 %v340, %v355
      %v380 = vadd.f32 %v341, %v355
      %v381 = vadd.f32 %v342, %v355
      %v382 = vadd.f32 %v343, %v355
      %v383 = vadd.f32 %v344, %v355
      %v384 = vadd.f32 %v345, %v355
      %v385 = vadd.f32 %v346, %v355
      %v386 = vadd.f32 %v347, %v355
      %v387 = vadd.f32 %v348, %v355
      %v388 = vadd.f32 %v349, %v355
      %v389 = vmax.f32 %v357, 0.0
      %v390 = vmax.f32 %v358, 0.0
      %v391 = vmax.f32 %v359, 0.0
      %v392 = vmax.f32 %v360, 0.0
      %v393 = vmax.f32 %v361, 0.0
      %v394 = vmax.f32 %v362, 0.0
      %v395 = vmax.f32 %v363, 0.0
      %v396 = vmax.f32 %v364, 0.0
      %v397 = vmax.f32 %v365, 0.0
      %v398 = vmax.f32 %v366, 0.0
      %v399 = vmax.f32 %v367, 0.0
      %v400 = vmax.f32 %v368, 0.0
      %v401 = vmax.f32 %v369, 0.0
      %v402 = vmax.f32 %v370, 0.0
      %v403 = vmax.f32 %v371, 0.0
      %v404 = vmax.f32 %v372, 0.0
      %v405 = vmax.f32 %v373, 0.0
      %v406 = vmax.f32 %v374, 0.0
      %v407 = vmax.f32 %v375, 0.0
      %v408 = vmax.f32 %v376, 0.0
      %v409 = vmax.f32 %v377, 0.0
      %v410 = vmax.f32 %v378, 0.0
      %v411 = vmax.f32 %v379, 0.0
      %v412 = vmax.f32 %v380, 0.0
      %v413 = vmax.f32 %v381, 0.0
      %v414 = vmax.f32 %v382, 0.0
      %v415 = vmax.f32 %v383, 0.0
      %v416 = vmax.f32 %v384, 0.0
      %v417 = vmax.f32 %v385, 0.0
      %v418 = vmax.f32 %v386, 0.0
      %v419 = vmax.f32 %v387, 0.0
      %v420 = vmax.f32 %v388, 0.0
      %vm421 = vcmask 64512
      %422 = vst.msk [vmem:[#allocation2] sm:$0xff] %vm421, 0.0
      %423 = vst.msk [vmem:[#allocation2 + $0x8] sm:$0xff] %vm421, 0.0
      %vm424 = vcmask 58368
      %425 = vst.msk [vmem:[#allocation2 + $0x10] sm:$0x3] %vm424, 0.0
      %s426 = scalar_lea.vmem [#allocation2], 408
      %427 = vst.msk [vmem:[%s426] sm:$0xff] %vm421, 0.0
      %428 = vst.msk [vmem:[%s426 + $0x8] sm:$0xff] %vm421, 0.0
      %429 = vst.msk [vmem:[%s426 + $0x10] sm:$0x3] %vm424, 0.0
      %vm430 = vcmask 57344
      %431 = vst.msk [vmem:[#allocation2] sm:$0x1] %vm430, 0.0
      %432 = vst.msk [vmem:[#allocation2 + $0x18] sm:$0x1] %vm430, 0.0
      %433 = vst.msk [vmem:[#allocation2 + $0x30] sm:$0x1] %vm430, 0.0
      %434 = vst.msk [vmem:[#allocation2 + $0x48] sm:$0x1] %vm430, 0.0
      %435 = vst.msk [vmem:[#allocation2 + $0x60] sm:$0x1] %vm430, 0.0
      %436 = vst.msk [vmem:[#allocation2 + $0x78] sm:$0x1] %vm430, 0.0
      %437 = vst.msk [vmem:[#allocation2 + $0x90] sm:$0x1] %vm430, 0.0
      %438 = vst.msk [vmem:[#allocation2 + $0xa8] sm:$0x1] %vm430, 0.0
      %439 = vst.msk [vmem:[#allocation2 + $0xc0] sm:$0x1] %vm430, 0.0
      %440 = vst.msk [vmem:[#allocation2 + $0xd8] sm:$0x1] %vm430, 0.0
      %441 = vst.msk [vmem:[#allocation2 + $0xf0] sm:$0x1] %vm430, 0.0
      %442 = vst.msk [vmem:[#allocation2 + $0x108] sm:$0x1] %vm430, 0.0
      %443 = vst.msk [vmem:[#allocation2 + $0x120] sm:$0x1] %vm430, 0.0
      %444 = vst.msk [vmem:[#allocation2 + $0x138] sm:$0x1] %vm430, 0.0
      %445 = vst.msk [vmem:[#allocation2 + $0x150] sm:$0x1] %vm430, 0.0
      %446 = vst.msk [vmem:[#allocation2 + $0x168] sm:$0x1] %vm430, 0.0
      %447 = vst.msk [vmem:[#allocation2 + $0x180] sm:$0x1] %vm430, 0.0
      %448 = vst.msk [vmem:[#allocation2 + $0x198] sm:$0x1] %vm430, 0.0
      %449 = vst.msk [vmem:[#allocation2 + $0x11] sm:$0x1] %vm430, 0.0
      %450 = vst.msk [vmem:[#allocation2 + $0x29] sm:$0x1] %vm430, 0.0
      %451 = vst.msk [vmem:[#allocation2 + $0x41] sm:$0x1] %vm430, 0.0
      %452 = vst.msk [vmem:[#allocation2 + $0x59] sm:$0x1] %vm430, 0.0
      %453 = vst.msk [vmem:[#allocation2 + $0x71] sm:$0x1] %vm430, 0.0
      %454 = vst.msk [vmem:[#allocation2 + $0x89] sm:$0x1] %vm430, 0.0
      %455 = vst.msk [vmem:[#allocation2 + $0xa1] sm:$0x1] %vm430, 0.0
      %456 = vst.msk [vmem:[#allocation2 + $0xb9] sm:$0x1] %vm430, 0.0
      %457 = vst.msk [vmem:[#allocation2 + $0xd1] sm:$0x1] %vm430, 0.0
      %458 = vst.msk [vmem:[#allocation2 + $0xe9] sm:$0x1] %vm430, 0.0
      %459 = vst.msk [vmem:[#allocation2 + $0x101] sm:$0x1] %vm430, 0.0
      %460 = vst.msk [vmem:[#allocation2 + $0x119] sm:$0x1] %vm430, 0.0
      %461 = vst.msk [vmem:[#allocation2 + $0x131] sm:$0x1] %vm430, 0.0
      %462 = vst.msk [vmem:[#allocation2 + $0x149] sm:$0x1] %vm430, 0.0
      %463 = vst.msk [vmem:[#allocation2 + $0x161] sm:$0x1] %vm430, 0.0
      %464 = vst.msk [vmem:[#allocation2 + $0x179] sm:$0x1] %vm430, 0.0
      %465 = vst.msk [vmem:[#allocation2 + $0x191] sm:$0x1] %vm430, 0.0
      %466 = vst.msk [vmem:[#allocation2 + $0x1a9] sm:$0x1] %vm430, 0.0
      %s467 = scalar_lea.vmem [#allocation2], 24
      %468 = vst.msk [vmem:[%s467 + $0x1] sm:$0xff] %vm421, %v389
      %469 = vst.msk [vmem:[%s467 + $0x9] sm:$0xff] %vm421, %v390
      %470 = vst.msk [vmem:[%s467 + $0x19] sm:$0xff] %vm421, %v391
      %471 = vst.msk [vmem:[%s467 + $0x21] sm:$0xff] %vm421, %v392
      %472 = vst.msk [vmem:[%s467 + $0x31] sm:$0xff] %vm421, %v393
      %473 = vst.msk [vmem:[%s467 + $0x39] sm:$0xff] %vm421, %v394
      %474 = vst.msk [vmem:[%s467 + $0x49] sm:$0xff] %vm421, %v395
      %475 = vst.msk [vmem:[%s467 + $0x51] sm:$0xff] %vm421, %v396
      %476 = vst.msk [vmem:[%s467 + $0x61] sm:$0xff] %vm421, %v397
      %477 = vst.msk [vmem:[%s467 + $0x69] sm:$0xff] %vm421, %v398
      %478 = vst.msk [vmem:[%s467 + $0x79] sm:$0xff] %vm421, %v399
      %479 = vst.msk [vmem:[%s467 + $0x81] sm:$0xff] %vm421, %v400
      %480 = vst.msk [vmem:[%s467 + $0x91] sm:$0xff] %vm421, %v401
      %481 = vst.msk [vmem:[%s467 + $0x99] sm:$0xff] %vm421, %v402
      %482 = vst.msk [vmem:[%s467 + $0xa9] sm:$0xff] %vm421, %v403
      %483 = vst.msk [vmem:[%s467 + $0xb1] sm:$0xff] %vm421, %v404
      %484 = vst.msk [vmem:[%s467 + $0xc1] sm:$0xff] %vm421, %v405
      %485 = vst.msk [vmem:[%s467 + $0xc9] sm:$0xff] %vm421, %v406
      %486 = vst.msk [vmem:[%s467 + $0xd9] sm:$0xff] %vm421, %v407
      %487 = vst.msk [vmem:[%s467 + $0xe1] sm:$0xff] %vm421, %v408
      %488 = vst.msk [vmem:[%s467 + $0xf1] sm:$0xff] %vm421, %v409
      %489 = vst.msk [vmem:[%s467 + $0xf9] sm:$0xff] %vm421, %v410
      %490 = vst.msk [vmem:[%s467 + $0x109] sm:$0xff] %vm421, %v411
      %491 = vst.msk [vmem:[%s467 + $0x111] sm:$0xff] %vm421, %v412
      %492 = vst.msk [vmem:[%s467 + $0x121] sm:$0xff] %vm421, %v413
      %493 = vst.msk [vmem:[%s467 + $0x129] sm:$0xff] %vm421, %v414
      %494 = vst.msk [vmem:[%s467 + $0x139] sm:$0xff] %vm421, %v415
      %495 = vst.msk [vmem:[%s467 + $0x141] sm:$0xff] %vm421, %v416
      %496 = vst.msk [vmem:[%s467 + $0x151] sm:$0xff] %vm421, %v417
      %497 = vst.msk [vmem:[%s467 + $0x159] sm:$0xff] %vm421, %v418
      %498 = vst.msk [vmem:[%s467 + $0x169] sm:$0xff] %vm421, %v419
      %499 = vst.msk [vmem:[%s467 + $0x171] sm:$0xff] %vm421, %v420
      %v500 = vld [vmem:[#allocation2] sm:$0xff]
      %v501 = vld [vmem:[#allocation2 + $0x8] sm:$0xff]
      %v502 = vld [vmem:[#allocation2 + $0x18] sm:$0xff]
      %v503 = vld [vmem:[#allocation2 + $0x20] sm:$0xff]
      %v504 = vld [vmem:[#allocation2 + $0x30] sm:$0xff]
      %v505 = vld [vmem:[#allocation2 + $0x38] sm:$0xff]
      %v506 = vld [vmem:[#allocation2 + $0x48] sm:$0xff]
      %v507 = vld [vmem:[#allocation2 + $0x50] sm:$0xff]
      %v508 = vld [vmem:[#allocation2 + $0x60] sm:$0xff]
      %v509 = vld [vmem:[#allocation2 + $0x68] sm:$0xff]
      %v510 = vld [vmem:[#allocation2 + $0x78] sm:$0xff]
      %v511 = vld [vmem:[#allocation2 + $0x80] sm:$0xff]
      %v512 = vld [vmem:[#allocation2 + $0x90] sm:$0xff]
      %v513 = vld [vmem:[#allocation2 + $0x98] sm:$0xff]
      %v514 = vld [vmem:[#allocation2 + $0xa8] sm:$0xff]
      %v515 = vld [vmem:[#allocation2 + $0xb0] sm:$0xff]
      %v516 = vld [vmem:[#allocation2 + $0xc0] sm:$0xff]
      %v517 = vld [vmem:[#allocation2 + $0xc8] sm:$0xff]
      %v518 = vld [vmem:[#allocation2 + $0xd8] sm:$0xff]
      %v519 = vld [vmem:[#allocation2 + $0xe0] sm:$0xff]
      %v520 = vld [vmem:[#allocation2 + $0xf0] sm:$0xff]
      %v521 = vld [vmem:[#allocation2 + $0xf8] sm:$0xff]
      %v522 = vld [vmem:[#allocation2 + $0x108] sm:$0xff]
      %v523 = vld [vmem:[#allocation2 + $0x110] sm:$0xff]
      %v524 = vld [vmem:[#allocation2 + $0x120] sm:$0xff]
      %v525 = vld [vmem:[#allocation2 + $0x128] sm:$0xff]
      %v526 = vld [vmem:[#allocation2 + $0x138] sm:$0xff]
      %v527 = vld [vmem:[#allocation2 + $0x140] sm:$0xff]
      %v528 = vld [vmem:[#allocation2 + $0x150] sm:$0xff]
      %v529 = vld [vmem:[#allocation2 + $0x158] sm:$0xff]
      %v530 = vld [vmem:[#allocation2 + $0x168] sm:$0xff]
      %v531 = vld [vmem:[#allocation2 + $0x170] sm:$0xff]
      %v532 = vld [vmem:[%s3] sm:$0xff]
      %v533 = vld [vmem:[#allocation2 + $0x1] sm:$0xff]
      %v534 = vld [vmem:[#allocation2 + $0x9] sm:$0xff]
      %v535 = vld [vmem:[#allocation2 + $0x19] sm:$0xff]
      %v536 = vld [vmem:[#allocation2 + $0x21] sm:$0xff]
      %v537 = vld [vmem:[#allocation2 + $0x31] sm:$0xff]
      %v538 = vld [vmem:[#allocation2 + $0x39] sm:$0xff]
      %v539 = vld [vmem:[#allocation2 + $0x49] sm:$0xff]
      %v540 = vld [vmem:[#allocation2 + $0x51] sm:$0xff]
      %v541 = vld [vmem:[#allocation2 + $0x61] sm:$0xff]
      %v542 = vld [vmem:[#allocation2 + $0x69] sm:$0xff]
      %v543 = vld [vmem:[#allocation2 + $0x79] sm:$0xff]
      %v544 = vld [vmem:[#allocation2 + $0x81] sm:$0xff]
      %v545 = vld [vmem:[#allocation2 + $0x91] sm:$0xff]
      %v546 = vld [vmem:[#allocation2 + $0x99] sm:$0xff]
      %v547 = vld [vmem:[#allocation2 + $0xa9] sm:$0xff]
      %v548 = vld [vmem:[#allocation2 + $0xb1] sm:$0xff]
      %v549 = vld [vmem:[#allocation2 + $0xc1] sm:$0xff]
      %v550 = vld [vmem:[#allocation2 + $0xc9] sm:$0xff]
      %v551 = vld [vmem:[#allocation2 + $0xd9] sm:$0xff]
      %v552 = vld [vmem:[#allocation2 + $0xe1] sm:$0xff]
      %v553 = vld [vmem:[#allocation2 + $0xf1] sm:$0xff]
      %v554 = vld [vmem:[#allocation2 + $0xf9] sm:$0xff]
      %v555 = vld [vmem:[#allocation2 + $0x109] sm:$0xff]
      %v556 = vld [vmem:[#allocation2 + $0x111] sm:$0xff]
      %v557 = vld [vmem:[#allocation2 + $0x121] sm:$0xff]
      %v558 = vld [vmem:[#allocation2 + $0x129] sm:$0xff]
      %v559 = vld [vmem:[#allocation2 + $0x139] sm:$0xff]
      %v560 = vld [vmem:[#allocation2 + $0x141] sm:$0xff]
      %v561 = vld [vmem:[#allocation2 + $0x151] sm:$0xff]
      %v562 = vld [vmem:[#allocation2 + $0x159] sm:$0xff]
      %v563 = vld [vmem:[#allocation2 + $0x169] sm:$0xff]
      %v564 = vld [vmem:[#allocation2 + $0x171] sm:$0xff]
      %s565 = scalar_lea.vmem %s3, 8
      %v566 = vld [vmem:[%s565] sm:$0xff]
      %v568 = vsel %vm421, %v533, 0
      %v571 = vsel %vm421, %v534, 0
      %v574 = vsel %vm421, %v535, 0
      %v577 = vsel %vm421, %v536, 0
      %v580 = vsel %vm421, %v537, 0
      %v583 = vsel %vm421, %v538, 0
      %v586 = vsel %vm421, %v539, 0
      %v589 = vsel %vm421, %v540, 0
      %v592 = vsel %vm421, %v541, 0
      %v595 = vsel %vm421, %v542, 0
      %v598 = vsel %vm421, %v543, 0
      %v601 = vsel %vm421, %v544, 0
      %v604 = vsel %vm421, %v545, 0
      %v607 = vsel %vm421, %v546, 0
      %v610 = vsel %vm421, %v547, 0
      %v613 = vsel %vm421, %v548, 0
      %v616 = vsel %vm421, %v549, 0
      %v619 = vsel %vm421, %v550, 0
      %v622 = vsel %vm421, %v551, 0
      %v625 = vsel %vm421, %v552, 0
      %v628 = vsel %vm421, %v553, 0
      %v631 = vsel %vm421, %v554, 0
      %v634 = vsel %vm421, %v555, 0
      %v637 = vsel %vm421, %v556, 0
      %v640 = vsel %vm421, %v557, 0
      %v643 = vsel %vm421, %v558, 0
      %v646 = vsel %vm421, %v559, 0
      %v649 = vsel %vm421, %v560, 0
      %v652 = vsel %vm421, %v561, 0
      %v655 = vsel %vm421, %v562, 0
      %v658 = vsel %vm421, %v563, 0
      %v661 = vsel %vm421, %v564, 0
      %663 = vmatprep.subr.mxu0 0.0
      %664 = vmatpush1.msra.mxu0 %v566
      %665 = vmatprep.subr.mxu0 0.0
      %666 = vmatpush1.msra.mxu0 0.0
      %667 = vmatprep.subr.mxu0 0.0
      %668 = vmatpush1.msra.mxu0 0.0
      %669 = vmatprep.subr.mxu0 0.0
      %670 = vmatpush1.msra.mxu0 0.0
      %671 = vmatprep.subr.mxu0 0.0
      %672 = vmatpush1.msra.mxu0 0.0
      %673 = vmatprep.subr.mxu0 0.0
      %674 = vmatpush1.msra.mxu0 0.0
      %675 = vmatprep.subr.mxu0 0.0
      %676 = vmatpush1.msra.mxu0 0.0
      %677 = vmatprep.subr.mxu0 0.0
      %678 = vmatpush1.msra.mxu0 0.0
      %679 = vmatprep.subr.mxu0 0.0
      %680 = vmatpush1.msra.mxu0 0.0
      %681 = vmatprep.subr.mxu0 0.0
      %682 = vmatpush1.msra.mxu0 0.0
      %683 = vmatprep.subr.mxu0 0.0
      %684 = vmatpush1.msra.mxu0 0.0
      %685 = vmatprep.subr.mxu0 0.0
      %686 = vmatpush1.msra.mxu0 0.0
      %687 = vmatprep.subr.mxu0 0.0
      %688 = vmatpush1.msra.mxu0 0.0
      %689 = vmatprep.subr.mxu0 0.0
      %690 = vmatpush1.msra.mxu0 0.0
      %691 = vmatprep.subr.mxu0 0.0
      %692 = vmatpush1.msra.mxu0 0.0
      %693 = vmatprep.subr.mxu0 0.0
      %694 = vmatpush1.msra.mxu0 0.0
      %695 = vmatprep.subr.mxu0 0.0
      %696 = vmatpush1.msra.mxu0 0.0
      %697 = vmatprep.subr.mxu0 0.0
      %698 = vmatpush1.msra.mxu0 0.0
      %699 = vmatprep.subr.mxu0 0.0
      %700 = vmatpush1.msra.mxu0 0.0
      %701 = vmatprep.subr.mxu0 0.0
      %702 = vmatpush1.msra.mxu0 0.0
      %703 = vmatprep.subr.mxu0 0.0
      %704 = vmatpush1.msra.mxu0 0.0
      %705 = vmatprep.subr.mxu0 0.0
      %706 = vmatpush1.msra.mxu0 0.0
      %707 = vmatprep.subr.mxu0 0.0
      %708 = vmatpush1.msra.mxu0 0.0
      %709 = vmatprep.subr.mxu0 0.0
      %710 = vmatpush1.msra.mxu0 0.0
      %711 = vmatprep.subr.mxu0 0.0
      %712 = vmatpush1.msra.mxu0 0.0
      %713 = vmatprep.subr.mxu0 0.0
      %714 = vmatpush1.msra.mxu0 0.0
      %715 = vmatprep.subr.mxu0 0.0
      %716 = vmatpush1.msra.mxu0 0.0
      %717 = vmatprep.subr.mxu0 0.0
      %718 = vmatpush1.msra.mxu0 0.0
      %719 = vmatprep.subr.mxu0 0.0
      %720 = vmatpush1.msra.mxu0 0.0
      %721 = vmatprep.subr.mxu0 0.0
      %722 = vmatpush1.msra.mxu0 0.0
      %723 = vmatprep.subr.mxu0 0.0
      %724 = vmatpush1.msra.mxu0 0.0
      %725 = vmatprep.subr.mxu0 0.0
      %726 = vmatpush1.msra.mxu0 0.0
      %727 = vmatprep.mubr.f32.mxu0 0.0
      %728 = vmatmul.mubr.f32.gmra.mrb[0].mxu0 %v568
      %v729 = vpop.f32.mrb[0].mxu0
      %v730 = vadd.f32 0.0, %v729
      %v731 = vpop.f32.mrb[0].mxu0
      %732 = vmatprep.mubr.f32.mxu0 0.0
      %733 = vmatmul.mubr.f32.gmra.mrb[0].mxu0 %v571
      %v734 = vpop.f32.mrb[0].mxu0
      %v735 = vadd.f32 0.0, %v734
      %v736 = vpop.f32.mrb[0].mxu0
      %737 = vmatprep.mubr.f32.mxu0 0.0
      %738 = vmatmul.mubr.f32.gmra.mrb[0].mxu0 %v574
      %v739 = vpop.f32.mrb[0].mxu0
      %v740 = vadd.f32 0.0, %v739
      %v741 = vpop.f32.mrb[0].mxu0
      %742 = vmatprep.mubr.f32.mxu0 0.0
      %743 = vmatmul.mubr.f32.gmra.mrb[0].mxu0 %v577
      %v744 = vpop.f32.mrb[0].mxu0
      %v745 = vadd.f32 0.0, %v744
      %v746 = vpop.f32.mrb[0].mxu0
      %747 = vmatprep.mubr.f32.mxu0 0.0
      %748 = vmatmul.mubr.f32.gmra.mrb[0].mxu0 %v580
      %v749 = vpop.f32.mrb[0].mxu0
      %v750 = vadd.f32 0.0, %v749
      %v751 = vpop.f32.mrb[0].mxu0
      %752 = vmatprep.mubr.f32.mxu0 0.0
      %753 = vmatmul.mubr.f32.gmra.mrb[0].mxu0 %v583
      %v754 = vpop.f32.mrb[0].mxu0
      %v755 = vadd.f32 0.0, %v754
      %v756 = vpop.f32.mrb[0].mxu0
      %757 = vmatprep.mubr.f32.mxu0 0.0
      %758 = vmatmul.mubr.f32.gmra.mrb[0].mxu0 %v586
      %v759 = vpop.f32.mrb[0].mxu0
      %v760 = vadd.f32 0.0, %v759
      %v761 = vpop.f32.mrb[0].mxu0
      %762 = vmatprep.mubr.f32.mxu0 0.0
      %763 = vmatmul.mubr.f32.gmra.mrb[0].mxu0 %v589
      %v764 = vpop.f32.mrb[0].mxu0
      %v765 = vadd.f32 0.0, %v764
      %v766 = vpop.f32.mrb[0].mxu0
      %767 = vmatprep.mubr.f32.mxu0 0.0
      %768 = vmatmul.mubr.f32.gmra.mrb[0].mxu0 %v592
      %v769 = vpop.f32.mrb[0].mxu0
      %v770 = vadd.f32 0.0, %v769
      %v771 = vpop.f32.mrb[0].mxu0
      %772 = vmatprep.mubr.f32.mxu0 0.0
      %773 = vmatmul.mubr.f32.gmra.mrb[0].mxu0 %v595
      %v774 = vpop.f32.mrb[0].mxu0
      %v775 = vadd.f32 0.0, %v774
      %v776 = vpop.f32.mrb[0].mxu0
      %777 = vmatprep.mubr.f32.mxu0 0.0
      %778 = vmatmul.mubr.f32.gmra.mrb[0].mxu0 %v598
      %v779 = vpop.f32.mrb[0].mxu0
      %v780 = vadd.f32 0.0, %v779
      %v781 = vpop.f32.mrb[0].mxu0
      %782 = vmatprep.mubr.f32.mxu0 0.0
      %783 = vmatmul.mubr.f32.gmra.mrb[0].mxu0 %v601
      %v784 = vpop.f32.mrb[0].mxu0
      %v785 = vadd.f32 0.0, %v784
      %v786 = vpop.f32.mrb[0].mxu0
      %787 = vmatprep.mubr.f32.mxu0 0.0
      %788 = vmatmul.mubr.f32.gmra.mrb[0].mxu0 %v604
      %v789 = vpop.f32.mrb[0].mxu0
      %v790 = vadd.f32 0.0, %v789
      %v791 = vpop.f32.mrb[0].mxu0
      %792 = vmatprep.mubr.f32.mxu0 0.0
      %793 = vmatmul.mubr.f32.gmra.mrb[0].mxu0 %v607
      %v794 = vpop.f32.mrb[0].mxu0
      %v795 = vadd.f32 0.0, %v794
      %v796 = vpop.f32.mrb[0].mxu0
      %797 = vmatprep.mubr.f32.mxu0 0.0
      %798 = vmatmul.mubr.f32.gmra.mrb[0].mxu0 %v610
      %v799 = vpop.f32.mrb[0].mxu0
      %v800 = vadd.f32 0.0, %v799
      %v801 = vpop.f32.mrb[0].mxu0
      %802 = vmatprep.mubr.f32.mxu0 0.0
      %803 = vmatmul.mubr.f32.gmra.mrb[0].mxu0 %v613
      %v804 = vpop.f32.mrb[0].mxu0
      %v805 = vadd.f32 0.0, %v804
      %v806 = vpop.f32.mrb[0].mxu0
      %807 = vmatprep.mubr.f32.mxu0 0.0
      %808 = vmatmul.mubr.f32.gmra.mrb[0].mxu0 %v616
      %v809 = vpop.f32.mrb[0].mxu0
      %v810 = vadd.f32 0.0, %v809
      %v811 = vpop.f32.mrb[0].mxu0
      %812 = vmatprep.mubr.f32.mxu0 0.0
      %813 = vmatmul.mubr.f32.gmra.mrb[0].mxu0 %v619
      %v814 = vpop.f32.mrb[0].mxu0
      %v815 = vadd.f32 0.0, %v814
      %v816 = vpop.f32.mrb[0].mxu0
      %817 = vmatprep.mubr.f32.mxu0 0.0
      %818 = vmatmul.mubr.f32.gmra.mrb[0].mxu0 %v622
      %v819 = vpop.f32.mrb[0].mxu0
      %v820 = vadd.f32 0.0, %v819
      %v821 = vpop.f32.mrb[0].mxu0
      %822 = vmatprep.mubr.f32.mxu0 0.0
      %823 = vmatmul.mubr.f32.gmra.mrb[0].mxu0 %v625
      %v824 = vpop.f32.mrb[0].mxu0
      %v825 = vadd.f32 0.0, %v824
      %v826 = vpop.f32.mrb[0].mxu0
      %827 = vmatprep.mubr.f32.mxu0 0.0
      %828 = vmatmul.mubr.f32.gmra.mrb[0].mxu0 %v628
      %v829 = vpop.f32.mrb[0].mxu0
      %v830 = vadd.f32 0.0, %v829
      %v831 = vpop.f32.mrb[0].mxu0
      %832 = vmatprep.mubr.f32.mxu0 0.0
      %833 = vmatmul.mubr.f32.gmra.mrb[0].mxu0 %v631
      %v834 = vpop.f32.mrb[0].mxu0
      %v835 = vadd.f32 0.0, %v834
      %v836 = vpop.f32.mrb[0].mxu0
      %837 = vmatprep.mubr.f32.mxu0 0.0
      %838 = vmatmul.mubr.f32.gmra.mrb[0].mxu0 %v634
      %v839 = vpop.f32.mrb[0].mxu0
      %v840 = vadd.f32 0.0, %v839
      %v841 = vpop.f32.mrb[0].mxu0
      %842 = vmatprep.mubr.f32.mxu0 0.0
      %843 = vmatmul.mubr.f32.gmra.mrb[0].mxu0 %v637
      %v844 = vpop.f32.mrb[0].mxu0
      %v845 = vadd.f32 0.0, %v844
      %v846 = vpop.f32.mrb[0].mxu0
      %847 = vmatprep.mubr.f32.mxu0 0.0
      %848 = vmatmul.mubr.f32.gmra.mrb[0].mxu0 %v640
      %v849 = vpop.f32.mrb[0].mxu0
      %v850 = vadd.f32 0.0, %v849
      %v851 = vpop.f32.mrb[0].mxu0
      %852 = vmatprep.mubr.f32.mxu0 0.0
      %853 = vmatmul.mubr.f32.gmra.mrb[0].mxu0 %v643
      %v854 = vpop.f32.mrb[0].mxu0
      %v855 = vadd.f32 0.0, %v854
      %v856 = vpop.f32.mrb[0].mxu0
      %857 = vmatprep.mubr.f32.mxu0 0.0
      %858 = vmatmul.mubr.f32.gmra.mrb[0].mxu0 %v646
      %v859 = vpop.f32.mrb[0].mxu0
      %v860 = vadd.f32 0.0, %v859
      %v861 = vpop.f32.mrb[0].mxu0
      %862 = vmatprep.mubr.f32.mxu0 0.0
      %863 = vmatmul.mubr.f32.gmra.mrb[0].mxu0 %v649
      %v864 = vpop.f32.mrb[0].mxu0
      %v865 = vadd.f32 0.0, %v864
      %v866 = vpop.f32.mrb[0].mxu0
      %867 = vmatprep.mubr.f32.mxu0 0.0
      %868 = vmatmul.mubr.f32.gmra.mrb[0].mxu0 %v652
      %v869 = vpop.f32.mrb[0].mxu0
      %v870 = vadd.f32 0.0, %v869
      %v871 = vpop.f32.mrb[0].mxu0
      %872 = vmatprep.mubr.f32.mxu0 0.0
      %873 = vmatmul.mubr.f32.gmra.mrb[0].mxu0 %v655
      %v874 = vpop.f32.mrb[0].mxu0
      %v875 = vadd.f32 0.0, %v874
      %v876 = vpop.f32.mrb[0].mxu0
      %877 = vmatprep.mubr.f32.mxu0 0.0
      %878 = vmatmul.mubr.f32.gmra.mrb[0].mxu0 %v658
      %v879 = vpop.f32.mrb[0].mxu0
      %v880 = vadd.f32 0.0, %v879
      %v881 = vpop.f32.mrb[0].mxu0
      %882 = vmatprep.mubr.f32.mxu0 0.0
      %883 = vmatmul.mubr.f32.gmra.mrb[0].mxu0 %v661
      %v884 = vpop.f32.mrb[0].mxu0
      %v885 = vadd.f32 0.0, %v884
      %v886 = vpop.f32.mrb[0].mxu0
      %887 = vdwg.mxu0
      %v889 = vsel %vm421, %v500, 0
      %v892 = vsel %vm421, %v501, 0
      %v895 = vsel %vm421, %v502, 0
      %v898 = vsel %vm421, %v503, 0
      %v901 = vsel %vm421, %v504, 0
      %v904 = vsel %vm421, %v505, 0
      %v907 = vsel %vm421, %v506, 0
      %v910 = vsel %vm421, %v507, 0
      %v913 = vsel %vm421, %v508, 0
      %v916 = vsel %vm421, %v509, 0
      %v919 = vsel %vm421, %v510, 0
      %v922 = vsel %vm421, %v511, 0
      %v925 = vsel %vm421, %v512, 0
      %v928 = vsel %vm421, %v513, 0
      %v931 = vsel %vm421, %v514, 0
      %v934 = vsel %vm421, %v515, 0
      %v937 = vsel %vm421, %v516, 0
      %v940 = vsel %vm421, %v517, 0
      %v943 = vsel %vm421, %v518, 0
      %v946 = vsel %vm421, %v519, 0
      %v949 = vsel %vm421, %v520, 0
      %v952 = vsel %vm421, %v521, 0
      %v955 = vsel %vm421, %v522, 0
      %v958 = vsel %vm421, %v523, 0
      %v961 = vsel %vm421, %v524, 0
      %v964 = vsel %vm421, %v525, 0
      %v967 = vsel %vm421, %v526, 0
      %v970 = vsel %vm421, %v527, 0
      %v973 = vsel %vm421, %v528, 0
      %v976 = vsel %vm421, %v529, 0
      %v979 = vsel %vm421, %v530, 0
      %v982 = vsel %vm421, %v531, 0
      %984 = vmatprep.subr.mxu0 0.0
      %985 = vmatpush1.msra.mxu0 %v532
      %986 = vmatprep.subr.mxu0 0.0
      %987 = vmatpush1.msra.mxu0 0.0
      %988 = vmatprep.subr.mxu0 0.0
      %989 = vmatpush1.msra.mxu0 0.0
      %990 = vmatprep.subr.mxu0 0.0
      %991 = vmatpush1.msra.mxu0 0.0
      %992 = vmatprep.subr.mxu0 0.0
      %993 = vmatpush1.msra.mxu0 0.0
      %994 = vmatprep.subr.mxu0 0.0
      %995 = vmatpush1.msra.mxu0 0.0
      %996 = vmatprep.subr.mxu0 0.0
      %997 = vmatpush1.msra.mxu0 0.0
      %998 = vmatprep.subr.mxu0 0.0
      %999 = vmatpush1.msra.mxu0 0.0
      %1000 = vmatprep.subr.mxu0 0.0
      %1001 = vmatpush1.msra.mxu0 0.0
      %1002 = vmatprep.subr.mxu0 0.0
      %1003 = vmatpush1.msra.mxu0 0.0
      %1004 = vmatprep.subr.mxu0 0.0
      %1005 = vmatpush1.msra.mxu0 0.0
      %1006 = vmatprep.subr.mxu0 0.0
      %1007 = vmatpush1.msra.mxu0 0.0
      %1008 = vmatprep.subr.mxu0 0.0
      %1009 = vmatpush1.msra.mxu0 0.0
      %1010 = vmatprep.subr.mxu0 0.0
      %1011 = vmatpush1.msra.mxu0 0.0
      %1012 = vmatprep.subr.mxu0 0.0
      %1013 = vmatpush1.msra.mxu0 0.0
      %1014 = vmatprep.subr.mxu0 0.0
      %1015 = vmatpush1.msra.mxu0 0.0
      %1016 = vmatprep.subr.mxu0 0.0
      %1017 = vmatpush1.msra.mxu0 0.0
      %1018 = vmatprep.subr.mxu0 0.0
      %1019 = vmatpush1.msra.mxu0 0.0
      %1020 = vmatprep.subr.mxu0 0.0
      %1021 = vmatpush1.msra.mxu0 0.0
      %1022 = vmatprep.subr.mxu0 0.0
      %1023 = vmatpush1.msra.mxu0 0.0
      %1024 = vmatprep.subr.mxu0 0.0
      %1025 = vmatpush1.msra.mxu0 0.0
      %1026 = vmatprep.subr.mxu0 0.0
      %1027 = vmatpush1.msra.mxu0 0.0
      %1028 = vmatprep.subr.mxu0 0.0
      %1029 = vmatpush1.msra.mxu0 0.0
      %1030 = vmatprep.subr.mxu0 0.0
      %1031 = vmatpush1.msra.mxu0 0.0
      %1032 = vmatprep.subr.mxu0 0.0
      %1033 = vmatpush1.msra.mxu0 0.0
      %1034 = vmatprep.subr.mxu0 0.0
      %1035 = vmatpush1.msra.mxu0 0.0
      %1036 = vmatprep.subr.mxu0 0.0
      %1037 = vmatpush1.msra.mxu0 0.0
      %1038 = vmatprep.subr.mxu0 0.0
      %1039 = vmatpush1.msra.mxu0 0.0
      %1040 = vmatprep.subr.mxu0 0.0
      %1041 = vmatpush1.msra.mxu0 0.0
      %1042 = vmatprep.subr.mxu0 0.0
      %1043 = vmatpush1.msra.mxu0 0.0
      %1044 = vmatprep.subr.mxu0 0.0
      %1045 = vmatpush1.msra.mxu0 0.0
      %1046 = vmatprep.subr.mxu0 0.0
      %1047 = vmatpush1.msra.mxu0 0.0
      %1048 = vmatprep.mubr.f32.mxu0 0.0
      %1049 = vmatmul.mubr.f32.gmra.mrb[0].mxu0 %v889
      %v1050 = vpop.f32.mrb[0].mxu0
      %v1051 = vadd.f32 %v730, %v1050
      %v1052 = vpop.f32.mrb[0].mxu0
      %1053 = vmatprep.mubr.f32.mxu0 0.0
      %1054 = vmatmul.mubr.f32.gmra.mrb[0].mxu0 %v892
      %v1055 = vpop.f32.mrb[0].mxu0
      %v1056 = vadd.f32 %v735, %v1055
      %v1057 = vpop.f32.mrb[0].mxu0
      %1058 = vmatprep.mubr.f32.mxu0 0.0
      %1059 = vmatmul.mubr.f32.gmra.mrb[0].mxu0 %v895
      %v1060 = vpop.f32.mrb[0].mxu0
      %v1061 = vadd.f32 %v740, %v1060
      %v1062 = vpop.f32.mrb[0].mxu0
      %1063 = vmatprep.mubr.f32.mxu0 0.0
      %1064 = vmatmul.mubr.f32.gmra.mrb[0].mxu0 %v898
      %v1065 = vpop.f32.mrb[0].mxu0
      %v1066 = vadd.f32 %v745, %v1065
      %v1067 = vpop.f32.mrb[0].mxu0
      %1068 = vmatprep.mubr.f32.mxu0 0.0
      %1069 = vmatmul.mubr.f32.gmra.mrb[0].mxu0 %v901
      %v1070 = vpop.f32.mrb[0].mxu0
      %v1071 = vadd.f32 %v750, %v1070
      %v1072 = vpop.f32.mrb[0].mxu0
      %1073 = vmatprep.mubr.f32.mxu0 0.0
      %1074 = vmatmul.mubr.f32.gmra.mrb[0].mxu0 %v904
      %v1075 = vpop.f32.mrb[0].mxu0
      %v1076 = vadd.f32 %v755, %v1075
      %v1077 = vpop.f32.mrb[0].mxu0
      %1078 = vmatprep.mubr.f32.mxu0 0.0
      %1079 = vmatmul.mubr.f32.gmra.mrb[0].mxu0 %v907
      %v1080 = vpop.f32.mrb[0].mxu0
      %v1081 = vadd.f32 %v760, %v1080
      %v1082 = vpop.f32.mrb[0].mxu0
      %1083 = vmatprep.mubr.f32.mxu0 0.0
      %1084 = vmatmul.mubr.f32.gmra.mrb[0].mxu0 %v910
      %v1085 = vpop.f32.mrb[0].mxu0
      %v1086 = vadd.f32 %v765, %v1085
      %v1087 = vpop.f32.mrb[0].mxu0
      %1088 = vmatprep.mubr.f32.mxu0 0.0
      %1089 = vmatmul.mubr.f32.gmra.mrb[0].mxu0 %v913
      %v1090 = vpop.f32.mrb[0].mxu0
      %v1091 = vadd.f32 %v770, %v1090
      %v1092 = vpop.f32.mrb[0].mxu0
      %1093 = vmatprep.mubr.f32.mxu0 0.0
      %1094 = vmatmul.mubr.f32.gmra.mrb[0].mxu0 %v916
      %v1095 = vpop.f32.mrb[0].mxu0
      %v1096 = vadd.f32 %v775, %v1095
      %v1097 = vpop.f32.mrb[0].mxu0
      %1098 = vmatprep.mubr.f32.mxu0 0.0
      %1099 = vmatmul.mubr.f32.gmra.mrb[0].mxu0 %v919
      %v1100 = vpop.f32.mrb[0].mxu0
      %v1101 = vadd.f32 %v780, %v1100
      %v1102 = vpop.f32.mrb[0].mxu0
      %1103 = vmatprep.mubr.f32.mxu0 0.0
      %1104 = vmatmul.mubr.f32.gmra.mrb[0].mxu0 %v922
      %v1105 = vpop.f32.mrb[0].mxu0
      %v1106 = vadd.f32 %v785, %v1105
      %v1107 = vpop.f32.mrb[0].mxu0
      %1108 = vmatprep.mubr.f32.mxu0 0.0
      %1109 = vmatmul.mubr.f32.gmra.mrb[0].mxu0 %v925
      %v1110 = vpop.f32.mrb[0].mxu0
      %v1111 = vadd.f32 %v790, %v1110
      %v1112 = vpop.f32.mrb[0].mxu0
      %1113 = vmatprep.mubr.f32.mxu0 0.0
      %1114 = vmatmul.mubr.f32.gmra.mrb[0].mxu0 %v928
      %v1115 = vpop.f32.mrb[0].mxu0
      %v1116 = vadd.f32 %v795, %v1115
      %v1117 = vpop.f32.mrb[0].mxu0
      %1118 = vmatprep.mubr.f32.mxu0 0.0
      %1119 = vmatmul.mubr.f32.gmra.mrb[0].mxu0 %v931
      %v1120 = vpop.f32.mrb[0].mxu0
      %v1121 = vadd.f32 %v800, %v1120
      %v1122 = vpop.f32.mrb[0].mxu0
      %1123 = vmatprep.mubr.f32.mxu0 0.0
      %1124 = vmatmul.mubr.f32.gmra.mrb[0].mxu0 %v934
      %v1125 = vpop.f32.mrb[0].mxu0
      %v1126 = vadd.f32 %v805, %v1125
      %v1127 = vpop.f32.mrb[0].mxu0
      %1128 = vmatprep.mubr.f32.mxu0 0.0
      %1129 = vmatmul.mubr.f32.gmra.mrb[0].mxu0 %v937
      %v1130 = vpop.f32.mrb[0].mxu0
      %v1131 = vadd.f32 %v810, %v1130
      %v1132 = vpop.f32.mrb[0].mxu0
      %1133 = vmatprep.mubr.f32.mxu0 0.0
      %1134 = vmatmul.mubr.f32.gmra.mrb[0].mxu0 %v940
      %v1135 = vpop.f32.mrb[0].mxu0
      %v1136 = vadd.f32 %v815, %v1135
      %v1137 = vpop.f32.mrb[0].mxu0
      %1138 = vmatprep.mubr.f32.mxu0 0.0
      %1139 = vmatmul.mubr.f32.gmra.mrb[0].mxu0 %v943
      %v1140 = vpop.f32.mrb[0].mxu0
      %v1141 = vadd.f32 %v820, %v1140
      %v1142 = vpop.f32.mrb[0].mxu0
      %1143 = vmatprep.mubr.f32.mxu0 0.0
      %1144 = vmatmul.mubr.f32.gmra.mrb[0].mxu0 %v946
      %v1145 = vpop.f32.mrb[0].mxu0
      %v1146 = vadd.f32 %v825, %v1145
      %v1147 = vpop.f32.mrb[0].mxu0
      %1148 = vmatprep.mubr.f32.mxu0 0.0
      %1149 = vmatmul.mubr.f32.gmra.mrb[0].mxu0 %v949
      %v1150 = vpop.f32.mrb[0].mxu0
      %v1151 = vadd.f32 %v830, %v1150
      %v1152 = vpop.f32.mrb[0].mxu0
      %1153 = vmatprep.mubr.f32.mxu0 0.0
      %1154 = vmatmul.mubr.f32.gmra.mrb[0].mxu0 %v952
      %v1155 = vpop.f32.mrb[0].mxu0
      %v1156 = vadd.f32 %v835, %v1155
      %v1157 = vpop.f32.mrb[0].mxu0
      %1158 = vmatprep.mubr.f32.mxu0 0.0
      %1159 = vmatmul.mubr.f32.gmra.mrb[0].mxu0 %v955
      %v1160 = vpop.f32.mrb[0].mxu0
      %v1161 = vadd.f32 %v840, %v1160
      %v1162 = vpop.f32.mrb[0].mxu0
      %1163 = vmatprep.mubr.f32.mxu0 0.0
      %1164 = vmatmul.mubr.f32.gmra.mrb[0].mxu0 %v958
      %v1165 = vpop.f32.mrb[0].mxu0
      %v1166 = vadd.f32 %v845, %v1165
      %v1167 = vpop.f32.mrb[0].mxu0
      %1168 = vmatprep.mubr.f32.mxu0 0.0
      %1169 = vmatmul.mubr.f32.gmra.mrb[0].mxu0 %v961
      %v1170 = vpop.f32.mrb[0].mxu0
      %v1171 = vadd.f32 %v850, %v1170
      %v1172 = vpop.f32.mrb[0].mxu0
      %1173 = vmatprep.mubr.f32.mxu0 0.0
      %1174 = vmatmul.mubr.f32.gmra.mrb[0].mxu0 %v964
      %v1175 = vpop.f32.mrb[0].mxu0
      %v1176 = vadd.f32 %v855, %v1175
      %v1177 = vpop.f32.mrb[0].mxu0
      %1178 = vmatprep.mubr.f32.mxu0 0.0
      %1179 = vmatmul.mubr.f32.gmra.mrb[0].mxu0 %v967
      %v1180 = vpop.f32.mrb[0].mxu0
      %v1181 = vadd.f32 %v860, %v1180
      %v1182 = vpop.f32.mrb[0].mxu0
      %1183 = vmatprep.mubr.f32.mxu0 0.0
      %1184 = vmatmul.mubr.f32.gmra.mrb[0].mxu0 %v970
      %v1185 = vpop.f32.mrb[0].mxu0
      %v1186 = vadd.f32 %v865, %v1185
      %v1187 = vpop.f32.mrb[0].mxu0
      %1188 = vmatprep.mubr.f32.mxu0 0.0
      %1189 = vmatmul.mubr.f32.gmra.mrb[0].mxu0 %v973
      %v1190 = vpop.f32.mrb[0].mxu0
      %v1191 = vadd.f32 %v870, %v1190
      %v1192 = vpop.f32.mrb[0].mxu0
      %1193 = vmatprep.mubr.f32.mxu0 0.0
      %1194 = vmatmul.mubr.f32.gmra.mrb[0].mxu0 %v976
      %v1195 = vpop.f32.mrb[0].mxu0
      %v1196 = vadd.f32 %v875, %v1195
      %v1197 = vpop.f32.mrb[0].mxu0
      %1198 = vmatprep.mubr.f32.mxu0 0.0
      %1199 = vmatmul.mubr.f32.gmra.mrb[0].mxu0 %v979
      %v1200 = vpop.f32.mrb[0].mxu0
      %v1201 = vadd.f32 %v880, %v1200
      %v1202 = vpop.f32.mrb[0].mxu0
      %1203 = vmatprep.mubr.f32.mxu0 0.0
      %1204 = vmatmul.mubr.f32.gmra.mrb[0].mxu0 %v982
      %v1205 = vpop.f32.mrb[0].mxu0
      %v1206 = vadd.f32 %v885, %v1205
      %v1207 = vpop.f32.mrb[0].mxu0
      %1208 = vdwg.mxu0
      %v1209 = vld [vmem:[#allocation2 + $0x2] sm:$0xff]
      %v1210 = vld [vmem:[#allocation2 + $0xa] sm:$0xff]
      %v1211 = vld [vmem:[#allocation2 + $0x1a] sm:$0xff]
      %v1212 = vld [vmem:[#allocation2 + $0x22] sm:$0xff]
      %v1213 = vld [vmem:[#allocation2 + $0x32] sm:$0xff]
      %v1214 = vld [vmem:[#allocation2 + $0x3a] sm:$0xff]
      %v1215 = vld [vmem:[#allocation2 + $0x4a] sm:$0xff]
      %v1216 = vld [vmem:[#allocation2 + $0x52] sm:$0xff]
      %v1217 = vld [vmem:[#allocation2 + $0x62] sm:$0xff]
      %v1218 = vld [vmem:[#allocation2 + $0x6a] sm:$0xff]
      %v1219 = vld [vmem:[#allocation2 + $0x7a] sm:$0xff]
      %v1220 = vld [vmem:[#allocation2 + $0x82] sm:$0xff]
      %v1221 = vld [vmem:[#allocation2 + $0x92] sm:$0xff]
      %v1222 = vld [vmem:[#allocation2 + $0x9a] sm:$0xff]
      %v1223 = vld [vmem:[#allocation2 + $0xaa] sm:$0xff]
      %v1224 = vld [vmem:[#allocation2 + $0xb2] sm:$0xff]
      %v1225 = vld [vmem:[#allocation2 + $0xc2] sm:$0xff]
      %v1226 = vld [vmem:[#allocation2 + $0xca] sm:$0xff]
      %v1227 = vld [vmem:[#allocation2 + $0xda] sm:$0xff]
      %v1228 = vld [vmem:[#allocation2 + $0xe2] sm:$0xff]
      %v1229 = vld [vmem:[#allocation2 + $0xf2] sm:$0xff]
      %v1230 = vld [vmem:[#allocation2 + $0xfa] sm:$0xff]
      %v1231 = vld [vmem:[#allocation2 + $0x10a] sm:$0xff]
      %v1232 = vld [vmem:[#allocation2 + $0x112] sm:$0xff]
      %v1233 = vld [vmem:[#allocation2 + $0x122] sm:$0xff]
      %v1234 = vld [vmem:[#allocation2 + $0x12a] sm:$0xff]
      %v1235 = vld [vmem:[#allocation2 + $0x13a] sm:$0xff]
      %v1236 = vld [vmem:[#allocation2 + $0x142] sm:$0xff]
      %v1237 = vld [vmem:[#allocation2 + $0x152] sm:$0xff]
      %v1238 = vld [vmem:[#allocation2 + $0x15a] sm:$0xff]
      %v1239 = vld [vmem:[#allocation2 + $0x16a] sm:$0xff]
      %v1240 = vld [vmem:[#allocation2 + $0x172] sm:$0xff]
      %s1241 = scalar_lea.vmem %s3, 16
      %v1242 = vld [vmem:[%s1241] sm:$0xff]
      %v1244 = vsel %vm421, %v1209, 0
      %v1247 = vsel %vm421, %v1210, 0
      %v1250 = vsel %vm421, %v1211, 0
      %v1253 = vsel %vm421, %v1212, 0
      %v1256 = vsel %vm421, %v1213, 0
      %v1259 = vsel %vm421, %v1214, 0
      %v1262 = vsel %vm421, %v1215, 0
      %v1265 = vsel %vm421, %v1216, 0
      %v1268 = vsel %vm421, %v1217, 0
      %v1271 = vsel %vm421, %v1218, 0
      %v1274 = vsel %vm421, %v1219, 0
      %v1277 = vsel %vm421, %v1220, 0
      %v1280 = vsel %vm421, %v1221, 0
      %v1283 = vsel %vm421, %v1222, 0
      %v1286 = vsel %vm421, %v1223, 0
      %v1289 = vsel %vm421, %v1224, 0
      %v1292 = vsel %vm421, %v1225, 0
      %v1295 = vsel %vm421, %v1226, 0
      %v1298 = vsel %vm421, %v1227, 0
      %v1301 = vsel %vm421, %v1228, 0
      %v1304 = vsel %vm421, %v1229, 0
      %v1307 = vsel %vm421, %v1230, 0
      %v1310 = vsel %vm421, %v1231, 0
      %v1313 = vsel %vm421, %v1232, 0
      %v1316 = vsel %vm421, %v1233, 0
      %v1319 = vsel %vm421, %v1234, 0
      %v1322 = vsel %vm421, %v1235, 0
      %v1325 = vsel %vm421, %v1236, 0
      %v1328 = vsel %vm421, %v1237, 0
      %v1331 = vsel %vm421, %v1238, 0
      %v1334 = vsel %vm421, %v1239, 0
      %v1337 = vsel %vm421, %v1240, 0
      %1339 = vmatprep.subr.mxu0 0.0
      %1340 = vmatpush1.msra.mxu0 %v1242
      %1341 = vmatprep.subr.mxu0 0.0
      %1342 = vmatpush1.msra.mxu0 0.0
      %1343 = vmatprep.subr.mxu0 0.0
      %1344 = vmatpush1.msra.mxu0 0.0
      %1345 = vmatprep.subr.mxu0 0.0
      %1346 = vmatpush1.msra.mxu0 0.0
      %1347 = vmatprep.subr.mxu0 0.0
      %1348 = vmatpush1.msra.mxu0 0.0
      %1349 = vmatprep.subr.mxu0 0.0
      %1350 = vmatpush1.msra.mxu0 0.0
      %1351 = vmatprep.subr.mxu0 0.0
      %1352 = vmatpush1.msra.mxu0 0.0
      %1353 = vmatprep.subr.mxu0 0.0
      %1354 = vmatpush1.msra.mxu0 0.0
      %1355 = vmatprep.subr.mxu0 0.0
      %1356 = vmatpush1.msra.mxu0 0.0
      %1357 = vmatprep.subr.mxu0 0.0
      %1358 = vmatpush1.msra.mxu0 0.0
      %1359 = vmatprep.subr.mxu0 0.0
      %1360 = vmatpush1.msra.mxu0 0.0
      %1361 = vmatprep.subr.mxu0 0.0
      %1362 = vmatpush1.msra.mxu0 0.0
      %1363 = vmatprep.subr.mxu0 0.0
      %1364 = vmatpush1.msra.mxu0 0.0
      %1365 = vmatprep.subr.mxu0 0.0
      %1366 = vmatpush1.msra.mxu0 0.0
      %1367 = vmatprep.subr.mxu0 0.0
      %1368 = vmatpush1.msra.mxu0 0.0
      %1369 = vmatprep.subr.mxu0 0.0
      %1370 = vmatpush1.msra.mxu0 0.0
      %1371 = vmatprep.subr.mxu0 0.0
      %1372 = vmatpush1.msra.mxu0 0.0
      %1373 = vmatprep.subr.mxu0 0.0
      %1374 = vmatpush1.msra.mxu0 0.0
      %1375 = vmatprep.subr.mxu0 0.0
      %1376 = vmatpush1.msra.mxu0 0.0
      %1377 = vmatprep.subr.mxu0 0.0
      %1378 = vmatpush1.msra.mxu0 0.0
      %1379 = vmatprep.subr.mxu0 0.0
      %1380 = vmatpush1.msra.mxu0 0.0
      %1381 = vmatprep.subr.mxu0 0.0
      %1382 = vmatpush1.msra.mxu0 0.0
      %1383 = vmatprep.subr.mxu0 0.0
      %1384 = vmatpush1.msra.mxu0 0.0
      %1385 = vmatprep.subr.mxu0 0.0
      %1386 = vmatpush1.msra.mxu0 0.0
      %1387 = vmatprep.subr.mxu0 0.0
      %1388 = vmatpush1.msra.mxu0 0.0
      %1389 = vmatprep.subr.mxu0 0.0
      %1390 = vmatpush1.msra.mxu0 0.0
      %1391 = vmatprep.subr.mxu0 0.0
      %1392 = vmatpush1.msra.mxu0 0.0
      %1393 = vmatprep.subr.mxu0 0.0
      %1394 = vmatpush1.msra.mxu0 0.0
      %1395 = vmatprep.subr.mxu0 0.0
      %1396 = vmatpush1.msra.mxu0 0.0
      %1397 = vmatprep.subr.mxu0 0.0
      %1398 = vmatpush1.msra.mxu0 0.0
      %1399 = vmatprep.subr.mxu0 0.0
      %1400 = vmatpush1.msra.mxu0 0.0
      %1401 = vmatprep.subr.mxu0 0.0
      %1402 = vmatpush1.msra.mxu0 0.0
      %1403 = vmatprep.mubr.f32.mxu0 0.0
      %1404 = vmatmul.mubr.f32.gmra.mrb[0].mxu0 %v1244
      %v1405 = vpop.f32.mrb[0].mxu0
      %v1406 = vadd.f32 0.0, %v1405
      %v1407 = vpop.f32.mrb[0].mxu0
      %1408 = vmatprep.mubr.f32.mxu0 0.0
      %1409 = vmatmul.mubr.f32.gmra.mrb[0].mxu0 %v1247
      %v1410 = vpop.f32.mrb[0].mxu0
      %v1411 = vadd.f32 0.0, %v1410
      %v1412 = vpop.f32.mrb[0].mxu0
      %1413 = vmatprep.mubr.f32.mxu0 0.0
      %1414 = vmatmul.mubr.f32.gmra.mrb[0].mxu0 %v1250
      %v1415 = vpop.f32.mrb[0].mxu0
      %v1416 = vadd.f32 0.0, %v1415
      %v1417 = vpop.f32.mrb[0].mxu0
      %1418 = vmatprep.mubr.f32.mxu0 0.0
      %1419 = vmatmul.mubr.f32.gmra.mrb[0].mxu0 %v1253
      %v1420 = vpop.f32.mrb[0].mxu0
      %v1421 = vadd.f32 0.0, %v1420
      %v1422 = vpop.f32.mrb[0].mxu0
      %1423 = vmatprep.mubr.f32.mxu0 0.0
      %1424 = vmatmul.mubr.f32.gmra.mrb[0].mxu0 %v1256
      %v1425 = vpop.f32.mrb[0].mxu0
      %v1426 = vadd.f32 0.0, %v1425
      %v1427 = vpop.f32.mrb[0].mxu0
      %1428 = vmatprep.mubr.f32.mxu0 0.0
      %1429 = vmatmul.mubr.f32.gmra.mrb[0].mxu0 %v1259
      %v1430 = vpop.f32.mrb[0].mxu0
      %v1431 = vadd.f32 0.0, %v1430
      %v1432 = vpop.f32.mrb[0].mxu0
      %1433 = vmatprep.mubr.f32.mxu0 0.0
      %1434 = vmatmul.mubr.f32.gmra.mrb[0].mxu0 %v1262
      %v1435 = vpop.f32.mrb[0].mxu0
      %v1436 = vadd.f32 0.0, %v1435
      %v1437 = vpop.f32.mrb[0].mxu0
      %1438 = vmatprep.mubr.f32.mxu0 0.0
      %1439 = vmatmul.mubr.f32.gmra.mrb[0].mxu0 %v1265
      %v1440 = vpop.f32.mrb[0].mxu0
      %v1441 = vadd.f32 0.0, %v1440
      %v1442 = vpop.f32.mrb[0].mxu0
      %1443 = vmatprep.mubr.f32.mxu0 0.0
      %1444 = vmatmul.mubr.f32.gmra.mrb[0].mxu0 %v1268
      %v1445 = vpop.f32.mrb[0].mxu0
      %v1446 = vadd.f32 0.0, %v1445
      %v1447 = vpop.f32.mrb[0].mxu0
      %1448 = vmatprep.mubr.f32.mxu0 0.0
      %1449 = vmatmul.mubr.f32.gmra.mrb[0].mxu0 %v1271
      %v1450 = vpop.f32.mrb[0].mxu0
      %v1451 = vadd.f32 0.0, %v1450
      %v1452 = vpop.f32.mrb[0].mxu0
      %1453 = vmatprep.mubr.f32.mxu0 0.0
      %1454 = vmatmul.mubr.f32.gmra.mrb[0].mxu0 %v1274
      %v1455 = vpop.f32.mrb[0].mxu0
      %v1456 = vadd.f32 0.0, %v1455
      %v1457 = vpop.f32.mrb[0].mxu0
      %1458 = vmatprep.mubr.f32.mxu0 0.0
      %1459 = vmatmul.mubr.f32.gmra.mrb[0].mxu0 %v1277
      %v1460 = vpop.f32.mrb[0].mxu0
      %v1461 = vadd.f32 0.0, %v1460
      %v1462 = vpop.f32.mrb[0].mxu0
      %1463 = vmatprep.mubr.f32.mxu0 0.0
      %1464 = vmatmul.mubr.f32.gmra.mrb[0].mxu0 %v1280
      %v1465 = vpop.f32.mrb[0].mxu0
      %v1466 = vadd.f32 0.0, %v1465
      %v1467 = vpop.f32.mrb[0].mxu0
      %1468 = vmatprep.mubr.f32.mxu0 0.0
      %1469 = vmatmul.mubr.f32.gmra.mrb[0].mxu0 %v1283
      %v1470 = vpop.f32.mrb[0].mxu0
      %v1471 = vadd.f32 0.0, %v1470
      %v1472 = vpop.f32.mrb[0].mxu0
      %1473 = vmatprep.mubr.f32.mxu0 0.0
      %1474 = vmatmul.mubr.f32.gmra.mrb[0].mxu0 %v1286
      %v1475 = vpop.f32.mrb[0].mxu0
      %v1476 = vadd.f32 0.0, %v1475
      %v1477 = vpop.f32.mrb[0].mxu0
      %1478 = vmatprep.mubr.f32.mxu0 0.0
      %1479 = vmatmul.mubr.f32.gmra.mrb[0].mxu0 %v1289
      %v1480 = vpop.f32.mrb[0].mxu0
      %v1481 = vadd.f32 0.0, %v1480
      %v1482 = vpop.f32.mrb[0].mxu0
      %1483 = vmatprep.mubr.f32.mxu0 0.0
      %1484 = vmatmul.mubr.f32.gmra.mrb[0].mxu0 %v1292
      %v1485 = vpop.f32.mrb[0].mxu0
      %v1486 = vadd.f32 0.0, %v1485
      %v1487 = vpop.f32.mrb[0].mxu0
      %1488 = vmatprep.mubr.f32.mxu0 0.0
      %1489 = vmatmul.mubr.f32.gmra.mrb[0].mxu0 %v1295
      %v1490 = vpop.f32.mrb[0].mxu0
      %v1491 = vadd.f32 0.0, %v1490
      %v1492 = vpop.f32.mrb[0].mxu0
      %1493 = vmatprep.mubr.f32.mxu0 0.0
      %1494 = vmatmul.mubr.f32.gmra.mrb[0].mxu0 %v1298
      %v1495 = vpop.f32.mrb[0].mxu0
      %v1496 = vadd.f32 0.0, %v1495
      %v1497 = vpop.f32.mrb[0].mxu0
      %1498 = vmatprep.mubr.f32.mxu0 0.0
      %1499 = vmatmul.mubr.f32.gmra.mrb[0].mxu0 %v1301
      %v1500 = vpop.f32.mrb[0].mxu0
      %v1501 = vadd.f32 0.0, %v1500
      %v1502 = vpop.f32.mrb[0].mxu0
      %1503 = vmatprep.mubr.f32.mxu0 0.0
      %1504 = vmatmul.mubr.f32.gmra.mrb[0].mxu0 %v1304
      %v1505 = vpop.f32.mrb[0].mxu0
      %v1506 = vadd.f32 0.0, %v1505
      %v1507 = vpop.f32.mrb[0].mxu0
      %1508 = vmatprep.mubr.f32.mxu0 0.0
      %1509 = vmatmul.mubr.f32.gmra.mrb[0].mxu0 %v1307
      %v1510 = vpop.f32.mrb[0].mxu0
      %v1511 = vadd.f32 0.0, %v1510
      %v1512 = vpop.f32.mrb[0].mxu0
      %1513 = vmatprep.mubr.f32.mxu0 0.0
      %1514 = vmatmul.mubr.f32.gmra.mrb[0].mxu0 %v1310
      %v1515 = vpop.f32.mrb[0].mxu0
      %v1516 = vadd.f32 0.0, %v1515
      %v1517 = vpop.f32.mrb[0].mxu0
      %1518 = vmatprep.mubr.f32.mxu0 0.0
      %1519 = vmatmul.mubr.f32.gmra.mrb[0].mxu0 %v1313
      %v1520 = vpop.f32.mrb[0].mxu0
      %v1521 = vadd.f32 0.0, %v1520
      %v1522 = vpop.f32.mrb[0].mxu0
      %1523 = vmatprep.mubr.f32.mxu0 0.0
      %1524 = vmatmul.mubr.f32.gmra.mrb[0].mxu0 %v1316
      %v1525 = vpop.f32.mrb[0].mxu0
      %v1526 = vadd.f32 0.0, %v1525
      %v1527 = vpop.f32.mrb[0].mxu0
      %1528 = vmatprep.mubr.f32.mxu0 0.0
      %1529 = vmatmul.mubr.f32.gmra.mrb[0].mxu0 %v1319
      %v1530 = vpop.f32.mrb[0].mxu0
      %v1531 = vadd.f32 0.0, %v1530
      %v1532 = vpop.f32.mrb[0].mxu0
      %1533 = vmatprep.mubr.f32.mxu0 0.0
      %1534 = vmatmul.mubr.f32.gmra.mrb[0].mxu0 %v1322
      %v1535 = vpop.f32.mrb[0].mxu0
      %v1536 = vadd.f32 0.0, %v1535
      %v1537 = vpop.f32.mrb[0].mxu0
      %1538 = vmatprep.mubr.f32.mxu0 0.0
      %1539 = vmatmul.mubr.f32.gmra.mrb[0].mxu0 %v1325
      %v1540 = vpop.f32.mrb[0].mxu0
      %v1541 = vadd.f32 0.0, %v1540
      %v1542 = vpop.f32.mrb[0].mxu0
      %1543 = vmatprep.mubr.f32.mxu0 0.0
      %1544 = vmatmul.mubr.f32.gmra.mrb[0].mxu0 %v1328
      %v1545 = vpop.f32.mrb[0].mxu0
      %v1546 = vadd.f32 0.0, %v1545
      %v1547 = vpop.f32.mrb[0].mxu0
      %1548 = vmatprep.mubr.f32.mxu0 0.0
      %1549 = vmatmul.mubr.f32.gmra.mrb[0].mxu0 %v1331
      %v1550 = vpop.f32.mrb[0].mxu0
      %v1551 = vadd.f32 0.0, %v1550
      %v1552 = vpop.f32.mrb[0].mxu0
      %1553 = vmatprep.mubr.f32.mxu0 0.0
      %1554 = vmatmul.mubr.f32.gmra.mrb[0].mxu0 %v1334
      %v1555 = vpop.f32.mrb[0].mxu0
      %v1556 = vadd.f32 0.0, %v1555
      %v1557 = vpop.f32.mrb[0].mxu0
      %1558 = vmatprep.mubr.f32.mxu0 0.0
      %1559 = vmatmul.mubr.f32.gmra.mrb[0].mxu0 %v1337
      %v1560 = vpop.f32.mrb[0].mxu0
      %v1561 = vadd.f32 0.0, %v1560
      %v1562 = vpop.f32.mrb[0].mxu0
      %1563 = vdwg.mxu0
      %v1564 = vadd.f32 %v1051, %v1406
      %v1565 = vadd.f32 %v1056, %v1411
      %v1566 = vadd.f32 %v1061, %v1416
      %v1567 = vadd.f32 %v1066, %v1421
      %v1568 = vadd.f32 %v1071, %v1426
      %v1569 = vadd.f32 %v1076, %v1431
      %v1570 = vadd.f32 %v1081, %v1436
      %v1571 = vadd.f32 %v1086, %v1441
      %v1572 = vadd.f32 %v1091, %v1446
      %v1573 = vadd.f32 %v1096, %v1451
      %v1574 = vadd.f32 %v1101, %v1456
      %v1575 = vadd.f32 %v1106, %v1461
      %v1576 = vadd.f32 %v1111, %v1466
      %v1577 = vadd.f32 %v1116, %v1471
      %v1578 = vadd.f32 %v1121, %v1476
      %v1579 = vadd.f32 %v1126, %v1481
      %v1580 = vadd.f32 %v1131, %v1486
      %v1581 = vadd.f32 %v1136, %v1491
      %v1582 = vadd.f32 %v1141, %v1496
      %v1583 = vadd.f32 %v1146, %v1501
      %v1584 = vadd.f32 %v1151, %v1506
      %v1585 = vadd.f32 %v1156, %v1511
      %v1586 = vadd.f32 %v1161, %v1516
      %v1587 = vadd.f32 %v1166, %v1521
      %v1588 = vadd.f32 %v1171, %v1526
      %v1589 = vadd.f32 %v1176, %v1531
      %v1590 = vadd.f32 %v1181, %v1536
      %v1591 = vadd.f32 %v1186, %v1541
      %v1592 = vadd.f32 %v1191, %v1546
      %v1593 = vadd.f32 %v1196, %v1551
      %v1594 = vadd.f32 %v1201, %v1556
      %v1595 = vadd.f32 %v1206, %v1561
      %v1596 = vld [vmem:[%s467] sm:$0xff]
      %v1597 = vld [vmem:[%s467 + $0x8] sm:$0xff]
      %v1598 = vld [vmem:[%s467 + $0x18] sm:$0xff]
      %v1599 = vld [vmem:[%s467 + $0x20] sm:$0xff]
      %v1600 = vld [vmem:[%s467 + $0x30] sm:$0xff]
      %v1601 = vld [vmem:[%s467 + $0x38] sm:$0xff]
      %v1602 = vld [vmem:[%s467 + $0x48] sm:$0xff]
      %v1603 = vld [vmem:[%s467 + $0x50] sm:$0xff]
      %v1604 = vld [vmem:[%s467 + $0x60] sm:$0xff]
      %v1605 = vld [vmem:[%s467 + $0x68] sm:$0xff]
      %v1606 = vld [vmem:[%s467 + $0x78] sm:$0xff]
      %v1607 = vld [vmem:[%s467 + $0x80] sm:$0xff]
      %v1608 = vld [vmem:[%s467 + $0x90] sm:$0xff]
      %v1609 = vld [vmem:[%s467 + $0x98] sm:$0xff]
      %v1610 = vld [vmem:[%s467 + $0xa8] sm:$0xff]
      %v1611 = vld [vmem:[%s467 + $0xb0] sm:$0xff]
      %v1612 = vld [vmem:[%s467 + $0xc0] sm:$0xff]
      %v1613 = vld [vmem:[%s467 + $0xc8] sm:$0xff]
      %v1614 = vld [vmem:[%s467 + $0xd8] sm:$0xff]
      %v1615 = vld [vmem:[%s467 + $0xe0] sm:$0xff]
      %v1616 = vld [vmem:[%s467 + $0xf0] sm:$0xff]
      %v1617 = vld [vmem:[%s467 + $0xf8] sm:$0xff]
      %v1618 = vld [vmem:[%s467 + $0x108] sm:$0xff]
      %v1619 = vld [vmem:[%s467 + $0x110] sm:$0xff]
      %v1620 = vld [vmem:[%s467 + $0x120] sm:$0xff]
      %v1621 = vld [vmem:[%s467 + $0x128] sm:$0xff]
      %v1622 = vld [vmem:[%s467 + $0x138] sm:$0xff]
      %v1623 = vld [vmem:[%s467 + $0x140] sm:$0xff]
      %v1624 = vld [vmem:[%s467 + $0x150] sm:$0xff]
      %v1625 = vld [vmem:[%s467 + $0x158] sm:$0xff]
      %v1626 = vld [vmem:[%s467 + $0x168] sm:$0xff]
      %v1627 = vld [vmem:[%s467 + $0x170] sm:$0xff]
      %s1628 = scalar_lea.vmem %s3, 24
      %v1629 = vld [vmem:[%s1628] sm:$0xff]
      %v1631 = vsel %vm421, %v1596, 0
      %v1634 = vsel %vm421, %v1597, 0
      %v1637 = vsel %vm421, %v1598, 0
      %v1640 = vsel %vm421, %v1599, 0
      %v1643 = vsel %vm421, %v1600, 0
      %v1646 = vsel %vm421, %v1601, 0
      %v1649 = vsel %vm421, %v1602, 0
      %v1652 = vsel %vm421, %v1603, 0
      %v1655 = vsel %vm421, %v1604, 0
      %v1658 = vsel %vm421, %v1605, 0
      %v1661 = vsel %vm421, %v1606, 0
      %v1664 = vsel %vm421, %v1607, 0
      %v1667 = vsel %vm421, %v1608, 0
      %v1670 = vsel %vm421, %v1609, 0
      %v1673 = vsel %vm421, %v1610, 0
      %v1676 = vsel %vm421, %v1611, 0
      %v1679 = vsel %vm421, %v1612, 0
      %v1682 = vsel %vm421, %v1613, 0
      %v1685 = vsel %vm421, %v1614, 0
      %v1688 = vsel %vm421, %v1615, 0
      %v1691 = vsel %vm421, %v1616, 0
      %v1694 = vsel %vm421, %v1617, 0
      %v1697 = vsel %vm421, %v1618, 0
      %v1700 = vsel %vm421, %v1619, 0
      %v1703 = vsel %vm421, %v1620, 0
      %v1706 = vsel %vm421, %v1621, 0
      %v1709 = vsel %vm421, %v1622, 0
      %v1712 = vsel %vm421, %v1623, 0
      %v1715 = vsel %vm421, %v1624, 0
      %v1718 = vsel %vm421, %v1625, 0
      %v1721 = vsel %vm421, %v1626, 0
      %v1724 = vsel %vm421, %v1627, 0
      %1726 = vmatprep.subr.mxu0 0.0
      %1727 = vmatpush1.msra.mxu0 %v1629
      %1728 = vmatprep.subr.mxu0 0.0
      %1729 = vmatpush1.msra.mxu0 0.0
      %1730 = vmatprep.subr.mxu0 0.0
      %1731 = vmatpush1.msra.mxu0 0.0
      %1732 = vmatprep.subr.mxu0 0.0
      %1733 = vmatpush1.msra.mxu0 0.0
      %1734 = vmatprep.subr.mxu0 0.0
      %1735 = vmatpush1.msra.mxu0 0.0
      %1736 = vmatprep.subr.mxu0 0.0
      %1737 = vmatpush1.msra.mxu0 0.0
      %1738 = vmatprep.subr.mxu0 0.0
      %1739 = vmatpush1.msra.mxu0 0.0
      %1740 = vmatprep.subr.mxu0 0.0
      %1741 = vmatpush1.msra.mxu0 0.0
      %1742 = vmatprep.subr.mxu0 0.0
      %1743 = vmatpush1.msra.mxu0 0.0
      %1744 = vmatprep.subr.mxu0 0.0
      %1745 = vmatpush1.msra.mxu0 0.0
      %1746 = vmatprep.subr.mxu0 0.0
      %1747 = vmatpush1.msra.mxu0 0.0
      %1748 = vmatprep.subr.mxu0 0.0
      %1749 = vmatpush1.msra.mxu0 0.0
      %1750 = vmatprep.subr.mxu0 0.0
      %1751 = vmatpush1.msra.mxu0 0.0
      %1752 = vmatprep.subr.mxu0 0.0
      %1753 = vmatpush1.msra.mxu0 0.0
      %1754 = vmatprep.subr.mxu0 0.0
      %1755 = vmatpush1.msra.mxu0 0.0
      %1756 = vmatprep.subr.mxu0 0.0
      %1757 = vmatpush1.msra.mxu0 0.0
      %1758 = vmatprep.subr.mxu0 0.0
      %1759 = vmatpush1.msra.mxu0 0.0
      %1760 = vmatprep.subr.mxu0 0.0
      %1761 = vmatpush1.msra.mxu0 0.0
      %1762 = vmatprep.subr.mxu0 0.0
      %1763 = vmatpush1.msra.mxu0 0.0
      %1764 = vmatprep.subr.mxu0 0.0
      %1765 = vmatpush1.msra.mxu0 0.0
      %1766 = vmatprep.subr.mxu0 0.0
      %1767 = vmatpush1.msra.mxu0 0.0
      %1768 = vmatprep.subr.mxu0 0.0
      %1769 = vmatpush1.msra.mxu0 0.0
      %1770 = vmatprep.subr.mxu0 0.0
      %1771 = vmatpush1.msra.mxu0 0.0
      %1772 = vmatprep.subr.mxu0 0.0
      %1773 = vmatpush1.msra.mxu0 0.0
      %1774 = vmatprep.subr.mxu0 0.0
      %1775 = vmatpush1.msra.mxu0 0.0
      %1776 = vmatprep.subr.mxu0 0.0
      %1777 = vmatpush1.msra.mxu0 0.0
      %1778 = vmatprep.subr.mxu0 0.0
      %1779 = vmatpush1.msra.mxu0 0.0
      %1780 = vmatprep.subr.mxu0 0.0
      %1781 = vmatpush1.msra.mxu0 0.0
      %1782 = vmatprep.subr.mxu0 0.0
      %1783 = vmatpush1.msra.mxu0 0.0
      %1784 = vmatprep.subr.mxu0 0.0
      %1785 = vmatpush1.msra.mxu0 0.0
      %1786 = vmatprep.subr.mxu0 0.0
      %1787 = vmatpush1.msra.mxu0 0.0
      %1788 = vmatprep.subr.mxu0 0.0
      %1789 = vmatpush1.msra.mxu0 0.0
      %1790 = vmatprep.mubr.f32.mxu0 0.0
      %1791 = vmatmul.mubr.f32.gmra.mrb[0].mxu0 %v1631
      %v1792 = vpop.f32.mrb[0].mxu0
      %v1793 = vadd.f32 0.0, %v1792
      %v1794 = vpop.f32.mrb[0].mxu0
      %1795 = vmatprep.mubr.f32.mxu0 0.0
      %1796 = vmatmul.mubr.f32.gmra.mrb[0].mxu0 %v1634
      %v1797 = vpop.f32.mrb[0].mxu0
      %v1798 = vadd.f32 0.0, %v1797
      %v1799 = vpop.f32.mrb[0].mxu0
      %1800 = vmatprep.mubr.f32.mxu0 0.0
      %1801 = vmatmul.mubr.f32.gmra.mrb[0].mxu0 %v1637
      %v1802 = vpop.f32.mrb[0].mxu0
      %v1803 = vadd.f32 0.0, %v1802
      %v1804 = vpop.f32.mrb[0].mxu0
      %1805 = vmatprep.mubr.f32.mxu0 0.0
      %1806 = vmatmul.mubr.f32.gmra.mrb[0].mxu0 %v1640
      %v1807 = vpop.f32.mrb[0].mxu0
      %v1808 = vadd.f32 0.0, %v1807
      %v1809 = vpop.f32.mrb[0].mxu0
      %1810 = vmatprep.mubr.f32.mxu0 0.0
      %1811 = vmatmul.mubr.f32.gmra.mrb[0].mxu0 %v1643
      %v1812 = vpop.f32.mrb[0].mxu0
      %v1813 = vadd.f32 0.0, %v1812
      %v1814 = vpop.f32.mrb[0].mxu0
      %1815 = vmatprep.mubr.f32.mxu0 0.0
      %1816 = vmatmul.mubr.f32.gmra.mrb[0].mxu0 %v1646
      %v1817 = vpop.f32.mrb[0].mxu0
      %v1818 = vadd.f32 0.0, %v1817
      %v1819 = vpop.f32.mrb[0].mxu0
      %1820 = vmatprep.mubr.f32.mxu0 0.0
      %1821 = vmatmul.mubr.f32.gmra.mrb[0].mxu0 %v1649
      %v1822 = vpop.f32.mrb[0].mxu0
      %v1823 = vadd.f32 0.0, %v1822
      %v1824 = vpop.f32.mrb[0].mxu0
      %1825 = vmatprep.mubr.f32.mxu0 0.0
      %1826 = vmatmul.mubr.f32.gmra.mrb[0].mxu0 %v1652
      %v1827 = vpop.f32.mrb[0].mxu0
      %v1828 = vadd.f32 0.0, %v1827
      %v1829 = vpop.f32.mrb[0].mxu0
      %1830 = vmatprep.mubr.f32.mxu0 0.0
      %1831 = vmatmul.mubr.f32.gmra.mrb[0].mxu0 %v1655
      %v1832 = vpop.f32.mrb[0].mxu0
      %v1833 = vadd.f32 0.0, %v1832
      %v1834 = vpop.f32.mrb[0].mxu0
      %1835 = vmatprep.mubr.f32.mxu0 0.0
      %1836 = vmatmul.mubr.f32.gmra.mrb[0].mxu0 %v1658
      %v1837 = vpop.f32.mrb[0].mxu0
      %v1838 = vadd.f32 0.0, %v1837
      %v1839 = vpop.f32.mrb[0].mxu0
      %1840 = vmatprep.mubr.f32.mxu0 0.0
      %1841 = vmatmul.mubr.f32.gmra.mrb[0].mxu0 %v1661
      %v1842 = vpop.f32.mrb[0].mxu0
      %v1843 = vadd.f32 0.0, %v1842
      %v1844 = vpop.f32.mrb[0].mxu0
      %1845 = vmatprep.mubr.f32.mxu0 0.0
      %1846 = vmatmul.mubr.f32.gmra.mrb[0].mxu0 %v1664
      %v1847 = vpop.f32.mrb[0].mxu0
      %v1848 = vadd.f32 0.0, %v1847
      %v1849 = vpop.f32.mrb[0].mxu0
      %1850 = vmatprep.mubr.f32.mxu0 0.0
      %1851 = vmatmul.mubr.f32.gmra.mrb[0].mxu0 %v1667
      %v1852 = vpop.f32.mrb[0].mxu0
      %v1853 = vadd.f32 0.0, %v1852
      %v1854 = vpop.f32.mrb[0].mxu0
      %1855 = vmatprep.mubr.f32.mxu0 0.0
      %1856 = vmatmul.mubr.f32.gmra.mrb[0].mxu0 %v1670
      %v1857 = vpop.f32.mrb[0].mxu0
      %v1858 = vadd.f32 0.0, %v1857
      %v1859 = vpop.f32.mrb[0].mxu0
      %1860 = vmatprep.mubr.f32.mxu0 0.0
      %1861 = vmatmul.mubr.f32.gmra.mrb[0].mxu0 %v1673
      %v1862 = vpop.f32.mrb[0].mxu0
      %v1863 = vadd.f32 0.0, %v1862
      %v1864 = vpop.f32.mrb[0].mxu0
      %1865 = vmatprep.mubr.f32.mxu0 0.0
      %1866 = vmatmul.mubr.f32.gmra.mrb[0].mxu0 %v1676
      %v1867 = vpop.f32.mrb[0].mxu0
      %v1868 = vadd.f32 0.0, %v1867
      %v1869 = vpop.f32.mrb[0].mxu0
      %1870 = vmatprep.mubr.f32.mxu0 0.0
      %1871 = vmatmul.mubr.f32.gmra.mrb[0].mxu0 %v1679
      %v1872 = vpop.f32.mrb[0].mxu0
      %v1873 = vadd.f32 0.0, %v1872
      %v1874 = vpop.f32.mrb[0].mxu0
      %1875 = vmatprep.mubr.f32.mxu0 0.0
      %1876 = vmatmul.mubr.f32.gmra.mrb[0].mxu0 %v1682
      %v1877 = vpop.f32.mrb[0].mxu0
      %v1878 = vadd.f32 0.0, %v1877
      %v1879 = vpop.f32.mrb[0].mxu0
      %1880 = vmatprep.mubr.f32.mxu0 0.0
      %1881 = vmatmul.mubr.f32.gmra.mrb[0].mxu0 %v1685
      %v1882 = vpop.f32.mrb[0].mxu0
      %v1883 = vadd.f32 0.0, %v1882
      %v1884 = vpop.f32.mrb[0].mxu0
      %1885 = vmatprep.mubr.f32.mxu0 0.0
      %1886 = vmatmul.mubr.f32.gmra.mrb[0].mxu0 %v1688
      %v1887 = vpop.f32.mrb[0].mxu0
      %v1888 = vadd.f32 0.0, %v1887
      %v1889 = vpop.f32.mrb[0].mxu0
      %1890 = vmatprep.mubr.f32.mxu0 0.0
      %1891 = vmatmul.mubr.f32.gmra.mrb[0].mxu0 %v1691
      %v1892 = vpop.f32.mrb[0].mxu0
      %v1893 = vadd.f32 0.0, %v1892
      %v1894 = vpop.f32.mrb[0].mxu0
      %1895 = vmatprep.mubr.f32.mxu0 0.0
      %1896 = vmatmul.mubr.f32.gmra.mrb[0].mxu0 %v1694
      %v1897 = vpop.f32.mrb[0].mxu0
      %v1898 = vadd.f32 0.0, %v1897
      %v1899 = vpop.f32.mrb[0].mxu0
      %1900 = vmatprep.mubr.f32.mxu0 0.0
      %1901 = vmatmul.mubr.f32.gmra.mrb[0].mxu0 %v1697
      %v1902 = vpop.f32.mrb[0].mxu0
      %v1903 = vadd.f32 0.0, %v1902
      %v1904 = vpop.f32.mrb[0].mxu0
      %1905 = vmatprep.mubr.f32.mxu0 0.0
      %1906 = vmatmul.mubr.f32.gmra.mrb[0].mxu0 %v1700
      %v1907 = vpop.f32.mrb[0].mxu0
      %v1908 = vadd.f32 0.0, %v1907
      %v1909 = vpop.f32.mrb[0].mxu0
      %1910 = vmatprep.mubr.f32.mxu0 0.0
      %1911 = vmatmul.mubr.f32.gmra.mrb[0].mxu0 %v1703
      %v1912 = vpop.f32.mrb[0].mxu0
      %v1913 = vadd.f32 0.0, %v1912
      %v1914 = vpop.f32.mrb[0].mxu0
      %1915 = vmatprep.mubr.f32.mxu0 0.0
      %1916 = vmatmul.mubr.f32.gmra.mrb[0].mxu0 %v1706
      %v1917 = vpop.f32.mrb[0].mxu0
      %v1918 = vadd.f32 0.0, %v1917
      %v1919 = vpop.f32.mrb[0].mxu0
      %1920 = vmatprep.mubr.f32.mxu0 0.0
      %1921 = vmatmul.mubr.f32.gmra.mrb[0].mxu0 %v1709
      %v1922 = vpop.f32.mrb[0].mxu0
      %v1923 = vadd.f32 0.0, %v1922
      %v1924 = vpop.f32.mrb[0].mxu0
      %1925 = vmatprep.mubr.f32.mxu0 0.0
      %1926 = vmatmul.mubr.f32.gmra.mrb[0].mxu0 %v1712
      %v1927 = vpop.f32.mrb[0].mxu0
      %v1928 = vadd.f32 0.0, %v1927
      %v1929 = vpop.f32.mrb[0].mxu0
      %1930 = vmatprep.mubr.f32.mxu0 0.0
      %1931 = vmatmul.mubr.f32.gmra.mrb[0].mxu0 %v1715
      %v1932 = vpop.f32.mrb[0].mxu0
      %v1933 = vadd.f32 0.0, %v1932
      %v1934 = vpop.f32.mrb[0].mxu0
      %1935 = vmatprep.mubr.f32.mxu0 0.0
      %1936 = vmatmul.mubr.f32.gmra.mrb[0].mxu0 %v1718
      %v1937 = vpop.f32.mrb[0].mxu0
      %v1938 = vadd.f32 0.0, %v1937
      %v1939 = vpop.f32.mrb[0].mxu0
      %1940 = vmatprep.mubr.f32.mxu0 0.0
      %1941 = vmatmul.mubr.f32.gmra.mrb[0].mxu0 %v1721
      %v1942 = vpop.f32.mrb[0].mxu0
      %v1943 = vadd.f32 0.0, %v1942
      %v1944 = vpop.f32.mrb[0].mxu0
      %1945 = vmatprep.mubr.f32.mxu0 0.0
      %1946 = vmatmul.mubr.f32.gmra.mrb[0].mxu0 %v1724
      %v1947 = vpop.f32.mrb[0].mxu0
      %v1948 = vadd.f32 0.0, %v1947
      %v1949 = vpop.f32.mrb[0].mxu0
      %1950 = vdwg.mxu0
      %v1951 = vadd.f32 %v1564, %v1793
      %v1952 = vadd.f32 %v1565, %v1798
      %v1953 = vadd.f32 %v1566, %v1803
      %v1954 = vadd.f32 %v1567, %v1808
      %v1955 = vadd.f32 %v1568, %v1813
      %v1956 = vadd.f32 %v1569, %v1818
      %v1957 = vadd.f32 %v1570, %v1823
      %v1958 = vadd.f32 %v1571, %v1828
      %v1959 = vadd.f32 %v1572, %v1833
      %v1960 = vadd.f32 %v1573, %v1838
      %v1961 = vadd.f32 %v1574, %v1843
      %v1962 = vadd.f32 %v1575, %v1848
      %v1963 = vadd.f32 %v1576, %v1853
      %v1964 = vadd.f32 %v1577, %v1858
      %v1965 = vadd.f32 %v1578, %v1863
      %v1966 = vadd.f32 %v1579, %v1868
      %v1967 = vadd.f32 %v1580, %v1873
      %v1968 = vadd.f32 %v1581, %v1878
      %v1969 = vadd.f32 %v1582, %v1883
      %v1970 = vadd.f32 %v1583, %v1888
      %v1971 = vadd.f32 %v1584, %v1893
      %v1972 = vadd.f32 %v1585, %v1898
      %v1973 = vadd.f32 %v1586, %v1903
      %v1974 = vadd.f32 %v1587, %v1908
      %v1975 = vadd.f32 %v1588, %v1913
      %v1976 = vadd.f32 %v1589, %v1918
      %v1977 = vadd.f32 %v1590, %v1923
      %v1978 = vadd.f32 %v1591, %v1928
      %v1979 = vadd.f32 %v1592, %v1933
      %v1980 = vadd.f32 %v1593, %v1938
      %v1981 = vadd.f32 %v1594, %v1943
      %v1982 = vadd.f32 %v1595, %v1948
      %v1983 = vld [vmem:[%s467 + $0x1] sm:$0xff]
      %v1984 = vld [vmem:[%s467 + $0x9] sm:$0xff]
      %v1985 = vld [vmem:[%s467 + $0x19] sm:$0xff]
      %v1986 = vld [vmem:[%s467 + $0x21] sm:$0xff]
      %v1987 = vld [vmem:[%s467 + $0x31] sm:$0xff]
      %v1988 = vld [vmem:[%s467 + $0x39] sm:$0xff]
      %v1989 = vld [vmem:[%s467 + $0x49] sm:$0xff]
      %v1990 = vld [vmem:[%s467 + $0x51] sm:$0xff]
      %v1991 = vld [vmem:[%s467 + $0x61] sm:$0xff]
      %v1992 = vld [vmem:[%s467 + $0x69] sm:$0xff]
      %v1993 = vld [vmem:[%s467 + $0x79] sm:$0xff]
      %v1994 = vld [vmem:[%s467 + $0x81] sm:$0xff]
      %v1995 = vld [vmem:[%s467 + $0x91] sm:$0xff]
      %v1996 = vld [vmem:[%s467 + $0x99] sm:$0xff]
      %v1997 = vld [vmem:[%s467 + $0xa9] sm:$0xff]
      %v1998 = vld [vmem:[%s467 + $0xb1] sm:$0xff]
      %v1999 = vld [vmem:[%s467 + $0xc1] sm:$0xff]
      %v2000 = vld [vmem:[%s467 + $0xc9] sm:$0xff]
      %v2001 = vld [vmem:[%s467 + $0xd9] sm:$0xff]
      %v2002 = vld [vmem:[%s467 + $0xe1] sm:$0xff]
      %v2003 = vld [vmem:[%s467 + $0xf1] sm:$0xff]
      %v2004 = vld [vmem:[%s467 + $0xf9] sm:$0xff]
      %v2005 = vld [vmem:[%s467 + $0x109] sm:$0xff]
      %v2006 = vld [vmem:[%s467 + $0x111] sm:$0xff]
      %v2007 = vld [vmem:[%s467 + $0x121] sm:$0xff]
      %v2008 = vld [vmem:[%s467 + $0x129] sm:$0xff]
      %v2009 = vld [vmem:[%s467 + $0x139] sm:$0xff]
      %v2010 = vld [vmem:[%s467 + $0x141] sm:$0xff]
      %v2011 = vld [vmem:[%s467 + $0x151] sm:$0xff]
      %v2012 = vld [vmem:[%s467 + $0x159] sm:$0xff]
      %v2013 = vld [vmem:[%s467 + $0x169] sm:$0xff]
      %v2014 = vld [vmem:[%s467 + $0x171] sm:$0xff]
      %s2015 = scalar_lea.vmem %s3, 32
      %v2016 = vld [vmem:[%s2015] sm:$0xff]
      %v2018 = vsel %vm421, %v1983, 0
      %v2021 = vsel %vm421, %v1984, 0
      %v2024 = vsel %vm421, %v1985, 0
      %v2027 = vsel %vm421, %v1986, 0
      %v2030 = vsel %vm421, %v1987, 0
      %v2033 = vsel %vm421, %v1988, 0
      %v2036 = vsel %vm421, %v1989, 0
      %v2039 = vsel %vm421, %v1990, 0
      %v2042 = vsel %vm421, %v1991, 0
      %v2045 = vsel %vm421, %v1992, 0
      %v2048 = vsel %vm421, %v1993, 0
      %v2051 = vsel %vm421, %v1994, 0
      %v2054 = vsel %vm421, %v1995, 0
      %v2057 = vsel %vm421, %v1996, 0
      %v2060 = vsel %vm421, %v1997, 0
      %v2063 = vsel %vm421, %v1998, 0
      %v2066 = vsel %vm421, %v1999, 0
      %v2069 = vsel %vm421, %v2000, 0
      %v2072 = vsel %vm421, %v2001, 0
      %v2075 = vsel %vm421, %v2002, 0
      %v2078 = vsel %vm421, %v2003, 0
      %v2081 = vsel %vm421, %v2004, 0
      %v2084 = vsel %vm421, %v2005, 0
      %v2087 = vsel %vm421, %v2006, 0
      %v2090 = vsel %vm421, %v2007, 0
      %v2093 = vsel %vm421, %v2008, 0
      %v2096 = vsel %vm421, %v2009, 0
      %v2099 = vsel %vm421, %v2010, 0
      %v2102 = vsel %vm421, %v2011, 0
      %v2105 = vsel %vm421, %v2012, 0
      %v2108 = vsel %vm421, %v2013, 0
      %v2111 = vsel %vm421, %v2014, 0
      %2113 = vmatprep.subr.mxu0 0.0
      %2114 = vmatpush1.msra.mxu0 %v2016
      %2115 = vmatprep.subr.mxu0 0.0
      %2116 = vmatpush1.msra.mxu0 0.0
      %2117 = vmatprep.subr.mxu0 0.0
      %2118 = vmatpush1.msra.mxu0 0.0
      %2119 = vmatprep.subr.mxu0 0.0
      %2120 = vmatpush1.msra.mxu0 0.0
      %2121 = vmatprep.subr.mxu0 0.0
      %2122 = vmatpush1.msra.mxu0 0.0
      %2123 = vmatprep.subr.mxu0 0.0
      %2124 = vmatpush1.msra.mxu0 0.0
      %2125 = vmatprep.subr.mxu0 0.0
      %2126 = vmatpush1.msra.mxu0 0.0
      %2127 = vmatprep.subr.mxu0 0.0
      %2128 = vmatpush1.msra.mxu0 0.0
      %2129 = vmatprep.subr.mxu0 0.0
      %2130 = vmatpush1.msra.mxu0 0.0
      %2131 = vmatprep.subr.mxu0 0.0
      %2132 = vmatpush1.msra.mxu0 0.0
      %2133 = vmatprep.subr.mxu0 0.0
      %2134 = vmatpush1.msra.mxu0 0.0
      %2135 = vmatprep.subr.mxu0 0.0
      %2136 = vmatpush1.msra.mxu0 0.0
      %2137 = vmatprep.subr.mxu0 0.0
      %2138 = vmatpush1.msra.mxu0 0.0
      %2139 = vmatprep.subr.mxu0 0.0
      %2140 = vmatpush1.msra.mxu0 0.0
      %2141 = vmatprep.subr.mxu0 0.0
      %2142 = vmatpush1.msra.mxu0 0.0
      %2143 = vmatprep.subr.mxu0 0.0
      %2144 = vmatpush1.msra.mxu0 0.0
      %2145 = vmatprep.subr.mxu0 0.0
      %2146 = vmatpush1.msra.mxu0 0.0
      %2147 = vmatprep.subr.mxu0 0.0
      %2148 = vmatpush1.msra.mxu0 0.0
      %2149 = vmatprep.subr.mxu0 0.0
      %2150 = vmatpush1.msra.mxu0 0.0
      %2151 = vmatprep.subr.mxu0 0.0
      %2152 = vmatpush1.msra.mxu0 0.0
      %2153 = vmatprep.subr.mxu0 0.0
      %2154 = vmatpush1.msra.mxu0 0.0
      %2155 = vmatprep.subr.mxu0 0.0
      %2156 = vmatpush1.msra.mxu0 0.0
      %2157 = vmatprep.subr.mxu0 0.0
      %2158 = vmatpush1.msra.mxu0 0.0
      %2159 = vmatprep.subr.mxu0 0.0
      %2160 = vmatpush1.msra.mxu0 0.0
      %2161 = vmatprep.subr.mxu0 0.0
      %2162 = vmatpush1.msra.mxu0 0.0
      %2163 = vmatprep.subr.mxu0 0.0
      %2164 = vmatpush1.msra.mxu0 0.0
      %2165 = vmatprep.subr.mxu0 0.0
      %2166 = vmatpush1.msra.mxu0 0.0
      %2167 = vmatprep.subr.mxu0 0.0
      %2168 = vmatpush1.msra.mxu0 0.0
      %2169 = vmatprep.subr.mxu0 0.0
      %2170 = vmatpush1.msra.mxu0 0.0
      %2171 = vmatprep.subr.mxu0 0.0
      %2172 = vmatpush1.msra.mxu0 0.0
      %2173 = vmatprep.subr.mxu0 0.0
      %2174 = vmatpush1.msra.mxu0 0.0
      %2175 = vmatprep.subr.mxu0 0.0
      %2176 = vmatpush1.msra.mxu0 0.0
      %2177 = vmatprep.mubr.f32.mxu0 0.0
      %2178 = vmatmul.mubr.f32.gmra.mrb[0].mxu0 %v2018
      %v2179 = vpop.f32.mrb[0].mxu0
      %v2180 = vadd.f32 0.0, %v2179
      %v2181 = vpop.f32.mrb[0].mxu0
      %2182 = vmatprep.mubr.f32.mxu0 0.0
      %2183 = vmatmul.mubr.f32.gmra.mrb[0].mxu0 %v2021
      %v2184 = vpop.f32.mrb[0].mxu0
      %v2185 = vadd.f32 0.0, %v2184
      %v2186 = vpop.f32.mrb[0].mxu0
      %2187 = vmatprep.mubr.f32.mxu0 0.0
      %2188 = vmatmul.mubr.f32.gmra.mrb[0].mxu0 %v2024
      %v2189 = vpop.f32.mrb[0].mxu0
      %v2190 = vadd.f32 0.0, %v2189
      %v2191 = vpop.f32.mrb[0].mxu0
      %2192 = vmatprep.mubr.f32.mxu0 0.0
      %2193 = vmatmul.mubr.f32.gmra.mrb[0].mxu0 %v2027
      %v2194 = vpop.f32.mrb[0].mxu0
      %v2195 = vadd.f32 0.0, %v2194
      %v2196 = vpop.f32.mrb[0].mxu0
      %2197 = vmatprep.mubr.f32.mxu0 0.0
      %2198 = vmatmul.mubr.f32.gmra.mrb[0].mxu0 %v2030
      %v2199 = vpop.f32.mrb[0].mxu0
      %v2200 = vadd.f32 0.0, %v2199
      %v2201 = vpop.f32.mrb[0].mxu0
      %2202 = vmatprep.mubr.f32.mxu0 0.0
      %2203 = vmatmul.mubr.f32.gmra.mrb[0].mxu0 %v2033
      %v2204 = vpop.f32.mrb[0].mxu0
      %v2205 = vadd.f32 0.0, %v2204
      %v2206 = vpop.f32.mrb[0].mxu0
      %2207 = vmatprep.mubr.f32.mxu0 0.0
      %2208 = vmatmul.mubr.f32.gmra.mrb[0].mxu0 %v2036
      %v2209 = vpop.f32.mrb[0].mxu0
      %v2210 = vadd.f32 0.0, %v2209
      %v2211 = vpop.f32.mrb[0].mxu0
      %2212 = vmatprep.mubr.f32.mxu0 0.0
      %2213 = vmatmul.mubr.f32.gmra.mrb[0].mxu0 %v2039
      %v2214 = vpop.f32.mrb[0].mxu0
      %v2215 = vadd.f32 0.0, %v2214
      %v2216 = vpop.f32.mrb[0].mxu0
      %2217 = vmatprep.mubr.f32.mxu0 0.0
      %2218 = vmatmul.mubr.f32.gmra.mrb[0].mxu0 %v2042
      %v2219 = vpop.f32.mrb[0].mxu0
      %v2220 = vadd.f32 0.0, %v2219
      %v2221 = vpop.f32.mrb[0].mxu0
      %2222 = vmatprep.mubr.f32.mxu0 0.0
      %2223 = vmatmul.mubr.f32.gmra.mrb[0].mxu0 %v2045
      %v2224 = vpop.f32.mrb[0].mxu0
      %v2225 = vadd.f32 0.0, %v2224
      %v2226 = vpop.f32.mrb[0].mxu0
      %2227 = vmatprep.mubr.f32.mxu0 0.0
      %2228 = vmatmul.mubr.f32.gmra.mrb[0].mxu0 %v2048
      %v2229 = vpop.f32.mrb[0].mxu0
      %v2230 = vadd.f32 0.0, %v2229
      %v2231 = vpop.f32.mrb[0].mxu0
      %2232 = vmatprep.mubr.f32.mxu0 0.0
      %2233 = vmatmul.mubr.f32.gmra.mrb[0].mxu0 %v2051
      %v2234 = vpop.f32.mrb[0].mxu0
      %v2235 = vadd.f32 0.0, %v2234
      %v2236 = vpop.f32.mrb[0].mxu0
      %2237 = vmatprep.mubr.f32.mxu0 0.0
      %2238 = vmatmul.mubr.f32.gmra.mrb[0].mxu0 %v2054
      %v2239 = vpop.f32.mrb[0].mxu0
      %v2240 = vadd.f32 0.0, %v2239
      %v2241 = vpop.f32.mrb[0].mxu0
      %2242 = vmatprep.mubr.f32.mxu0 0.0
      %2243 = vmatmul.mubr.f32.gmra.mrb[0].mxu0 %v2057
      %v2244 = vpop.f32.mrb[0].mxu0
      %v2245 = vadd.f32 0.0, %v2244
      %v2246 = vpop.f32.mrb[0].mxu0
      %2247 = vmatprep.mubr.f32.mxu0 0.0
      %2248 = vmatmul.mubr.f32.gmra.mrb[0].mxu0 %v2060
      %v2249 = vpop.f32.mrb[0].mxu0
      %v2250 = vadd.f32 0.0, %v2249
      %v2251 = vpop.f32.mrb[0].mxu0
      %2252 = vmatprep.mubr.f32.mxu0 0.0
      %2253 = vmatmul.mubr.f32.gmra.mrb[0].mxu0 %v2063
      %v2254 = vpop.f32.mrb[0].mxu0
      %v2255 = vadd.f32 0.0, %v2254
      %v2256 = vpop.f32.mrb[0].mxu0
      %2257 = vmatprep.mubr.f32.mxu0 0.0
      %2258 = vmatmul.mubr.f32.gmra.mrb[0].mxu0 %v2066
      %v2259 = vpop.f32.mrb[0].mxu0
      %v2260 = vadd.f32 0.0, %v2259
      %v2261 = vpop.f32.mrb[0].mxu0
      %2262 = vmatprep.mubr.f32.mxu0 0.0
      %2263 = vmatmul.mubr.f32.gmra.mrb[0].mxu0 %v2069
      %v2264 = vpop.f32.mrb[0].mxu0
      %v2265 = vadd.f32 0.0, %v2264
      %v2266 = vpop.f32.mrb[0].mxu0
      %2267 = vmatprep.mubr.f32.mxu0 0.0
      %2268 = vmatmul.mubr.f32.gmra.mrb[0].mxu0 %v2072
      %v2269 = vpop.f32.mrb[0].mxu0
      %v2270 = vadd.f32 0.0, %v2269
      %v2271 = vpop.f32.mrb[0].mxu0
      %2272 = vmatprep.mubr.f32.mxu0 0.0
      %2273 = vmatmul.mubr.f32.gmra.mrb[0].mxu0 %v2075
      %v2274 = vpop.f32.mrb[0].mxu0
      %v2275 = vadd.f32 0.0, %v2274
      %v2276 = vpop.f32.mrb[0].mxu0
      %2277 = vmatprep.mubr.f32.mxu0 0.0
      %2278 = vmatmul.mubr.f32.gmra.mrb[0].mxu0 %v2078
      %v2279 = vpop.f32.mrb[0].mxu0
      %v2280 = vadd.f32 0.0, %v2279
      %v2281 = vpop.f32.mrb[0].mxu0
      %2282 = vmatprep.mubr.f32.mxu0 0.0
      %2283 = vmatmul.mubr.f32.gmra.mrb[0].mxu0 %v2081
      %v2284 = vpop.f32.mrb[0].mxu0
      %v2285 = vadd.f32 0.0, %v2284
      %v2286 = vpop.f32.mrb[0].mxu0
      %2287 = vmatprep.mubr.f32.mxu0 0.0
      %2288 = vmatmul.mubr.f32.gmra.mrb[0].mxu0 %v2084
      %v2289 = vpop.f32.mrb[0].mxu0
      %v2290 = vadd.f32 0.0, %v2289
      %v2291 = vpop.f32.mrb[0].mxu0
      %2292 = vmatprep.mubr.f32.mxu0 0.0
      %2293 = vmatmul.mubr.f32.gmra.mrb[0].mxu0 %v2087
      %v2294 = vpop.f32.mrb[0].mxu0
      %v2295 = vadd.f32 0.0, %v2294
      %v2296 = vpop.f32.mrb[0].mxu0
      %2297 = vmatprep.mubr.f32.mxu0 0.0
      %2298 = vmatmul.mubr.f32.gmra.mrb[0].mxu0 %v2090
      %v2299 = vpop.f32.mrb[0].mxu0
      %v2300 = vadd.f32 0.0, %v2299
      %v2301 = vpop.f32.mrb[0].mxu0
      %2302 = vmatprep.mubr.f32.mxu0 0.0
      %2303 = vmatmul.mubr.f32.gmra.mrb[0].mxu0 %v2093
      %v2304 = vpop.f32.mrb[0].mxu0
      %v2305 = vadd.f32 0.0, %v2304
      %v2306 = vpop.f32.mrb[0].mxu0
      %2307 = vmatprep.mubr.f32.mxu0 0.0
      %2308 = vmatmul.mubr.f32.gmra.mrb[0].mxu0 %v2096
      %v2309 = vpop.f32.mrb[0].mxu0
      %v2310 = vadd.f32 0.0, %v2309
      %v2311 = vpop.f32.mrb[0].mxu0
      %2312 = vmatprep.mubr.f32.mxu0 0.0
      %2313 = vmatmul.mubr.f32.gmra.mrb[0].mxu0 %v2099
      %v2314 = vpop.f32.mrb[0].mxu0
      %v2315 = vadd.f32 0.0, %v2314
      %v2316 = vpop.f32.mrb[0].mxu0
      %2317 = vmatprep.mubr.f32.mxu0 0.0
      %2318 = vmatmul.mubr.f32.gmra.mrb[0].mxu0 %v2102
      %v2319 = vpop.f32.mrb[0].mxu0
      %v2320 = vadd.f32 0.0, %v2319
      %v2321 = vpop.f32.mrb[0].mxu0
      %2322 = vmatprep.mubr.f32.mxu0 0.0
      %2323 = vmatmul.mubr.f32.gmra.mrb[0].mxu0 %v2105
      %v2324 = vpop.f32.mrb[0].mxu0
      %v2325 = vadd.f32 0.0, %v2324
      %v2326 = vpop.f32.mrb[0].mxu0
      %2327 = vmatprep.mubr.f32.mxu0 0.0
      %2328 = vmatmul.mubr.f32.gmra.mrb[0].mxu0 %v2108
      %v2329 = vpop.f32.mrb[0].mxu0
      %v2330 = vadd.f32 0.0, %v2329
      %v2331 = vpop.f32.mrb[0].mxu0
      %2332 = vmatprep.mubr.f32.mxu0 0.0
      %2333 = vmatmul.mubr.f32.gmra.mrb[0].mxu0 %v2111
      %v2334 = vpop.f32.mrb[0].mxu0
      %v2335 = vadd.f32 0.0, %v2334
      %v2336 = vpop.f32.mrb[0].mxu0
      %2337 = vdwg.mxu0
      %v2338 = vadd.f32 %v1951, %v2180
      %v2339 = vadd.f32 %v1952, %v2185
      %v2340 = vadd.f32 %v1953, %v2190
      %v2341 = vadd.f32 %v1954, %v2195
      %v2342 = vadd.f32 %v1955, %v2200
      %v2343 = vadd.f32 %v1956, %v2205
      %v2344 = vadd.f32 %v1957, %v2210
      %v2345 = vadd.f32 %v1958, %v2215
      %v2346 = vadd.f32 %v1959, %v2220
      %v2347 = vadd.f32 %v1960, %v2225
      %v2348 = vadd.f32 %v1961, %v2230
      %v2349 = vadd.f32 %v1962, %v2235
      %v2350 = vadd.f32 %v1963, %v2240
      %v2351 = vadd.f32 %v1964, %v2245
      %v2352 = vadd.f32 %v1965, %v2250
      %v2353 = vadd.f32 %v1966, %v2255
      %v2354 = vadd.f32 %v1967, %v2260
      %v2355 = vadd.f32 %v1968, %v2265
      %v2356 = vadd.f32 %v1969, %v2270
      %v2357 = vadd.f32 %v1970, %v2275
      %v2358 = vadd.f32 %v1971, %v2280
      %v2359 = vadd.f32 %v1972, %v2285
      %v2360 = vadd.f32 %v1973, %v2290
      %v2361 = vadd.f32 %v1974, %v2295
      %v2362 = vadd.f32 %v1975, %v2300
      %v2363 = vadd.f32 %v1976, %v2305
      %v2364 = vadd.f32 %v1977, %v2310
      %v2365 = vadd.f32 %v1978, %v2315
      %v2366 = vadd.f32 %v1979, %v2320
      %v2367 = vadd.f32 %v1980, %v2325
      %v2368 = vadd.f32 %v1981, %v2330
      %v2369 = vadd.f32 %v1982, %v2335
      %v2370 = vld [vmem:[%s467 + $0x2] sm:$0xff]
      %v2371 = vld [vmem:[%s467 + $0xa] sm:$0xff]
      %v2372 = vld [vmem:[%s467 + $0x1a] sm:$0xff]
      %v2373 = vld [vmem:[%s467 + $0x22] sm:$0xff]
      %v2374 = vld [vmem:[%s467 + $0x32] sm:$0xff]
      %v2375 = vld [vmem:[%s467 + $0x3a] sm:$0xff]
      %v2376 = vld [vmem:[%s467 + $0x4a] sm:$0xff]
      %v2377 = vld [vmem:[%s467 + $0x52] sm:$0xff]
      %v2378 = vld [vmem:[%s467 + $0x62] sm:$0xff]
      %v2379 = vld [vmem:[%s467 + $0x6a] sm:$0xff]
      %v2380 = vld [vmem:[%s467 + $0x7a] sm:$0xff]
      %v2381 = vld [vmem:[%s467 + $0x82] sm:$0xff]
      %v2382 = vld [vmem:[%s467 + $0x92] sm:$0xff]
      %v2383 = vld [vmem:[%s467 + $0x9a] sm:$0xff]
      %v2384 = vld [vmem:[%s467 + $0xaa] sm:$0xff]
      %v2385 = vld [vmem:[%s467 + $0xb2] sm:$0xff]
      %v2386 = vld [vmem:[%s467 + $0xc2] sm:$0xff]
      %v2387 = vld [vmem:[%s467 + $0xca] sm:$0xff]
      %v2388 = vld [vmem:[%s467 + $0xda] sm:$0xff]
      %v2389 = vld [vmem:[%s467 + $0xe2] sm:$0xff]
      %v2390 = vld [vmem:[%s467 + $0xf2] sm:$0xff]
      %v2391 = vld [vmem:[%s467 + $0xfa] sm:$0xff]
      %v2392 = vld [vmem:[%s467 + $0x10a] sm:$0xff]
      %v2393 = vld [vmem:[%s467 + $0x112] sm:$0xff]
      %v2394 = vld [vmem:[%s467 + $0x122] sm:$0xff]
      %v2395 = vld [vmem:[%s467 + $0x12a] sm:$0xff]
      %v2396 = vld [vmem:[%s467 + $0x13a] sm:$0xff]
      %v2397 = vld [vmem:[%s467 + $0x142] sm:$0xff]
      %v2398 = vld [vmem:[%s467 + $0x152] sm:$0xff]
      %v2399 = vld [vmem:[%s467 + $0x15a] sm:$0xff]
      %v2400 = vld [vmem:[%s467 + $0x16a] sm:$0xff]
      %v2401 = vld [vmem:[%s467 + $0x172] sm:$0xff]
      %s2402 = scalar_lea.vmem %s3, 40
      %v2403 = vld [vmem:[%s2402] sm:$0xff]
      %v2405 = vsel %vm421, %v2370, 0
      %v2408 = vsel %vm421, %v2371, 0
      %v2411 = vsel %vm421, %v2372, 0
      %v2414 = vsel %vm421, %v2373, 0
      %v2417 = vsel %vm421, %v2374, 0
      %v2420 = vsel %vm421, %v2375, 0
      %v2423 = vsel %vm421, %v2376, 0
      %v2426 = vsel %vm421, %v2377, 0
      %v2429 = vsel %vm421, %v2378, 0
      %v2432 = vsel %vm421, %v2379, 0
      %v2435 = vsel %vm421, %v2380, 0
      %v2438 = vsel %vm421, %v2381, 0
      %v2441 = vsel %vm421, %v2382, 0
      %v2444 = vsel %vm421, %v2383, 0
      %v2447 = vsel %vm421, %v2384, 0
      %v2450 = vsel %vm421, %v2385, 0
      %v2453 = vsel %vm421, %v2386, 0
      %v2456 = vsel %vm421, %v2387, 0
      %v2459 = vsel %vm421, %v2388, 0
      %v2462 = vsel %vm421, %v2389, 0
      %v2465 = vsel %vm421, %v2390, 0
      %v2468 = vsel %vm421, %v2391, 0
      %v2471 = vsel %vm421, %v2392, 0
      %v2474 = vsel %vm421, %v2393, 0
      %v2477 = vsel %vm421, %v2394, 0
      %v2480 = vsel %vm421, %v2395, 0
      %v2483 = vsel %vm421, %v2396, 0
      %v2486 = vsel %vm421, %v2397, 0
      %v2489 = vsel %vm421, %v2398, 0
      %v2492 = vsel %vm421, %v2399, 0
      %v2495 = vsel %vm421, %v2400, 0
      %v2498 = vsel %vm421, %v2401, 0
      %2500 = vmatprep.subr.mxu0 0.0
      %2501 = vmatpush1.msra.mxu0 %v2403
      %2502 = vmatprep.subr.mxu0 0.0
      %2503 = vmatpush1.msra.mxu0 0.0
      %2504 = vmatprep.subr.mxu0 0.0
      %2505 = vmatpush1.msra.mxu0 0.0
      %2506 = vmatprep.subr.mxu0 0.0
      %2507 = vmatpush1.msra.mxu0 0.0
      %2508 = vmatprep.subr.mxu0 0.0
      %2509 = vmatpush1.msra.mxu0 0.0
      %2510 = vmatprep.subr.mxu0 0.0
      %2511 = vmatpush1.msra.mxu0 0.0
      %2512 = vmatprep.subr.mxu0 0.0
      %2513 = vmatpush1.msra.mxu0 0.0
      %2514 = vmatprep.subr.mxu0 0.0
      %2515 = vmatpush1.msra.mxu0 0.0
      %2516 = vmatprep.subr.mxu0 0.0
      %2517 = vmatpush1.msra.mxu0 0.0
      %2518 = vmatprep.subr.mxu0 0.0
      %2519 = vmatpush1.msra.mxu0 0.0
      %2520 = vmatprep.subr.mxu0 0.0
      %2521 = vmatpush1.msra.mxu0 0.0
      %2522 = vmatprep.subr.mxu0 0.0
      %2523 = vmatpush1.msra.mxu0 0.0
      %2524 = vmatprep.subr.mxu0 0.0
      %2525 = vmatpush1.msra.mxu0 0.0
      %2526 = vmatprep.subr.mxu0 0.0
      %2527 = vmatpush1.msra.mxu0 0.0
      %2528 = vmatprep.subr.mxu0 0.0
      %2529 = vmatpush1.msra.mxu0 0.0
      %2530 = vmatprep.subr.mxu0 0.0
      %2531 = vmatpush1.msra.mxu0 0.0
      %2532 = vmatprep.subr.mxu0 0.0
      %2533 = vmatpush1.msra.mxu0 0.0
      %2534 = vmatprep.subr.mxu0 0.0
      %2535 = vmatpush1.msra.mxu0 0.0
      %2536 = vmatprep.subr.mxu0 0.0
      %2537 = vmatpush1.msra.mxu0 0.0
      %2538 = vmatprep.subr.mxu0 0.0
      %2539 = vmatpush1.msra.mxu0 0.0
      %2540 = vmatprep.subr.mxu0 0.0
      %2541 = vmatpush1.msra.mxu0 0.0
      %2542 = vmatprep.subr.mxu0 0.0
      %2543 = vmatpush1.msra.mxu0 0.0
      %2544 = vmatprep.subr.mxu0 0.0
      %2545 = vmatpush1.msra.mxu0 0.0
      %2546 = vmatprep.subr.mxu0 0.0
      %2547 = vmatpush1.msra.mxu0 0.0
      %2548 = vmatprep.subr.mxu0 0.0
      %2549 = vmatpush1.msra.mxu0 0.0
      %2550 = vmatprep.subr.mxu0 0.0
      %2551 = vmatpush1.msra.mxu0 0.0
      %2552 = vmatprep.subr.mxu0 0.0
      %2553 = vmatpush1.msra.mxu0 0.0
      %2554 = vmatprep.subr.mxu0 0.0
      %2555 = vmatpush1.msra.mxu0 0.0
      %2556 = vmatprep.subr.mxu0 0.0
      %2557 = vmatpush1.msra.mxu0 0.0
      %2558 = vmatprep.subr.mxu0 0.0
      %2559 = vmatpush1.msra.mxu0 0.0
      %2560 = vmatprep.subr.mxu0 0.0
      %2561 = vmatpush1.msra.mxu0 0.0
      %2562 = vmatprep.subr.mxu0 0.0
      %2563 = vmatpush1.msra.mxu0 0.0
      %2564 = vmatprep.mubr.f32.mxu0 0.0
      %2565 = vmatmul.mubr.f32.gmra.mrb[0].mxu0 %v2405
      %v2566 = vpop.f32.mrb[0].mxu0
      %v2567 = vadd.f32 0.0, %v2566
      %v2568 = vpop.f32.mrb[0].mxu0
      %2569 = vmatprep.mubr.f32.mxu0 0.0
      %2570 = vmatmul.mubr.f32.gmra.mrb[0].mxu0 %v2408
      %v2571 = vpop.f32.mrb[0].mxu0
      %v2572 = vadd.f32 0.0, %v2571
      %v2573 = vpop.f32.mrb[0].mxu0
      %2574 = vmatprep.mubr.f32.mxu0 0.0
      %2575 = vmatmul.mubr.f32.gmra.mrb[0].mxu0 %v2411
      %v2576 = vpop.f32.mrb[0].mxu0
      %v2577 = vadd.f32 0.0, %v2576
      %v2578 = vpop.f32.mrb[0].mxu0
      %2579 = vmatprep.mubr.f32.mxu0 0.0
      %2580 = vmatmul.mubr.f32.gmra.mrb[0].mxu0 %v2414
      %v2581 = vpop.f32.mrb[0].mxu0
      %v2582 = vadd.f32 0.0, %v2581
      %v2583 = vpop.f32.mrb[0].mxu0
      %2584 = vmatprep.mubr.f32.mxu0 0.0
      %2585 = vmatmul.mubr.f32.gmra.mrb[0].mxu0 %v2417
      %v2586 = vpop.f32.mrb[0].mxu0
      %v2587 = vadd.f32 0.0, %v2586
      %v2588 = vpop.f32.mrb[0].mxu0
      %2589 = vmatprep.mubr.f32.mxu0 0.0
      %2590 = vmatmul.mubr.f32.gmra.mrb[0].mxu0 %v2420
      %v2591 = vpop.f32.mrb[0].mxu0
      %v2592 = vadd.f32 0.0, %v2591
      %v2593 = vpop.f32.mrb[0].mxu0
      %2594 = vmatprep.mubr.f32.mxu0 0.0
      %2595 = vmatmul.mubr.f32.gmra.mrb[0].mxu0 %v2423
      %v2596 = vpop.f32.mrb[0].mxu0
      %v2597 = vadd.f32 0.0, %v2596
      %v2598 = vpop.f32.mrb[0].mxu0
      %2599 = vmatprep.mubr.f32.mxu0 0.0
      %2600 = vmatmul.mubr.f32.gmra.mrb[0].mxu0 %v2426
      %v2601 = vpop.f32.mrb[0].mxu0
      %v2602 = vadd.f32 0.0, %v2601
      %v2603 = vpop.f32.mrb[0].mxu0
      %2604 = vmatprep.mubr.f32.mxu0 0.0
      %2605 = vmatmul.mubr.f32.gmra.mrb[0].mxu0 %v2429
      %v2606 = vpop.f32.mrb[0].mxu0
      %v2607 = vadd.f32 0.0, %v2606
      %v2608 = vpop.f32.mrb[0].mxu0
      %2609 = vmatprep.mubr.f32.mxu0 0.0
      %2610 = vmatmul.mubr.f32.gmra.mrb[0].mxu0 %v2432
      %v2611 = vpop.f32.mrb[0].mxu0
      %v2612 = vadd.f32 0.0, %v2611
      %v2613 = vpop.f32.mrb[0].mxu0
      %2614 = vmatprep.mubr.f32.mxu0 0.0
      %2615 = vmatmul.mubr.f32.gmra.mrb[0].mxu0 %v2435
      %v2616 = vpop.f32.mrb[0].mxu0
      %v2617 = vadd.f32 0.0, %v2616
      %v2618 = vpop.f32.mrb[0].mxu0
      %2619 = vmatprep.mubr.f32.mxu0 0.0
      %2620 = vmatmul.mubr.f32.gmra.mrb[0].mxu0 %v2438
      %v2621 = vpop.f32.mrb[0].mxu0
      %v2622 = vadd.f32 0.0, %v2621
      %v2623 = vpop.f32.mrb[0].mxu0
      %2624 = vmatprep.mubr.f32.mxu0 0.0
      %2625 = vmatmul.mubr.f32.gmra.mrb[0].mxu0 %v2441
      %v2626 = vpop.f32.mrb[0].mxu0
      %v2627 = vadd.f32 0.0, %v2626
      %v2628 = vpop.f32.mrb[0].mxu0
      %2629 = vmatprep.mubr.f32.mxu0 0.0
      %2630 = vmatmul.mubr.f32.gmra.mrb[0].mxu0 %v2444
      %v2631 = vpop.f32.mrb[0].mxu0
      %v2632 = vadd.f32 0.0, %v2631
      %v2633 = vpop.f32.mrb[0].mxu0
      %2634 = vmatprep.mubr.f32.mxu0 0.0
      %2635 = vmatmul.mubr.f32.gmra.mrb[0].mxu0 %v2447
      %v2636 = vpop.f32.mrb[0].mxu0
      %v2637 = vadd.f32 0.0, %v2636
      %v2638 = vpop.f32.mrb[0].mxu0
      %2639 = vmatprep.mubr.f32.mxu0 0.0
      %2640 = vmatmul.mubr.f32.gmra.mrb[0].mxu0 %v2450
      %v2641 = vpop.f32.mrb[0].mxu0
      %v2642 = vadd.f32 0.0, %v2641
      %v2643 = vpop.f32.mrb[0].mxu0
      %2644 = vmatprep.mubr.f32.mxu0 0.0
      %2645 = vmatmul.mubr.f32.gmra.mrb[0].mxu0 %v2453
      %v2646 = vpop.f32.mrb[0].mxu0
      %v2647 = vadd.f32 0.0, %v2646
      %v2648 = vpop.f32.mrb[0].mxu0
      %2649 = vmatprep.mubr.f32.mxu0 0.0
      %2650 = vmatmul.mubr.f32.gmra.mrb[0].mxu0 %v2456
      %v2651 = vpop.f32.mrb[0].mxu0
      %v2652 = vadd.f32 0.0, %v2651
      %v2653 = vpop.f32.mrb[0].mxu0
      %2654 = vmatprep.mubr.f32.mxu0 0.0
      %2655 = vmatmul.mubr.f32.gmra.mrb[0].mxu0 %v2459
      %v2656 = vpop.f32.mrb[0].mxu0
      %v2657 = vadd.f32 0.0, %v2656
      %v2658 = vpop.f32.mrb[0].mxu0
      %2659 = vmatprep.mubr.f32.mxu0 0.0
      %2660 = vmatmul.mubr.f32.gmra.mrb[0].mxu0 %v2462
      %v2661 = vpop.f32.mrb[0].mxu0
      %v2662 = vadd.f32 0.0, %v2661
      %v2663 = vpop.f32.mrb[0].mxu0
      %2664 = vmatprep.mubr.f32.mxu0 0.0
      %2665 = vmatmul.mubr.f32.gmra.mrb[0].mxu0 %v2465
      %v2666 = vpop.f32.mrb[0].mxu0
      %v2667 = vadd.f32 0.0, %v2666
      %v2668 = vpop.f32.mrb[0].mxu0
      %2669 = vmatprep.mubr.f32.mxu0 0.0
      %2670 = vmatmul.mubr.f32.gmra.mrb[0].mxu0 %v2468
      %v2671 = vpop.f32.mrb[0].mxu0
      %v2672 = vadd.f32 0.0, %v2671
      %v2673 = vpop.f32.mrb[0].mxu0
      %2674 = vmatprep.mubr.f32.mxu0 0.0
      %2675 = vmatmul.mubr.f32.gmra.mrb[0].mxu0 %v2471
      %v2676 = vpop.f32.mrb[0].mxu0
      %v2677 = vadd.f32 0.0, %v2676
      %v2678 = vpop.f32.mrb[0].mxu0
      %2679 = vmatprep.mubr.f32.mxu0 0.0
      %2680 = vmatmul.mubr.f32.gmra.mrb[0].mxu0 %v2474
      %v2681 = vpop.f32.mrb[0].mxu0
      %v2682 = vadd.f32 0.0, %v2681
      %v2683 = vpop.f32.mrb[0].mxu0
      %2684 = vmatprep.mubr.f32.mxu0 0.0
      %2685 = vmatmul.mubr.f32.gmra.mrb[0].mxu0 %v2477
      %v2686 = vpop.f32.mrb[0].mxu0
      %v2687 = vadd.f32 0.0, %v2686
      %v2688 = vpop.f32.mrb[0].mxu0
      %2689 = vmatprep.mubr.f32.mxu0 0.0
      %2690 = vmatmul.mubr.f32.gmra.mrb[0].mxu0 %v2480
      %v2691 = vpop.f32.mrb[0].mxu0
      %v2692 = vadd.f32 0.0, %v2691
      %v2693 = vpop.f32.mrb[0].mxu0
      %2694 = vmatprep.mubr.f32.mxu0 0.0
      %2695 = vmatmul.mubr.f32.gmra.mrb[0].mxu0 %v2483
      %v2696 = vpop.f32.mrb[0].mxu0
      %v2697 = vadd.f32 0.0, %v2696
      %v2698 = vpop.f32.mrb[0].mxu0
      %2699 = vmatprep.mubr.f32.mxu0 0.0
      %2700 = vmatmul.mubr.f32.gmra.mrb[0].mxu0 %v2486
      %v2701 = vpop.f32.mrb[0].mxu0
      %v2702 = vadd.f32 0.0, %v2701
      %v2703 = vpop.f32.mrb[0].mxu0
      %2704 = vmatprep.mubr.f32.mxu0 0.0
      %2705 = vmatmul.mubr.f32.gmra.mrb[0].mxu0 %v2489
      %v2706 = vpop.f32.mrb[0].mxu0
      %v2707 = vadd.f32 0.0, %v2706
      %v2708 = vpop.f32.mrb[0].mxu0
      %2709 = vmatprep.mubr.f32.mxu0 0.0
      %2710 = vmatmul.mubr.f32.gmra.mrb[0].mxu0 %v2492
      %v2711 = vpop.f32.mrb[0].mxu0
      %v2712 = vadd.f32 0.0, %v2711
      %v2713 = vpop.f32.mrb[0].mxu0
      %2714 = vmatprep.mubr.f32.mxu0 0.0
      %2715 = vmatmul.mubr.f32.gmra.mrb[0].mxu0 %v2495
      %v2716 = vpop.f32.mrb[0].mxu0
      %v2717 = vadd.f32 0.0, %v2716
      %v2718 = vpop.f32.mrb[0].mxu0
      %2719 = vmatprep.mubr.f32.mxu0 0.0
      %2720 = vmatmul.mubr.f32.gmra.mrb[0].mxu0 %v2498
      %v2721 = vpop.f32.mrb[0].mxu0
      %v2722 = vadd.f32 0.0, %v2721
      %v2723 = vpop.f32.mrb[0].mxu0
      %2724 = vdwg.mxu0
      %v2725 = vadd.f32 %v2338, %v2567
      %v2726 = vadd.f32 %v2339, %v2572
      %v2727 = vadd.f32 %v2340, %v2577
      %v2728 = vadd.f32 %v2341, %v2582
      %v2729 = vadd.f32 %v2342, %v2587
      %v2730 = vadd.f32 %v2343, %v2592
      %v2731 = vadd.f32 %v2344, %v2597
      %v2732 = vadd.f32 %v2345, %v2602
      %v2733 = vadd.f32 %v2346, %v2607
      %v2734 = vadd.f32 %v2347, %v2612
      %v2735 = vadd.f32 %v2348, %v2617
      %v2736 = vadd.f32 %v2349, %v2622
      %v2737 = vadd.f32 %v2350, %v2627
      %v2738 = vadd.f32 %v2351, %v2632
      %v2739 = vadd.f32 %v2352, %v2637
      %v2740 = vadd.f32 %v2353, %v2642
      %v2741 = vadd.f32 %v2354, %v2647
      %v2742 = vadd.f32 %v2355, %v2652
      %v2743 = vadd.f32 %v2356, %v2657
      %v2744 = vadd.f32 %v2357, %v2662
      %v2745 = vadd.f32 %v2358, %v2667
      %v2746 = vadd.f32 %v2359, %v2672
      %v2747 = vadd.f32 %v2360, %v2677
      %v2748 = vadd.f32 %v2361, %v2682
      %v2749 = vadd.f32 %v2362, %v2687
      %v2750 = vadd.f32 %v2363, %v2692
      %v2751 = vadd.f32 %v2364, %v2697
      %v2752 = vadd.f32 %v2365, %v2702
      %v2753 = vadd.f32 %v2366, %v2707
      %v2754 = vadd.f32 %v2367, %v2712
      %v2755 = vadd.f32 %v2368, %v2717
      %v2756 = vadd.f32 %v2369, %v2722
      %s2757 = scalar_lea.vmem [#allocation2], 48
      %v2758 = vld [vmem:[%s2757] sm:$0xff]
      %v2759 = vld [vmem:[%s2757 + $0x8] sm:$0xff]
      %v2760 = vld [vmem:[%s2757 + $0x18] sm:$0xff]
      %v2761 = vld [vmem:[%s2757 + $0x20] sm:$0xff]
      %v2762 = vld [vmem:[%s2757 + $0x30] sm:$0xff]
      %v2763 = vld [vmem:[%s2757 + $0x38] sm:$0xff]
      %v2764 = vld [vmem:[%s2757 + $0x48] sm:$0xff]
      %v2765 = vld [vmem:[%s2757 + $0x50] sm:$0xff]
      %v2766 = vld [vmem:[%s2757 + $0x60] sm:$0xff]
      %v2767 = vld [vmem:[%s2757 + $0x68] sm:$0xff]
      %v2768 = vld [vmem:[%s2757 + $0x78] sm:$0xff]
      %v2769 = vld [vmem:[%s2757 + $0x80] sm:$0xff]
      %v2770 = vld [vmem:[%s2757 + $0x90] sm:$0xff]
      %v2771 = vld [vmem:[%s2757 + $0x98] sm:$0xff]
      %v2772 = vld [vmem:[%s2757 + $0xa8] sm:$0xff]
      %v2773 = vld [vmem:[%s2757 + $0xb0] sm:$0xff]
      %v2774 = vld [vmem:[%s2757 + $0xc0] sm:$0xff]
      %v2775 = vld [vmem:[%s2757 + $0xc8] sm:$0xff]
      %v2776 = vld [vmem:[%s2757 + $0xd8] sm:$0xff]
      %v2777 = vld [vmem:[%s2757 + $0xe0] sm:$0xff]
      %v2778 = vld [vmem:[%s2757 + $0xf0] sm:$0xff]
      %v2779 = vld [vmem:[%s2757 + $0xf8] sm:$0xff]
      %v2780 = vld [vmem:[%s2757 + $0x108] sm:$0xff]
      %v2781 = vld [vmem:[%s2757 + $0x110] sm:$0xff]
      %v2782 = vld [vmem:[%s2757 + $0x120] sm:$0xff]
      %v2783 = vld [vmem:[%s2757 + $0x128] sm:$0xff]
      %v2784 = vld [vmem:[%s2757 + $0x138] sm:$0xff]
      %v2785 = vld [vmem:[%s2757 + $0x140] sm:$0xff]
      %v2786 = vld [vmem:[%s2757 + $0x150] sm:$0xff]
      %v2787 = vld [vmem:[%s2757 + $0x158] sm:$0xff]
      %v2788 = vld [vmem:[%s2757 + $0x168] sm:$0xff]
      %v2789 = vld [vmem:[%s2757 + $0x170] sm:$0xff]
      %s2790 = scalar_lea.vmem %s3, 48
      %v2791 = vld [vmem:[%s2790] sm:$0xff]
      %v2793 = vsel %vm421, %v2758, 0
      %v2796 = vsel %vm421, %v2759, 0
      %v2799 = vsel %vm421, %v2760, 0
      %v2802 = vsel %vm421, %v2761, 0
      %v2805 = vsel %vm421, %v2762, 0
      %v2808 = vsel %vm421, %v2763, 0
      %v2811 = vsel %vm421, %v2764, 0
      %v2814 = vsel %vm421, %v2765, 0
      %v2817 = vsel %vm421, %v2766, 0
      %v2820 = vsel %vm421, %v2767, 0
      %v2823 = vsel %vm421, %v2768, 0
      %v2826 = vsel %vm421, %v2769, 0
      %v2829 = vsel %vm421, %v2770, 0
      %v2832 = vsel %vm421, %v2771, 0
      %v2835 = vsel %vm421, %v2772, 0
      %v2838 = vsel %vm421, %v2773, 0
      %v2841 = vsel %vm421, %v2774, 0
      %v2844 = vsel %vm421, %v2775, 0
      %v2847 = vsel %vm421, %v2776, 0
      %v2850 = vsel %vm421, %v2777, 0
      %v2853 = vsel %vm421, %v2778, 0
      %v2856 = vsel %vm421, %v2779, 0
      %v2859 = vsel %vm421, %v2780, 0
      %v2862 = vsel %vm421, %v2781, 0
      %v2865 = vsel %vm421, %v2782, 0
      %v2868 = vsel %vm421, %v2783, 0
      %v2871 = vsel %vm421, %v2784, 0
      %v2874 = vsel %vm421, %v2785, 0
      %v2877 = vsel %vm421, %v2786, 0
      %v2880 = vsel %vm421, %v2787, 0
      %v2883 = vsel %vm421, %v2788, 0
      %v2886 = vsel %vm421, %v2789, 0
      %2888 = vmatprep.subr.mxu0 0.0
      %2889 = vmatpush1.msra.mxu0 %v2791
      %2890 = vmatprep.subr.mxu0 0.0
      %2891 = vmatpush1.msra.mxu0 0.0
      %2892 = vmatprep.subr.mxu0 0.0
      %2893 = vmatpush1.msra.mxu0 0.0
      %2894 = vmatprep.subr.mxu0 0.0
      %2895 = vmatpush1.msra.mxu0 0.0
      %2896 = vmatprep.subr.mxu0 0.0
      %2897 = vmatpush1.msra.mxu0 0.0
      %2898 = vmatprep.subr.mxu0 0.0
      %2899 = vmatpush1.msra.mxu0 0.0
      %2900 = vmatprep.subr.mxu0 0.0
      %2901 = vmatpush1.msra.mxu0 0.0
      %2902 = vmatprep.subr.mxu0 0.0
      %2903 = vmatpush1.msra.mxu0 0.0
      %2904 = vmatprep.subr.mxu0 0.0
      %2905 = vmatpush1.msra.mxu0 0.0
      %2906 = vmatprep.subr.mxu0 0.0
      %2907 = vmatpush1.msra.mxu0 0.0
      %2908 = vmatprep.subr.mxu0 0.0
      %2909 = vmatpush1.msra.mxu0 0.0
      %2910 = vmatprep.subr.mxu0 0.0
      %2911 = vmatpush1.msra.mxu0 0.0
      %2912 = vmatprep.subr.mxu0 0.0
      %2913 = vmatpush1.msra.mxu0 0.0
      %2914 = vmatprep.subr.mxu0 0.0
      %2915 = vmatpush1.msra.mxu0 0.0
      %2916 = vmatprep.subr.mxu0 0.0
      %2917 = vmatpush1.msra.mxu0 0.0
      %2918 = vmatprep.subr.mxu0 0.0
      %2919 = vmatpush1.msra.mxu0 0.0
      %2920 = vmatprep.subr.mxu0 0.0
      %2921 = vmatpush1.msra.mxu0 0.0
      %2922 = vmatprep.subr.mxu0 0.0
      %2923 = vmatpush1.msra.mxu0 0.0
      %2924 = vmatprep.subr.mxu0 0.0
      %2925 = vmatpush1.msra.mxu0 0.0
      %2926 = vmatprep.subr.mxu0 0.0
      %2927 = vmatpush1.msra.mxu0 0.0
      %2928 = vmatprep.subr.mxu0 0.0
      %2929 = vmatpush1.msra.mxu0 0.0
      %2930 = vmatprep.subr.mxu0 0.0
      %2931 = vmatpush1.msra.mxu0 0.0
      %2932 = vmatprep.subr.mxu0 0.0
      %2933 = vmatpush1.msra.mxu0 0.0
      %2934 = vmatprep.subr.mxu0 0.0
      %2935 = vmatpush1.msra.mxu0 0.0
      %2936 = vmatprep.subr.mxu0 0.0
      %2937 = vmatpush1.msra.mxu0 0.0
      %2938 = vmatprep.subr.mxu0 0.0
      %2939 = vmatpush1.msra.mxu0 0.0
      %2940 = vmatprep.subr.mxu0 0.0
      %2941 = vmatpush1.msra.mxu0 0.0
      %2942 = vmatprep.subr.mxu0 0.0
      %2943 = vmatpush1.msra.mxu0 0.0
      %2944 = vmatprep.subr.mxu0 0.0
      %2945 = vmatpush1.msra.mxu0 0.0
      %2946 = vmatprep.subr.mxu0 0.0
      %2947 = vmatpush1.msra.mxu0 0.0
      %2948 = vmatprep.subr.mxu0 0.0
      %2949 = vmatpush1.msra.mxu0 0.0
      %2950 = vmatprep.subr.mxu0 0.0
      %2951 = vmatpush1.msra.mxu0 0.0
      %2952 = vmatprep.mubr.f32.mxu0 0.0
      %2953 = vmatmul.mubr.f32.gmra.mrb[0].mxu0 %v2793
      %v2954 = vpop.f32.mrb[0].mxu0
      %v2955 = vadd.f32 0.0, %v2954
      %v2956 = vpop.f32.mrb[0].mxu0
      %2957 = vmatprep.mubr.f32.mxu0 0.0
      %2958 = vmatmul.mubr.f32.gmra.mrb[0].mxu0 %v2796
      %v2959 = vpop.f32.mrb[0].mxu0
      %v2960 = vadd.f32 0.0, %v2959
      %v2961 = vpop.f32.mrb[0].mxu0
      %2962 = vmatprep.mubr.f32.mxu0 0.0
      %2963 = vmatmul.mubr.f32.gmra.mrb[0].mxu0 %v2799
      %v2964 = vpop.f32.mrb[0].mxu0
      %v2965 = vadd.f32 0.0, %v2964
      %v2966 = vpop.f32.mrb[0].mxu0
      %2967 = vmatprep.mubr.f32.mxu0 0.0
      %2968 = vmatmul.mubr.f32.gmra.mrb[0].mxu0 %v2802
      %v2969 = vpop.f32.mrb[0].mxu0
      %v2970 = vadd.f32 0.0, %v2969
      %v2971 = vpop.f32.mrb[0].mxu0
      %2972 = vmatprep.mubr.f32.mxu0 0.0
      %2973 = vmatmul.mubr.f32.gmra.mrb[0].mxu0 %v2805
      %v2974 = vpop.f32.mrb[0].mxu0
      %v2975 = vadd.f32 0.0, %v2974
      %v2976 = vpop.f32.mrb[0].mxu0
      %2977 = vmatprep.mubr.f32.mxu0 0.0
      %2978 = vmatmul.mubr.f32.gmra.mrb[0].mxu0 %v2808
      %v2979 = vpop.f32.mrb[0].mxu0
      %v2980 = vadd.f32 0.0, %v2979
      %v2981 = vpop.f32.mrb[0].mxu0
      %2982 = vmatprep.mubr.f32.mxu0 0.0
      %2983 = vmatmul.mubr.f32.gmra.mrb[0].mxu0 %v2811
      %v2984 = vpop.f32.mrb[0].mxu0
      %v2985 = vadd.f32 0.0, %v2984
      %v2986 = vpop.f32.mrb[0].mxu0
      %2987 = vmatprep.mubr.f32.mxu0 0.0
      %2988 = vmatmul.mubr.f32.gmra.mrb[0].mxu0 %v2814
      %v2989 = vpop.f32.mrb[0].mxu0
      %v2990 = vadd.f32 0.0, %v2989
      %v2991 = vpop.f32.mrb[0].mxu0
      %2992 = vmatprep.mubr.f32.mxu0 0.0
      %2993 = vmatmul.mubr.f32.gmra.mrb[0].mxu0 %v2817
      %v2994 = vpop.f32.mrb[0].mxu0
      %v2995 = vadd.f32 0.0, %v2994
      %v2996 = vpop.f32.mrb[0].mxu0
      %2997 = vmatprep.mubr.f32.mxu0 0.0
      %2998 = vmatmul.mubr.f32.gmra.mrb[0].mxu0 %v2820
      %v2999 = vpop.f32.mrb[0].mxu0
      %v3000 = vadd.f32 0.0, %v2999
      %v3001 = vpop.f32.mrb[0].mxu0
      %3002 = vmatprep.mubr.f32.mxu0 0.0
      %3003 = vmatmul.mubr.f32.gmra.mrb[0].mxu0 %v2823
      %v3004 = vpop.f32.mrb[0].mxu0
      %v3005 = vadd.f32 0.0, %v3004
      %v3006 = vpop.f32.mrb[0].mxu0
      %3007 = vmatprep.mubr.f32.mxu0 0.0
      %3008 = vmatmul.mubr.f32.gmra.mrb[0].mxu0 %v2826
      %v3009 = vpop.f32.mrb[0].mxu0
      %v3010 = vadd.f32 0.0, %v3009
      %v3011 = vpop.f32.mrb[0].mxu0
      %3012 = vmatprep.mubr.f32.mxu0 0.0
      %3013 = vmatmul.mubr.f32.gmra.mrb[0].mxu0 %v2829
      %v3014 = vpop.f32.mrb[0].mxu0
      %v3015 = vadd.f32 0.0, %v3014
      %v3016 = vpop.f32.mrb[0].mxu0
      %3017 = vmatprep.mubr.f32.mxu0 0.0
      %3018 = vmatmul.mubr.f32.gmra.mrb[0].mxu0 %v2832
      %v3019 = vpop.f32.mrb[0].mxu0
      %v3020 = vadd.f32 0.0, %v3019
      %v3021 = vpop.f32.mrb[0].mxu0
      %3022 = vmatprep.mubr.f32.mxu0 0.0
      %3023 = vmatmul.mubr.f32.gmra.mrb[0].mxu0 %v2835
      %v3024 = vpop.f32.mrb[0].mxu0
      %v3025 = vadd.f32 0.0, %v3024
      %v3026 = vpop.f32.mrb[0].mxu0
      %3027 = vmatprep.mubr.f32.mxu0 0.0
      %3028 = vmatmul.mubr.f32.gmra.mrb[0].mxu0 %v2838
      %v3029 = vpop.f32.mrb[0].mxu0
      %v3030 = vadd.f32 0.0, %v3029
      %v3031 = vpop.f32.mrb[0].mxu0
      %3032 = vmatprep.mubr.f32.mxu0 0.0
      %3033 = vmatmul.mubr.f32.gmra.mrb[0].mxu0 %v2841
      %v3034 = vpop.f32.mrb[0].mxu0
      %v3035 = vadd.f32 0.0, %v3034
      %v3036 = vpop.f32.mrb[0].mxu0
      %3037 = vmatprep.mubr.f32.mxu0 0.0
      %3038 = vmatmul.mubr.f32.gmra.mrb[0].mxu0 %v2844
      %v3039 = vpop.f32.mrb[0].mxu0
      %v3040 = vadd.f32 0.0, %v3039
      %v3041 = vpop.f32.mrb[0].mxu0
      %3042 = vmatprep.mubr.f32.mxu0 0.0
      %3043 = vmatmul.mubr.f32.gmra.mrb[0].mxu0 %v2847
      %v3044 = vpop.f32.mrb[0].mxu0
      %v3045 = vadd.f32 0.0, %v3044
      %v3046 = vpop.f32.mrb[0].mxu0
      %3047 = vmatprep.mubr.f32.mxu0 0.0
      %3048 = vmatmul.mubr.f32.gmra.mrb[0].mxu0 %v2850
      %v3049 = vpop.f32.mrb[0].mxu0
      %v3050 = vadd.f32 0.0, %v3049
      %v3051 = vpop.f32.mrb[0].mxu0
      %3052 = vmatprep.mubr.f32.mxu0 0.0
      %3053 = vmatmul.mubr.f32.gmra.mrb[0].mxu0 %v2853
      %v3054 = vpop.f32.mrb[0].mxu0
      %v3055 = vadd.f32 0.0, %v3054
      %v3056 = vpop.f32.mrb[0].mxu0
      %3057 = vmatprep.mubr.f32.mxu0 0.0
      %3058 = vmatmul.mubr.f32.gmra.mrb[0].mxu0 %v2856
      %v3059 = vpop.f32.mrb[0].mxu0
      %v3060 = vadd.f32 0.0, %v3059
      %v3061 = vpop.f32.mrb[0].mxu0
      %3062 = vmatprep.mubr.f32.mxu0 0.0
      %3063 = vmatmul.mubr.f32.gmra.mrb[0].mxu0 %v2859
      %v3064 = vpop.f32.mrb[0].mxu0
      %v3065 = vadd.f32 0.0, %v3064
      %v3066 = vpop.f32.mrb[0].mxu0
      %3067 = vmatprep.mubr.f32.mxu0 0.0
      %3068 = vmatmul.mubr.f32.gmra.mrb[0].mxu0 %v2862
      %v3069 = vpop.f32.mrb[0].mxu0
      %v3070 = vadd.f32 0.0, %v3069
      %v3071 = vpop.f32.mrb[0].mxu0
      %3072 = vmatprep.mubr.f32.mxu0 0.0
      %3073 = vmatmul.mubr.f32.gmra.mrb[0].mxu0 %v2865
      %v3074 = vpop.f32.mrb[0].mxu0
      %v3075 = vadd.f32 0.0, %v3074
      %v3076 = vpop.f32.mrb[0].mxu0
      %3077 = vmatprep.mubr.f32.mxu0 0.0
      %3078 = vmatmul.mubr.f32.gmra.mrb[0].mxu0 %v2868
      %v3079 = vpop.f32.mrb[0].mxu0
      %v3080 = vadd.f32 0.0, %v3079
      %v3081 = vpop.f32.mrb[0].mxu0
      %3082 = vmatprep.mubr.f32.mxu0 0.0
      %3083 = vmatmul.mubr.f32.gmra.mrb[0].mxu0 %v2871
      %v3084 = vpop.f32.mrb[0].mxu0
      %v3085 = vadd.f32 0.0, %v3084
      %v3086 = vpop.f32.mrb[0].mxu0
      %3087 = vmatprep.mubr.f32.mxu0 0.0
      %3088 = vmatmul.mubr.f32.gmra.mrb[0].mxu0 %v2874
      %v3089 = vpop.f32.mrb[0].mxu0
      %v3090 = vadd.f32 0.0, %v3089
      %v3091 = vpop.f32.mrb[0].mxu0
      %3092 = vmatprep.mubr.f32.mxu0 0.0
      %3093 = vmatmul.mubr.f32.gmra.mrb[0].mxu0 %v2877
      %v3094 = vpop.f32.mrb[0].mxu0
      %v3095 = vadd.f32 0.0, %v3094
      %v3096 = vpop.f32.mrb[0].mxu0
      %3097 = vmatprep.mubr.f32.mxu0 0.0
      %3098 = vmatmul.mubr.f32.gmra.mrb[0].mxu0 %v2880
      %v3099 = vpop.f32.mrb[0].mxu0
      %v3100 = vadd.f32 0.0, %v3099
      %v3101 = vpop.f32.mrb[0].mxu0
      %3102 = vmatprep.mubr.f32.mxu0 0.0
      %3103 = vmatmul.mubr.f32.gmra.mrb[0].mxu0 %v2883
      %v3104 = vpop.f32.mrb[0].mxu0
      %v3105 = vadd.f32 0.0, %v3104
      %v3106 = vpop.f32.mrb[0].mxu0
      %3107 = vmatprep.mubr.f32.mxu0 0.0
      %3108 = vmatmul.mubr.f32.gmra.mrb[0].mxu0 %v2886
      %v3109 = vpop.f32.mrb[0].mxu0
      %v3110 = vadd.f32 0.0, %v3109
      %v3111 = vpop.f32.mrb[0].mxu0
      %3112 = vdwg.mxu0
      %v3113 = vadd.f32 %v2725, %v2955
      %v3114 = vadd.f32 %v2726, %v2960
      %v3115 = vadd.f32 %v2727, %v2965
      %v3116 = vadd.f32 %v2728, %v2970
      %v3117 = vadd.f32 %v2729, %v2975
      %v3118 = vadd.f32 %v2730, %v2980
      %v3119 = vadd.f32 %v2731, %v2985
      %v3120 = vadd.f32 %v2732, %v2990
      %v3121 = vadd.f32 %v2733, %v2995
      %v3122 = vadd.f32 %v2734, %v3000
      %v3123 = vadd.f32 %v2735, %v3005
      %v3124 = vadd.f32 %v2736, %v3010
      %v3125 = vadd.f32 %v2737, %v3015
      %v3126 = vadd.f32 %v2738, %v3020
      %v3127 = vadd.f32 %v2739, %v3025
      %v3128 = vadd.f32 %v2740, %v3030
      %v3129 = vadd.f32 %v2741, %v3035
      %v3130 = vadd.f32 %v2742, %v3040
      %v3131 = vadd.f32 %v2743, %v3045
      %v3132 = vadd.f32 %v2744, %v3050
      %v3133 = vadd.f32 %v2745, %v3055
      %v3134 = vadd.f32 %v2746, %v3060
      %v3135 = vadd.f32 %v2747, %v3065
      %v3136 = vadd.f32 %v2748, %v3070
      %v3137 = vadd.f32 %v2749, %v3075
      %v3138 = vadd.f32 %v2750, %v3080
      %v3139 = vadd.f32 %v2751, %v3085
      %v3140 = vadd.f32 %v2752, %v3090
      %v3141 = vadd.f32 %v2753, %v3095
      %v3142 = vadd.f32 %v2754, %v3100
      %v3143 = vadd.f32 %v2755, %v3105
      %v3144 = vadd.f32 %v2756, %v3110
      %v3145 = vld [vmem:[%s2757 + $0x1] sm:$0xff]
      %v3146 = vld [vmem:[%s2757 + $0x9] sm:$0xff]
      %v3147 = vld [vmem:[%s2757 + $0x19] sm:$0xff]
      %v3148 = vld [vmem:[%s2757 + $0x21] sm:$0xff]
      %v3149 = vld [vmem:[%s2757 + $0x31] sm:$0xff]
      %v3150 = vld [vmem:[%s2757 + $0x39] sm:$0xff]
      %v3151 = vld [vmem:[%s2757 + $0x49] sm:$0xff]
      %v3152 = vld [vmem:[%s2757 + $0x51] sm:$0xff]
      %v3153 = vld [vmem:[%s2757 + $0x61] sm:$0xff]
      %v3154 = vld [vmem:[%s2757 + $0x69] sm:$0xff]
      %v3155 = vld [vmem:[%s2757 + $0x79] sm:$0xff]
      %v3156 = vld [vmem:[%s2757 + $0x81] sm:$0xff]
      %v3157 = vld [vmem:[%s2757 + $0x91] sm:$0xff]
      %v3158 = vld [vmem:[%s2757 + $0x99] sm:$0xff]
      %v3159 = vld [vmem:[%s2757 + $0xa9] sm:$0xff]
      %v3160 = vld [vmem:[%s2757 + $0xb1] sm:$0xff]
      %v3161 = vld [vmem:[%s2757 + $0xc1] sm:$0xff]
      %v3162 = vld [vmem:[%s2757 + $0xc9] sm:$0xff]
      %v3163 = vld [vmem:[%s2757 + $0xd9] sm:$0xff]
      %v3164 = vld [vmem:[%s2757 + $0xe1] sm:$0xff]
      %v3165 = vld [vmem:[%s2757 + $0xf1] sm:$0xff]
      %v3166 = vld [vmem:[%s2757 + $0xf9] sm:$0xff]
      %v3167 = vld [vmem:[%s2757 + $0x109] sm:$0xff]
      %v3168 = vld [vmem:[%s2757 + $0x111] sm:$0xff]
      %v3169 = vld [vmem:[%s2757 + $0x121] sm:$0xff]
      %v3170 = vld [vmem:[%s2757 + $0x129] sm:$0xff]
      %v3171 = vld [vmem:[%s2757 + $0x139] sm:$0xff]
      %v3172 = vld [vmem:[%s2757 + $0x141] sm:$0xff]
      %v3173 = vld [vmem:[%s2757 + $0x151] sm:$0xff]
      %v3174 = vld [vmem:[%s2757 + $0x159] sm:$0xff]
      %v3175 = vld [vmem:[%s2757 + $0x169] sm:$0xff]
      %v3176 = vld [vmem:[%s2757 + $0x171] sm:$0xff]
      %s3177 = scalar_lea.vmem %s3, 56
      %v3178 = vld [vmem:[%s3177] sm:$0xff]
      %v3180 = vsel %vm421, %v3145, 0
      %v3183 = vsel %vm421, %v3146, 0
      %v3186 = vsel %vm421, %v3147, 0
      %v3189 = vsel %vm421, %v3148, 0
      %v3192 = vsel %vm421, %v3149, 0
      %v3195 = vsel %vm421, %v3150, 0
      %v3198 = vsel %vm421, %v3151, 0
      %v3201 = vsel %vm421, %v3152, 0
      %v3204 = vsel %vm421, %v3153, 0
      %v3207 = vsel %vm421, %v3154, 0
      %v3210 = vsel %vm421, %v3155, 0
      %v3213 = vsel %vm421, %v3156, 0
      %v3216 = vsel %vm421, %v3157, 0
      %v3219 = vsel %vm421, %v3158, 0
      %v3222 = vsel %vm421, %v3159, 0
      %v3225 = vsel %vm421, %v3160, 0
      %v3228 = vsel %vm421, %v3161, 0
      %v3231 = vsel %vm421, %v3162, 0
      %v3234 = vsel %vm421, %v3163, 0
      %v3237 = vsel %vm421, %v3164, 0
      %v3240 = vsel %vm421, %v3165, 0
      %v3243 = vsel %vm421, %v3166, 0
      %v3246 = vsel %vm421, %v3167, 0
      %v3249 = vsel %vm421, %v3168, 0
      %v3252 = vsel %vm421, %v3169, 0
      %v3255 = vsel %vm421, %v3170, 0
      %v3258 = vsel %vm421, %v3171, 0
      %v3261 = vsel %vm421, %v3172, 0
      %v3264 = vsel %vm421, %v3173, 0
      %v3267 = vsel %vm421, %v3174, 0
      %v3270 = vsel %vm421, %v3175, 0
      %v3273 = vsel %vm421, %v3176, 0
      %3275 = vmatprep.subr.mxu0 0.0
      %3276 = vmatpush1.msra.mxu0 %v3178
      %3277 = vmatprep.subr.mxu0 0.0
      %3278 = vmatpush1.msra.mxu0 0.0
      %3279 = vmatprep.subr.mxu0 0.0
      %3280 = vmatpush1.msra.mxu0 0.0
      %3281 = vmatprep.subr.mxu0 0.0
      %3282 = vmatpush1.msra.mxu0 0.0
      %3283 = vmatprep.subr.mxu0 0.0
      %3284 = vmatpush1.msra.mxu0 0.0
      %3285 = vmatprep.subr.mxu0 0.0
      %3286 = vmatpush1.msra.mxu0 0.0
      %3287 = vmatprep.subr.mxu0 0.0
      %3288 = vmatpush1.msra.mxu0 0.0
      %3289 = vmatprep.subr.mxu0 0.0
      %3290 = vmatpush1.msra.mxu0 0.0
      %3291 = vmatprep.subr.mxu0 0.0
      %3292 = vmatpush1.msra.mxu0 0.0
      %3293 = vmatprep.subr.mxu0 0.0
      %3294 = vmatpush1.msra.mxu0 0.0
      %3295 = vmatprep.subr.mxu0 0.0
      %3296 = vmatpush1.msra.mxu0 0.0
      %3297 = vmatprep.subr.mxu0 0.0
      %3298 = vmatpush1.msra.mxu0 0.0
      %3299 = vmatprep.subr.mxu0 0.0
      %3300 = vmatpush1.msra.mxu0 0.0
      %3301 = vmatprep.subr.mxu0 0.0
      %3302 = vmatpush1.msra.mxu0 0.0
      %3303 = vmatprep.subr.mxu0 0.0
      %3304 = vmatpush1.msra.mxu0 0.0
      %3305 = vmatprep.subr.mxu0 0.0
      %3306 = vmatpush1.msra.mxu0 0.0
      %3307 = vmatprep.subr.mxu0 0.0
      %3308 = vmatpush1.msra.mxu0 0.0
      %3309 = vmatprep.subr.mxu0 0.0
      %3310 = vmatpush1.msra.mxu0 0.0
      %3311 = vmatprep.subr.mxu0 0.0
      %3312 = vmatpush1.msra.mxu0 0.0
      %3313 = vmatprep.subr.mxu0 0.0
      %3314 = vmatpush1.msra.mxu0 0.0
      %3315 = vmatprep.subr.mxu0 0.0
      %3316 = vmatpush1.msra.mxu0 0.0
      %3317 = vmatprep.subr.mxu0 0.0
      %3318 = vmatpush1.msra.mxu0 0.0
      %3319 = vmatprep.subr.mxu0 0.0
      %3320 = vmatpush1.msra.mxu0 0.0
      %3321 = vmatprep.subr.mxu0 0.0
      %3322 = vmatpush1.msra.mxu0 0.0
      %3323 = vmatprep.subr.mxu0 0.0
      %3324 = vmatpush1.msra.mxu0 0.0
      %3325 = vmatprep.subr.mxu0 0.0
      %3326 = vmatpush1.msra.mxu0 0.0
      %3327 = vmatprep.subr.mxu0 0.0
      %3328 = vmatpush1.msra.mxu0 0.0
      %3329 = vmatprep.subr.mxu0 0.0
      %3330 = vmatpush1.msra.mxu0 0.0
      %3331 = vmatprep.subr.mxu0 0.0
      %3332 = vmatpush1.msra.mxu0 0.0
      %3333 = vmatprep.subr.mxu0 0.0
      %3334 = vmatpush1.msra.mxu0 0.0
      %3335 = vmatprep.subr.mxu0 0.0
      %3336 = vmatpush1.msra.mxu0 0.0
      %3337 = vmatprep.subr.mxu0 0.0
      %3338 = vmatpush1.msra.mxu0 0.0
      %3339 = vmatprep.mubr.f32.mxu0 0.0
      %3340 = vmatmul.mubr.f32.gmra.mrb[0].mxu0 %v3180
      %v3341 = vpop.f32.mrb[0].mxu0
      %v3342 = vadd.f32 0.0, %v3341
      %v3343 = vpop.f32.mrb[0].mxu0
      %3344 = vmatprep.mubr.f32.mxu0 0.0
      %3345 = vmatmul.mubr.f32.gmra.mrb[0].mxu0 %v3183
      %v3346 = vpop.f32.mrb[0].mxu0
      %v3347 = vadd.f32 0.0, %v3346
      %v3348 = vpop.f32.mrb[0].mxu0
      %3349 = vmatprep.mubr.f32.mxu0 0.0
      %3350 = vmatmul.mubr.f32.gmra.mrb[0].mxu0 %v3186
      %v3351 = vpop.f32.mrb[0].mxu0
      %v3352 = vadd.f32 0.0, %v3351
      %v3353 = vpop.f32.mrb[0].mxu0
      %3354 = vmatprep.mubr.f32.mxu0 0.0
      %3355 = vmatmul.mubr.f32.gmra.mrb[0].mxu0 %v3189
      %v3356 = vpop.f32.mrb[0].mxu0
      %v3357 = vadd.f32 0.0, %v3356
      %v3358 = vpop.f32.mrb[0].mxu0
      %3359 = vmatprep.mubr.f32.mxu0 0.0
      %3360 = vmatmul.mubr.f32.gmra.mrb[0].mxu0 %v3192
      %v3361 = vpop.f32.mrb[0].mxu0
      %v3362 = vadd.f32 0.0, %v3361
      %v3363 = vpop.f32.mrb[0].mxu0
      %3364 = vmatprep.mubr.f32.mxu0 0.0
      %3365 = vmatmul.mubr.f32.gmra.mrb[0].mxu0 %v3195
      %v3366 = vpop.f32.mrb[0].mxu0
      %v3367 = vadd.f32 0.0, %v3366
      %v3368 = vpop.f32.mrb[0].mxu0
      %3369 = vmatprep.mubr.f32.mxu0 0.0
      %3370 = vmatmul.mubr.f32.gmra.mrb[0].mxu0 %v3198
      %v3371 = vpop.f32.mrb[0].mxu0
      %v3372 = vadd.f32 0.0, %v3371
      %v3373 = vpop.f32.mrb[0].mxu0
      %3374 = vmatprep.mubr.f32.mxu0 0.0
      %3375 = vmatmul.mubr.f32.gmra.mrb[0].mxu0 %v3201
      %v3376 = vpop.f32.mrb[0].mxu0
      %v3377 = vadd.f32 0.0, %v3376
      %v3378 = vpop.f32.mrb[0].mxu0
      %3379 = vmatprep.mubr.f32.mxu0 0.0
      %3380 = vmatmul.mubr.f32.gmra.mrb[0].mxu0 %v3204
      %v3381 = vpop.f32.mrb[0].mxu0
      %v3382 = vadd.f32 0.0, %v3381
      %v3383 = vpop.f32.mrb[0].mxu0
      %3384 = vmatprep.mubr.f32.mxu0 0.0
      %3385 = vmatmul.mubr.f32.gmra.mrb[0].mxu0 %v3207
      %v3386 = vpop.f32.mrb[0].mxu0
      %v3387 = vadd.f32 0.0, %v3386
      %v3388 = vpop.f32.mrb[0].mxu0
      %3389 = vmatprep.mubr.f32.mxu0 0.0
      %3390 = vmatmul.mubr.f32.gmra.mrb[0].mxu0 %v3210
      %v3391 = vpop.f32.mrb[0].mxu0
      %v3392 = vadd.f32 0.0, %v3391
      %v3393 = vpop.f32.mrb[0].mxu0
      %3394 = vmatprep.mubr.f32.mxu0 0.0
      %3395 = vmatmul.mubr.f32.gmra.mrb[0].mxu0 %v3213
      %v3396 = vpop.f32.mrb[0].mxu0
      %v3397 = vadd.f32 0.0, %v3396
      %v3398 = vpop.f32.mrb[0].mxu0
      %3399 = vmatprep.mubr.f32.mxu0 0.0
      %3400 = vmatmul.mubr.f32.gmra.mrb[0].mxu0 %v3216
      %v3401 = vpop.f32.mrb[0].mxu0
      %v3402 = vadd.f32 0.0, %v3401
      %v3403 = vpop.f32.mrb[0].mxu0
      %3404 = vmatprep.mubr.f32.mxu0 0.0
      %3405 = vmatmul.mubr.f32.gmra.mrb[0].mxu0 %v3219
      %v3406 = vpop.f32.mrb[0].mxu0
      %v3407 = vadd.f32 0.0, %v3406
      %v3408 = vpop.f32.mrb[0].mxu0
      %3409 = vmatprep.mubr.f32.mxu0 0.0
      %3410 = vmatmul.mubr.f32.gmra.mrb[0].mxu0 %v3222
      %v3411 = vpop.f32.mrb[0].mxu0
      %v3412 = vadd.f32 0.0, %v3411
      %v3413 = vpop.f32.mrb[0].mxu0
      %3414 = vmatprep.mubr.f32.mxu0 0.0
      %3415 = vmatmul.mubr.f32.gmra.mrb[0].mxu0 %v3225
      %v3416 = vpop.f32.mrb[0].mxu0
      %v3417 = vadd.f32 0.0, %v3416
      %v3418 = vpop.f32.mrb[0].mxu0
      %3419 = vmatprep.mubr.f32.mxu0 0.0
      %3420 = vmatmul.mubr.f32.gmra.mrb[0].mxu0 %v3228
      %v3421 = vpop.f32.mrb[0].mxu0
      %v3422 = vadd.f32 0.0, %v3421
      %v3423 = vpop.f32.mrb[0].mxu0
      %3424 = vmatprep.mubr.f32.mxu0 0.0
      %3425 = vmatmul.mubr.f32.gmra.mrb[0].mxu0 %v3231
      %v3426 = vpop.f32.mrb[0].mxu0
      %v3427 = vadd.f32 0.0, %v3426
      %v3428 = vpop.f32.mrb[0].mxu0
      %3429 = vmatprep.mubr.f32.mxu0 0.0
      %3430 = vmatmul.mubr.f32.gmra.mrb[0].mxu0 %v3234
      %v3431 = vpop.f32.mrb[0].mxu0
      %v3432 = vadd.f32 0.0, %v3431
      %v3433 = vpop.f32.mrb[0].mxu0
      %3434 = vmatprep.mubr.f32.mxu0 0.0
      %3435 = vmatmul.mubr.f32.gmra.mrb[0].mxu0 %v3237
      %v3436 = vpop.f32.mrb[0].mxu0
      %v3437 = vadd.f32 0.0, %v3436
      %v3438 = vpop.f32.mrb[0].mxu0
      %3439 = vmatprep.mubr.f32.mxu0 0.0
      %3440 = vmatmul.mubr.f32.gmra.mrb[0].mxu0 %v3240
      %v3441 = vpop.f32.mrb[0].mxu0
      %v3442 = vadd.f32 0.0, %v3441
      %v3443 = vpop.f32.mrb[0].mxu0
      %3444 = vmatprep.mubr.f32.mxu0 0.0
      %3445 = vmatmul.mubr.f32.gmra.mrb[0].mxu0 %v3243
      %v3446 = vpop.f32.mrb[0].mxu0
      %v3447 = vadd.f32 0.0, %v3446
      %v3448 = vpop.f32.mrb[0].mxu0
      %3449 = vmatprep.mubr.f32.mxu0 0.0
      %3450 = vmatmul.mubr.f32.gmra.mrb[0].mxu0 %v3246
      %v3451 = vpop.f32.mrb[0].mxu0
      %v3452 = vadd.f32 0.0, %v3451
      %v3453 = vpop.f32.mrb[0].mxu0
      %3454 = vmatprep.mubr.f32.mxu0 0.0
      %3455 = vmatmul.mubr.f32.gmra.mrb[0].mxu0 %v3249
      %v3456 = vpop.f32.mrb[0].mxu0
      %v3457 = vadd.f32 0.0, %v3456
      %v3458 = vpop.f32.mrb[0].mxu0
      %3459 = vmatprep.mubr.f32.mxu0 0.0
      %3460 = vmatmul.mubr.f32.gmra.mrb[0].mxu0 %v3252
      %v3461 = vpop.f32.mrb[0].mxu0
      %v3462 = vadd.f32 0.0, %v3461
      %v3463 = vpop.f32.mrb[0].mxu0
      %3464 = vmatprep.mubr.f32.mxu0 0.0
      %3465 = vmatmul.mubr.f32.gmra.mrb[0].mxu0 %v3255
      %v3466 = vpop.f32.mrb[0].mxu0
      %v3467 = vadd.f32 0.0, %v3466
      %v3468 = vpop.f32.mrb[0].mxu0
      %3469 = vmatprep.mubr.f32.mxu0 0.0
      %3470 = vmatmul.mubr.f32.gmra.mrb[0].mxu0 %v3258
      %v3471 = vpop.f32.mrb[0].mxu0
      %v3472 = vadd.f32 0.0, %v3471
      %v3473 = vpop.f32.mrb[0].mxu0
      %3474 = vmatprep.mubr.f32.mxu0 0.0
      %3475 = vmatmul.mubr.f32.gmra.mrb[0].mxu0 %v3261
      %v3476 = vpop.f32.mrb[0].mxu0
      %v3477 = vadd.f32 0.0, %v3476
      %v3478 = vpop.f32.mrb[0].mxu0
      %3479 = vmatprep.mubr.f32.mxu0 0.0
      %3480 = vmatmul.mubr.f32.gmra.mrb[0].mxu0 %v3264
      %v3481 = vpop.f32.mrb[0].mxu0
      %v3482 = vadd.f32 0.0, %v3481
      %v3483 = vpop.f32.mrb[0].mxu0
      %3484 = vmatprep.mubr.f32.mxu0 0.0
      %3485 = vmatmul.mubr.f32.gmra.mrb[0].mxu0 %v3267
      %v3486 = vpop.f32.mrb[0].mxu0
      %v3487 = vadd.f32 0.0, %v3486
      %v3488 = vpop.f32.mrb[0].mxu0
      %3489 = vmatprep.mubr.f32.mxu0 0.0
      %3490 = vmatmul.mubr.f32.gmra.mrb[0].mxu0 %v3270
      %v3491 = vpop.f32.mrb[0].mxu0
      %v3492 = vadd.f32 0.0, %v3491
      %v3493 = vpop.f32.mrb[0].mxu0
      %3494 = vmatprep.mubr.f32.mxu0 0.0
      %3495 = vmatmul.mubr.f32.gmra.mrb[0].mxu0 %v3273
      %v3496 = vpop.f32.mrb[0].mxu0
      %v3497 = vadd.f32 0.0, %v3496
      %v3498 = vpop.f32.mrb[0].mxu0
      %3499 = vdwg.mxu0
      %v3500 = vadd.f32 %v3113, %v3342
      %v3501 = vadd.f32 %v3114, %v3347
      %v3502 = vadd.f32 %v3115, %v3352
      %v3503 = vadd.f32 %v3116, %v3357
      %v3504 = vadd.f32 %v3117, %v3362
      %v3505 = vadd.f32 %v3118, %v3367
      %v3506 = vadd.f32 %v3119, %v3372
      %v3507 = vadd.f32 %v3120, %v3377
      %v3508 = vadd.f32 %v3121, %v3382
      %v3509 = vadd.f32 %v3122, %v3387
      %v3510 = vadd.f32 %v3123, %v3392
      %v3511 = vadd.f32 %v3124, %v3397
      %v3512 = vadd.f32 %v3125, %v3402
      %v3513 = vadd.f32 %v3126, %v3407
      %v3514 = vadd.f32 %v3127, %v3412
      %v3515 = vadd.f32 %v3128, %v3417
      %v3516 = vadd.f32 %v3129, %v3422
      %v3517 = vadd.f32 %v3130, %v3427
      %v3518 = vadd.f32 %v3131, %v3432
      %v3519 = vadd.f32 %v3132, %v3437
      %v3520 = vadd.f32 %v3133, %v3442
      %v3521 = vadd.f32 %v3134, %v3447
      %v3522 = vadd.f32 %v3135, %v3452
      %v3523 = vadd.f32 %v3136, %v3457
      %v3524 = vadd.f32 %v3137, %v3462
      %v3525 = vadd.f32 %v3138, %v3467
      %v3526 = vadd.f32 %v3139, %v3472
      %v3527 = vadd.f32 %v3140, %v3477
      %v3528 = vadd.f32 %v3141, %v3482
      %v3529 = vadd.f32 %v3142, %v3487
      %v3530 = vadd.f32 %v3143, %v3492
      %v3531 = vadd.f32 %v3144, %v3497
      %v3532 = vld [vmem:[%s2757 + $0x2] sm:$0xff]
      %v3533 = vld [vmem:[%s2757 + $0xa] sm:$0xff]
      %v3534 = vld [vmem:[%s2757 + $0x1a] sm:$0xff]
      %v3535 = vld [vmem:[%s2757 + $0x22] sm:$0xff]
      %v3536 = vld [vmem:[%s2757 + $0x32] sm:$0xff]
      %v3537 = vld [vmem:[%s2757 + $0x3a] sm:$0xff]
      %v3538 = vld [vmem:[%s2757 + $0x4a] sm:$0xff]
      %v3539 = vld [vmem:[%s2757 + $0x52] sm:$0xff]
      %v3540 = vld [vmem:[%s2757 + $0x62] sm:$0xff]
      %v3541 = vld [vmem:[%s2757 + $0x6a] sm:$0xff]
      %v3542 = vld [vmem:[%s2757 + $0x7a] sm:$0xff]
      %v3543 = vld [vmem:[%s2757 + $0x82] sm:$0xff]
      %v3544 = vld [vmem:[%s2757 + $0x92] sm:$0xff]
      %v3545 = vld [vmem:[%s2757 + $0x9a] sm:$0xff]
      %v3546 = vld [vmem:[%s2757 + $0xaa] sm:$0xff]
      %v3547 = vld [vmem:[%s2757 + $0xb2] sm:$0xff]
      %v3548 = vld [vmem:[%s2757 + $0xc2] sm:$0xff]
      %v3549 = vld [vmem:[%s2757 + $0xca] sm:$0xff]
      %v3550 = vld [vmem:[%s2757 + $0xda] sm:$0xff]
      %v3551 = vld [vmem:[%s2757 + $0xe2] sm:$0xff]
      %v3552 = vld [vmem:[%s2757 + $0xf2] sm:$0xff]
      %v3553 = vld [vmem:[%s2757 + $0xfa] sm:$0xff]
      %v3554 = vld [vmem:[%s2757 + $0x10a] sm:$0xff]
      %v3555 = vld [vmem:[%s2757 + $0x112] sm:$0xff]
      %v3556 = vld [vmem:[%s2757 + $0x122] sm:$0xff]
      %v3557 = vld [vmem:[%s2757 + $0x12a] sm:$0xff]
      %v3558 = vld [vmem:[%s2757 + $0x13a] sm:$0xff]
      %v3559 = vld [vmem:[%s2757 + $0x142] sm:$0xff]
      %v3560 = vld [vmem:[%s2757 + $0x152] sm:$0xff]
      %v3561 = vld [vmem:[%s2757 + $0x15a] sm:$0xff]
      %v3562 = vld [vmem:[%s2757 + $0x16a] sm:$0xff]
      %v3563 = vld [vmem:[%s2757 + $0x172] sm:$0xff]
      %s3564 = scalar_lea.vmem %s3, 64
      %v3565 = vld [vmem:[%s3564] sm:$0xff]
      %v3567 = vsel %vm421, %v3532, 0
      %v3570 = vsel %vm421, %v3533, 0
      %v3573 = vsel %vm421, %v3534, 0
      %v3576 = vsel %vm421, %v3535, 0
      %v3579 = vsel %vm421, %v3536, 0
      %v3582 = vsel %vm421, %v3537, 0
      %v3585 = vsel %vm421, %v3538, 0
      %v3588 = vsel %vm421, %v3539, 0
      %v3591 = vsel %vm421, %v3540, 0
      %v3594 = vsel %vm421, %v3541, 0
      %v3597 = vsel %vm421, %v3542, 0
      %v3600 = vsel %vm421, %v3543, 0
      %v3603 = vsel %vm421, %v3544, 0
      %v3606 = vsel %vm421, %v3545, 0
      %v3609 = vsel %vm421, %v3546, 0
      %v3612 = vsel %vm421, %v3547, 0
      %v3615 = vsel %vm421, %v3548, 0
      %v3618 = vsel %vm421, %v3549, 0
      %v3621 = vsel %vm421, %v3550, 0
      %v3624 = vsel %vm421, %v3551, 0
      %v3627 = vsel %vm421, %v3552, 0
      %v3630 = vsel %vm421, %v3553, 0
      %v3633 = vsel %vm421, %v3554, 0
      %v3636 = vsel %vm421, %v3555, 0
      %v3639 = vsel %vm421, %v3556, 0
      %v3642 = vsel %vm421, %v3557, 0
      %v3645 = vsel %vm421, %v3558, 0
      %v3648 = vsel %vm421, %v3559, 0
      %v3651 = vsel %vm421, %v3560, 0
      %v3654 = vsel %vm421, %v3561, 0
      %v3657 = vsel %vm421, %v3562, 0
      %v3660 = vsel %vm421, %v3563, 0
      %3662 = vmatprep.subr.mxu0 0.0
      %3663 = vmatpush1.msra.mxu0 %v3565
      %3664 = vmatprep.subr.mxu0 0.0
      %3665 = vmatpush1.msra.mxu0 0.0
      %3666 = vmatprep.subr.mxu0 0.0
      %3667 = vmatpush1.msra.mxu0 0.0
      %3668 = vmatprep.subr.mxu0 0.0
      %3669 = vmatpush1.msra.mxu0 0.0
      %3670 = vmatprep.subr.mxu0 0.0
      %3671 = vmatpush1.msra.mxu0 0.0
      %3672 = vmatprep.subr.mxu0 0.0
      %3673 = vmatpush1.msra.mxu0 0.0
      %3674 = vmatprep.subr.mxu0 0.0
      %3675 = vmatpush1.msra.mxu0 0.0
      %3676 = vmatprep.subr.mxu0 0.0
      %3677 = vmatpush1.msra.mxu0 0.0
      %3678 = vmatprep.subr.mxu0 0.0
      %3679 = vmatpush1.msra.mxu0 0.0
      %3680 = vmatprep.subr.mxu0 0.0
      %3681 = vmatpush1.msra.mxu0 0.0
      %3682 = vmatprep.subr.mxu0 0.0
      %3683 = vmatpush1.msra.mxu0 0.0
      %3684 = vmatprep.subr.mxu0 0.0
      %3685 = vmatpush1.msra.mxu0 0.0
      %3686 = vmatprep.subr.mxu0 0.0
      %3687 = vmatpush1.msra.mxu0 0.0
      %3688 = vmatprep.subr.mxu0 0.0
      %3689 = vmatpush1.msra.mxu0 0.0
      %3690 = vmatprep.subr.mxu0 0.0
      %3691 = vmatpush1.msra.mxu0 0.0
      %3692 = vmatprep.subr.mxu0 0.0
      %3693 = vmatpush1.msra.mxu0 0.0
      %3694 = vmatprep.subr.mxu0 0.0
      %3695 = vmatpush1.msra.mxu0 0.0
      %3696 = vmatprep.subr.mxu0 0.0
      %3697 = vmatpush1.msra.mxu0 0.0
      %3698 = vmatprep.subr.mxu0 0.0
      %3699 = vmatpush1.msra.mxu0 0.0
      %3700 = vmatprep.subr.mxu0 0.0
      %3701 = vmatpush1.msra.mxu0 0.0
      %3702 = vmatprep.subr.mxu0 0.0
      %3703 = vmatpush1.msra.mxu0 0.0
      %3704 = vmatprep.subr.mxu0 0.0
      %3705 = vmatpush1.msra.mxu0 0.0
      %3706 = vmatprep.subr.mxu0 0.0
      %3707 = vmatpush1.msra.mxu0 0.0
      %3708 = vmatprep.subr.mxu0 0.0
      %3709 = vmatpush1.msra.mxu0 0.0
      %3710 = vmatprep.subr.mxu0 0.0
      %3711 = vmatpush1.msra.mxu0 0.0
      %3712 = vmatprep.subr.mxu0 0.0
      %3713 = vmatpush1.msra.mxu0 0.0
      %3714 = vmatprep.subr.mxu0 0.0
      %3715 = vmatpush1.msra.mxu0 0.0
      %3716 = vmatprep.subr.mxu0 0.0
      %3717 = vmatpush1.msra.mxu0 0.0
      %3718 = vmatprep.subr.mxu0 0.0
      %3719 = vmatpush1.msra.mxu0 0.0
      %3720 = vmatprep.subr.mxu0 0.0
      %3721 = vmatpush1.msra.mxu0 0.0
      %3722 = vmatprep.subr.mxu0 0.0
      %3723 = vmatpush1.msra.mxu0 0.0
      %3724 = vmatprep.subr.mxu0 0.0
      %3725 = vmatpush1.msra.mxu0 0.0
      %3726 = vmatprep.mubr.f32.mxu0 0.0
      %3727 = vmatmul.mubr.f32.gmra.mrb[0].mxu0 %v3567
      %v3728 = vpop.f32.mrb[0].mxu0
      %v3729 = vadd.f32 0.0, %v3728
      %v3730 = vpop.f32.mrb[0].mxu0
      %3731 = vmatprep.mubr.f32.mxu0 0.0
      %3732 = vmatmul.mubr.f32.gmra.mrb[0].mxu0 %v3570
      %v3733 = vpop.f32.mrb[0].mxu0
      %v3734 = vadd.f32 0.0, %v3733
      %v3735 = vpop.f32.mrb[0].mxu0
      %3736 = vmatprep.mubr.f32.mxu0 0.0
      %3737 = vmatmul.mubr.f32.gmra.mrb[0].mxu0 %v3573
      %v3738 = vpop.f32.mrb[0].mxu0
      %v3739 = vadd.f32 0.0, %v3738
      %v3740 = vpop.f32.mrb[0].mxu0
      %3741 = vmatprep.mubr.f32.mxu0 0.0
      %3742 = vmatmul.mubr.f32.gmra.mrb[0].mxu0 %v3576
      %v3743 = vpop.f32.mrb[0].mxu0
      %v3744 = vadd.f32 0.0, %v3743
      %v3745 = vpop.f32.mrb[0].mxu0
      %3746 = vmatprep.mubr.f32.mxu0 0.0
      %3747 = vmatmul.mubr.f32.gmra.mrb[0].mxu0 %v3579
      %v3748 = vpop.f32.mrb[0].mxu0
      %v3749 = vadd.f32 0.0, %v3748
      %v3750 = vpop.f32.mrb[0].mxu0
      %3751 = vmatprep.mubr.f32.mxu0 0.0
      %3752 = vmatmul.mubr.f32.gmra.mrb[0].mxu0 %v3582
      %v3753 = vpop.f32.mrb[0].mxu0
      %v3754 = vadd.f32 0.0, %v3753
      %v3755 = vpop.f32.mrb[0].mxu0
      %3756 = vmatprep.mubr.f32.mxu0 0.0
      %3757 = vmatmul.mubr.f32.gmra.mrb[0].mxu0 %v3585
      %v3758 = vpop.f32.mrb[0].mxu0
      %v3759 = vadd.f32 0.0, %v3758
      %v3760 = vpop.f32.mrb[0].mxu0
      %3761 = vmatprep.mubr.f32.mxu0 0.0
      %3762 = vmatmul.mubr.f32.gmra.mrb[0].mxu0 %v3588
      %v3763 = vpop.f32.mrb[0].mxu0
      %v3764 = vadd.f32 0.0, %v3763
      %v3765 = vpop.f32.mrb[0].mxu0
      %3766 = vmatprep.mubr.f32.mxu0 0.0
      %3767 = vmatmul.mubr.f32.gmra.mrb[0].mxu0 %v3591
      %v3768 = vpop.f32.mrb[0].mxu0
      %v3769 = vadd.f32 0.0, %v3768
      %v3770 = vpop.f32.mrb[0].mxu0
      %3771 = vmatprep.mubr.f32.mxu0 0.0
      %3772 = vmatmul.mubr.f32.gmra.mrb[0].mxu0 %v3594
      %v3773 = vpop.f32.mrb[0].mxu0
      %v3774 = vadd.f32 0.0, %v3773
      %v3775 = vpop.f32.mrb[0].mxu0
      %3776 = vmatprep.mubr.f32.mxu0 0.0
      %3777 = vmatmul.mubr.f32.gmra.mrb[0].mxu0 %v3597
      %v3778 = vpop.f32.mrb[0].mxu0
      %v3779 = vadd.f32 0.0, %v3778
      %v3780 = vpop.f32.mrb[0].mxu0
      %3781 = vmatprep.mubr.f32.mxu0 0.0
      %3782 = vmatmul.mubr.f32.gmra.mrb[0].mxu0 %v3600
      %v3783 = vpop.f32.mrb[0].mxu0
      %v3784 = vadd.f32 0.0, %v3783
      %v3785 = vpop.f32.mrb[0].mxu0
      %3786 = vmatprep.mubr.f32.mxu0 0.0
      %3787 = vmatmul.mubr.f32.gmra.mrb[0].mxu0 %v3603
      %v3788 = vpop.f32.mrb[0].mxu0
      %v3789 = vadd.f32 0.0, %v3788
      %v3790 = vpop.f32.mrb[0].mxu0
      %3791 = vmatprep.mubr.f32.mxu0 0.0
      %3792 = vmatmul.mubr.f32.gmra.mrb[0].mxu0 %v3606
      %v3793 = vpop.f32.mrb[0].mxu0
      %v3794 = vadd.f32 0.0, %v3793
      %v3795 = vpop.f32.mrb[0].mxu0
      %3796 = vmatprep.mubr.f32.mxu0 0.0
      %3797 = vmatmul.mubr.f32.gmra.mrb[0].mxu0 %v3609
      %v3798 = vpop.f32.mrb[0].mxu0
      %v3799 = vadd.f32 0.0, %v3798
      %v3800 = vpop.f32.mrb[0].mxu0
      %3801 = vmatprep.mubr.f32.mxu0 0.0
      %3802 = vmatmul.mubr.f32.gmra.mrb[0].mxu0 %v3612
      %v3803 = vpop.f32.mrb[0].mxu0
      %v3804 = vadd.f32 0.0, %v3803
      %v3805 = vpop.f32.mrb[0].mxu0
      %3806 = vmatprep.mubr.f32.mxu0 0.0
      %3807 = vmatmul.mubr.f32.gmra.mrb[0].mxu0 %v3615
      %v3808 = vpop.f32.mrb[0].mxu0
      %v3809 = vadd.f32 0.0, %v3808
      %v3810 = vpop.f32.mrb[0].mxu0
      %3811 = vmatprep.mubr.f32.mxu0 0.0
      %3812 = vmatmul.mubr.f32.gmra.mrb[0].mxu0 %v3618
      %v3813 = vpop.f32.mrb[0].mxu0
      %v3814 = vadd.f32 0.0, %v3813
      %v3815 = vpop.f32.mrb[0].mxu0
      %3816 = vmatprep.mubr.f32.mxu0 0.0
      %3817 = vmatmul.mubr.f32.gmra.mrb[0].mxu0 %v3621
      %v3818 = vpop.f32.mrb[0].mxu0
      %v3819 = vadd.f32 0.0, %v3818
      %v3820 = vpop.f32.mrb[0].mxu0
      %3821 = vmatprep.mubr.f32.mxu0 0.0
      %3822 = vmatmul.mubr.f32.gmra.mrb[0].mxu0 %v3624
      %v3823 = vpop.f32.mrb[0].mxu0
      %v3824 = vadd.f32 0.0, %v3823
      %v3825 = vpop.f32.mrb[0].mxu0
      %3826 = vmatprep.mubr.f32.mxu0 0.0
      %3827 = vmatmul.mubr.f32.gmra.mrb[0].mxu0 %v3627
      %v3828 = vpop.f32.mrb[0].mxu0
      %v3829 = vadd.f32 0.0, %v3828
      %v3830 = vpop.f32.mrb[0].mxu0
      %3831 = vmatprep.mubr.f32.mxu0 0.0
      %3832 = vmatmul.mubr.f32.gmra.mrb[0].mxu0 %v3630
      %v3833 = vpop.f32.mrb[0].mxu0
      %v3834 = vadd.f32 0.0, %v3833
      %v3835 = vpop.f32.mrb[0].mxu0
      %3836 = vmatprep.mubr.f32.mxu0 0.0
      %3837 = vmatmul.mubr.f32.gmra.mrb[0].mxu0 %v3633
      %v3838 = vpop.f32.mrb[0].mxu0
      %v3839 = vadd.f32 0.0, %v3838
      %v3840 = vpop.f32.mrb[0].mxu0
      %3841 = vmatprep.mubr.f32.mxu0 0.0
      %3842 = vmatmul.mubr.f32.gmra.mrb[0].mxu0 %v3636
      %v3843 = vpop.f32.mrb[0].mxu0
      %v3844 = vadd.f32 0.0, %v3843
      %v3845 = vpop.f32.mrb[0].mxu0
      %3846 = vmatprep.mubr.f32.mxu0 0.0
      %3847 = vmatmul.mubr.f32.gmra.mrb[0].mxu0 %v3639
      %v3848 = vpop.f32.mrb[0].mxu0
      %v3849 = vadd.f32 0.0, %v3848
      %v3850 = vpop.f32.mrb[0].mxu0
      %3851 = vmatprep.mubr.f32.mxu0 0.0
      %3852 = vmatmul.mubr.f32.gmra.mrb[0].mxu0 %v3642
      %v3853 = vpop.f32.mrb[0].mxu0
      %v3854 = vadd.f32 0.0, %v3853
      %v3855 = vpop.f32.mrb[0].mxu0
      %3856 = vmatprep.mubr.f32.mxu0 0.0
      %3857 = vmatmul.mubr.f32.gmra.mrb[0].mxu0 %v3645
      %v3858 = vpop.f32.mrb[0].mxu0
      %v3859 = vadd.f32 0.0, %v3858
      %v3860 = vpop.f32.mrb[0].mxu0
      %3861 = vmatprep.mubr.f32.mxu0 0.0
      %3862 = vmatmul.mubr.f32.gmra.mrb[0].mxu0 %v3648
      %v3863 = vpop.f32.mrb[0].mxu0
      %v3864 = vadd.f32 0.0, %v3863
      %v3865 = vpop.f32.mrb[0].mxu0
      %3866 = vmatprep.mubr.f32.mxu0 0.0
      %3867 = vmatmul.mubr.f32.gmra.mrb[0].mxu0 %v3651
      %v3868 = vpop.f32.mrb[0].mxu0
      %v3869 = vadd.f32 0.0, %v3868
      %v3870 = vpop.f32.mrb[0].mxu0
      %3871 = vmatprep.mubr.f32.mxu0 0.0
      %3872 = vmatmul.mubr.f32.gmra.mrb[0].mxu0 %v3654
      %v3873 = vpop.f32.mrb[0].mxu0
      %v3874 = vadd.f32 0.0, %v3873
      %v3875 = vpop.f32.mrb[0].mxu0
      %3876 = vmatprep.mubr.f32.mxu0 0.0
      %3877 = vmatmul.mubr.f32.gmra.mrb[0].mxu0 %v3657
      %v3878 = vpop.f32.mrb[0].mxu0
      %v3879 = vadd.f32 0.0, %v3878
      %v3880 = vpop.f32.mrb[0].mxu0
      %3881 = vmatprep.mubr.f32.mxu0 0.0
      %3882 = vmatmul.mubr.f32.gmra.mrb[0].mxu0 %v3660
      %v3883 = vpop.f32.mrb[0].mxu0
      %v3884 = vadd.f32 0.0, %v3883
      %v3885 = vpop.f32.mrb[0].mxu0
      %3886 = vdwg.mxu0
      %v3887 = vadd.f32 %v3500, %v3729
      %v3888 = vadd.f32 %v3501, %v3734
      %v3889 = vadd.f32 %v3502, %v3739
      %v3890 = vadd.f32 %v3503, %v3744
      %v3891 = vadd.f32 %v3504, %v3749
      %v3892 = vadd.f32 %v3505, %v3754
      %v3893 = vadd.f32 %v3506, %v3759
      %v3894 = vadd.f32 %v3507, %v3764
      %v3895 = vadd.f32 %v3508, %v3769
      %v3896 = vadd.f32 %v3509, %v3774
      %v3897 = vadd.f32 %v3510, %v3779
      %v3898 = vadd.f32 %v3511, %v3784
      %v3899 = vadd.f32 %v3512, %v3789
      %v3900 = vadd.f32 %v3513, %v3794
      %v3901 = vadd.f32 %v3514, %v3799
      %v3902 = vadd.f32 %v3515, %v3804
      %v3903 = vadd.f32 %v3516, %v3809
      %v3904 = vadd.f32 %v3517, %v3814
      %v3905 = vadd.f32 %v3518, %v3819
      %v3906 = vadd.f32 %v3519, %v3824
      %v3907 = vadd.f32 %v3520, %v3829
      %v3908 = vadd.f32 %v3521, %v3834
      %v3909 = vadd.f32 %v3522, %v3839
      %v3910 = vadd.f32 %v3523, %v3844
      %v3911 = vadd.f32 %v3524, %v3849
      %v3912 = vadd.f32 %v3525, %v3854
      %v3913 = vadd.f32 %v3526, %v3859
      %v3914 = vadd.f32 %v3527, %v3864
      %v3915 = vadd.f32 %v3528, %v3869
      %v3916 = vadd.f32 %v3529, %v3874
      %v3917 = vadd.f32 %v3530, %v3879
      %v3918 = vadd.f32 %v3531, %v3884
      %v3919 = vld [vmem:[%s4] sm:$0x1]
      %v3921 = vlaneseq
      %v3922 = vshrl.u32 %v3921, 7
      %v3923 = vsub.s32 0, %v3922
      %v3924 = vrot.slane %v3919, %v3923
      %v3926 = vmul.f32 %v3887, %v3924
      %v3927 = vmul.f32 %v3888, %v3924
      %v3928 = vmul.f32 %v3889, %v3924
      %v3929 = vmul.f32 %v3890, %v3924
      %v3930 = vmul.f32 %v3891, %v3924
      %v3931 = vmul.f32 %v3892, %v3924
      %v3932 = vmul.f32 %v3893, %v3924
      %v3933 = vmul.f32 %v3894, %v3924
      %v3934 = vmul.f32 %v3895, %v3924
      %v3935 = vmul.f32 %v3896, %v3924
      %v3936 = vmul.f32 %v3897, %v3924
      %v3937 = vmul.f32 %v3898, %v3924
      %v3938 = vmul.f32 %v3899, %v3924
      %v3939 = vmul.f32 %v3900, %v3924
      %v3940 = vmul.f32 %v3901, %v3924
      %v3941 = vmul.f32 %v3902, %v3924
      %v3942 = vmul.f32 %v3903, %v3924
      %v3943 = vmul.f32 %v3904, %v3924
      %v3944 = vmul.f32 %v3905, %v3924
      %v3945 = vmul.f32 %v3906, %v3924
      %v3946 = vmul.f32 %v3907, %v3924
      %v3947 = vmul.f32 %v3908, %v3924
      %v3948 = vmul.f32 %v3909, %v3924
      %v3949 = vmul.f32 %v3910, %v3924
      %v3950 = vmul.f32 %v3911, %v3924
      %v3951 = vmul.f32 %v3912, %v3924
      %v3952 = vmul.f32 %v3913, %v3924
      %v3953 = vmul.f32 %v3914, %v3924
      %v3954 = vmul.f32 %v3915, %v3924
      %v3955 = vmul.f32 %v3916, %v3924
      %v3956 = vmul.f32 %v3917, %v3924
      %v3957 = vmul.f32 %v3918, %v3924
      %v3958 = vld [vmem:[%s5] sm:$0x1]
      %v3960 = vlaneseq
      %v3961 = vshrl.u32 %v3960, 7
      %v3962 = vsub.s32 0, %v3961
      %v3963 = vrot.slane %v3958, %v3962
      %v3965 = vadd.f32 %v3926, %v3963
      %v3966 = vadd.f32 %v3927, %v3963
      %v3967 = vadd.f32 %v3928, %v3963
      %v3968 = vadd.f32 %v3929, %v3963
      %v3969 = vadd.f32 %v3930, %v3963
      %v3970 = vadd.f32 %v3931, %v3963
      %v3971 = vadd.f32 %v3932, %v3963
      %v3972 = vadd.f32 %v3933, %v3963
      %v3973 = vadd.f32 %v3934, %v3963
      %v3974 = vadd.f32 %v3935, %v3963
      %v3975 = vadd.f32 %v3936, %v3963
      %v3976 = vadd.f32 %v3937, %v3963
      %v3977 = vadd.f32 %v3938, %v3963
      %v3978 = vadd.f32 %v3939, %v3963
      %v3979 = vadd.f32 %v3940, %v3963
      %v3980 = vadd.f32 %v3941, %v3963
      %v3981 = vadd.f32 %v3942, %v3963
      %v3982 = vadd.f32 %v3943, %v3963
      %v3983 = vadd.f32 %v3944, %v3963
      %v3984 = vadd.f32 %v3945, %v3963
      %v3985 = vadd.f32 %v3946, %v3963
      %v3986 = vadd.f32 %v3947, %v3963
      %v3987 = vadd.f32 %v3948, %v3963
      %v3988 = vadd.f32 %v3949, %v3963
      %v3989 = vadd.f32 %v3950, %v3963
      %v3990 = vadd.f32 %v3951, %v3963
      %v3991 = vadd.f32 %v3952, %v3963
      %v3992 = vadd.f32 %v3953, %v3963
      %v3993 = vadd.f32 %v3954, %v3963
      %v3994 = vadd.f32 %v3955, %v3963
      %v3995 = vadd.f32 %v3956, %v3963
      %v3996 = vadd.f32 %v3957, %v3963
      %v3997 = vmax.f32 %v3965, 0.0
      %v3998 = vmax.f32 %v3966, 0.0
      %v3999 = vmax.f32 %v3967, 0.0
      %v4000 = vmax.f32 %v3968, 0.0
      %v4001 = vmax.f32 %v3969, 0.0
      %v4002 = vmax.f32 %v3970, 0.0
      %v4003 = vmax.f32 %v3971, 0.0
      %v4004 = vmax.f32 %v3972, 0.0
      %v4005 = vmax.f32 %v3973, 0.0
      %v4006 = vmax.f32 %v3974, 0.0
      %v4007 = vmax.f32 %v3975, 0.0
      %v4008 = vmax.f32 %v3976, 0.0
      %v4009 = vmax.f32 %v3977, 0.0
      %v4010 = vmax.f32 %v3978, 0.0
      %v4011 = vmax.f32 %v3979, 0.0
      %v4012 = vmax.f32 %v3980, 0.0
      %v4013 = vmax.f32 %v3981, 0.0
      %v4014 = vmax.f32 %v3982, 0.0
      %v4015 = vmax.f32 %v3983, 0.0
      %v4016 = vmax.f32 %v3984, 0.0
      %v4017 = vmax.f32 %v3985, 0.0
      %v4018 = vmax.f32 %v3986, 0.0
      %v4019 = vmax.f32 %v3987, 0.0
      %v4020 = vmax.f32 %v3988, 0.0
      %v4021 = vmax.f32 %v3989, 0.0
      %v4022 = vmax.f32 %v3990, 0.0
      %v4023 = vmax.f32 %v3991, 0.0
      %v4024 = vmax.f32 %v3992, 0.0
      %v4025 = vmax.f32 %v3993, 0.0
      %v4026 = vmax.f32 %v3994, 0.0
      %v4027 = vmax.f32 %v3995, 0.0
      %v4028 = vmax.f32 %v3996, 0.0
      %4029 = vst.msk [vmem:[%s467 + $0x1] sm:$0xff] %vm421, %v3997
      %4030 = vst.msk [vmem:[%s467 + $0x9] sm:$0xff] %vm421, %v3998
      %4031 = vst.msk [vmem:[%s467 + $0x19] sm:$0xff] %vm421, %v3999
      %4032 = vst.msk [vmem:[%s467 + $0x21] sm:$0xff] %vm421, %v4000
      %4033 = vst.msk [vmem:[%s467 + $0x31] sm:$0xff] %vm421, %v4001
      %4034 = vst.msk [vmem:[%s467 + $0x39] sm:$0xff] %vm421, %v4002
      %4035 = vst.msk [vmem:[%s467 + $0x49] sm:$0xff] %vm421, %v4003
      %4036 = vst.msk [vmem:[%s467 + $0x51] sm:$0xff] %vm421, %v4004
      %4037 = vst.msk [vmem:[%s467 + $0x61] sm:$0xff] %vm421, %v4005
      %4038 = vst.msk [vmem:[%s467 + $0x69] sm:$0xff] %vm421, %v4006
      %4039 = vst.msk [vmem:[%s467 + $0x79] sm:$0xff] %vm421, %v4007
      %4040 = vst.msk [vmem:[%s467 + $0x81] sm:$0xff] %vm421, %v4008
      %4041 = vst.msk [vmem:[%s467 + $0x91] sm:$0xff] %vm421, %v4009
      %4042 = vst.msk [vmem:[%s467 + $0x99] sm:$0xff] %vm421, %v4010
      %4043 = vst.msk [vmem:[%s467 + $0xa9] sm:$0xff] %vm421, %v4011
      %4044 = vst.msk [vmem:[%s467 + $0xb1] sm:$0xff] %vm421, %v4012
      %4045 = vst.msk [vmem:[%s467 + $0xc1] sm:$0xff] %vm421, %v4013
      %4046 = vst.msk [vmem:[%s467 + $0xc9] sm:$0xff] %vm421, %v4014
      %4047 = vst.msk [vmem:[%s467 + $0xd9] sm:$0xff] %vm421, %v4015
      %4048 = vst.msk [vmem:[%s467 + $0xe1] sm:$0xff] %vm421, %v4016
      %4049 = vst.msk [vmem:[%s467 + $0xf1] sm:$0xff] %vm421, %v4017
      %4050 = vst.msk [vmem:[%s467 + $0xf9] sm:$0xff] %vm421, %v4018
      %4051 = vst.msk [vmem:[%s467 + $0x109] sm:$0xff] %vm421, %v4019
      %4052 = vst.msk [vmem:[%s467 + $0x111] sm:$0xff] %vm421, %v4020
      %4053 = vst.msk [vmem:[%s467 + $0x121] sm:$0xff] %vm421, %v4021
      %4054 = vst.msk [vmem:[%s467 + $0x129] sm:$0xff] %vm421, %v4022
      %4055 = vst.msk [vmem:[%s467 + $0x139] sm:$0xff] %vm421, %v4023
      %4056 = vst.msk [vmem:[%s467 + $0x141] sm:$0xff] %vm421, %v4024
      %4057 = vst.msk [vmem:[%s467 + $0x151] sm:$0xff] %vm421, %v4025
      %4058 = vst.msk [vmem:[%s467 + $0x159] sm:$0xff] %vm421, %v4026
      %4059 = vst.msk [vmem:[%s467 + $0x169] sm:$0xff] %vm421, %v4027
      %4060 = vst.msk [vmem:[%s467 + $0x171] sm:$0xff] %vm421, %v4028
      %v4061 = vld [vmem:[#allocation2] sm:$0xff]
      %v4062 = vld [vmem:[#allocation2 + $0x8] sm:$0xff]
      %v4063 = vld [vmem:[#allocation2 + $0x18] sm:$0xff]
      %v4064 = vld [vmem:[#allocation2 + $0x20] sm:$0xff]
      %v4065 = vld [vmem:[#allocation2 + $0x30] sm:$0xff]
      %v4066 = vld [vmem:[#allocation2 + $0x38] sm:$0xff]
      %v4067 = vld [vmem:[#allocation2 + $0x48] sm:$0xff]
      %v4068 = vld [vmem:[#allocation2 + $0x50] sm:$0xff]
      %v4069 = vld [vmem:[#allocation2 + $0x60] sm:$0xff]
      %v4070 = vld [vmem:[#allocation2 + $0x68] sm:$0xff]
      %v4071 = vld [vmem:[#allocation2 + $0x78] sm:$0xff]
      %v4072 = vld [vmem:[#allocation2 + $0x80] sm:$0xff]
      %v4073 = vld [vmem:[#allocation2 + $0x90] sm:$0xff]
      %v4074 = vld [vmem:[#allocation2 + $0x98] sm:$0xff]
      %v4075 = vld [vmem:[#allocation2 + $0xa8] sm:$0xff]
      %v4076 = vld [vmem:[#allocation2 + $0xb0] sm:$0xff]
      %v4077 = vld [vmem:[#allocation2 + $0xc0] sm:$0xff]
      %v4078 = vld [vmem:[#allocation2 + $0xc8] sm:$0xff]
      %v4079 = vld [vmem:[#allocation2 + $0xd8] sm:$0xff]
      %v4080 = vld [vmem:[#allocation2 + $0xe0] sm:$0xff]
      %v4081 = vld [vmem:[#allocation2 + $0xf0] sm:$0xff]
      %v4082 = vld [vmem:[#allocation2 + $0xf8] sm:$0xff]
      %v4083 = vld [vmem:[#allocation2 + $0x108] sm:$0xff]
      %v4084 = vld [vmem:[#allocation2 + $0x110] sm:$0xff]
      %v4085 = vld [vmem:[#allocation2 + $0x120] sm:$0xff]
      %v4086 = vld [vmem:[#allocation2 + $0x128] sm:$0xff]
      %v4087 = vld [vmem:[#allocation2 + $0x138] sm:$0xff]
      %v4088 = vld [vmem:[#allocation2 + $0x140] sm:$0xff]
      %v4089 = vld [vmem:[#allocation2 + $0x150] sm:$0xff]
      %v4090 = vld [vmem:[#allocation2 + $0x158] sm:$0xff]
      %v4091 = vld [vmem:[#allocation2 + $0x168] sm:$0xff]
      %v4092 = vld [vmem:[#allocation2 + $0x170] sm:$0xff]
      %v4093 = vld [vmem:[%s6] sm:$0xff]
      %v4094 = vld [vmem:[#allocation2 + $0x1] sm:$0xff]
      %v4095 = vld [vmem:[#allocation2 + $0x9] sm:$0xff]
      %v4096 = vld [vmem:[#allocation2 + $0x19] sm:$0xff]
      %v4097 = vld [vmem:[#allocation2 + $0x21] sm:$0xff]
      %v4098 = vld [vmem:[#allocation2 + $0x31] sm:$0xff]
      %v4099 = vld [vmem:[#allocation2 + $0x39] sm:$0xff]
      %v4100 = vld [vmem:[#allocation2 + $0x49] sm:$0xff]
      %v4101 = vld [vmem:[#allocation2 + $0x51] sm:$0xff]
      %v4102 = vld [vmem:[#allocation2 + $0x61] sm:$0xff]
      %v4103 = vld [vmem:[#allocation2 + $0x69] sm:$0xff]
      %v4104 = vld [vmem:[#allocation2 + $0x79] sm:$0xff]
      %v4105 = vld [vmem:[#allocation2 + $0x81] sm:$0xff]
      %v4106 = vld [vmem:[#allocation2 + $0x91] sm:$0xff]
      %v4107 = vld [vmem:[#allocation2 + $0x99] sm:$0xff]
      %v4108 = vld [vmem:[#allocation2 + $0xa9] sm:$0xff]
      %v4109 = vld [vmem:[#allocation2 + $0xb1] sm:$0xff]
      %v4110 = vld [vmem:[#allocation2 + $0xc1] sm:$0xff]
      %v4111 = vld [vmem:[#allocation2 + $0xc9] sm:$0xff]
      %v4112 = vld [vmem:[#allocation2 + $0xd9] sm:$0xff]
      %v4113 = vld [vmem:[#allocation2 + $0xe1] sm:$0xff]
      %v4114 = vld [vmem:[#allocation2 + $0xf1] sm:$0xff]
      %v4115 = vld [vmem:[#allocation2 + $0xf9] sm:$0xff]
      %v4116 = vld [vmem:[#allocation2 + $0x109] sm:$0xff]
      %v4117 = vld [vmem:[#allocation2 + $0x111] sm:$0xff]
      %v4118 = vld [vmem:[#allocation2 + $0x121] sm:$0xff]
      %v4119 = vld [vmem:[#allocation2 + $0x129] sm:$0xff]
      %v4120 = vld [vmem:[#allocation2 + $0x139] sm:$0xff]
      %v4121 = vld [vmem:[#allocation2 + $0x141] sm:$0xff]
      %v4122 = vld [vmem:[#allocation2 + $0x151] sm:$0xff]
      %v4123 = vld [vmem:[#allocation2 + $0x159] sm:$0xff]
      %v4124 = vld [vmem:[#allocation2 + $0x169] sm:$0xff]
      %v4125 = vld [vmem:[#allocation2 + $0x171] sm:$0xff]
      %s4126 = scalar_lea.vmem %s6, 8
      %v4127 = vld [vmem:[%s4126] sm:$0xff]
      %v4129 = vsel %vm421, %v4094, 0
      %v4132 = vsel %vm421, %v4095, 0
      %v4135 = vsel %vm421, %v4096, 0
      %v4138 = vsel %vm421, %v4097, 0
      %v4141 = vsel %vm421, %v4098, 0
      %v4144 = vsel %vm421, %v4099, 0
      %v4147 = vsel %vm421, %v4100, 0
      %v4150 = vsel %vm421, %v4101, 0
      %v4153 = vsel %vm421, %v4102, 0
      %v4156 = vsel %vm421, %v4103, 0
      %v4159 = vsel %vm421, %v4104, 0
      %v4162 = vsel %vm421, %v4105, 0
      %v4165 = vsel %vm421, %v4106, 0
      %v4168 = vsel %vm421, %v4107, 0
      %v4171 = vsel %vm421, %v4108, 0
      %v4174 = vsel %vm421, %v4109, 0
      %v4177 = vsel %vm421, %v4110, 0
      %v4180 = vsel %vm421, %v4111, 0
      %v4183 = vsel %vm421, %v4112, 0
      %v4186 = vsel %vm421, %v4113, 0
      %v4189 = vsel %vm421, %v4114, 0
      %v4192 = vsel %vm421, %v4115, 0
      %v4195 = vsel %vm421, %v4116, 0
      %v4198 = vsel %vm421, %v4117, 0
      %v4201 = vsel %vm421, %v4118, 0
      %v4204 = vsel %vm421, %v4119, 0
      %v4207 = vsel %vm421, %v4120, 0
      %v4210 = vsel %vm421, %v4121, 0
      %v4213 = vsel %vm421, %v4122, 0
      %v4216 = vsel %vm421, %v4123, 0
      %v4219 = vsel %vm421, %v4124, 0
      %v4222 = vsel %vm421, %v4125, 0
      %4224 = vmatprep.subr.mxu0 0.0
      %4225 = vmatpush1.msra.mxu0 %v4127
      %4226 = vmatprep.subr.mxu0 0.0
      %4227 = vmatpush1.msra.mxu0 0.0
      %4228 = vmatprep.subr.mxu0 0.0
      %4229 = vmatpush1.msra.mxu0 0.0
      %4230 = vmatprep.subr.mxu0 0.0
      %4231 = vmatpush1.msra.mxu0 0.0
      %4232 = vmatprep.subr.mxu0 0.0
      %4233 = vmatpush1.msra.mxu0 0.0
      %4234 = vmatprep.subr.mxu0 0.0
      %4235 = vmatpush1.msra.mxu0 0.0
      %4236 = vmatprep.subr.mxu0 0.0
      %4237 = vmatpush1.msra.mxu0 0.0
      %4238 = vmatprep.subr.mxu0 0.0
      %4239 = vmatpush1.msra.mxu0 0.0
      %4240 = vmatprep.subr.mxu0 0.0
      %4241 = vmatpush1.msra.mxu0 0.0
      %4242 = vmatprep.subr.mxu0 0.0
      %4243 = vmatpush1.msra.mxu0 0.0
      %4244 = vmatprep.subr.mxu0 0.0
      %4245 = vmatpush1.msra.mxu0 0.0
      %4246 = vmatprep.subr.mxu0 0.0
      %4247 = vmatpush1.msra.mxu0 0.0
      %4248 = vmatprep.subr.mxu0 0.0
      %4249 = vmatpush1.msra.mxu0 0.0
      %4250 = vmatprep.subr.mxu0 0.0
      %4251 = vmatpush1.msra.mxu0 0.0
      %4252 = vmatprep.subr.mxu0 0.0
      %4253 = vmatpush1.msra.mxu0 0.0
      %4254 = vmatprep.subr.mxu0 0.0
      %4255 = vmatpush1.msra.mxu0 0.0
      %4256 = vmatprep.subr.mxu0 0.0
      %4257 = vmatpush1.msra.mxu0 0.0
      %4258 = vmatprep.subr.mxu0 0.0
      %4259 = vmatpush1.msra.mxu0 0.0
      %4260 = vmatprep.subr.mxu0 0.0
      %4261 = vmatpush1.msra.mxu0 0.0
      %4262 = vmatprep.subr.mxu0 0.0
      %4263 = vmatpush1.msra.mxu0 0.0
      %4264 = vmatprep.subr.mxu0 0.0
      %4265 = vmatpush1.msra.mxu0 0.0
      %4266 = vmatprep.subr.mxu0 0.0
      %4267 = vmatpush1.msra.mxu0 0.0
      %4268 = vmatprep.subr.mxu0 0.0
      %4269 = vmatpush1.msra.mxu0 0.0
      %4270 = vmatprep.subr.mxu0 0.0
      %4271 = vmatpush1.msra.mxu0 0.0
      %4272 = vmatprep.subr.mxu0 0.0
      %4273 = vmatpush1.msra.mxu0 0.0
      %4274 = vmatprep.subr.mxu0 0.0
      %4275 = vmatpush1.msra.mxu0 0.0
      %4276 = vmatprep.subr.mxu0 0.0
      %4277 = vmatpush1.msra.mxu0 0.0
      %4278 = vmatprep.subr.mxu0 0.0
      %4279 = vmatpush1.msra.mxu0 0.0
      %4280 = vmatprep.subr.mxu0 0.0
      %4281 = vmatpush1.msra.mxu0 0.0
      %4282 = vmatprep.subr.mxu0 0.0
      %4283 = vmatpush1.msra.mxu0 0.0
      %4284 = vmatprep.subr.mxu0 0.0
      %4285 = vmatpush1.msra.mxu0 0.0
      %4286 = vmatprep.subr.mxu0 0.0
      %4287 = vmatpush1.msra.mxu0 0.0
      %4288 = vmatprep.mubr.f32.mxu0 0.0
      %4289 = vmatmul.mubr.f32.gmra.mrb[0].mxu0 %v4129
      %v4290 = vpop.f32.mrb[0].mxu0
      %v4291 = vadd.f32 0.0, %v4290
      %v4292 = vpop.f32.mrb[0].mxu0
      %4293 = vmatprep.mubr.f32.mxu0 0.0
      %4294 = vmatmul.mubr.f32.gmra.mrb[0].mxu0 %v4132
      %v4295 = vpop.f32.mrb[0].mxu0
      %v4296 = vadd.f32 0.0, %v4295
      %v4297 = vpop.f32.mrb[0].mxu0
      %4298 = vmatprep.mubr.f32.mxu0 0.0
      %4299 = vmatmul.mubr.f32.gmra.mrb[0].mxu0 %v4135
      %v4300 = vpop.f32.mrb[0].mxu0
      %v4301 = vadd.f32 0.0, %v4300
      %v4302 = vpop.f32.mrb[0].mxu0
      %4303 = vmatprep.mubr.f32.mxu0 0.0
      %4304 = vmatmul.mubr.f32.gmra.mrb[0].mxu0 %v4138
      %v4305 = vpop.f32.mrb[0].mxu0
      %v4306 = vadd.f32 0.0, %v4305
      %v4307 = vpop.f32.mrb[0].mxu0
      %4308 = vmatprep.mubr.f32.mxu0 0.0
      %4309 = vmatmul.mubr.f32.gmra.mrb[0].mxu0 %v4141
      %v4310 = vpop.f32.mrb[0].mxu0
      %v4311 = vadd.f32 0.0, %v4310
      %v4312 = vpop.f32.mrb[0].mxu0
      %4313 = vmatprep.mubr.f32.mxu0 0.0
      %4314 = vmatmul.mubr.f32.gmra.mrb[0].mxu0 %v4144
      %v4315 = vpop.f32.mrb[0].mxu0
      %v4316 = vadd.f32 0.0, %v4315
      %v4317 = vpop.f32.mrb[0].mxu0
      %4318 = vmatprep.mubr.f32.mxu0 0.0
      %4319 = vmatmul.mubr.f32.gmra.mrb[0].mxu0 %v4147
      %v4320 = vpop.f32.mrb[0].mxu0
      %v4321 = vadd.f32 0.0, %v4320
      %v4322 = vpop.f32.mrb[0].mxu0
      %4323 = vmatprep.mubr.f32.mxu0 0.0
      %4324 = vmatmul.mubr.f32.gmra.mrb[0].mxu0 %v4150
      %v4325 = vpop.f32.mrb[0].mxu0
      %v4326 = vadd.f32 0.0, %v4325
      %v4327 = vpop.f32.mrb[0].mxu0
      %4328 = vmatprep.mubr.f32.mxu0 0.0
      %4329 = vmatmul.mubr.f32.gmra.mrb[0].mxu0 %v4153
      %v4330 = vpop.f32.mrb[0].mxu0
      %v4331 = vadd.f32 0.0, %v4330
      %v4332 = vpop.f32.mrb[0].mxu0
      %4333 = vmatprep.mubr.f32.mxu0 0.0
      %4334 = vmatmul.mubr.f32.gmra.mrb[0].mxu0 %v4156
      %v4335 = vpop.f32.mrb[0].mxu0
      %v4336 = vadd.f32 0.0, %v4335
      %v4337 = vpop.f32.mrb[0].mxu0
      %4338 = vmatprep.mubr.f32.mxu0 0.0
      %4339 = vmatmul.mubr.f32.gmra.mrb[0].mxu0 %v4159
      %v4340 = vpop.f32.mrb[0].mxu0
      %v4341 = vadd.f32 0.0, %v4340
      %v4342 = vpop.f32.mrb[0].mxu0
      %4343 = vmatprep.mubr.f32.mxu0 0.0
      %4344 = vmatmul.mubr.f32.gmra.mrb[0].mxu0 %v4162
      %v4345 = vpop.f32.mrb[0].mxu0
      %v4346 = vadd.f32 0.0, %v4345
      %v4347 = vpop.f32.mrb[0].mxu0
      %4348 = vmatprep.mubr.f32.mxu0 0.0
      %4349 = vmatmul.mubr.f32.gmra.mrb[0].mxu0 %v4165
      %v4350 = vpop.f32.mrb[0].mxu0
      %v4351 = vadd.f32 0.0, %v4350
      %v4352 = vpop.f32.mrb[0].mxu0
      %4353 = vmatprep.mubr.f32.mxu0 0.0
      %4354 = vmatmul.mubr.f32.gmra.mrb[0].mxu0 %v4168
      %v4355 = vpop.f32.mrb[0].mxu0
      %v4356 = vadd.f32 0.0, %v4355
      %v4357 = vpop.f32.mrb[0].mxu0
      %4358 = vmatprep.mubr.f32.mxu0 0.0
      %4359 = vmatmul.mubr.f32.gmra.mrb[0].mxu0 %v4171
      %v4360 = vpop.f32.mrb[0].mxu0
      %v4361 = vadd.f32 0.0, %v4360
      %v4362 = vpop.f32.mrb[0].mxu0
      %4363 = vmatprep.mubr.f32.mxu0 0.0
      %4364 = vmatmul.mubr.f32.gmra.mrb[0].mxu0 %v4174
      %v4365 = vpop.f32.mrb[0].mxu0
      %v4366 = vadd.f32 0.0, %v4365
      %v4367 = vpop.f32.mrb[0].mxu0
      %4368 = vmatprep.mubr.f32.mxu0 0.0
      %4369 = vmatmul.mubr.f32.gmra.mrb[0].mxu0 %v4177
      %v4370 = vpop.f32.mrb[0].mxu0
      %v4371 = vadd.f32 0.0, %v4370
      %v4372 = vpop.f32.mrb[0].mxu0
      %4373 = vmatprep.mubr.f32.mxu0 0.0
      %4374 = vmatmul.mubr.f32.gmra.mrb[0].mxu0 %v4180
      %v4375 = vpop.f32.mrb[0].mxu0
      %v4376 = vadd.f32 0.0, %v4375
      %v4377 = vpop.f32.mrb[0].mxu0
      %4378 = vmatprep.mubr.f32.mxu0 0.0
      %4379 = vmatmul.mubr.f32.gmra.mrb[0].mxu0 %v4183
      %v4380 = vpop.f32.mrb[0].mxu0
      %v4381 = vadd.f32 0.0, %v4380
      %v4382 = vpop.f32.mrb[0].mxu0
      %4383 = vmatprep.mubr.f32.mxu0 0.0
      %4384 = vmatmul.mubr.f32.gmra.mrb[0].mxu0 %v4186
      %v4385 = vpop.f32.mrb[0].mxu0
      %v4386 = vadd.f32 0.0, %v4385
      %v4387 = vpop.f32.mrb[0].mxu0
      %4388 = vmatprep.mubr.f32.mxu0 0.0
      %4389 = vmatmul.mubr.f32.gmra.mrb[0].mxu0 %v4189
      %v4390 = vpop.f32.mrb[0].mxu0
      %v4391 = vadd.f32 0.0, %v4390
      %v4392 = vpop.f32.mrb[0].mxu0
      %4393 = vmatprep.mubr.f32.mxu0 0.0
      %4394 = vmatmul.mubr.f32.gmra.mrb[0].mxu0 %v4192
      %v4395 = vpop.f32.mrb[0].mxu0
      %v4396 = vadd.f32 0.0, %v4395
      %v4397 = vpop.f32.mrb[0].mxu0
      %4398 = vmatprep.mubr.f32.mxu0 0.0
      %4399 = vmatmul.mubr.f32.gmra.mrb[0].mxu0 %v4195
      %v4400 = vpop.f32.mrb[0].mxu0
      %v4401 = vadd.f32 0.0, %v4400
      %v4402 = vpop.f32.mrb[0].mxu0
      %4403 = vmatprep.mubr.f32.mxu0 0.0
      %4404 = vmatmul.mubr.f32.gmra.mrb[0].mxu0 %v4198
      %v4405 = vpop.f32.mrb[0].mxu0
      %v4406 = vadd.f32 0.0, %v4405
      %v4407 = vpop.f32.mrb[0].mxu0
      %4408 = vmatprep.mubr.f32.mxu0 0.0
      %4409 = vmatmul.mubr.f32.gmra.mrb[0].mxu0 %v4201
      %v4410 = vpop.f32.mrb[0].mxu0
      %v4411 = vadd.f32 0.0, %v4410
      %v4412 = vpop.f32.mrb[0].mxu0
      %4413 = vmatprep.mubr.f32.mxu0 0.0
      %4414 = vmatmul.mubr.f32.gmra.mrb[0].mxu0 %v4204
      %v4415 = vpop.f32.mrb[0].mxu0
      %v4416 = vadd.f32 0.0, %v4415
      %v4417 = vpop.f32.mrb[0].mxu0
      %4418 = vmatprep.mubr.f32.mxu0 0.0
      %4419 = vmatmul.mubr.f32.gmra.mrb[0].mxu0 %v4207
      %v4420 = vpop.f32.mrb[0].mxu0
      %v4421 = vadd.f32 0.0, %v4420
      %v4422 = vpop.f32.mrb[0].mxu0
      %4423 = vmatprep.mubr.f32.mxu0 0.0
      %4424 = vmatmul.mubr.f32.gmra.mrb[0].mxu0 %v4210
      %v4425 = vpop.f32.mrb[0].mxu0
      %v4426 = vadd.f32 0.0, %v4425
      %v4427 = vpop.f32.mrb[0].mxu0
      %4428 = vmatprep.mubr.f32.mxu0 0.0
      %4429 = vmatmul.mubr.f32.gmra.mrb[0].mxu0 %v4213
      %v4430 = vpop.f32.mrb[0].mxu0
      %v4431 = vadd.f32 0.0, %v4430
      %v4432 = vpop.f32.mrb[0].mxu0
      %4433 = vmatprep.mubr.f32.mxu0 0.0
      %4434 = vmatmul.mubr.f32.gmra.mrb[0].mxu0 %v4216
      %v4435 = vpop.f32.mrb[0].mxu0
      %v4436 = vadd.f32 0.0, %v4435
      %v4437 = vpop.f32.mrb[0].mxu0
      %4438 = vmatprep.mubr.f32.mxu0 0.0
      %4439 = vmatmul.mubr.f32.gmra.mrb[0].mxu0 %v4219
      %v4440 = vpop.f32.mrb[0].mxu0
      %v4441 = vadd.f32 0.0, %v4440
      %v4442 = vpop.f32.mrb[0].mxu0
      %4443 = vmatprep.mubr.f32.mxu0 0.0
      %4444 = vmatmul.mubr.f32.gmra.mrb[0].mxu0 %v4222
      %v4445 = vpop.f32.mrb[0].mxu0
      %v4446 = vadd.f32 0.0, %v4445
      %v4447 = vpop.f32.mrb[0].mxu0
      %4448 = vdwg.mxu0
      %v4450 = vsel %vm421, %v4061, 0
      %v4453 = vsel %vm421, %v4062, 0
      %v4456 = vsel %vm421, %v4063, 0
      %v4459 = vsel %vm421, %v4064, 0
      %v4462 = vsel %vm421, %v4065, 0
      %v4465 = vsel %vm421, %v4066, 0
      %v4468 = vsel %vm421, %v4067, 0
      %v4471 = vsel %vm421, %v4068, 0
      %v4474 = vsel %vm421, %v4069, 0
      %v4477 = vsel %vm421, %v4070, 0
      %v4480 = vsel %vm421, %v4071, 0
      %v4483 = vsel %vm421, %v4072, 0
      %v4486 = vsel %vm421, %v4073, 0
      %v4489 = vsel %vm421, %v4074, 0
      %v4492 = vsel %vm421, %v4075, 0
      %v4495 = vsel %vm421, %v4076, 0
      %v4498 = vsel %vm421, %v4077, 0
      %v4501 = vsel %vm421, %v4078, 0
      %v4504 = vsel %vm421, %v4079, 0
      %v4507 = vsel %vm421, %v4080, 0
      %v4510 = vsel %vm421, %v4081, 0
      %v4513 = vsel %vm421, %v4082, 0
      %v4516 = vsel %vm421, %v4083, 0
      %v4519 = vsel %vm421, %v4084, 0
      %v4522 = vsel %vm421, %v4085, 0
      %v4525 = vsel %vm421, %v4086, 0
      %v4528 = vsel %vm421, %v4087, 0
      %v4531 = vsel %vm421, %v4088, 0
      %v4534 = vsel %vm421, %v4089, 0
      %v4537 = vsel %vm421, %v4090, 0
      %v4540 = vsel %vm421, %v4091, 0
      %v4543 = vsel %vm421, %v4092, 0
      %4545 = vmatprep.subr.mxu0 0.0
      %4546 = vmatpush1.msra.mxu0 %v4093
      %4547 = vmatprep.subr.mxu0 0.0
      %4548 = vmatpush1.msra.mxu0 0.0
      %4549 = vmatprep.subr.mxu0 0.0
      %4550 = vmatpush1.msra.mxu0 0.0
      %4551 = vmatprep.subr.mxu0 0.0
      %4552 = vmatpush1.msra.mxu0 0.0
      %4553 = vmatprep.subr.mxu0 0.0
      %4554 = vmatpush1.msra.mxu0 0.0
      %4555 = vmatprep.subr.mxu0 0.0
      %4556 = vmatpush1.msra.mxu0 0.0
      %4557 = vmatprep.subr.mxu0 0.0
      %4558 = vmatpush1.msra.mxu0 0.0
      %4559 = vmatprep.subr.mxu0 0.0
      %4560 = vmatpush1.msra.mxu0 0.0
      %4561 = vmatprep.subr.mxu0 0.0
      %4562 = vmatpush1.msra.mxu0 0.0
      %4563 = vmatprep.subr.mxu0 0.0
      %4564 = vmatpush1.msra.mxu0 0.0
      %4565 = vmatprep.subr.mxu0 0.0
      %4566 = vmatpush1.msra.mxu0 0.0
      %4567 = vmatprep.subr.mxu0 0.0
      %4568 = vmatpush1.msra.mxu0 0.0
      %4569 = vmatprep.subr.mxu0 0.0
      %4570 = vmatpush1.msra.mxu0 0.0
      %4571 = vmatprep.subr.mxu0 0.0
      %4572 = vmatpush1.msra.mxu0 0.0
      %4573 = vmatprep.subr.mxu0 0.0
      %4574 = vmatpush1.msra.mxu0 0.0
      %4575 = vmatprep.subr.mxu0 0.0
      %4576 = vmatpush1.msra.mxu0 0.0
      %4577 = vmatprep.subr.mxu0 0.0
      %4578 = vmatpush1.msra.mxu0 0.0
      %4579 = vmatprep.subr.mxu0 0.0
      %4580 = vmatpush1.msra.mxu0 0.0
      %4581 = vmatprep.subr.mxu0 0.0
      %4582 = vmatpush1.msra.mxu0 0.0
      %4583 = vmatprep.subr.mxu0 0.0
      %4584 = vmatpush1.msra.mxu0 0.0
      %4585 = vmatprep.subr.mxu0 0.0
      %4586 = vmatpush1.msra.mxu0 0.0
      %4587 = vmatprep.subr.mxu0 0.0
      %4588 = vmatpush1.msra.mxu0 0.0
      %4589 = vmatprep.subr.mxu0 0.0
      %4590 = vmatpush1.msra.mxu0 0.0
      %4591 = vmatprep.subr.mxu0 0.0
      %4592 = vmatpush1.msra.mxu0 0.0
      %4593 = vmatprep.subr.mxu0 0.0
      %4594 = vmatpush1.msra.mxu0 0.0
      %4595 = vmatprep.subr.mxu0 0.0
      %4596 = vmatpush1.msra.mxu0 0.0
      %4597 = vmatprep.subr.mxu0 0.0
      %4598 = vmatpush1.msra.mxu0 0.0
      %4599 = vmatprep.subr.mxu0 0.0
      %4600 = vmatpush1.msra.mxu0 0.0
      %4601 = vmatprep.subr.mxu0 0.0
      %4602 = vmatpush1.msra.mxu0 0.0
      %4603 = vmatprep.subr.mxu0 0.0
      %4604 = vmatpush1.msra.mxu0 0.0
      %4605 = vmatprep.subr.mxu0 0.0
      %4606 = vmatpush1.msra.mxu0 0.0
      %4607 = vmatprep.subr.mxu0 0.0
      %4608 = vmatpush1.msra.mxu0 0.0
      %4609 = vmatprep.mubr.f32.mxu0 0.0
      %4610 = vmatmul.mubr.f32.gmra.mrb[0].mxu0 %v4450
      %v4611 = vpop.f32.mrb[0].mxu0
      %v4612 = vadd.f32 %v4291, %v4611
      %v4613 = vpop.f32.mrb[0].mxu0
      %4614 = vmatprep.mubr.f32.mxu0 0.0
      %4615 = vmatmul.mubr.f32.gmra.mrb[0].mxu0 %v4453
      %v4616 = vpop.f32.mrb[0].mxu0
      %v4617 = vadd.f32 %v4296, %v4616
      %v4618 = vpop.f32.mrb[0].mxu0
      %4619 = vmatprep.mubr.f32.mxu0 0.0
      %4620 = vmatmul.mubr.f32.gmra.mrb[0].mxu0 %v4456
      %v4621 = vpop.f32.mrb[0].mxu0
      %v4622 = vadd.f32 %v4301, %v4621
      %v4623 = vpop.f32.mrb[0].mxu0
      %4624 = vmatprep.mubr.f32.mxu0 0.0
      %4625 = vmatmul.mubr.f32.gmra.mrb[0].mxu0 %v4459
      %v4626 = vpop.f32.mrb[0].mxu0
      %v4627 = vadd.f32 %v4306, %v4626
      %v4628 = vpop.f32.mrb[0].mxu0
      %4629 = vmatprep.mubr.f32.mxu0 0.0
      %4630 = vmatmul.mubr.f32.gmra.mrb[0].mxu0 %v4462
      %v4631 = vpop.f32.mrb[0].mxu0
      %v4632 = vadd.f32 %v4311, %v4631
      %v4633 = vpop.f32.mrb[0].mxu0
      %4634 = vmatprep.mubr.f32.mxu0 0.0
      %4635 = vmatmul.mubr.f32.gmra.mrb[0].mxu0 %v4465
      %v4636 = vpop.f32.mrb[0].mxu0
      %v4637 = vadd.f32 %v4316, %v4636
      %v4638 = vpop.f32.mrb[0].mxu0
      %4639 = vmatprep.mubr.f32.mxu0 0.0
      %4640 = vmatmul.mubr.f32.gmra.mrb[0].mxu0 %v4468
      %v4641 = vpop.f32.mrb[0].mxu0
      %v4642 = vadd.f32 %v4321, %v4641
      %v4643 = vpop.f32.mrb[0].mxu0
      %4644 = vmatprep.mubr.f32.mxu0 0.0
      %4645 = vmatmul.mubr.f32.gmra.mrb[0].mxu0 %v4471
      %v4646 = vpop.f32.mrb[0].mxu0
      %v4647 = vadd.f32 %v4326, %v4646
      %v4648 = vpop.f32.mrb[0].mxu0
      %4649 = vmatprep.mubr.f32.mxu0 0.0
      %4650 = vmatmul.mubr.f32.gmra.mrb[0].mxu0 %v4474
      %v4651 = vpop.f32.mrb[0].mxu0
      %v4652 = vadd.f32 %v4331, %v4651
      %v4653 = vpop.f32.mrb[0].mxu0
      %4654 = vmatprep.mubr.f32.mxu0 0.0
      %4655 = vmatmul.mubr.f32.gmra.mrb[0].mxu0 %v4477
      %v4656 = vpop.f32.mrb[0].mxu0
      %v4657 = vadd.f32 %v4336, %v4656
      %v4658 = vpop.f32.mrb[0].mxu0
      %4659 = vmatprep.mubr.f32.mxu0 0.0
      %4660 = vmatmul.mubr.f32.gmra.mrb[0].mxu0 %v4480
      %v4661 = vpop.f32.mrb[0].mxu0
      %v4662 = vadd.f32 %v4341, %v4661
      %v4663 = vpop.f32.mrb[0].mxu0
      %4664 = vmatprep.mubr.f32.mxu0 0.0
      %4665 = vmatmul.mubr.f32.gmra.mrb[0].mxu0 %v4483
      %v4666 = vpop.f32.mrb[0].mxu0
      %v4667 = vadd.f32 %v4346, %v4666
      %v4668 = vpop.f32.mrb[0].mxu0
      %4669 = vmatprep.mubr.f32.mxu0 0.0
      %4670 = vmatmul.mubr.f32.gmra.mrb[0].mxu0 %v4486
      %v4671 = vpop.f32.mrb[0].mxu0
      %v4672 = vadd.f32 %v4351, %v4671
      %v4673 = vpop.f32.mrb[0].mxu0
      %4674 = vmatprep.mubr.f32.mxu0 0.0
      %4675 = vmatmul.mubr.f32.gmra.mrb[0].mxu0 %v4489
      %v4676 = vpop.f32.mrb[0].mxu0
      %v4677 = vadd.f32 %v4356, %v4676
      %v4678 = vpop.f32.mrb[0].mxu0
      %4679 = vmatprep.mubr.f32.mxu0 0.0
      %4680 = vmatmul.mubr.f32.gmra.mrb[0].mxu0 %v4492
      %v4681 = vpop.f32.mrb[0].mxu0
      %v4682 = vadd.f32 %v4361, %v4681
      %v4683 = vpop.f32.mrb[0].mxu0
      %4684 = vmatprep.mubr.f32.mxu0 0.0
      %4685 = vmatmul.mubr.f32.gmra.mrb[0].mxu0 %v4495
      %v4686 = vpop.f32.mrb[0].mxu0
      %v4687 = vadd.f32 %v4366, %v4686
      %v4688 = vpop.f32.mrb[0].mxu0
      %4689 = vmatprep.mubr.f32.mxu0 0.0
      %4690 = vmatmul.mubr.f32.gmra.mrb[0].mxu0 %v4498
      %v4691 = vpop.f32.mrb[0].mxu0
      %v4692 = vadd.f32 %v4371, %v4691
      %v4693 = vpop.f32.mrb[0].mxu0
      %4694 = vmatprep.mubr.f32.mxu0 0.0
      %4695 = vmatmul.mubr.f32.gmra.mrb[0].mxu0 %v4501
      %v4696 = vpop.f32.mrb[0].mxu0
      %v4697 = vadd.f32 %v4376, %v4696
      %v4698 = vpop.f32.mrb[0].mxu0
      %4699 = vmatprep.mubr.f32.mxu0 0.0
      %4700 = vmatmul.mubr.f32.gmra.mrb[0].mxu0 %v4504
      %v4701 = vpop.f32.mrb[0].mxu0
      %v4702 = vadd.f32 %v4381, %v4701
      %v4703 = vpop.f32.mrb[0].mxu0
      %4704 = vmatprep.mubr.f32.mxu0 0.0
      %4705 = vmatmul.mubr.f32.gmra.mrb[0].mxu0 %v4507
      %v4706 = vpop.f32.mrb[0].mxu0
      %v4707 = vadd.f32 %v4386, %v4706
      %v4708 = vpop.f32.mrb[0].mxu0
      %4709 = vmatprep.mubr.f32.mxu0 0.0
      %4710 = vmatmul.mubr.f32.gmra.mrb[0].mxu0 %v4510
      %v4711 = vpop.f32.mrb[0].mxu0
      %v4712 = vadd.f32 %v4391, %v4711
      %v4713 = vpop.f32.mrb[0].mxu0
      %4714 = vmatprep.mubr.f32.mxu0 0.0
      %4715 = vmatmul.mubr.f32.gmra.mrb[0].mxu0 %v4513
      %v4716 = vpop.f32.mrb[0].mxu0
      %v4717 = vadd.f32 %v4396, %v4716
      %v4718 = vpop.f32.mrb[0].mxu0
      %4719 = vmatprep.mubr.f32.mxu0 0.0
      %4720 = vmatmul.mubr.f32.gmra.mrb[0].mxu0 %v4516
      %v4721 = vpop.f32.mrb[0].mxu0
      %v4722 = vadd.f32 %v4401, %v4721
      %v4723 = vpop.f32.mrb[0].mxu0
      %4724 = vmatprep.mubr.f32.mxu0 0.0
      %4725 = vmatmul.mubr.f32.gmra.mrb[0].mxu0 %v4519
      %v4726 = vpop.f32.mrb[0].mxu0
      %v4727 = vadd.f32 %v4406, %v4726
      %v4728 = vpop.f32.mrb[0].mxu0
      %4729 = vmatprep.mubr.f32.mxu0 0.0
      %4730 = vmatmul.mubr.f32.gmra.mrb[0].mxu0 %v4522
      %v4731 = vpop.f32.mrb[0].mxu0
      %v4732 = vadd.f32 %v4411, %v4731
      %v4733 = vpop.f32.mrb[0].mxu0
      %4734 = vmatprep.mubr.f32.mxu0 0.0
      %4735 = vmatmul.mubr.f32.gmra.mrb[0].mxu0 %v4525
      %v4736 = vpop.f32.mrb[0].mxu0
      %v4737 = vadd.f32 %v4416, %v4736
      %v4738 = vpop.f32.mrb[0].mxu0
      %4739 = vmatprep.mubr.f32.mxu0 0.0
      %4740 = vmatmul.mubr.f32.gmra.mrb[0].mxu0 %v4528
      %v4741 = vpop.f32.mrb[0].mxu0
      %v4742 = vadd.f32 %v4421, %v4741
      %v4743 = vpop.f32.mrb[0].mxu0
      %4744 = vmatprep.mubr.f32.mxu0 0.0
      %4745 = vmatmul.mubr.f32.gmra.mrb[0].mxu0 %v4531
      %v4746 = vpop.f32.mrb[0].mxu0
      %v4747 = vadd.f32 %v4426, %v4746
      %v4748 = vpop.f32.mrb[0].mxu0
      %4749 = vmatprep.mubr.f32.mxu0 0.0
      %4750 = vmatmul.mubr.f32.gmra.mrb[0].mxu0 %v4534
      %v4751 = vpop.f32.mrb[0].mxu0
      %v4752 = vadd.f32 %v4431, %v4751
      %v4753 = vpop.f32.mrb[0].mxu0
      %4754 = vmatprep.mubr.f32.mxu0 0.0
      %4755 = vmatmul.mubr.f32.gmra.mrb[0].mxu0 %v4537
      %v4756 = vpop.f32.mrb[0].mxu0
      %v4757 = vadd.f32 %v4436, %v4756
      %v4758 = vpop.f32.mrb[0].mxu0
      %4759 = vmatprep.mubr.f32.mxu0 0.0
      %4760 = vmatmul.mubr.f32.gmra.mrb[0].mxu0 %v4540
      %v4761 = vpop.f32.mrb[0].mxu0
      %v4762 = vadd.f32 %v4441, %v4761
      %v4763 = vpop.f32.mrb[0].mxu0
      %4764 = vmatprep.mubr.f32.mxu0 0.0
      %4765 = vmatmul.mubr.f32.gmra.mrb[0].mxu0 %v4543
      %v4766 = vpop.f32.mrb[0].mxu0
      %v4767 = vadd.f32 %v4446, %v4766
      %v4768 = vpop.f32.mrb[0].mxu0
      %4769 = vdwg.mxu0
      %v4770 = vld [vmem:[#allocation2 + $0x2] sm:$0xff]
      %v4771 = vld [vmem:[#allocation2 + $0xa] sm:$0xff]
      %v4772 = vld [vmem:[#allocation2 + $0x1a] sm:$0xff]
      %v4773 = vld [vmem:[#allocation2 + $0x22] sm:$0xff]
      %v4774 = vld [vmem:[#allocation2 + $0x32] sm:$0xff]
      %v4775 = vld [vmem:[#allocation2 + $0x3a] sm:$0xff]
      %v4776 = vld [vmem:[#allocation2 + $0x4a] sm:$0xff]
      %v4777 = vld [vmem:[#allocation2 + $0x52] sm:$0xff]
      %v4778 = vld [vmem:[#allocation2 + $0x62] sm:$0xff]
      %v4779 = vld [vmem:[#allocation2 + $0x6a] sm:$0xff]
      %v4780 = vld [vmem:[#allocation2 + $0x7a] sm:$0xff]
      %v4781 = vld [vmem:[#allocation2 + $0x82] sm:$0xff]
      %v4782 = vld [vmem:[#allocation2 + $0x92] sm:$0xff]
      %v4783 = vld [vmem:[#allocation2 + $0x9a] sm:$0xff]
      %v4784 = vld [vmem:[#allocation2 + $0xaa] sm:$0xff]
      %v4785 = vld [vmem:[#allocation2 + $0xb2] sm:$0xff]
      %v4786 = vld [vmem:[#allocation2 + $0xc2] sm:$0xff]
      %v4787 = vld [vmem:[#allocation2 + $0xca] sm:$0xff]
      %v4788 = vld [vmem:[#allocation2 + $0xda] sm:$0xff]
      %v4789 = vld [vmem:[#allocation2 + $0xe2] sm:$0xff]
      %v4790 = vld [vmem:[#allocation2 + $0xf2] sm:$0xff]
      %v4791 = vld [vmem:[#allocation2 + $0xfa] sm:$0xff]
      %v4792 = vld [vmem:[#allocation2 + $0x10a] sm:$0xff]
      %v4793 = vld [vmem:[#allocation2 + $0x112] sm:$0xff]
      %v4794 = vld [vmem:[#allocation2 + $0x122] sm:$0xff]
      %v4795 = vld [vmem:[#allocation2 + $0x12a] sm:$0xff]
      %v4796 = vld [vmem:[#allocation2 + $0x13a] sm:$0xff]
      %v4797 = vld [vmem:[#allocation2 + $0x142] sm:$0xff]
      %v4798 = vld [vmem:[#allocation2 + $0x152] sm:$0xff]
      %v4799 = vld [vmem:[#allocation2 + $0x15a] sm:$0xff]
      %v4800 = vld [vmem:[#allocation2 + $0x16a] sm:$0xff]
      %v4801 = vld [vmem:[#allocation2 + $0x172] sm:$0xff]
      %s4802 = scalar_lea.vmem %s6, 16
      %v4803 = vld [vmem:[%s4802] sm:$0xff]
      %v4805 = vsel %vm421, %v4770, 0
      %v4808 = vsel %vm421, %v4771, 0
      %v4811 = vsel %vm421, %v4772, 0
      %v4814 = vsel %vm421, %v4773, 0
      %v4817 = vsel %vm421, %v4774, 0
      %v4820 = vsel %vm421, %v4775, 0
      %v4823 = vsel %vm421, %v4776, 0
      %v4826 = vsel %vm421, %v4777, 0
      %v4829 = vsel %vm421, %v4778, 0
      %v4832 = vsel %vm421, %v4779, 0
      %v4835 = vsel %vm421, %v4780, 0
      %v4838 = vsel %vm421, %v4781, 0
      %v4841 = vsel %vm421, %v4782, 0
      %v4844 = vsel %vm421, %v4783, 0
      %v4847 = vsel %vm421, %v4784, 0
      %v4850 = vsel %vm421, %v4785, 0
      %v4853 = vsel %vm421, %v4786, 0
      %v4856 = vsel %vm421, %v4787, 0
      %v4859 = vsel %vm421, %v4788, 0
      %v4862 = vsel %vm421, %v4789, 0
      %v4865 = vsel %vm421, %v4790, 0
      %v4868 = vsel %vm421, %v4791, 0
      %v4871 = vsel %vm421, %v4792, 0
      %v4874 = vsel %vm421, %v4793, 0
      %v4877 = vsel %vm421, %v4794, 0
      %v4880 = vsel %vm421, %v4795, 0
      %v4883 = vsel %vm421, %v4796, 0
      %v4886 = vsel %vm421, %v4797, 0
      %v4889 = vsel %vm421, %v4798, 0
      %v4892 = vsel %vm421, %v4799, 0
      %v4895 = vsel %vm421, %v4800, 0
      %v4898 = vsel %vm421, %v4801, 0
      %4900 = vmatprep.subr.mxu0 0.0
      %4901 = vmatpush1.msra.mxu0 %v4803
      %4902 = vmatprep.subr.mxu0 0.0
      %4903 = vmatpush1.msra.mxu0 0.0
      %4904 = vmatprep.subr.mxu0 0.0
      %4905 = vmatpush1.msra.mxu0 0.0
      %4906 = vmatprep.subr.mxu0 0.0
      %4907 = vmatpush1.msra.mxu0 0.0
      %4908 = vmatprep.subr.mxu0 0.0
      %4909 = vmatpush1.msra.mxu0 0.0
      %4910 = vmatprep.subr.mxu0 0.0
      %4911 = vmatpush1.msra.mxu0 0.0
      %4912 = vmatprep.subr.mxu0 0.0
      %4913 = vmatpush1.msra.mxu0 0.0
      %4914 = vmatprep.subr.mxu0 0.0
      %4915 = vmatpush1.msra.mxu0 0.0
      %4916 = vmatprep.subr.mxu0 0.0
      %4917 = vmatpush1.msra.mxu0 0.0
      %4918 = vmatprep.subr.mxu0 0.0
      %4919 = vmatpush1.msra.mxu0 0.0
      %4920 = vmatprep.subr.mxu0 0.0
      %4921 = vmatpush1.msra.mxu0 0.0
      %4922 = vmatprep.subr.mxu0 0.0
      %4923 = vmatpush1.msra.mxu0 0.0
      %4924 = vmatprep.subr.mxu0 0.0
      %4925 = vmatpush1.msra.mxu0 0.0
      %4926 = vmatprep.subr.mxu0 0.0
      %4927 = vmatpush1.msra.mxu0 0.0
      %4928 = vmatprep.subr.mxu0 0.0
      %4929 = vmatpush1.msra.mxu0 0.0
      %4930 = vmatprep.subr.mxu0 0.0
      %4931 = vmatpush1.msra.mxu0 0.0
      %4932 = vmatprep.subr.mxu0 0.0
      %4933 = vmatpush1.msra.mxu0 0.0
      %4934 = vmatprep.subr.mxu0 0.0
      %4935 = vmatpush1.msra.mxu0 0.0
      %4936 = vmatprep.subr.mxu0 0.0
      %4937 = vmatpush1.msra.mxu0 0.0
      %4938 = vmatprep.subr.mxu0 0.0
      %4939 = vmatpush1.msra.mxu0 0.0
      %4940 = vmatprep.subr.mxu0 0.0
      %4941 = vmatpush1.msra.mxu0 0.0
      %4942 = vmatprep.subr.mxu0 0.0
      %4943 = vmatpush1.msra.mxu0 0.0
      %4944 = vmatprep.subr.mxu0 0.0
      %4945 = vmatpush1.msra.mxu0 0.0
      %4946 = vmatprep.subr.mxu0 0.0
      %4947 = vmatpush1.msra.mxu0 0.0
      %4948 = vmatprep.subr.mxu0 0.0
      %4949 = vmatpush1.msra.mxu0 0.0
      %4950 = vmatprep.subr.mxu0 0.0
      %4951 = vmatpush1.msra.mxu0 0.0
      %4952 = vmatprep.subr.mxu0 0.0
      %4953 = vmatpush1.msra.mxu0 0.0
      %4954 = vmatprep.subr.mxu0 0.0
      %4955 = vmatpush1.msra.mxu0 0.0
      %4956 = vmatprep.subr.mxu0 0.0
      %4957 = vmatpush1.msra.mxu0 0.0
      %4958 = vmatprep.subr.mxu0 0.0
      %4959 = vmatpush1.msra.mxu0 0.0
      %4960 = vmatprep.subr.mxu0 0.0
      %4961 = vmatpush1.msra.mxu0 0.0
      %4962 = vmatprep.subr.mxu0 0.0
      %4963 = vmatpush1.msra.mxu0 0.0
      %4964 = vmatprep.mubr.f32.mxu0 0.0
      %4965 = vmatmul.mubr.f32.gmra.mrb[0].mxu0 %v4805
      %v4966 = vpop.f32.mrb[0].mxu0
      %v4967 = vadd.f32 0.0, %v4966
      %v4968 = vpop.f32.mrb[0].mxu0
      %4969 = vmatprep.mubr.f32.mxu0 0.0
      %4970 = vmatmul.mubr.f32.gmra.mrb[0].mxu0 %v4808
      %v4971 = vpop.f32.mrb[0].mxu0
      %v4972 = vadd.f32 0.0, %v4971
      %v4973 = vpop.f32.mrb[0].mxu0
      %4974 = vmatprep.mubr.f32.mxu0 0.0
      %4975 = vmatmul.mubr.f32.gmra.mrb[0].mxu0 %v4811
      %v4976 = vpop.f32.mrb[0].mxu0
      %v4977 = vadd.f32 0.0, %v4976
      %v4978 = vpop.f32.mrb[0].mxu0
      %4979 = vmatprep.mubr.f32.mxu0 0.0
      %4980 = vmatmul.mubr.f32.gmra.mrb[0].mxu0 %v4814
      %v4981 = vpop.f32.mrb[0].mxu0
      %v4982 = vadd.f32 0.0, %v4981
      %v4983 = vpop.f32.mrb[0].mxu0
      %4984 = vmatprep.mubr.f32.mxu0 0.0
      %4985 = vmatmul.mubr.f32.gmra.mrb[0].mxu0 %v4817
      %v4986 = vpop.f32.mrb[0].mxu0
      %v4987 = vadd.f32 0.0, %v4986
      %v4988 = vpop.f32.mrb[0].mxu0
      %4989 = vmatprep.mubr.f32.mxu0 0.0
      %4990 = vmatmul.mubr.f32.gmra.mrb[0].mxu0 %v4820
      %v4991 = vpop.f32.mrb[0].mxu0
      %v4992 = vadd.f32 0.0, %v4991
      %v4993 = vpop.f32.mrb[0].mxu0
      %4994 = vmatprep.mubr.f32.mxu0 0.0
      %4995 = vmatmul.mubr.f32.gmra.mrb[0].mxu0 %v4823
      %v4996 = vpop.f32.mrb[0].mxu0
      %v4997 = vadd.f32 0.0, %v4996
      %v4998 = vpop.f32.mrb[0].mxu0
      %4999 = vmatprep.mubr.f32.mxu0 0.0
      %5000 = vmatmul.mubr.f32.gmra.mrb[0].mxu0 %v4826
      %v5001 = vpop.f32.mrb[0].mxu0
      %v5002 = vadd.f32 0.0, %v5001
      %v5003 = vpop.f32.mrb[0].mxu0
      %5004 = vmatprep.mubr.f32.mxu0 0.0
      %5005 = vmatmul.mubr.f32.gmra.mrb[0].mxu0 %v4829
      %v5006 = vpop.f32.mrb[0].mxu0
      %v5007 = vadd.f32 0.0, %v5006
      %v5008 = vpop.f32.mrb[0].mxu0
      %5009 = vmatprep.mubr.f32.mxu0 0.0
      %5010 = vmatmul.mubr.f32.gmra.mrb[0].mxu0 %v4832
      %v5011 = vpop.f32.mrb[0].mxu0
      %v5012 = vadd.f32 0.0, %v5011
      %v5013 = vpop.f32.mrb[0].mxu0
      %5014 = vmatprep.mubr.f32.mxu0 0.0
      %5015 = vmatmul.mubr.f32.gmra.mrb[0].mxu0 %v4835
      %v5016 = vpop.f32.mrb[0].mxu0
      %v5017 = vadd.f32 0.0, %v5016
      %v5018 = vpop.f32.mrb[0].mxu0
      %5019 = vmatprep.mubr.f32.mxu0 0.0
      %5020 = vmatmul.mubr.f32.gmra.mrb[0].mxu0 %v4838
      %v5021 = vpop.f32.mrb[0].mxu0
      %v5022 = vadd.f32 0.0, %v5021
      %v5023 = vpop.f32.mrb[0].mxu0
      %5024 = vmatprep.mubr.f32.mxu0 0.0
      %5025 = vmatmul.mubr.f32.gmra.mrb[0].mxu0 %v4841
      %v5026 = vpop.f32.mrb[0].mxu0
      %v5027 = vadd.f32 0.0, %v5026
      %v5028 = vpop.f32.mrb[0].mxu0
      %5029 = vmatprep.mubr.f32.mxu0 0.0
      %5030 = vmatmul.mubr.f32.gmra.mrb[0].mxu0 %v4844
      %v5031 = vpop.f32.mrb[0].mxu0
      %v5032 = vadd.f32 0.0, %v5031
      %v5033 = vpop.f32.mrb[0].mxu0
      %5034 = vmatprep.mubr.f32.mxu0 0.0
      %5035 = vmatmul.mubr.f32.gmra.mrb[0].mxu0 %v4847
      %v5036 = vpop.f32.mrb[0].mxu0
      %v5037 = vadd.f32 0.0, %v5036
      %v5038 = vpop.f32.mrb[0].mxu0
      %5039 = vmatprep.mubr.f32.mxu0 0.0
      %5040 = vmatmul.mubr.f32.gmra.mrb[0].mxu0 %v4850
      %v5041 = vpop.f32.mrb[0].mxu0
      %v5042 = vadd.f32 0.0, %v5041
      %v5043 = vpop.f32.mrb[0].mxu0
      %5044 = vmatprep.mubr.f32.mxu0 0.0
      %5045 = vmatmul.mubr.f32.gmra.mrb[0].mxu0 %v4853
      %v5046 = vpop.f32.mrb[0].mxu0
      %v5047 = vadd.f32 0.0, %v5046
      %v5048 = vpop.f32.mrb[0].mxu0
      %5049 = vmatprep.mubr.f32.mxu0 0.0
      %5050 = vmatmul.mubr.f32.gmra.mrb[0].mxu0 %v4856
      %v5051 = vpop.f32.mrb[0].mxu0
      %v5052 = vadd.f32 0.0, %v5051
      %v5053 = vpop.f32.mrb[0].mxu0
      %5054 = vmatprep.mubr.f32.mxu0 0.0
      %5055 = vmatmul.mubr.f32.gmra.mrb[0].mxu0 %v4859
      %v5056 = vpop.f32.mrb[0].mxu0
      %v5057 = vadd.f32 0.0, %v5056
      %v5058 = vpop.f32.mrb[0].mxu0
      %5059 = vmatprep.mubr.f32.mxu0 0.0
      %5060 = vmatmul.mubr.f32.gmra.mrb[0].mxu0 %v4862
      %v5061 = vpop.f32.mrb[0].mxu0
      %v5062 = vadd.f32 0.0, %v5061
      %v5063 = vpop.f32.mrb[0].mxu0
      %5064 = vmatprep.mubr.f32.mxu0 0.0
      %5065 = vmatmul.mubr.f32.gmra.mrb[0].mxu0 %v4865
      %v5066 = vpop.f32.mrb[0].mxu0
      %v5067 = vadd.f32 0.0, %v5066
      %v5068 = vpop.f32.mrb[0].mxu0
      %5069 = vmatprep.mubr.f32.mxu0 0.0
      %5070 = vmatmul.mubr.f32.gmra.mrb[0].mxu0 %v4868
      %v5071 = vpop.f32.mrb[0].mxu0
      %v5072 = vadd.f32 0.0, %v5071
      %v5073 = vpop.f32.mrb[0].mxu0
      %5074 = vmatprep.mubr.f32.mxu0 0.0
      %5075 = vmatmul.mubr.f32.gmra.mrb[0].mxu0 %v4871
      %v5076 = vpop.f32.mrb[0].mxu0
      %v5077 = vadd.f32 0.0, %v5076
      %v5078 = vpop.f32.mrb[0].mxu0
      %5079 = vmatprep.mubr.f32.mxu0 0.0
      %5080 = vmatmul.mubr.f32.gmra.mrb[0].mxu0 %v4874
      %v5081 = vpop.f32.mrb[0].mxu0
      %v5082 = vadd.f32 0.0, %v5081
      %v5083 = vpop.f32.mrb[0].mxu0
      %5084 = vmatprep.mubr.f32.mxu0 0.0
      %5085 = vmatmul.mubr.f32.gmra.mrb[0].mxu0 %v4877
      %v5086 = vpop.f32.mrb[0].mxu0
      %v5087 = vadd.f32 0.0, %v5086
      %v5088 = vpop.f32.mrb[0].mxu0
      %5089 = vmatprep.mubr.f32.mxu0 0.0
      %5090 = vmatmul.mubr.f32.gmra.mrb[0].mxu0 %v4880
      %v5091 = vpop.f32.mrb[0].mxu0
      %v5092 = vadd.f32 0.0, %v5091
      %v5093 = vpop.f32.mrb[0].mxu0
      %5094 = vmatprep.mubr.f32.mxu0 0.0
      %5095 = vmatmul.mubr.f32.gmra.mrb[0].mxu0 %v4883
      %v5096 = vpop.f32.mrb[0].mxu0
      %v5097 = vadd.f32 0.0, %v5096
      %v5098 = vpop.f32.mrb[0].mxu0
      %5099 = vmatprep.mubr.f32.mxu0 0.0
      %5100 = vmatmul.mubr.f32.gmra.mrb[0].mxu0 %v4886
      %v5101 = vpop.f32.mrb[0].mxu0
      %v5102 = vadd.f32 0.0, %v5101
      %v5103 = vpop.f32.mrb[0].mxu0
      %5104 = vmatprep.mubr.f32.mxu0 0.0
      %5105 = vmatmul.mubr.f32.gmra.mrb[0].mxu0 %v4889
      %v5106 = vpop.f32.mrb[0].mxu0
      %v5107 = vadd.f32 0.0, %v5106
      %v5108 = vpop.f32.mrb[0].mxu0
      %5109 = vmatprep.mubr.f32.mxu0 0.0
      %5110 = vmatmul.mubr.f32.gmra.mrb[0].mxu0 %v4892
      %v5111 = vpop.f32.mrb[0].mxu0
      %v5112 = vadd.f32 0.0, %v5111
      %v5113 = vpop.f32.mrb[0].mxu0
      %5114 = vmatprep.mubr.f32.mxu0 0.0
      %5115 = vmatmul.mubr.f32.gmra.mrb[0].mxu0 %v4895
      %v5116 = vpop.f32.mrb[0].mxu0
      %v5117 = vadd.f32 0.0, %v5116
      %v5118 = vpop.f32.mrb[0].mxu0
      %5119 = vmatprep.mubr.f32.mxu0 0.0
      %5120 = vmatmul.mubr.f32.gmra.mrb[0].mxu0 %v4898
      %v5121 = vpop.f32.mrb[0].mxu0
      %v5122 = vadd.f32 0.0, %v5121
      %v5123 = vpop.f32.mrb[0].mxu0
      %5124 = vdwg.mxu0
      %v5125 = vadd.f32 %v4612, %v4967
      %v5126 = vadd.f32 %v4617, %v4972
      %v5127 = vadd.f32 %v4622, %v4977
      %v5128 = vadd.f32 %v4627, %v4982
      %v5129 = vadd.f32 %v4632, %v4987
      %v5130 = vadd.f32 %v4637, %v4992
      %v5131 = vadd.f32 %v4642, %v4997
      %v5132 = vadd.f32 %v4647, %v5002
      %v5133 = vadd.f32 %v4652, %v5007
      %v5134 = vadd.f32 %v4657, %v5012
      %v5135 = vadd.f32 %v4662, %v5017
      %v5136 = vadd.f32 %v4667, %v5022
      %v5137 = vadd.f32 %v4672, %v5027
      %v5138 = vadd.f32 %v4677, %v5032
      %v5139 = vadd.f32 %v4682, %v5037
      %v5140 = vadd.f32 %v4687, %v5042
      %v5141 = vadd.f32 %v4692, %v5047
      %v5142 = vadd.f32 %v4697, %v5052
      %v5143 = vadd.f32 %v4702, %v5057
      %v5144 = vadd.f32 %v4707, %v5062
      %v5145 = vadd.f32 %v4712, %v5067
      %v5146 = vadd.f32 %v4717, %v5072
      %v5147 = vadd.f32 %v4722, %v5077
      %v5148 = vadd.f32 %v4727, %v5082
      %v5149 = vadd.f32 %v4732, %v5087
      %v5150 = vadd.f32 %v4737, %v5092
      %v5151 = vadd.f32 %v4742, %v5097
      %v5152 = vadd.f32 %v4747, %v5102
      %v5153 = vadd.f32 %v4752, %v5107
      %v5154 = vadd.f32 %v4757, %v5112
      %v5155 = vadd.f32 %v4762, %v5117
      %v5156 = vadd.f32 %v4767, %v5122
      %v5157 = vld [vmem:[%s467] sm:$0xff]
      %v5158 = vld [vmem:[%s467 + $0x8] sm:$0xff]
      %v5159 = vld [vmem:[%s467 + $0x18] sm:$0xff]
      %v5160 = vld [vmem:[%s467 + $0x20] sm:$0xff]
      %v5161 = vld [vmem:[%s467 + $0x30] sm:$0xff]
      %v5162 = vld [vmem:[%s467 + $0x38] sm:$0xff]
      %v5163 = vld [vmem:[%s467 + $0x48] sm:$0xff]
      %v5164 = vld [vmem:[%s467 + $0x50] sm:$0xff]
      %v5165 = vld [vmem:[%s467 + $0x60] sm:$0xff]
      %v5166 = vld [vmem:[%s467 + $0x68] sm:$0xff]
      %v5167 = vld [vmem:[%s467 + $0x78] sm:$0xff]
      %v5168 = vld [vmem:[%s467 + $0x80] sm:$0xff]
      %v5169 = vld [vmem:[%s467 + $0x90] sm:$0xff]
      %v5170 = vld [vmem:[%s467 + $0x98] sm:$0xff]
      %v5171 = vld [vmem:[%s467 + $0xa8] sm:$0xff]
      %v5172 = vld [vmem:[%s467 + $0xb0] sm:$0xff]
      %v5173 = vld [vmem:[%s467 + $0xc0] sm:$0xff]
      %v5174 = vld [vmem:[%s467 + $0xc8] sm:$0xff]
      %v5175 = vld [vmem:[%s467 + $0xd8] sm:$0xff]
      %v5176 = vld [vmem:[%s467 + $0xe0] sm:$0xff]
      %v5177 = vld [vmem:[%s467 + $0xf0] sm:$0xff]
      %v5178 = vld [vmem:[%s467 + $0xf8] sm:$0xff]
      %v5179 = vld [vmem:[%s467 + $0x108] sm:$0xff]
      %v5180 = vld [vmem:[%s467 + $0x110] sm:$0xff]
      %v5181 = vld [vmem:[%s467 + $0x120] sm:$0xff]
      %v5182 = vld [vmem:[%s467 + $0x128] sm:$0xff]
      %v5183 = vld [vmem:[%s467 + $0x138] sm:$0xff]
      %v5184 = vld [vmem:[%s467 + $0x140] sm:$0xff]
      %v5185 = vld [vmem:[%s467 + $0x150] sm:$0xff]
      %v5186 = vld [vmem:[%s467 + $0x158] sm:$0xff]
      %v5187 = vld [vmem:[%s467 + $0x168] sm:$0xff]
      %v5188 = vld [vmem:[%s467 + $0x170] sm:$0xff]
      %s5189 = scalar_lea.vmem %s6, 24
      %v5190 = vld [vmem:[%s5189] sm:$0xff]
      %v5192 = vsel %vm421, %v5157, 0
      %v5195 = vsel %vm421, %v5158, 0
      %v5198 = vsel %vm421, %v5159, 0
      %v5201 = vsel %vm421, %v5160, 0
      %v5204 = vsel %vm421, %v5161, 0
      %v5207 = vsel %vm421, %v5162, 0
      %v5210 = vsel %vm421, %v5163, 0
      %v5213 = vsel %vm421, %v5164, 0
      %v5216 = vsel %vm421, %v5165, 0
      %v5219 = vsel %vm421, %v5166, 0
      %v5222 = vsel %vm421, %v5167, 0
      %v5225 = vsel %vm421, %v5168, 0
      %v5228 = vsel %vm421, %v5169, 0
      %v5231 = vsel %vm421, %v5170, 0
      %v5234 = vsel %vm421, %v5171, 0
      %v5237 = vsel %vm421, %v5172, 0
      %v5240 = vsel %vm421, %v5173, 0
      %v5243 = vsel %vm421, %v5174, 0
      %v5246 = vsel %vm421, %v5175, 0
      %v5249 = vsel %vm421, %v5176, 0
      %v5252 = vsel %vm421, %v5177, 0
      %v5255 = vsel %vm421, %v5178, 0
      %v5258 = vsel %vm421, %v5179, 0
      %v5261 = vsel %vm421, %v5180, 0
      %v5264 = vsel %vm421, %v5181, 0
      %v5267 = vsel %vm421, %v5182, 0
      %v5270 = vsel %vm421, %v5183, 0
      %v5273 = vsel %vm421, %v5184, 0
      %v5276 = vsel %vm421, %v5185, 0
      %v5279 = vsel %vm421, %v5186, 0
      %v5282 = vsel %vm421, %v5187, 0
      %v5285 = vsel %vm421, %v5188, 0
      %5287 = vmatprep.subr.mxu0 0.0
      %5288 = vmatpush1.msra.mxu0 %v5190
      %5289 = vmatprep.subr.mxu0 0.0
      %5290 = vmatpush1.msra.mxu0 0.0
      %5291 = vmatprep.subr.mxu0 0.0
      %5292 = vmatpush1.msra.mxu0 0.0
      %5293 = vmatprep.subr.mxu0 0.0
      %5294 = vmatpush1.msra.mxu0 0.0
      %5295 = vmatprep.subr.mxu0 0.0
      %5296 = vmatpush1.msra.mxu0 0.0
      %5297 = vmatprep.subr.mxu0 0.0
      %5298 = vmatpush1.msra.mxu0 0.0
      %5299 = vmatprep.subr.mxu0 0.0
      %5300 = vmatpush1.msra.mxu0 0.0
      %5301 = vmatprep.subr.mxu0 0.0
      %5302 = vmatpush1.msra.mxu0 0.0
      %5303 = vmatprep.subr.mxu0 0.0
      %5304 = vmatpush1.msra.mxu0 0.0
      %5305 = vmatprep.subr.mxu0 0.0
      %5306 = vmatpush1.msra.mxu0 0.0
      %5307 = vmatprep.subr.mxu0 0.0
      %5308 = vmatpush1.msra.mxu0 0.0
      %5309 = vmatprep.subr.mxu0 0.0
      %5310 = vmatpush1.msra.mxu0 0.0
      %5311 = vmatprep.subr.mxu0 0.0
      %5312 = vmatpush1.msra.mxu0 0.0
      %5313 = vmatprep.subr.mxu0 0.0
      %5314 = vmatpush1.msra.mxu0 0.0
      %5315 = vmatprep.subr.mxu0 0.0
      %5316 = vmatpush1.msra.mxu0 0.0
      %5317 = vmatprep.subr.mxu0 0.0
      %5318 = vmatpush1.msra.mxu0 0.0
      %5319 = vmatprep.subr.mxu0 0.0
      %5320 = vmatpush1.msra.mxu0 0.0
      %5321 = vmatprep.subr.mxu0 0.0
      %5322 = vmatpush1.msra.mxu0 0.0
      %5323 = vmatprep.subr.mxu0 0.0
      %5324 = vmatpush1.msra.mxu0 0.0
      %5325 = vmatprep.subr.mxu0 0.0
      %5326 = vmatpush1.msra.mxu0 0.0
      %5327 = vmatprep.subr.mxu0 0.0
      %5328 = vmatpush1.msra.mxu0 0.0
      %5329 = vmatprep.subr.mxu0 0.0
      %5330 = vmatpush1.msra.mxu0 0.0
      %5331 = vmatprep.subr.mxu0 0.0
      %5332 = vmatpush1.msra.mxu0 0.0
      %5333 = vmatprep.subr.mxu0 0.0
      %5334 = vmatpush1.msra.mxu0 0.0
      %5335 = vmatprep.subr.mxu0 0.0
      %5336 = vmatpush1.msra.mxu0 0.0
      %5337 = vmatprep.subr.mxu0 0.0
      %5338 = vmatpush1.msra.mxu0 0.0
      %5339 = vmatprep.subr.mxu0 0.0
      %5340 = vmatpush1.msra.mxu0 0.0
      %5341 = vmatprep.subr.mxu0 0.0
      %5342 = vmatpush1.msra.mxu0 0.0
      %5343 = vmatprep.subr.mxu0 0.0
      %5344 = vmatpush1.msra.mxu0 0.0
      %5345 = vmatprep.subr.mxu0 0.0
      %5346 = vmatpush1.msra.mxu0 0.0
      %5347 = vmatprep.subr.mxu0 0.0
      %5348 = vmatpush1.msra.mxu0 0.0
      %5349 = vmatprep.subr.mxu0 0.0
      %5350 = vmatpush1.msra.mxu0 0.0
      %5351 = vmatprep.mubr.f32.mxu0 0.0
      %5352 = vmatmul.mubr.f32.gmra.mrb[0].mxu0 %v5192
      %v5353 = vpop.f32.mrb[0].mxu0
      %v5354 = vadd.f32 0.0, %v5353
      %v5355 = vpop.f32.mrb[0].mxu0
      %5356 = vmatprep.mubr.f32.mxu0 0.0
      %5357 = vmatmul.mubr.f32.gmra.mrb[0].mxu0 %v5195
      %v5358 = vpop.f32.mrb[0].mxu0
      %v5359 = vadd.f32 0.0, %v5358
      %v5360 = vpop.f32.mrb[0].mxu0
      %5361 = vmatprep.mubr.f32.mxu0 0.0
      %5362 = vmatmul.mubr.f32.gmra.mrb[0].mxu0 %v5198
      %v5363 = vpop.f32.mrb[0].mxu0
      %v5364 = vadd.f32 0.0, %v5363
      %v5365 = vpop.f32.mrb[0].mxu0
      %5366 = vmatprep.mubr.f32.mxu0 0.0
      %5367 = vmatmul.mubr.f32.gmra.mrb[0].mxu0 %v5201
      %v5368 = vpop.f32.mrb[0].mxu0
      %v5369 = vadd.f32 0.0, %v5368
      %v5370 = vpop.f32.mrb[0].mxu0
      %5371 = vmatprep.mubr.f32.mxu0 0.0
      %5372 = vmatmul.mubr.f32.gmra.mrb[0].mxu0 %v5204
      %v5373 = vpop.f32.mrb[0].mxu0
      %v5374 = vadd.f32 0.0, %v5373
      %v5375 = vpop.f32.mrb[0].mxu0
      %5376 = vmatprep.mubr.f32.mxu0 0.0
      %5377 = vmatmul.mubr.f32.gmra.mrb[0].mxu0 %v5207
      %v5378 = vpop.f32.mrb[0].mxu0
      %v5379 = vadd.f32 0.0, %v5378
      %v5380 = vpop.f32.mrb[0].mxu0
      %5381 = vmatprep.mubr.f32.mxu0 0.0
      %5382 = vmatmul.mubr.f32.gmra.mrb[0].mxu0 %v5210
      %v5383 = vpop.f32.mrb[0].mxu0
      %v5384 = vadd.f32 0.0, %v5383
      %v5385 = vpop.f32.mrb[0].mxu0
      %5386 = vmatprep.mubr.f32.mxu0 0.0
      %5387 = vmatmul.mubr.f32.gmra.mrb[0].mxu0 %v5213
      %v5388 = vpop.f32.mrb[0].mxu0
      %v5389 = vadd.f32 0.0, %v5388
      %v5390 = vpop.f32.mrb[0].mxu0
      %5391 = vmatprep.mubr.f32.mxu0 0.0
      %5392 = vmatmul.mubr.f32.gmra.mrb[0].mxu0 %v5216
      %v5393 = vpop.f32.mrb[0].mxu0
      %v5394 = vadd.f32 0.0, %v5393
      %v5395 = vpop.f32.mrb[0].mxu0
      %5396 = vmatprep.mubr.f32.mxu0 0.0
      %5397 = vmatmul.mubr.f32.gmra.mrb[0].mxu0 %v5219
      %v5398 = vpop.f32.mrb[0].mxu0
      %v5399 = vadd.f32 0.0, %v5398
      %v5400 = vpop.f32.mrb[0].mxu0
      %5401 = vmatprep.mubr.f32.mxu0 0.0
      %5402 = vmatmul.mubr.f32.gmra.mrb[0].mxu0 %v5222
      %v5403 = vpop.f32.mrb[0].mxu0
      %v5404 = vadd.f32 0.0, %v5403
      %v5405 = vpop.f32.mrb[0].mxu0
      %5406 = vmatprep.mubr.f32.mxu0 0.0
      %5407 = vmatmul.mubr.f32.gmra.mrb[0].mxu0 %v5225
      %v5408 = vpop.f32.mrb[0].mxu0
      %v5409 = vadd.f32 0.0, %v5408
      %v5410 = vpop.f32.mrb[0].mxu0
      %5411 = vmatprep.mubr.f32.mxu0 0.0
      %5412 = vmatmul.mubr.f32.gmra.mrb[0].mxu0 %v5228
      %v5413 = vpop.f32.mrb[0].mxu0
      %v5414 = vadd.f32 0.0, %v5413
      %v5415 = vpop.f32.mrb[0].mxu0
      %5416 = vmatprep.mubr.f32.mxu0 0.0
      %5417 = vmatmul.mubr.f32.gmra.mrb[0].mxu0 %v5231
      %v5418 = vpop.f32.mrb[0].mxu0
      %v5419 = vadd.f32 0.0, %v5418
      %v5420 = vpop.f32.mrb[0].mxu0
      %5421 = vmatprep.mubr.f32.mxu0 0.0
      %5422 = vmatmul.mubr.f32.gmra.mrb[0].mxu0 %v5234
      %v5423 = vpop.f32.mrb[0].mxu0
      %v5424 = vadd.f32 0.0, %v5423
      %v5425 = vpop.f32.mrb[0].mxu0
      %5426 = vmatprep.mubr.f32.mxu0 0.0
      %5427 = vmatmul.mubr.f32.gmra.mrb[0].mxu0 %v5237
      %v5428 = vpop.f32.mrb[0].mxu0
      %v5429 = vadd.f32 0.0, %v5428
      %v5430 = vpop.f32.mrb[0].mxu0
      %5431 = vmatprep.mubr.f32.mxu0 0.0
      %5432 = vmatmul.mubr.f32.gmra.mrb[0].mxu0 %v5240
      %v5433 = vpop.f32.mrb[0].mxu0
      %v5434 = vadd.f32 0.0, %v5433
      %v5435 = vpop.f32.mrb[0].mxu0
      %5436 = vmatprep.mubr.f32.mxu0 0.0
      %5437 = vmatmul.mubr.f32.gmra.mrb[0].mxu0 %v5243
      %v5438 = vpop.f32.mrb[0].mxu0
      %v5439 = vadd.f32 0.0, %v5438
      %v5440 = vpop.f32.mrb[0].mxu0
      %5441 = vmatprep.mubr.f32.mxu0 0.0
      %5442 = vmatmul.mubr.f32.gmra.mrb[0].mxu0 %v5246
      %v5443 = vpop.f32.mrb[0].mxu0
      %v5444 = vadd.f32 0.0, %v5443
      %v5445 = vpop.f32.mrb[0].mxu0
      %5446 = vmatprep.mubr.f32.mxu0 0.0
      %5447 = vmatmul.mubr.f32.gmra.mrb[0].mxu0 %v5249
      %v5448 = vpop.f32.mrb[0].mxu0
      %v5449 = vadd.f32 0.0, %v5448
      %v5450 = vpop.f32.mrb[0].mxu0
      %5451 = vmatprep.mubr.f32.mxu0 0.0
      %5452 = vmatmul.mubr.f32.gmra.mrb[0].mxu0 %v5252
      %v5453 = vpop.f32.mrb[0].mxu0
      %v5454 = vadd.f32 0.0, %v5453
      %v5455 = vpop.f32.mrb[0].mxu0
      %5456 = vmatprep.mubr.f32.mxu0 0.0
      %5457 = vmatmul.mubr.f32.gmra.mrb[0].mxu0 %v5255
      %v5458 = vpop.f32.mrb[0].mxu0
      %v5459 = vadd.f32 0.0, %v5458
      %v5460 = vpop.f32.mrb[0].mxu0
      %5461 = vmatprep.mubr.f32.mxu0 0.0
      %5462 = vmatmul.mubr.f32.gmra.mrb[0].mxu0 %v5258
      %v5463 = vpop.f32.mrb[0].mxu0
      %v5464 = vadd.f32 0.0, %v5463
      %v5465 = vpop.f32.mrb[0].mxu0
      %5466 = vmatprep.mubr.f32.mxu0 0.0
      %5467 = vmatmul.mubr.f32.gmra.mrb[0].mxu0 %v5261
      %v5468 = vpop.f32.mrb[0].mxu0
      %v5469 = vadd.f32 0.0, %v5468
      %v5470 = vpop.f32.mrb[0].mxu0
      %5471 = vmatprep.mubr.f32.mxu0 0.0
      %5472 = vmatmul.mubr.f32.gmra.mrb[0].mxu0 %v5264
      %v5473 = vpop.f32.mrb[0].mxu0
      %v5474 = vadd.f32 0.0, %v5473
      %v5475 = vpop.f32.mrb[0].mxu0
      %5476 = vmatprep.mubr.f32.mxu0 0.0
      %5477 = vmatmul.mubr.f32.gmra.mrb[0].mxu0 %v5267
      %v5478 = vpop.f32.mrb[0].mxu0
      %v5479 = vadd.f32 0.0, %v5478
      %v5480 = vpop.f32.mrb[0].mxu0
      %5481 = vmatprep.mubr.f32.mxu0 0.0
      %5482 = vmatmul.mubr.f32.gmra.mrb[0].mxu0 %v5270
      %v5483 = vpop.f32.mrb[0].mxu0
      %v5484 = vadd.f32 0.0, %v5483
      %v5485 = vpop.f32.mrb[0].mxu0
      %5486 = vmatprep.mubr.f32.mxu0 0.0
      %5487 = vmatmul.mubr.f32.gmra.mrb[0].mxu0 %v5273
      %v5488 = vpop.f32.mrb[0].mxu0
      %v5489 = vadd.f32 0.0, %v5488
      %v5490 = vpop.f32.mrb[0].mxu0
      %5491 = vmatprep.mubr.f32.mxu0 0.0
      %5492 = vmatmul.mubr.f32.gmra.mrb[0].mxu0 %v5276
      %v5493 = vpop.f32.mrb[0].mxu0
      %v5494 = vadd.f32 0.0, %v5493
      %v5495 = vpop.f32.mrb[0].mxu0
      %5496 = vmatprep.mubr.f32.mxu0 0.0
      %5497 = vmatmul.mubr.f32.gmra.mrb[0].mxu0 %v5279
      %v5498 = vpop.f32.mrb[0].mxu0
      %v5499 = vadd.f32 0.0, %v5498
      %v5500 = vpop.f32.mrb[0].mxu0
      %5501 = vmatprep.mubr.f32.mxu0 0.0
      %5502 = vmatmul.mubr.f32.gmra.mrb[0].mxu0 %v5282
      %v5503 = vpop.f32.mrb[0].mxu0
      %v5504 = vadd.f32 0.0, %v5503
      %v5505 = vpop.f32.mrb[0].mxu0
      %5506 = vmatprep.mubr.f32.mxu0 0.0
      %5507 = vmatmul.mubr.f32.gmra.mrb[0].mxu0 %v5285
      %v5508 = vpop.f32.mrb[0].mxu0
      %v5509 = vadd.f32 0.0, %v5508
      %v5510 = vpop.f32.mrb[0].mxu0
      %5511 = vdwg.mxu0
      %v5512 = vadd.f32 %v5125, %v5354
      %v5513 = vadd.f32 %v5126, %v5359
      %v5514 = vadd.f32 %v5127, %v5364
      %v5515 = vadd.f32 %v5128, %v5369
      %v5516 = vadd.f32 %v5129, %v5374
      %v5517 = vadd.f32 %v5130, %v5379
      %v5518 = vadd.f32 %v5131, %v5384
      %v5519 = vadd.f32 %v5132, %v5389
      %v5520 = vadd.f32 %v5133, %v5394
      %v5521 = vadd.f32 %v5134, %v5399
      %v5522 = vadd.f32 %v5135, %v5404
      %v5523 = vadd.f32 %v5136, %v5409
      %v5524 = vadd.f32 %v5137, %v5414
      %v5525 = vadd.f32 %v5138, %v5419
      %v5526 = vadd.f32 %v5139, %v5424
      %v5527 = vadd.f32 %v5140, %v5429
      %v5528 = vadd.f32 %v5141, %v5434
      %v5529 = vadd.f32 %v5142, %v5439
      %v5530 = vadd.f32 %v5143, %v5444
      %v5531 = vadd.f32 %v5144, %v5449
      %v5532 = vadd.f32 %v5145, %v5454
      %v5533 = vadd.f32 %v5146, %v5459
      %v5534 = vadd.f32 %v5147, %v5464
      %v5535 = vadd.f32 %v5148, %v5469
      %v5536 = vadd.f32 %v5149, %v5474
      %v5537 = vadd.f32 %v5150, %v5479
      %v5538 = vadd.f32 %v5151, %v5484
      %v5539 = vadd.f32 %v5152, %v5489
      %v5540 = vadd.f32 %v5153, %v5494
      %v5541 = vadd.f32 %v5154, %v5499
      %v5542 = vadd.f32 %v5155, %v5504
      %v5543 = vadd.f32 %v5156, %v5509
      %v5544 = vld [vmem:[%s467 + $0x1] sm:$0xff]
      %v5545 = vld [vmem:[%s467 + $0x9] sm:$0xff]
      %v5546 = vld [vmem:[%s467 + $0x19] sm:$0xff]
      %v5547 = vld [vmem:[%s467 + $0x21] sm:$0xff]
      %v5548 = vld [vmem:[%s467 + $0x31] sm:$0xff]
      %v5549 = vld [vmem:[%s467 + $0x39] sm:$0xff]
      %v5550 = vld [vmem:[%s467 + $0x49] sm:$0xff]
      %v5551 = vld [vmem:[%s467 + $0x51] sm:$0xff]
      %v5552 = vld [vmem:[%s467 + $0x61] sm:$0xff]
      %v5553 = vld [vmem:[%s467 + $0x69] sm:$0xff]
      %v5554 = vld [vmem:[%s467 + $0x79] sm:$0xff]
      %v5555 = vld [vmem:[%s467 + $0x81] sm:$0xff]
      %v5556 = vld [vmem:[%s467 + $0x91] sm:$0xff]
      %v5557 = vld [vmem:[%s467 + $0x99] sm:$0xff]
      %v5558 = vld [vmem:[%s467 + $0xa9] sm:$0xff]
      %v5559 = vld [vmem:[%s467 + $0xb1] sm:$0xff]
      %v5560 = vld [vmem:[%s467 + $0xc1] sm:$0xff]
      %v5561 = vld [vmem:[%s467 + $0xc9] sm:$0xff]
      %v5562 = vld [vmem:[%s467 + $0xd9] sm:$0xff]
      %v5563 = vld [vmem:[%s467 + $0xe1] sm:$0xff]
      %v5564 = vld [vmem:[%s467 + $0xf1] sm:$0xff]
      %v5565 = vld [vmem:[%s467 + $0xf9] sm:$0xff]
      %v5566 = vld [vmem:[%s467 + $0x109] sm:$0xff]
      %v5567 = vld [vmem:[%s467 + $0x111] sm:$0xff]
      %v5568 = vld [vmem:[%s467 + $0x121] sm:$0xff]
      %v5569 = vld [vmem:[%s467 + $0x129] sm:$0xff]
      %v5570 = vld [vmem:[%s467 + $0x139] sm:$0xff]
      %v5571 = vld [vmem:[%s467 + $0x141] sm:$0xff]
      %v5572 = vld [vmem:[%s467 + $0x151] sm:$0xff]
      %v5573 = vld [vmem:[%s467 + $0x159] sm:$0xff]
      %v5574 = vld [vmem:[%s467 + $0x169] sm:$0xff]
      %v5575 = vld [vmem:[%s467 + $0x171] sm:$0xff]
      %s5576 = scalar_lea.vmem %s6, 32
      %v5577 = vld [vmem:[%s5576] sm:$0xff]
      %v5579 = vsel %vm421, %v5544, 0
      %v5582 = vsel %vm421, %v5545, 0
      %v5585 = vsel %vm421, %v5546, 0
      %v5588 = vsel %vm421, %v5547, 0
      %v5591 = vsel %vm421, %v5548, 0
      %v5594 = vsel %vm421, %v5549, 0
      %v5597 = vsel %vm421, %v5550, 0
      %v5600 = vsel %vm421, %v5551, 0
      %v5603 = vsel %vm421, %v5552, 0
      %v5606 = vsel %vm421, %v5553, 0
      %v5609 = vsel %vm421, %v5554, 0
      %v5612 = vsel %vm421, %v5555, 0
      %v5615 = vsel %vm421, %v5556, 0
      %v5618 = vsel %vm421, %v5557, 0
      %v5621 = vsel %vm421, %v5558, 0
      %v5624 = vsel %vm421, %v5559, 0
      %v5627 = vsel %vm421, %v5560, 0
      %v5630 = vsel %vm421, %v5561, 0
      %v5633 = vsel %vm421, %v5562, 0
      %v5636 = vsel %vm421, %v5563, 0
      %v5639 = vsel %vm421, %v5564, 0
      %v5642 = vsel %vm421, %v5565, 0
      %v5645 = vsel %vm421, %v5566, 0
      %v5648 = vsel %vm421, %v5567, 0
      %v5651 = vsel %vm421, %v5568, 0
      %v5654 = vsel %vm421, %v5569, 0
      %v5657 = vsel %vm421, %v5570, 0
      %v5660 = vsel %vm421, %v5571, 0
      %v5663 = vsel %vm421, %v5572, 0
      %v5666 = vsel %vm421, %v5573, 0
      %v5669 = vsel %vm421, %v5574, 0
      %v5672 = vsel %vm421, %v5575, 0
      %5674 = vmatprep.subr.mxu0 0.0
      %5675 = vmatpush1.msra.mxu0 %v5577
      %5676 = vmatprep.subr.mxu0 0.0
      %5677 = vmatpush1.msra.mxu0 0.0
      %5678 = vmatprep.subr.mxu0 0.0
      %5679 = vmatpush1.msra.mxu0 0.0
      %5680 = vmatprep.subr.mxu0 0.0
      %5681 = vmatpush1.msra.mxu0 0.0
      %5682 = vmatprep.subr.mxu0 0.0
      %5683 = vmatpush1.msra.mxu0 0.0
      %5684 = vmatprep.subr.mxu0 0.0
      %5685 = vmatpush1.msra.mxu0 0.0
      %5686 = vmatprep.subr.mxu0 0.0
      %5687 = vmatpush1.msra.mxu0 0.0
      %5688 = vmatprep.subr.mxu0 0.0
      %5689 = vmatpush1.msra.mxu0 0.0
      %5690 = vmatprep.subr.mxu0 0.0
      %5691 = vmatpush1.msra.mxu0 0.0
      %5692 = vmatprep.subr.mxu0 0.0
      %5693 = vmatpush1.msra.mxu0 0.0
      %5694 = vmatprep.subr.mxu0 0.0
      %5695 = vmatpush1.msra.mxu0 0.0
      %5696 = vmatprep.subr.mxu0 0.0
      %5697 = vmatpush1.msra.mxu0 0.0
      %5698 = vmatprep.subr.mxu0 0.0
      %5699 = vmatpush1.msra.mxu0 0.0
      %5700 = vmatprep.subr.mxu0 0.0
      %5701 = vmatpush1.msra.mxu0 0.0
      %5702 = vmatprep.subr.mxu0 0.0
      %5703 = vmatpush1.msra.mxu0 0.0
      %5704 = vmatprep.subr.mxu0 0.0
      %5705 = vmatpush1.msra.mxu0 0.0
      %5706 = vmatprep.subr.mxu0 0.0
      %5707 = vmatpush1.msra.mxu0 0.0
      %5708 = vmatprep.subr.mxu0 0.0
      %5709 = vmatpush1.msra.mxu0 0.0
      %5710 = vmatprep.subr.mxu0 0.0
      %5711 = vmatpush1.msra.mxu0 0.0
      %5712 = vmatprep.subr.mxu0 0.0
      %5713 = vmatpush1.msra.mxu0 0.0
      %5714 = vmatprep.subr.mxu0 0.0
      %5715 = vmatpush1.msra.mxu0 0.0
      %5716 = vmatprep.subr.mxu0 0.0
      %5717 = vmatpush1.msra.mxu0 0.0
      %5718 = vmatprep.subr.mxu0 0.0
      %5719 = vmatpush1.msra.mxu0 0.0
      %5720 = vmatprep.subr.mxu0 0.0
      %5721 = vmatpush1.msra.mxu0 0.0
      %5722 = vmatprep.subr.mxu0 0.0
      %5723 = vmatpush1.msra.mxu0 0.0
      %5724 = vmatprep.subr.mxu0 0.0
      %5725 = vmatpush1.msra.mxu0 0.0
      %5726 = vmatprep.subr.mxu0 0.0
      %5727 = vmatpush1.msra.mxu0 0.0
      %5728 = vmatprep.subr.mxu0 0.0
      %5729 = vmatpush1.msra.mxu0 0.0
      %5730 = vmatprep.subr.mxu0 0.0
      %5731 = vmatpush1.msra.mxu0 0.0
      %5732 = vmatprep.subr.mxu0 0.0
      %5733 = vmatpush1.msra.mxu0 0.0
      %5734 = vmatprep.subr.mxu0 0.0
      %5735 = vmatpush1.msra.mxu0 0.0
      %5736 = vmatprep.subr.mxu0 0.0
      %5737 = vmatpush1.msra.mxu0 0.0
      %5738 = vmatprep.mubr.f32.mxu0 0.0
      %5739 = vmatmul.mubr.f32.gmra.mrb[0].mxu0 %v5579
      %v5740 = vpop.f32.mrb[0].mxu0
      %v5741 = vadd.f32 0.0, %v5740
      %v5742 = vpop.f32.mrb[0].mxu0
      %5743 = vmatprep.mubr.f32.mxu0 0.0
      %5744 = vmatmul.mubr.f32.gmra.mrb[0].mxu0 %v5582
      %v5745 = vpop.f32.mrb[0].mxu0
      %v5746 = vadd.f32 0.0, %v5745
      %v5747 = vpop.f32.mrb[0].mxu0
      %5748 = vmatprep.mubr.f32.mxu0 0.0
      %5749 = vmatmul.mubr.f32.gmra.mrb[0].mxu0 %v5585
      %v5750 = vpop.f32.mrb[0].mxu0
      %v5751 = vadd.f32 0.0, %v5750
      %v5752 = vpop.f32.mrb[0].mxu0
      %5753 = vmatprep.mubr.f32.mxu0 0.0
      %5754 = vmatmul.mubr.f32.gmra.mrb[0].mxu0 %v5588
      %v5755 = vpop.f32.mrb[0].mxu0
      %v5756 = vadd.f32 0.0, %v5755
      %v5757 = vpop.f32.mrb[0].mxu0
      %5758 = vmatprep.mubr.f32.mxu0 0.0
      %5759 = vmatmul.mubr.f32.gmra.mrb[0].mxu0 %v5591
      %v5760 = vpop.f32.mrb[0].mxu0
      %v5761 = vadd.f32 0.0, %v5760
      %v5762 = vpop.f32.mrb[0].mxu0
      %5763 = vmatprep.mubr.f32.mxu0 0.0
      %5764 = vmatmul.mubr.f32.gmra.mrb[0].mxu0 %v5594
      %v5765 = vpop.f32.mrb[0].mxu0
      %v5766 = vadd.f32 0.0, %v5765
      %v5767 = vpop.f32.mrb[0].mxu0
      %5768 = vmatprep.mubr.f32.mxu0 0.0
      %5769 = vmatmul.mubr.f32.gmra.mrb[0].mxu0 %v5597
      %v5770 = vpop.f32.mrb[0].mxu0
      %v5771 = vadd.f32 0.0, %v5770
      %v5772 = vpop.f32.mrb[0].mxu0
      %5773 = vmatprep.mubr.f32.mxu0 0.0
      %5774 = vmatmul.mubr.f32.gmra.mrb[0].mxu0 %v5600
      %v5775 = vpop.f32.mrb[0].mxu0
      %v5776 = vadd.f32 0.0, %v5775
      %v5777 = vpop.f32.mrb[0].mxu0
      %5778 = vmatprep.mubr.f32.mxu0 0.0
      %5779 = vmatmul.mubr.f32.gmra.mrb[0].mxu0 %v5603
      %v5780 = vpop.f32.mrb[0].mxu0
      %v5781 = vadd.f32 0.0, %v5780
      %v5782 = vpop.f32.mrb[0].mxu0
      %5783 = vmatprep.mubr.f32.mxu0 0.0
      %5784 = vmatmul.mubr.f32.gmra.mrb[0].mxu0 %v5606
      %v5785 = vpop.f32.mrb[0].mxu0
      %v5786 = vadd.f32 0.0, %v5785
      %v5787 = vpop.f32.mrb[0].mxu0
      %5788 = vmatprep.mubr.f32.mxu0 0.0
      %5789 = vmatmul.mubr.f32.gmra.mrb[0].mxu0 %v5609
      %v5790 = vpop.f32.mrb[0].mxu0
      %v5791 = vadd.f32 0.0, %v5790
      %v5792 = vpop.f32.mrb[0].mxu0
      %5793 = vmatprep.mubr.f32.mxu0 0.0
      %5794 = vmatmul.mubr.f32.gmra.mrb[0].mxu0 %v5612
      %v5795 = vpop.f32.mrb[0].mxu0
      %v5796 = vadd.f32 0.0, %v5795
      %v5797 = vpop.f32.mrb[0].mxu0
      %5798 = vmatprep.mubr.f32.mxu0 0.0
      %5799 = vmatmul.mubr.f32.gmra.mrb[0].mxu0 %v5615
      %v5800 = vpop.f32.mrb[0].mxu0
      %v5801 = vadd.f32 0.0, %v5800
      %v5802 = vpop.f32.mrb[0].mxu0
      %5803 = vmatprep.mubr.f32.mxu0 0.0
      %5804 = vmatmul.mubr.f32.gmra.mrb[0].mxu0 %v5618
      %v5805 = vpop.f32.mrb[0].mxu0
      %v5806 = vadd.f32 0.0, %v5805
      %v5807 = vpop.f32.mrb[0].mxu0
      %5808 = vmatprep.mubr.f32.mxu0 0.0
      %5809 = vmatmul.mubr.f32.gmra.mrb[0].mxu0 %v5621
      %v5810 = vpop.f32.mrb[0].mxu0
      %v5811 = vadd.f32 0.0, %v5810
      %v5812 = vpop.f32.mrb[0].mxu0
      %5813 = vmatprep.mubr.f32.mxu0 0.0
      %5814 = vmatmul.mubr.f32.gmra.mrb[0].mxu0 %v5624
      %v5815 = vpop.f32.mrb[0].mxu0
      %v5816 = vadd.f32 0.0, %v5815
      %v5817 = vpop.f32.mrb[0].mxu0
      %5818 = vmatprep.mubr.f32.mxu0 0.0
      %5819 = vmatmul.mubr.f32.gmra.mrb[0].mxu0 %v5627
      %v5820 = vpop.f32.mrb[0].mxu0
      %v5821 = vadd.f32 0.0, %v5820
      %v5822 = vpop.f32.mrb[0].mxu0
      %5823 = vmatprep.mubr.f32.mxu0 0.0
      %5824 = vmatmul.mubr.f32.gmra.mrb[0].mxu0 %v5630
      %v5825 = vpop.f32.mrb[0].mxu0
      %v5826 = vadd.f32 0.0, %v5825
      %v5827 = vpop.f32.mrb[0].mxu0
      %5828 = vmatprep.mubr.f32.mxu0 0.0
      %5829 = vmatmul.mubr.f32.gmra.mrb[0].mxu0 %v5633
      %v5830 = vpop.f32.mrb[0].mxu0
      %v5831 = vadd.f32 0.0, %v5830
      %v5832 = vpop.f32.mrb[0].mxu0
      %5833 = vmatprep.mubr.f32.mxu0 0.0
      %5834 = vmatmul.mubr.f32.gmra.mrb[0].mxu0 %v5636
      %v5835 = vpop.f32.mrb[0].mxu0
      %v5836 = vadd.f32 0.0, %v5835
      %v5837 = vpop.f32.mrb[0].mxu0
      %5838 = vmatprep.mubr.f32.mxu0 0.0
      %5839 = vmatmul.mubr.f32.gmra.mrb[0].mxu0 %v5639
      %v5840 = vpop.f32.mrb[0].mxu0
      %v5841 = vadd.f32 0.0, %v5840
      %v5842 = vpop.f32.mrb[0].mxu0
      %5843 = vmatprep.mubr.f32.mxu0 0.0
      %5844 = vmatmul.mubr.f32.gmra.mrb[0].mxu0 %v5642
      %v5845 = vpop.f32.mrb[0].mxu0
      %v5846 = vadd.f32 0.0, %v5845
      %v5847 = vpop.f32.mrb[0].mxu0
      %5848 = vmatprep.mubr.f32.mxu0 0.0
      %5849 = vmatmul.mubr.f32.gmra.mrb[0].mxu0 %v5645
      %v5850 = vpop.f32.mrb[0].mxu0
      %v5851 = vadd.f32 0.0, %v5850
      %v5852 = vpop.f32.mrb[0].mxu0
      %5853 = vmatprep.mubr.f32.mxu0 0.0
      %5854 = vmatmul.mubr.f32.gmra.mrb[0].mxu0 %v5648
      %v5855 = vpop.f32.mrb[0].mxu0
      %v5856 = vadd.f32 0.0, %v5855
      %v5857 = vpop.f32.mrb[0].mxu0
      %5858 = vmatprep.mubr.f32.mxu0 0.0
      %5859 = vmatmul.mubr.f32.gmra.mrb[0].mxu0 %v5651
      %v5860 = vpop.f32.mrb[0].mxu0
      %v5861 = vadd.f32 0.0, %v5860
      %v5862 = vpop.f32.mrb[0].mxu0
      %5863 = vmatprep.mubr.f32.mxu0 0.0
      %5864 = vmatmul.mubr.f32.gmra.mrb[0].mxu0 %v5654
      %v5865 = vpop.f32.mrb[0].mxu0
      %v5866 = vadd.f32 0.0, %v5865
      %v5867 = vpop.f32.mrb[0].mxu0
      %5868 = vmatprep.mubr.f32.mxu0 0.0
      %5869 = vmatmul.mubr.f32.gmra.mrb[0].mxu0 %v5657
      %v5870 = vpop.f32.mrb[0].mxu0
      %v5871 = vadd.f32 0.0, %v5870
      %v5872 = vpop.f32.mrb[0].mxu0
      %5873 = vmatprep.mubr.f32.mxu0 0.0
      %5874 = vmatmul.mubr.f32.gmra.mrb[0].mxu0 %v5660
      %v5875 = vpop.f32.mrb[0].mxu0
      %v5876 = vadd.f32 0.0, %v5875
      %v5877 = vpop.f32.mrb[0].mxu0
      %5878 = vmatprep.mubr.f32.mxu0 0.0
      %5879 = vmatmul.mubr.f32.gmra.mrb[0].mxu0 %v5663
      %v5880 = vpop.f32.mrb[0].mxu0
      %v5881 = vadd.f32 0.0, %v5880
      %v5882 = vpop.f32.mrb[0].mxu0
      %5883 = vmatprep.mubr.f32.mxu0 0.0
      %5884 = vmatmul.mubr.f32.gmra.mrb[0].mxu0 %v5666
      %v5885 = vpop.f32.mrb[0].mxu0
      %v5886 = vadd.f32 0.0, %v5885
      %v5887 = vpop.f32.mrb[0].mxu0
      %5888 = vmatprep.mubr.f32.mxu0 0.0
      %5889 = vmatmul.mubr.f32.gmra.mrb[0].mxu0 %v5669
      %v5890 = vpop.f32.mrb[0].mxu0
      %v5891 = vadd.f32 0.0, %v5890
      %v5892 = vpop.f32.mrb[0].mxu0
      %5893 = vmatprep.mubr.f32.mxu0 0.0
      %5894 = vmatmul.mubr.f32.gmra.mrb[0].mxu0 %v5672
      %v5895 = vpop.f32.mrb[0].mxu0
      %v5896 = vadd.f32 0.0, %v5895
      %v5897 = vpop.f32.mrb[0].mxu0
      %5898 = vdwg.mxu0
      %v5899 = vadd.f32 %v5512, %v5741
      %v5900 = vadd.f32 %v5513, %v5746
      %v5901 = vadd.f32 %v5514, %v5751
      %v5902 = vadd.f32 %v5515, %v5756
      %v5903 = vadd.f32 %v5516, %v5761
      %v5904 = vadd.f32 %v5517, %v5766
      %v5905 = vadd.f32 %v5518, %v5771
      %v5906 = vadd.f32 %v5519, %v5776
      %v5907 = vadd.f32 %v5520, %v5781
      %v5908 = vadd.f32 %v5521, %v5786
      %v5909 = vadd.f32 %v5522, %v5791
      %v5910 = vadd.f32 %v5523, %v5796
      %v5911 = vadd.f32 %v5524, %v5801
      %v5912 = vadd.f32 %v5525, %v5806
      %v5913 = vadd.f32 %v5526, %v5811
      %v5914 = vadd.f32 %v5527, %v5816
      %v5915 = vadd.f32 %v5528, %v5821
      %v5916 = vadd.f32 %v5529, %v5826
      %v5917 = vadd.f32 %v5530, %v5831
      %v5918 = vadd.f32 %v5531, %v5836
      %v5919 = vadd.f32 %v5532, %v5841
      %v5920 = vadd.f32 %v5533, %v5846
      %v5921 = vadd.f32 %v5534, %v5851
      %v5922 = vadd.f32 %v5535, %v5856
      %v5923 = vadd.f32 %v5536, %v5861
      %v5924 = vadd.f32 %v5537, %v5866
      %v5925 = vadd.f32 %v5538, %v5871
      %v5926 = vadd.f32 %v5539, %v5876
      %v5927 = vadd.f32 %v5540, %v5881
      %v5928 = vadd.f32 %v5541, %v5886
      %v5929 = vadd.f32 %v5542, %v5891
      %v5930 = vadd.f32 %v5543, %v5896
      %v5931 = vld [vmem:[%s467 + $0x2] sm:$0xff]
      %v5932 = vld [vmem:[%s467 + $0xa] sm:$0xff]
      %v5933 = vld [vmem:[%s467 + $0x1a] sm:$0xff]
      %v5934 = vld [vmem:[%s467 + $0x22] sm:$0xff]
      %v5935 = vld [vmem:[%s467 + $0x32] sm:$0xff]
      %v5936 = vld [vmem:[%s467 + $0x3a] sm:$0xff]
      %v5937 = vld [vmem:[%s467 + $0x4a] sm:$0xff]
      %v5938 = vld [vmem:[%s467 + $0x52] sm:$0xff]
      %v5939 = vld [vmem:[%s467 + $0x62] sm:$0xff]
      %v5940 = vld [vmem:[%s467 + $0x6a] sm:$0xff]
      %v5941 = vld [vmem:[%s467 + $0x7a] sm:$0xff]
      %v5942 = vld [vmem:[%s467 + $0x82] sm:$0xff]
      %v5943 = vld [vmem:[%s467 + $0x92] sm:$0xff]
      %v5944 = vld [vmem:[%s467 + $0x9a] sm:$0xff]
      %v5945 = vld [vmem:[%s467 + $0xaa] sm:$0xff]
      %v5946 = vld [vmem:[%s467 + $0xb2] sm:$0xff]
      %v5947 = vld [vmem:[%s467 + $0xc2] sm:$0xff]
      %v5948 = vld [vmem:[%s467 + $0xca] sm:$0xff]
      %v5949 = vld [vmem:[%s467 + $0xda] sm:$0xff]
      %v5950 = vld [vmem:[%s467 + $0xe2] sm:$0xff]
      %v5951 = vld [vmem:[%s467 + $0xf2] sm:$0xff]
      %v5952 = vld [vmem:[%s467 + $0xfa] sm:$0xff]
      %v5953 = vld [vmem:[%s467 + $0x10a] sm:$0xff]
      %v5954 = vld [vmem:[%s467 + $0x112] sm:$0xff]
      %v5955 = vld [vmem:[%s467 + $0x122] sm:$0xff]
      %v5956 = vld [vmem:[%s467 + $0x12a] sm:$0xff]
      %v5957 = vld [vmem:[%s467 + $0x13a] sm:$0xff]
      %v5958 = vld [vmem:[%s467 + $0x142] sm:$0xff]
      %v5959 = vld [vmem:[%s467 + $0x152] sm:$0xff]
      %v5960 = vld [vmem:[%s467 + $0x15a] sm:$0xff]
      %v5961 = vld [vmem:[%s467 + $0x16a] sm:$0xff]
      %v5962 = vld [vmem:[%s467 + $0x172] sm:$0xff]
      %s5963 = scalar_lea.vmem %s6, 40
      %v5964 = vld [vmem:[%s5963] sm:$0xff]
      %v5966 = vsel %vm421, %v5931, 0
      %v5969 = vsel %vm421, %v5932, 0
      %v5972 = vsel %vm421, %v5933, 0
      %v5975 = vsel %vm421, %v5934, 0
      %v5978 = vsel %vm421, %v5935, 0
      %v5981 = vsel %vm421, %v5936, 0
      %v5984 = vsel %vm421, %v5937, 0
      %v5987 = vsel %vm421, %v5938, 0
      %v5990 = vsel %vm421, %v5939, 0
      %v5993 = vsel %vm421, %v5940, 0
      %v5996 = vsel %vm421, %v5941, 0
      %v5999 = vsel %vm421, %v5942, 0
      %v6002 = vsel %vm421, %v5943, 0
      %v6005 = vsel %vm421, %v5944, 0
      %v6008 = vsel %vm421, %v5945, 0
      %v6011 = vsel %vm421, %v5946, 0
      %v6014 = vsel %vm421, %v5947, 0
      %v6017 = vsel %vm421, %v5948, 0
      %v6020 = vsel %vm421, %v5949, 0
      %v6023 = vsel %vm421, %v5950, 0
      %v6026 = vsel %vm421, %v5951, 0
      %v6029 = vsel %vm421, %v5952, 0
      %v6032 = vsel %vm421, %v5953, 0
      %v6035 = vsel %vm421, %v5954, 0
      %v6038 = vsel %vm421, %v5955, 0
      %v6041 = vsel %vm421, %v5956, 0
      %v6044 = vsel %vm421, %v5957, 0
      %v6047 = vsel %vm421, %v5958, 0
      %v6050 = vsel %vm421, %v5959, 0
      %v6053 = vsel %vm421, %v5960, 0
      %v6056 = vsel %vm421, %v5961, 0
      %v6059 = vsel %vm421, %v5962, 0
      %6061 = vmatprep.subr.mxu0 0.0
      %6062 = vmatpush1.msra.mxu0 %v5964
      %6063 = vmatprep.subr.mxu0 0.0
      %6064 = vmatpush1.msra.mxu0 0.0
      %6065 = vmatprep.subr.mxu0 0.0
      %6066 = vmatpush1.msra.mxu0 0.0
      %6067 = vmatprep.subr.mxu0 0.0
      %6068 = vmatpush1.msra.mxu0 0.0
      %6069 = vmatprep.subr.mxu0 0.0
      %6070 = vmatpush1.msra.mxu0 0.0
      %6071 = vmatprep.subr.mxu0 0.0
      %6072 = vmatpush1.msra.mxu0 0.0
      %6073 = vmatprep.subr.mxu0 0.0
      %6074 = vmatpush1.msra.mxu0 0.0
      %6075 = vmatprep.subr.mxu0 0.0
      %6076 = vmatpush1.msra.mxu0 0.0
      %6077 = vmatprep.subr.mxu0 0.0
      %6078 = vmatpush1.msra.mxu0 0.0
      %6079 = vmatprep.subr.mxu0 0.0
      %6080 = vmatpush1.msra.mxu0 0.0
      %6081 = vmatprep.subr.mxu0 0.0
      %6082 = vmatpush1.msra.mxu0 0.0
      %6083 = vmatprep.subr.mxu0 0.0
      %6084 = vmatpush1.msra.mxu0 0.0
      %6085 = vmatprep.subr.mxu0 0.0
      %6086 = vmatpush1.msra.mxu0 0.0
      %6087 = vmatprep.subr.mxu0 0.0
      %6088 = vmatpush1.msra.mxu0 0.0
      %6089 = vmatprep.subr.mxu0 0.0
      %6090 = vmatpush1.msra.mxu0 0.0
      %6091 = vmatprep.subr.mxu0 0.0
      %6092 = vmatpush1.msra.mxu0 0.0
      %6093 = vmatprep.subr.mxu0 0.0
      %6094 = vmatpush1.msra.mxu0 0.0
      %6095 = vmatprep.subr.mxu0 0.0
      %6096 = vmatpush1.msra.mxu0 0.0
      %6097 = vmatprep.subr.mxu0 0.0
      %6098 = vmatpush1.msra.mxu0 0.0
      %6099 = vmatprep.subr.mxu0 0.0
      %6100 = vmatpush1.msra.mxu0 0.0
      %6101 = vmatprep.subr.mxu0 0.0
      %6102 = vmatpush1.msra.mxu0 0.0
      %6103 = vmatprep.subr.mxu0 0.0
      %6104 = vmatpush1.msra.mxu0 0.0
      %6105 = vmatprep.subr.mxu0 0.0
      %6106 = vmatpush1.msra.mxu0 0.0
      %6107 = vmatprep.subr.mxu0 0.0
      %6108 = vmatpush1.msra.mxu0 0.0
      %6109 = vmatprep.subr.mxu0 0.0
      %6110 = vmatpush1.msra.mxu0 0.0
      %6111 = vmatprep.subr.mxu0 0.0
      %6112 = vmatpush1.msra.mxu0 0.0
      %6113 = vmatprep.subr.mxu0 0.0
      %6114 = vmatpush1.msra.mxu0 0.0
      %6115 = vmatprep.subr.mxu0 0.0
      %6116 = vmatpush1.msra.mxu0 0.0
      %6117 = vmatprep.subr.mxu0 0.0
      %6118 = vmatpush1.msra.mxu0 0.0
      %6119 = vmatprep.subr.mxu0 0.0
      %6120 = vmatpush1.msra.mxu0 0.0
      %6121 = vmatprep.subr.mxu0 0.0
      %6122 = vmatpush1.msra.mxu0 0.0
      %6123 = vmatprep.subr.mxu0 0.0
      %6124 = vmatpush1.msra.mxu0 0.0
      %6125 = vmatprep.mubr.f32.mxu0 0.0
      %6126 = vmatmul.mubr.f32.gmra.mrb[0].mxu0 %v5966
      %v6127 = vpop.f32.mrb[0].mxu0
      %v6128 = vadd.f32 0.0, %v6127
      %v6129 = vpop.f32.mrb[0].mxu0
      %6130 = vmatprep.mubr.f32.mxu0 0.0
      %6131 = vmatmul.mubr.f32.gmra.mrb[0].mxu0 %v5969
      %v6132 = vpop.f32.mrb[0].mxu0
      %v6133 = vadd.f32 0.0, %v6132
      %v6134 = vpop.f32.mrb[0].mxu0
      %6135 = vmatprep.mubr.f32.mxu0 0.0
      %6136 = vmatmul.mubr.f32.gmra.mrb[0].mxu0 %v5972
      %v6137 = vpop.f32.mrb[0].mxu0
      %v6138 = vadd.f32 0.0, %v6137
      %v6139 = vpop.f32.mrb[0].mxu0
      %6140 = vmatprep.mubr.f32.mxu0 0.0
      %6141 = vmatmul.mubr.f32.gmra.mrb[0].mxu0 %v5975
      %v6142 = vpop.f32.mrb[0].mxu0
      %v6143 = vadd.f32 0.0, %v6142
      %v6144 = vpop.f32.mrb[0].mxu0
      %6145 = vmatprep.mubr.f32.mxu0 0.0
      %6146 = vmatmul.mubr.f32.gmra.mrb[0].mxu0 %v5978
      %v6147 = vpop.f32.mrb[0].mxu0
      %v6148 = vadd.f32 0.0, %v6147
      %v6149 = vpop.f32.mrb[0].mxu0
      %6150 = vmatprep.mubr.f32.mxu0 0.0
      %6151 = vmatmul.mubr.f32.gmra.mrb[0].mxu0 %v5981
      %v6152 = vpop.f32.mrb[0].mxu0
      %v6153 = vadd.f32 0.0, %v6152
      %v6154 = vpop.f32.mrb[0].mxu0
      %6155 = vmatprep.mubr.f32.mxu0 0.0
      %6156 = vmatmul.mubr.f32.gmra.mrb[0].mxu0 %v5984
      %v6157 = vpop.f32.mrb[0].mxu0
      %v6158 = vadd.f32 0.0, %v6157
      %v6159 = vpop.f32.mrb[0].mxu0
      %6160 = vmatprep.mubr.f32.mxu0 0.0
      %6161 = vmatmul.mubr.f32.gmra.mrb[0].mxu0 %v5987
      %v6162 = vpop.f32.mrb[0].mxu0
      %v6163 = vadd.f32 0.0, %v6162
      %v6164 = vpop.f32.mrb[0].mxu0
      %6165 = vmatprep.mubr.f32.mxu0 0.0
      %6166 = vmatmul.mubr.f32.gmra.mrb[0].mxu0 %v5990
      %v6167 = vpop.f32.mrb[0].mxu0
      %v6168 = vadd.f32 0.0, %v6167
      %v6169 = vpop.f32.mrb[0].mxu0
      %6170 = vmatprep.mubr.f32.mxu0 0.0
      %6171 = vmatmul.mubr.f32.gmra.mrb[0].mxu0 %v5993
      %v6172 = vpop.f32.mrb[0].mxu0
      %v6173 = vadd.f32 0.0, %v6172
      %v6174 = vpop.f32.mrb[0].mxu0
      %6175 = vmatprep.mubr.f32.mxu0 0.0
      %6176 = vmatmul.mubr.f32.gmra.mrb[0].mxu0 %v5996
      %v6177 = vpop.f32.mrb[0].mxu0
      %v6178 = vadd.f32 0.0, %v6177
      %v6179 = vpop.f32.mrb[0].mxu0
      %6180 = vmatprep.mubr.f32.mxu0 0.0
      %6181 = vmatmul.mubr.f32.gmra.mrb[0].mxu0 %v5999
      %v6182 = vpop.f32.mrb[0].mxu0
      %v6183 = vadd.f32 0.0, %v6182
      %v6184 = vpop.f32.mrb[0].mxu0
      %6185 = vmatprep.mubr.f32.mxu0 0.0
      %6186 = vmatmul.mubr.f32.gmra.mrb[0].mxu0 %v6002
      %v6187 = vpop.f32.mrb[0].mxu0
      %v6188 = vadd.f32 0.0, %v6187
      %v6189 = vpop.f32.mrb[0].mxu0
      %6190 = vmatprep.mubr.f32.mxu0 0.0
      %6191 = vmatmul.mubr.f32.gmra.mrb[0].mxu0 %v6005
      %v6192 = vpop.f32.mrb[0].mxu0
      %v6193 = vadd.f32 0.0, %v6192
      %v6194 = vpop.f32.mrb[0].mxu0
      %6195 = vmatprep.mubr.f32.mxu0 0.0
      %6196 = vmatmul.mubr.f32.gmra.mrb[0].mxu0 %v6008
      %v6197 = vpop.f32.mrb[0].mxu0
      %v6198 = vadd.f32 0.0, %v6197
      %v6199 = vpop.f32.mrb[0].mxu0
      %6200 = vmatprep.mubr.f32.mxu0 0.0
      %6201 = vmatmul.mubr.f32.gmra.mrb[0].mxu0 %v6011
      %v6202 = vpop.f32.mrb[0].mxu0
      %v6203 = vadd.f32 0.0, %v6202
      %v6204 = vpop.f32.mrb[0].mxu0
      %6205 = vmatprep.mubr.f32.mxu0 0.0
      %6206 = vmatmul.mubr.f32.gmra.mrb[0].mxu0 %v6014
      %v6207 = vpop.f32.mrb[0].mxu0
      %v6208 = vadd.f32 0.0, %v6207
      %v6209 = vpop.f32.mrb[0].mxu0
      %6210 = vmatprep.mubr.f32.mxu0 0.0
      %6211 = vmatmul.mubr.f32.gmra.mrb[0].mxu0 %v6017
      %v6212 = vpop.f32.mrb[0].mxu0
      %v6213 = vadd.f32 0.0, %v6212
      %v6214 = vpop.f32.mrb[0].mxu0
      %6215 = vmatprep.mubr.f32.mxu0 0.0
      %6216 = vmatmul.mubr.f32.gmra.mrb[0].mxu0 %v6020
      %v6217 = vpop.f32.mrb[0].mxu0
      %v6218 = vadd.f32 0.0, %v6217
      %v6219 = vpop.f32.mrb[0].mxu0
      %6220 = vmatprep.mubr.f32.mxu0 0.0
      %6221 = vmatmul.mubr.f32.gmra.mrb[0].mxu0 %v6023
      %v6222 = vpop.f32.mrb[0].mxu0
      %v6223 = vadd.f32 0.0, %v6222
      %v6224 = vpop.f32.mrb[0].mxu0
      %6225 = vmatprep.mubr.f32.mxu0 0.0
      %6226 = vmatmul.mubr.f32.gmra.mrb[0].mxu0 %v6026
      %v6227 = vpop.f32.mrb[0].mxu0
      %v6228 = vadd.f32 0.0, %v6227
      %v6229 = vpop.f32.mrb[0].mxu0
      %6230 = vmatprep.mubr.f32.mxu0 0.0
      %6231 = vmatmul.mubr.f32.gmra.mrb[0].mxu0 %v6029
      %v6232 = vpop.f32.mrb[0].mxu0
      %v6233 = vadd.f32 0.0, %v6232
      %v6234 = vpop.f32.mrb[0].mxu0
      %6235 = vmatprep.mubr.f32.mxu0 0.0
      %6236 = vmatmul.mubr.f32.gmra.mrb[0].mxu0 %v6032
      %v6237 = vpop.f32.mrb[0].mxu0
      %v6238 = vadd.f32 0.0, %v6237
      %v6239 = vpop.f32.mrb[0].mxu0
      %6240 = vmatprep.mubr.f32.mxu0 0.0
      %6241 = vmatmul.mubr.f32.gmra.mrb[0].mxu0 %v6035
      %v6242 = vpop.f32.mrb[0].mxu0
      %v6243 = vadd.f32 0.0, %v6242
      %v6244 = vpop.f32.mrb[0].mxu0
      %6245 = vmatprep.mubr.f32.mxu0 0.0
      %6246 = vmatmul.mubr.f32.gmra.mrb[0].mxu0 %v6038
      %v6247 = vpop.f32.mrb[0].mxu0
      %v6248 = vadd.f32 0.0, %v6247
      %v6249 = vpop.f32.mrb[0].mxu0
      %6250 = vmatprep.mubr.f32.mxu0 0.0
      %6251 = vmatmul.mubr.f32.gmra.mrb[0].mxu0 %v6041
      %v6252 = vpop.f32.mrb[0].mxu0
      %v6253 = vadd.f32 0.0, %v6252
      %v6254 = vpop.f32.mrb[0].mxu0
      %6255 = vmatprep.mubr.f32.mxu0 0.0
      %6256 = vmatmul.mubr.f32.gmra.mrb[0].mxu0 %v6044
      %v6257 = vpop.f32.mrb[0].mxu0
      %v6258 = vadd.f32 0.0, %v6257
      %v6259 = vpop.f32.mrb[0].mxu0
      %6260 = vmatprep.mubr.f32.mxu0 0.0
      %6261 = vmatmul.mubr.f32.gmra.mrb[0].mxu0 %v6047
      %v6262 = vpop.f32.mrb[0].mxu0
      %v6263 = vadd.f32 0.0, %v6262
      %v6264 = vpop.f32.mrb[0].mxu0
      %6265 = vmatprep.mubr.f32.mxu0 0.0
      %6266 = vmatmul.mubr.f32.gmra.mrb[0].mxu0 %v6050
      %v6267 = vpop.f32.mrb[0].mxu0
      %v6268 = vadd.f32 0.0, %v6267
      %v6269 = vpop.f32.mrb[0].mxu0
      %6270 = vmatprep.mubr.f32.mxu0 0.0
      %6271 = vmatmul.mubr.f32.gmra.mrb[0].mxu0 %v6053
      %v6272 = vpop.f32.mrb[0].mxu0
      %v6273 = vadd.f32 0.0, %v6272
      %v6274 = vpop.f32.mrb[0].mxu0
      %6275 = vmatprep.mubr.f32.mxu0 0.0
      %6276 = vmatmul.mubr.f32.gmra.mrb[0].mxu0 %v6056
      %v6277 = vpop.f32.mrb[0].mxu0
      %v6278 = vadd.f32 0.0, %v6277
      %v6279 = vpop.f32.mrb[0].mxu0
      %6280 = vmatprep.mubr.f32.mxu0 0.0
      %6281 = vmatmul.mubr.f32.gmra.mrb[0].mxu0 %v6059
      %v6282 = vpop.f32.mrb[0].mxu0
      %v6283 = vadd.f32 0.0, %v6282
      %v6284 = vpop.f32.mrb[0].mxu0
      %6285 = vdwg.mxu0
      %v6286 = vadd.f32 %v5899, %v6128
      %v6287 = vadd.f32 %v5900, %v6133
      %v6288 = vadd.f32 %v5901, %v6138
      %v6289 = vadd.f32 %v5902, %v6143
      %v6290 = vadd.f32 %v5903, %v6148
      %v6291 = vadd.f32 %v5904, %v6153
      %v6292 = vadd.f32 %v5905, %v6158
      %v6293 = vadd.f32 %v5906, %v6163
      %v6294 = vadd.f32 %v5907, %v6168
      %v6295 = vadd.f32 %v5908, %v6173
      %v6296 = vadd.f32 %v5909, %v6178
      %v6297 = vadd.f32 %v5910, %v6183
      %v6298 = vadd.f32 %v5911, %v6188
      %v6299 = vadd.f32 %v5912, %v6193
      %v6300 = vadd.f32 %v5913, %v6198
      %v6301 = vadd.f32 %v5914, %v6203
      %v6302 = vadd.f32 %v5915, %v6208
      %v6303 = vadd.f32 %v5916, %v6213
      %v6304 = vadd.f32 %v5917, %v6218
      %v6305 = vadd.f32 %v5918, %v6223
      %v6306 = vadd.f32 %v5919, %v6228
      %v6307 = vadd.f32 %v5920, %v6233
      %v6308 = vadd.f32 %v5921, %v6238
      %v6309 = vadd.f32 %v5922, %v6243
      %v6310 = vadd.f32 %v5923, %v6248
      %v6311 = vadd.f32 %v5924, %v6253
      %v6312 = vadd.f32 %v5925, %v6258
      %v6313 = vadd.f32 %v5926, %v6263
      %v6314 = vadd.f32 %v5927, %v6268
      %v6315 = vadd.f32 %v5928, %v6273
      %v6316 = vadd.f32 %v5929, %v6278
      %v6317 = vadd.f32 %v5930, %v6283
      %v6318 = vld [vmem:[%s2757] sm:$0xff]
      %v6319 = vld [vmem:[%s2757 + $0x8] sm:$0xff]
      %v6320 = vld [vmem:[%s2757 + $0x18] sm:$0xff]
      %v6321 = vld [vmem:[%s2757 + $0x20] sm:$0xff]
      %v6322 = vld [vmem:[%s2757 + $0x30] sm:$0xff]
      %v6323 = vld [vmem:[%s2757 + $0x38] sm:$0xff]
      %v6324 = vld [vmem:[%s2757 + $0x48] sm:$0xff]
      %v6325 = vld [vmem:[%s2757 + $0x50] sm:$0xff]
      %v6326 = vld [vmem:[%s2757 + $0x60] sm:$0xff]
      %v6327 = vld [vmem:[%s2757 + $0x68] sm:$0xff]
      %v6328 = vld [vmem:[%s2757 + $0x78] sm:$0xff]
      %v6329 = vld [vmem:[%s2757 + $0x80] sm:$0xff]
      %v6330 = vld [vmem:[%s2757 + $0x90] sm:$0xff]
      %v6331 = vld [vmem:[%s2757 + $0x98] sm:$0xff]
      %v6332 = vld [vmem:[%s2757 + $0xa8] sm:$0xff]
      %v6333 = vld [vmem:[%s2757 + $0xb0] sm:$0xff]
      %v6334 = vld [vmem:[%s2757 + $0xc0] sm:$0xff]
      %v6335 = vld [vmem:[%s2757 + $0xc8] sm:$0xff]
      %v6336 = vld [vmem:[%s2757 + $0xd8] sm:$0xff]
      %v6337 = vld [vmem:[%s2757 + $0xe0] sm:$0xff]
      %v6338 = vld [vmem:[%s2757 + $0xf0] sm:$0xff]
      %v6339 = vld [vmem:[%s2757 + $0xf8] sm:$0xff]
      %v6340 = vld [vmem:[%s2757 + $0x108] sm:$0xff]
      %v6341 = vld [vmem:[%s2757 + $0x110] sm:$0xff]
      %v6342 = vld [vmem:[%s2757 + $0x120] sm:$0xff]
      %v6343 = vld [vmem:[%s2757 + $0x128] sm:$0xff]
      %v6344 = vld [vmem:[%s2757 + $0x138] sm:$0xff]
      %v6345 = vld [vmem:[%s2757 + $0x140] sm:$0xff]
      %v6346 = vld [vmem:[%s2757 + $0x150] sm:$0xff]
      %v6347 = vld [vmem:[%s2757 + $0x158] sm:$0xff]
      %v6348 = vld [vmem:[%s2757 + $0x168] sm:$0xff]
      %v6349 = vld [vmem:[%s2757 + $0x170] sm:$0xff]
      %s6350 = scalar_lea.vmem %s6, 48
      %v6351 = vld [vmem:[%s6350] sm:$0xff]
      %v6353 = vsel %vm421, %v6318, 0
      %v6356 = vsel %vm421, %v6319, 0
      %v6359 = vsel %vm421, %v6320, 0
      %v6362 = vsel %vm421, %v6321, 0
      %v6365 = vsel %vm421, %v6322, 0
      %v6368 = vsel %vm421, %v6323, 0
      %v6371 = vsel %vm421, %v6324, 0
      %v6374 = vsel %vm421, %v6325, 0
      %v6377 = vsel %vm421, %v6326, 0
      %v6380 = vsel %vm421, %v6327, 0
      %v6383 = vsel %vm421, %v6328, 0
      %v6386 = vsel %vm421, %v6329, 0
      %v6389 = vsel %vm421, %v6330, 0
      %v6392 = vsel %vm421, %v6331, 0
      %v6395 = vsel %vm421, %v6332, 0
      %v6398 = vsel %vm421, %v6333, 0
      %v6401 = vsel %vm421, %v6334, 0
      %v6404 = vsel %vm421, %v6335, 0
      %v6407 = vsel %vm421, %v6336, 0
      %v6410 = vsel %vm421, %v6337, 0
      %v6413 = vsel %vm421, %v6338, 0
      %v6416 = vsel %vm421, %v6339, 0
      %v6419 = vsel %vm421, %v6340, 0
      %v6422 = vsel %vm421, %v6341, 0
      %v6425 = vsel %vm421, %v6342, 0
      %v6428 = vsel %vm421, %v6343, 0
      %v6431 = vsel %vm421, %v6344, 0
      %v6434 = vsel %vm421, %v6345, 0
      %v6437 = vsel %vm421, %v6346, 0
      %v6440 = vsel %vm421, %v6347, 0
      %v6443 = vsel %vm421, %v6348, 0
      %v6446 = vsel %vm421, %v6349, 0
      %6448 = vmatprep.subr.mxu0 0.0
      %6449 = vmatpush1.msra.mxu0 %v6351
      %6450 = vmatprep.subr.mxu0 0.0
      %6451 = vmatpush1.msra.mxu0 0.0
      %6452 = vmatprep.subr.mxu0 0.0
      %6453 = vmatpush1.msra.mxu0 0.0
      %6454 = vmatprep.subr.mxu0 0.0
      %6455 = vmatpush1.msra.mxu0 0.0
      %6456 = vmatprep.subr.mxu0 0.0
      %6457 = vmatpush1.msra.mxu0 0.0
      %6458 = vmatprep.subr.mxu0 0.0
      %6459 = vmatpush1.msra.mxu0 0.0
      %6460 = vmatprep.subr.mxu0 0.0
      %6461 = vmatpush1.msra.mxu0 0.0
      %6462 = vmatprep.subr.mxu0 0.0
      %6463 = vmatpush1.msra.mxu0 0.0
      %6464 = vmatprep.subr.mxu0 0.0
      %6465 = vmatpush1.msra.mxu0 0.0
      %6466 = vmatprep.subr.mxu0 0.0
      %6467 = vmatpush1.msra.mxu0 0.0
      %6468 = vmatprep.subr.mxu0 0.0
      %6469 = vmatpush1.msra.mxu0 0.0
      %6470 = vmatprep.subr.mxu0 0.0
      %6471 = vmatpush1.msra.mxu0 0.0
      %6472 = vmatprep.subr.mxu0 0.0
      %6473 = vmatpush1.msra.mxu0 0.0
      %6474 = vmatprep.subr.mxu0 0.0
      %6475 = vmatpush1.msra.mxu0 0.0
      %6476 = vmatprep.subr.mxu0 0.0
      %6477 = vmatpush1.msra.mxu0 0.0
      %6478 = vmatprep.subr.mxu0 0.0
      %6479 = vmatpush1.msra.mxu0 0.0
      %6480 = vmatprep.subr.mxu0 0.0
      %6481 = vmatpush1.msra.mxu0 0.0
      %6482 = vmatprep.subr.mxu0 0.0
      %6483 = vmatpush1.msra.mxu0 0.0
      %6484 = vmatprep.subr.mxu0 0.0
      %6485 = vmatpush1.msra.mxu0 0.0
      %6486 = vmatprep.subr.mxu0 0.0
      %6487 = vmatpush1.msra.mxu0 0.0
      %6488 = vmatprep.subr.mxu0 0.0
      %6489 = vmatpush1.msra.mxu0 0.0
      %6490 = vmatprep.subr.mxu0 0.0
      %6491 = vmatpush1.msra.mxu0 0.0
      %6492 = vmatprep.subr.mxu0 0.0
      %6493 = vmatpush1.msra.mxu0 0.0
      %6494 = vmatprep.subr.mxu0 0.0
      %6495 = vmatpush1.msra.mxu0 0.0
      %6496 = vmatprep.subr.mxu0 0.0
      %6497 = vmatpush1.msra.mxu0 0.0
      %6498 = vmatprep.subr.mxu0 0.0
      %6499 = vmatpush1.msra.mxu0 0.0
      %6500 = vmatprep.subr.mxu0 0.0
      %6501 = vmatpush1.msra.mxu0 0.0
      %6502 = vmatprep.subr.mxu0 0.0
      %6503 = vmatpush1.msra.mxu0 0.0
      %6504 = vmatprep.subr.mxu0 0.0
      %6505 = vmatpush1.msra.mxu0 0.0
      %6506 = vmatprep.subr.mxu0 0.0
      %6507 = vmatpush1.msra.mxu0 0.0
      %6508 = vmatprep.subr.mxu0 0.0
      %6509 = vmatpush1.msra.mxu0 0.0
      %6510 = vmatprep.subr.mxu0 0.0
      %6511 = vmatpush1.msra.mxu0 0.0
      %6512 = vmatprep.mubr.f32.mxu0 0.0
      %6513 = vmatmul.mubr.f32.gmra.mrb[0].mxu0 %v6353
      %v6514 = vpop.f32.mrb[0].mxu0
      %v6515 = vadd.f32 0.0, %v6514
      %v6516 = vpop.f32.mrb[0].mxu0
      %6517 = vmatprep.mubr.f32.mxu0 0.0
      %6518 = vmatmul.mubr.f32.gmra.mrb[0].mxu0 %v6356
      %v6519 = vpop.f32.mrb[0].mxu0
      %v6520 = vadd.f32 0.0, %v6519
      %v6521 = vpop.f32.mrb[0].mxu0
      %6522 = vmatprep.mubr.f32.mxu0 0.0
      %6523 = vmatmul.mubr.f32.gmra.mrb[0].mxu0 %v6359
      %v6524 = vpop.f32.mrb[0].mxu0
      %v6525 = vadd.f32 0.0, %v6524
      %v6526 = vpop.f32.mrb[0].mxu0
      %6527 = vmatprep.mubr.f32.mxu0 0.0
      %6528 = vmatmul.mubr.f32.gmra.mrb[0].mxu0 %v6362
      %v6529 = vpop.f32.mrb[0].mxu0
      %v6530 = vadd.f32 0.0, %v6529
      %v6531 = vpop.f32.mrb[0].mxu0
      %6532 = vmatprep.mubr.f32.mxu0 0.0
      %6533 = vmatmul.mubr.f32.gmra.mrb[0].mxu0 %v6365
      %v6534 = vpop.f32.mrb[0].mxu0
      %v6535 = vadd.f32 0.0, %v6534
      %v6536 = vpop.f32.mrb[0].mxu0
      %6537 = vmatprep.mubr.f32.mxu0 0.0
      %6538 = vmatmul.mubr.f32.gmra.mrb[0].mxu0 %v6368
      %v6539 = vpop.f32.mrb[0].mxu0
      %v6540 = vadd.f32 0.0, %v6539
      %v6541 = vpop.f32.mrb[0].mxu0
      %6542 = vmatprep.mubr.f32.mxu0 0.0
      %6543 = vmatmul.mubr.f32.gmra.mrb[0].mxu0 %v6371
      %v6544 = vpop.f32.mrb[0].mxu0
      %v6545 = vadd.f32 0.0, %v6544
      %v6546 = vpop.f32.mrb[0].mxu0
      %6547 = vmatprep.mubr.f32.mxu0 0.0
      %6548 = vmatmul.mubr.f32.gmra.mrb[0].mxu0 %v6374
      %v6549 = vpop.f32.mrb[0].mxu0
      %v6550 = vadd.f32 0.0, %v6549
      %v6551 = vpop.f32.mrb[0].mxu0
      %6552 = vmatprep.mubr.f32.mxu0 0.0
      %6553 = vmatmul.mubr.f32.gmra.mrb[0].mxu0 %v6377
      %v6554 = vpop.f32.mrb[0].mxu0
      %v6555 = vadd.f32 0.0, %v6554
      %v6556 = vpop.f32.mrb[0].mxu0
      %6557 = vmatprep.mubr.f32.mxu0 0.0
      %6558 = vmatmul.mubr.f32.gmra.mrb[0].mxu0 %v6380
      %v6559 = vpop.f32.mrb[0].mxu0
      %v6560 = vadd.f32 0.0, %v6559
      %v6561 = vpop.f32.mrb[0].mxu0
      %6562 = vmatprep.mubr.f32.mxu0 0.0
      %6563 = vmatmul.mubr.f32.gmra.mrb[0].mxu0 %v6383
      %v6564 = vpop.f32.mrb[0].mxu0
      %v6565 = vadd.f32 0.0, %v6564
      %v6566 = vpop.f32.mrb[0].mxu0
      %6567 = vmatprep.mubr.f32.mxu0 0.0
      %6568 = vmatmul.mubr.f32.gmra.mrb[0].mxu0 %v6386
      %v6569 = vpop.f32.mrb[0].mxu0
      %v6570 = vadd.f32 0.0, %v6569
      %v6571 = vpop.f32.mrb[0].mxu0
      %6572 = vmatprep.mubr.f32.mxu0 0.0
      %6573 = vmatmul.mubr.f32.gmra.mrb[0].mxu0 %v6389
      %v6574 = vpop.f32.mrb[0].mxu0
      %v6575 = vadd.f32 0.0, %v6574
      %v6576 = vpop.f32.mrb[0].mxu0
      %6577 = vmatprep.mubr.f32.mxu0 0.0
      %6578 = vmatmul.mubr.f32.gmra.mrb[0].mxu0 %v6392
      %v6579 = vpop.f32.mrb[0].mxu0
      %v6580 = vadd.f32 0.0, %v6579
      %v6581 = vpop.f32.mrb[0].mxu0
      %6582 = vmatprep.mubr.f32.mxu0 0.0
      %6583 = vmatmul.mubr.f32.gmra.mrb[0].mxu0 %v6395
      %v6584 = vpop.f32.mrb[0].mxu0
      %v6585 = vadd.f32 0.0, %v6584
      %v6586 = vpop.f32.mrb[0].mxu0
      %6587 = vmatprep.mubr.f32.mxu0 0.0
      %6588 = vmatmul.mubr.f32.gmra.mrb[0].mxu0 %v6398
      %v6589 = vpop.f32.mrb[0].mxu0
      %v6590 = vadd.f32 0.0, %v6589
      %v6591 = vpop.f32.mrb[0].mxu0
      %6592 = vmatprep.mubr.f32.mxu0 0.0
      %6593 = vmatmul.mubr.f32.gmra.mrb[0].mxu0 %v6401
      %v6594 = vpop.f32.mrb[0].mxu0
      %v6595 = vadd.f32 0.0, %v6594
      %v6596 = vpop.f32.mrb[0].mxu0
      %6597 = vmatprep.mubr.f32.mxu0 0.0
      %6598 = vmatmul.mubr.f32.gmra.mrb[0].mxu0 %v6404
      %v6599 = vpop.f32.mrb[0].mxu0
      %v6600 = vadd.f32 0.0, %v6599
      %v6601 = vpop.f32.mrb[0].mxu0
      %6602 = vmatprep.mubr.f32.mxu0 0.0
      %6603 = vmatmul.mubr.f32.gmra.mrb[0].mxu0 %v6407
      %v6604 = vpop.f32.mrb[0].mxu0
      %v6605 = vadd.f32 0.0, %v6604
      %v6606 = vpop.f32.mrb[0].mxu0
      %6607 = vmatprep.mubr.f32.mxu0 0.0
      %6608 = vmatmul.mubr.f32.gmra.mrb[0].mxu0 %v6410
      %v6609 = vpop.f32.mrb[0].mxu0
      %v6610 = vadd.f32 0.0, %v6609
      %v6611 = vpop.f32.mrb[0].mxu0
      %6612 = vmatprep.mubr.f32.mxu0 0.0
      %6613 = vmatmul.mubr.f32.gmra.mrb[0].mxu0 %v6413
      %v6614 = vpop.f32.mrb[0].mxu0
      %v6615 = vadd.f32 0.0, %v6614
      %v6616 = vpop.f32.mrb[0].mxu0
      %6617 = vmatprep.mubr.f32.mxu0 0.0
      %6618 = vmatmul.mubr.f32.gmra.mrb[0].mxu0 %v6416
      %v6619 = vpop.f32.mrb[0].mxu0
      %v6620 = vadd.f32 0.0, %v6619
      %v6621 = vpop.f32.mrb[0].mxu0
      %6622 = vmatprep.mubr.f32.mxu0 0.0
      %6623 = vmatmul.mubr.f32.gmra.mrb[0].mxu0 %v6419
      %v6624 = vpop.f32.mrb[0].mxu0
      %v6625 = vadd.f32 0.0, %v6624
      %v6626 = vpop.f32.mrb[0].mxu0
      %6627 = vmatprep.mubr.f32.mxu0 0.0
      %6628 = vmatmul.mubr.f32.gmra.mrb[0].mxu0 %v6422
      %v6629 = vpop.f32.mrb[0].mxu0
      %v6630 = vadd.f32 0.0, %v6629
      %v6631 = vpop.f32.mrb[0].mxu0
      %6632 = vmatprep.mubr.f32.mxu0 0.0
      %6633 = vmatmul.mubr.f32.gmra.mrb[0].mxu0 %v6425
      %v6634 = vpop.f32.mrb[0].mxu0
      %v6635 = vadd.f32 0.0, %v6634
      %v6636 = vpop.f32.mrb[0].mxu0
      %6637 = vmatprep.mubr.f32.mxu0 0.0
      %6638 = vmatmul.mubr.f32.gmra.mrb[0].mxu0 %v6428
      %v6639 = vpop.f32.mrb[0].mxu0
      %v6640 = vadd.f32 0.0, %v6639
      %v6641 = vpop.f32.mrb[0].mxu0
      %6642 = vmatprep.mubr.f32.mxu0 0.0
      %6643 = vmatmul.mubr.f32.gmra.mrb[0].mxu0 %v6431
      %v6644 = vpop.f32.mrb[0].mxu0
      %v6645 = vadd.f32 0.0, %v6644
      %v6646 = vpop.f32.mrb[0].mxu0
      %6647 = vmatprep.mubr.f32.mxu0 0.0
      %6648 = vmatmul.mubr.f32.gmra.mrb[0].mxu0 %v6434
      %v6649 = vpop.f32.mrb[0].mxu0
      %v6650 = vadd.f32 0.0, %v6649
      %v6651 = vpop.f32.mrb[0].mxu0
      %6652 = vmatprep.mubr.f32.mxu0 0.0
      %6653 = vmatmul.mubr.f32.gmra.mrb[0].mxu0 %v6437
      %v6654 = vpop.f32.mrb[0].mxu0
      %v6655 = vadd.f32 0.0, %v6654
      %v6656 = vpop.f32.mrb[0].mxu0
      %6657 = vmatprep.mubr.f32.mxu0 0.0
      %6658 = vmatmul.mubr.f32.gmra.mrb[0].mxu0 %v6440
      %v6659 = vpop.f32.mrb[0].mxu0
      %v6660 = vadd.f32 0.0, %v6659
      %v6661 = vpop.f32.mrb[0].mxu0
      %6662 = vmatprep.mubr.f32.mxu0 0.0
      %6663 = vmatmul.mubr.f32.gmra.mrb[0].mxu0 %v6443
      %v6664 = vpop.f32.mrb[0].mxu0
      %v6665 = vadd.f32 0.0, %v6664
      %v6666 = vpop.f32.mrb[0].mxu0
      %6667 = vmatprep.mubr.f32.mxu0 0.0
      %6668 = vmatmul.mubr.f32.gmra.mrb[0].mxu0 %v6446
      %v6669 = vpop.f32.mrb[0].mxu0
      %v6670 = vadd.f32 0.0, %v6669
      %v6671 = vpop.f32.mrb[0].mxu0
      %6672 = vdwg.mxu0
      %v6673 = vadd.f32 %v6286, %v6515
      %v6674 = vadd.f32 %v6287, %v6520
      %v6675 = vadd.f32 %v6288, %v6525
      %v6676 = vadd.f32 %v6289, %v6530
      %v6677 = vadd.f32 %v6290, %v6535
      %v6678 = vadd.f32 %v6291, %v6540
      %v6679 = vadd.f32 %v6292, %v6545
      %v6680 = vadd.f32 %v6293, %v6550
      %v6681 = vadd.f32 %v6294, %v6555
      %v6682 = vadd.f32 %v6295, %v6560
      %v6683 = vadd.f32 %v6296, %v6565
      %v6684 = vadd.f32 %v6297, %v6570
      %v6685 = vadd.f32 %v6298, %v6575
      %v6686 = vadd.f32 %v6299, %v6580
      %v6687 = vadd.f32 %v6300, %v6585
      %v6688 = vadd.f32 %v6301, %v6590
      %v6689 = vadd.f32 %v6302, %v6595
      %v6690 = vadd.f32 %v6303, %v6600
      %v6691 = vadd.f32 %v6304, %v6605
      %v6692 = vadd.f32 %v6305, %v6610
      %v6693 = vadd.f32 %v6306, %v6615
      %v6694 = vadd.f32 %v6307, %v6620
      %v6695 = vadd.f32 %v6308, %v6625
      %v6696 = vadd.f32 %v6309, %v6630
      %v6697 = vadd.f32 %v6310, %v6635
      %v6698 = vadd.f32 %v6311, %v6640
      %v6699 = vadd.f32 %v6312, %v6645
      %v6700 = vadd.f32 %v6313, %v6650
      %v6701 = vadd.f32 %v6314, %v6655
      %v6702 = vadd.f32 %v6315, %v6660
      %v6703 = vadd.f32 %v6316, %v6665
      %v6704 = vadd.f32 %v6317, %v6670
      %v6705 = vld [vmem:[%s2757 + $0x1] sm:$0xff]
      %v6706 = vld [vmem:[%s2757 + $0x9] sm:$0xff]
      %v6707 = vld [vmem:[%s2757 + $0x19] sm:$0xff]
      %v6708 = vld [vmem:[%s2757 + $0x21] sm:$0xff]
      %v6709 = vld [vmem:[%s2757 + $0x31] sm:$0xff]
      %v6710 = vld [vmem:[%s2757 + $0x39] sm:$0xff]
      %v6711 = vld [vmem:[%s2757 + $0x49] sm:$0xff]
      %v6712 = vld [vmem:[%s2757 + $0x51] sm:$0xff]
      %v6713 = vld [vmem:[%s2757 + $0x61] sm:$0xff]
      %v6714 = vld [vmem:[%s2757 + $0x69] sm:$0xff]
      %v6715 = vld [vmem:[%s2757 + $0x79] sm:$0xff]
      %v6716 = vld [vmem:[%s2757 + $0x81] sm:$0xff]
      %v6717 = vld [vmem:[%s2757 + $0x91] sm:$0xff]
      %v6718 = vld [vmem:[%s2757 + $0x99] sm:$0xff]
      %v6719 = vld [vmem:[%s2757 + $0xa9] sm:$0xff]
      %v6720 = vld [vmem:[%s2757 + $0xb1] sm:$0xff]
      %v6721 = vld [vmem:[%s2757 + $0xc1] sm:$0xff]
      %v6722 = vld [vmem:[%s2757 + $0xc9] sm:$0xff]
      %v6723 = vld [vmem:[%s2757 + $0xd9] sm:$0xff]
      %v6724 = vld [vmem:[%s2757 + $0xe1] sm:$0xff]
      %v6725 = vld [vmem:[%s2757 + $0xf1] sm:$0xff]
      %v6726 = vld [vmem:[%s2757 + $0xf9] sm:$0xff]
      %v6727 = vld [vmem:[%s2757 + $0x109] sm:$0xff]
      %v6728 = vld [vmem:[%s2757 + $0x111] sm:$0xff]
      %v6729 = vld [vmem:[%s2757 + $0x121] sm:$0xff]
      %v6730 = vld [vmem:[%s2757 + $0x129] sm:$0xff]
      %v6731 = vld [vmem:[%s2757 + $0x139] sm:$0xff]
      %v6732 = vld [vmem:[%s2757 + $0x141] sm:$0xff]
      %v6733 = vld [vmem:[%s2757 + $0x151] sm:$0xff]
      %v6734 = vld [vmem:[%s2757 + $0x159] sm:$0xff]
      %v6735 = vld [vmem:[%s2757 + $0x169] sm:$0xff]
      %v6736 = vld [vmem:[%s2757 + $0x171] sm:$0xff]
      %s6737 = scalar_lea.vmem %s6, 56
      %v6738 = vld [vmem:[%s6737] sm:$0xff]
      %v6740 = vsel %vm421, %v6705, 0
      %v6743 = vsel %vm421, %v6706, 0
      %v6746 = vsel %vm421, %v6707, 0
      %v6749 = vsel %vm421, %v6708, 0
      %v6752 = vsel %vm421, %v6709, 0
      %v6755 = vsel %vm421, %v6710, 0
      %v6758 = vsel %vm421, %v6711, 0
      %v6761 = vsel %vm421, %v6712, 0
      %v6764 = vsel %vm421, %v6713, 0
      %v6767 = vsel %vm421, %v6714, 0
      %v6770 = vsel %vm421, %v6715, 0
      %v6773 = vsel %vm421, %v6716, 0
      %v6776 = vsel %vm421, %v6717, 0
      %v6779 = vsel %vm421, %v6718, 0
      %v6782 = vsel %vm421, %v6719, 0
      %v6785 = vsel %vm421, %v6720, 0
      %v6788 = vsel %vm421, %v6721, 0
      %v6791 = vsel %vm421, %v6722, 0
      %v6794 = vsel %vm421, %v6723, 0
      %v6797 = vsel %vm421, %v6724, 0
      %v6800 = vsel %vm421, %v6725, 0
      %v6803 = vsel %vm421, %v6726, 0
      %v6806 = vsel %vm421, %v6727, 0
      %v6809 = vsel %vm421, %v6728, 0
      %v6812 = vsel %vm421, %v6729, 0
      %v6815 = vsel %vm421, %v6730, 0
      %v6818 = vsel %vm421, %v6731, 0
      %v6821 = vsel %vm421, %v6732, 0
      %v6824 = vsel %vm421, %v6733, 0
      %v6827 = vsel %vm421, %v6734, 0
      %v6830 = vsel %vm421, %v6735, 0
      %v6833 = vsel %vm421, %v6736, 0
      %6835 = vmatprep.subr.mxu0 0.0
      %6836 = vmatpush1.msra.mxu0 %v6738
      %6837 = vmatprep.subr.mxu0 0.0
      %6838 = vmatpush1.msra.mxu0 0.0
      %6839 = vmatprep.subr.mxu0 0.0
      %6840 = vmatpush1.msra.mxu0 0.0
      %6841 = vmatprep.subr.mxu0 0.0
      %6842 = vmatpush1.msra.mxu0 0.0
      %6843 = vmatprep.subr.mxu0 0.0
      %6844 = vmatpush1.msra.mxu0 0.0
      %6845 = vmatprep.subr.mxu0 0.0
      %6846 = vmatpush1.msra.mxu0 0.0
      %6847 = vmatprep.subr.mxu0 0.0
      %6848 = vmatpush1.msra.mxu0 0.0
      %6849 = vmatprep.subr.mxu0 0.0
      %6850 = vmatpush1.msra.mxu0 0.0
      %6851 = vmatprep.subr.mxu0 0.0
      %6852 = vmatpush1.msra.mxu0 0.0
      %6853 = vmatprep.subr.mxu0 0.0
      %6854 = vmatpush1.msra.mxu0 0.0
      %6855 = vmatprep.subr.mxu0 0.0
      %6856 = vmatpush1.msra.mxu0 0.0
      %6857 = vmatprep.subr.mxu0 0.0
      %6858 = vmatpush1.msra.mxu0 0.0
      %6859 = vmatprep.subr.mxu0 0.0
      %6860 = vmatpush1.msra.mxu0 0.0
      %6861 = vmatprep.subr.mxu0 0.0
      %6862 = vmatpush1.msra.mxu0 0.0
      %6863 = vmatprep.subr.mxu0 0.0
      %6864 = vmatpush1.msra.mxu0 0.0
      %6865 = vmatprep.subr.mxu0 0.0
      %6866 = vmatpush1.msra.mxu0 0.0
      %6867 = vmatprep.subr.mxu0 0.0
      %6868 = vmatpush1.msra.mxu0 0.0
      %6869 = vmatprep.subr.mxu0 0.0
      %6870 = vmatpush1.msra.mxu0 0.0
      %6871 = vmatprep.subr.mxu0 0.0
      %6872 = vmatpush1.msra.mxu0 0.0
      %6873 = vmatprep.subr.mxu0 0.0
      %6874 = vmatpush1.msra.mxu0 0.0
      %6875 = vmatprep.subr.mxu0 0.0
      %6876 = vmatpush1.msra.mxu0 0.0
      %6877 = vmatprep.subr.mxu0 0.0
      %6878 = vmatpush1.msra.mxu0 0.0
      %6879 = vmatprep.subr.mxu0 0.0
      %6880 = vmatpush1.msra.mxu0 0.0
      %6881 = vmatprep.subr.mxu0 0.0
      %6882 = vmatpush1.msra.mxu0 0.0
      %6883 = vmatprep.subr.mxu0 0.0
      %6884 = vmatpush1.msra.mxu0 0.0
      %6885 = vmatprep.subr.mxu0 0.0
      %6886 = vmatpush1.msra.mxu0 0.0
      %6887 = vmatprep.subr.mxu0 0.0
      %6888 = vmatpush1.msra.mxu0 0.0
      %6889 = vmatprep.subr.mxu0 0.0
      %6890 = vmatpush1.msra.mxu0 0.0
      %6891 = vmatprep.subr.mxu0 0.0
      %6892 = vmatpush1.msra.mxu0 0.0
      %6893 = vmatprep.subr.mxu0 0.0
      %6894 = vmatpush1.msra.mxu0 0.0
      %6895 = vmatprep.subr.mxu0 0.0
      %6896 = vmatpush1.msra.mxu0 0.0
      %6897 = vmatprep.subr.mxu0 0.0
      %6898 = vmatpush1.msra.mxu0 0.0
      %6899 = vmatprep.mubr.f32.mxu0 0.0
      %6900 = vmatmul.mubr.f32.gmra.mrb[0].mxu0 %v6740
      %v6901 = vpop.f32.mrb[0].mxu0
      %v6902 = vadd.f32 0.0, %v6901
      %v6903 = vpop.f32.mrb[0].mxu0
      %6904 = vmatprep.mubr.f32.mxu0 0.0
      %6905 = vmatmul.mubr.f32.gmra.mrb[0].mxu0 %v6743
      %v6906 = vpop.f32.mrb[0].mxu0
      %v6907 = vadd.f32 0.0, %v6906
      %v6908 = vpop.f32.mrb[0].mxu0
      %6909 = vmatprep.mubr.f32.mxu0 0.0
      %6910 = vmatmul.mubr.f32.gmra.mrb[0].mxu0 %v6746
      %v6911 = vpop.f32.mrb[0].mxu0
      %v6912 = vadd.f32 0.0, %v6911
      %v6913 = vpop.f32.mrb[0].mxu0
      %6914 = vmatprep.mubr.f32.mxu0 0.0
      %6915 = vmatmul.mubr.f32.gmra.mrb[0].mxu0 %v6749
      %v6916 = vpop.f32.mrb[0].mxu0
      %v6917 = vadd.f32 0.0, %v6916
      %v6918 = vpop.f32.mrb[0].mxu0
      %6919 = vmatprep.mubr.f32.mxu0 0.0
      %6920 = vmatmul.mubr.f32.gmra.mrb[0].mxu0 %v6752
      %v6921 = vpop.f32.mrb[0].mxu0
      %v6922 = vadd.f32 0.0, %v6921
      %v6923 = vpop.f32.mrb[0].mxu0
      %6924 = vmatprep.mubr.f32.mxu0 0.0
      %6925 = vmatmul.mubr.f32.gmra.mrb[0].mxu0 %v6755
      %v6926 = vpop.f32.mrb[0].mxu0
      %v6927 = vadd.f32 0.0, %v6926
      %v6928 = vpop.f32.mrb[0].mxu0
      %6929 = vmatprep.mubr.f32.mxu0 0.0
      %6930 = vmatmul.mubr.f32.gmra.mrb[0].mxu0 %v6758
      %v6931 = vpop.f32.mrb[0].mxu0
      %v6932 = vadd.f32 0.0, %v6931
      %v6933 = vpop.f32.mrb[0].mxu0
      %6934 = vmatprep.mubr.f32.mxu0 0.0
      %6935 = vmatmul.mubr.f32.gmra.mrb[0].mxu0 %v6761
      %v6936 = vpop.f32.mrb[0].mxu0
      %v6937 = vadd.f32 0.0, %v6936
      %v6938 = vpop.f32.mrb[0].mxu0
      %6939 = vmatprep.mubr.f32.mxu0 0.0
      %6940 = vmatmul.mubr.f32.gmra.mrb[0].mxu0 %v6764
      %v6941 = vpop.f32.mrb[0].mxu0
      %v6942 = vadd.f32 0.0, %v6941
      %v6943 = vpop.f32.mrb[0].mxu0
      %6944 = vmatprep.mubr.f32.mxu0 0.0
      %6945 = vmatmul.mubr.f32.gmra.mrb[0].mxu0 %v6767
      %v6946 = vpop.f32.mrb[0].mxu0
      %v6947 = vadd.f32 0.0, %v6946
      %v6948 = vpop.f32.mrb[0].mxu0
      %6949 = vmatprep.mubr.f32.mxu0 0.0
      %6950 = vmatmul.mubr.f32.gmra.mrb[0].mxu0 %v6770
      %v6951 = vpop.f32.mrb[0].mxu0
      %v6952 = vadd.f32 0.0, %v6951
      %v6953 = vpop.f32.mrb[0].mxu0
      %6954 = vmatprep.mubr.f32.mxu0 0.0
      %6955 = vmatmul.mubr.f32.gmra.mrb[0].mxu0 %v6773
      %v6956 = vpop.f32.mrb[0].mxu0
      %v6957 = vadd.f32 0.0, %v6956
      %v6958 = vpop.f32.mrb[0].mxu0
      %6959 = vmatprep.mubr.f32.mxu0 0.0
      %6960 = vmatmul.mubr.f32.gmra.mrb[0].mxu0 %v6776
      %v6961 = vpop.f32.mrb[0].mxu0
      %v6962 = vadd.f32 0.0, %v6961
      %v6963 = vpop.f32.mrb[0].mxu0
      %6964 = vmatprep.mubr.f32.mxu0 0.0
      %6965 = vmatmul.mubr.f32.gmra.mrb[0].mxu0 %v6779
      %v6966 = vpop.f32.mrb[0].mxu0
      %v6967 = vadd.f32 0.0, %v6966
      %v6968 = vpop.f32.mrb[0].mxu0
      %6969 = vmatprep.mubr.f32.mxu0 0.0
      %6970 = vmatmul.mubr.f32.gmra.mrb[0].mxu0 %v6782
      %v6971 = vpop.f32.mrb[0].mxu0
      %v6972 = vadd.f32 0.0, %v6971
      %v6973 = vpop.f32.mrb[0].mxu0
      %6974 = vmatprep.mubr.f32.mxu0 0.0
      %6975 = vmatmul.mubr.f32.gmra.mrb[0].mxu0 %v6785
      %v6976 = vpop.f32.mrb[0].mxu0
      %v6977 = vadd.f32 0.0, %v6976
      %v6978 = vpop.f32.mrb[0].mxu0
      %6979 = vmatprep.mubr.f32.mxu0 0.0
      %6980 = vmatmul.mubr.f32.gmra.mrb[0].mxu0 %v6788
      %v6981 = vpop.f32.mrb[0].mxu0
      %v6982 = vadd.f32 0.0, %v6981
      %v6983 = vpop.f32.mrb[0].mxu0
      %6984 = vmatprep.mubr.f32.mxu0 0.0
      %6985 = vmatmul.mubr.f32.gmra.mrb[0].mxu0 %v6791
      %v6986 = vpop.f32.mrb[0].mxu0
      %v6987 = vadd.f32 0.0, %v6986
      %v6988 = vpop.f32.mrb[0].mxu0
      %6989 = vmatprep.mubr.f32.mxu0 0.0
      %6990 = vmatmul.mubr.f32.gmra.mrb[0].mxu0 %v6794
      %v6991 = vpop.f32.mrb[0].mxu0
      %v6992 = vadd.f32 0.0, %v6991
      %v6993 = vpop.f32.mrb[0].mxu0
      %6994 = vmatprep.mubr.f32.mxu0 0.0
      %6995 = vmatmul.mubr.f32.gmra.mrb[0].mxu0 %v6797
      %v6996 = vpop.f32.mrb[0].mxu0
      %v6997 = vadd.f32 0.0, %v6996
      %v6998 = vpop.f32.mrb[0].mxu0
      %6999 = vmatprep.mubr.f32.mxu0 0.0
      %7000 = vmatmul.mubr.f32.gmra.mrb[0].mxu0 %v6800
      %v7001 = vpop.f32.mrb[0].mxu0
      %v7002 = vadd.f32 0.0, %v7001
      %v7003 = vpop.f32.mrb[0].mxu0
      %7004 = vmatprep.mubr.f32.mxu0 0.0
      %7005 = vmatmul.mubr.f32.gmra.mrb[0].mxu0 %v6803
      %v7006 = vpop.f32.mrb[0].mxu0
      %v7007 = vadd.f32 0.0, %v7006
      %v7008 = vpop.f32.mrb[0].mxu0
      %7009 = vmatprep.mubr.f32.mxu0 0.0
      %7010 = vmatmul.mubr.f32.gmra.mrb[0].mxu0 %v6806
      %v7011 = vpop.f32.mrb[0].mxu0
      %v7012 = vadd.f32 0.0, %v7011
      %v7013 = vpop.f32.mrb[0].mxu0
      %7014 = vmatprep.mubr.f32.mxu0 0.0
      %7015 = vmatmul.mubr.f32.gmra.mrb[0].mxu0 %v6809
      %v7016 = vpop.f32.mrb[0].mxu0
      %v7017 = vadd.f32 0.0, %v7016
      %v7018 = vpop.f32.mrb[0].mxu0
      %7019 = vmatprep.mubr.f32.mxu0 0.0
      %7020 = vmatmul.mubr.f32.gmra.mrb[0].mxu0 %v6812
      %v7021 = vpop.f32.mrb[0].mxu0
      %v7022 = vadd.f32 0.0, %v7021
      %v7023 = vpop.f32.mrb[0].mxu0
      %7024 = vmatprep.mubr.f32.mxu0 0.0
      %7025 = vmatmul.mubr.f32.gmra.mrb[0].mxu0 %v6815
      %v7026 = vpop.f32.mrb[0].mxu0
      %v7027 = vadd.f32 0.0, %v7026
      %v7028 = vpop.f32.mrb[0].mxu0
      %7029 = vmatprep.mubr.f32.mxu0 0.0
      %7030 = vmatmul.mubr.f32.gmra.mrb[0].mxu0 %v6818
      %v7031 = vpop.f32.mrb[0].mxu0
      %v7032 = vadd.f32 0.0, %v7031
      %v7033 = vpop.f32.mrb[0].mxu0
      %7034 = vmatprep.mubr.f32.mxu0 0.0
      %7035 = vmatmul.mubr.f32.gmra.mrb[0].mxu0 %v6821
      %v7036 = vpop.f32.mrb[0].mxu0
      %v7037 = vadd.f32 0.0, %v7036
      %v7038 = vpop.f32.mrb[0].mxu0
      %7039 = vmatprep.mubr.f32.mxu0 0.0
      %7040 = vmatmul.mubr.f32.gmra.mrb[0].mxu0 %v6824
      %v7041 = vpop.f32.mrb[0].mxu0
      %v7042 = vadd.f32 0.0, %v7041
      %v7043 = vpop.f32.mrb[0].mxu0
      %7044 = vmatprep.mubr.f32.mxu0 0.0
      %7045 = vmatmul.mubr.f32.gmra.mrb[0].mxu0 %v6827
      %v7046 = vpop.f32.mrb[0].mxu0
      %v7047 = vadd.f32 0.0, %v7046
      %v7048 = vpop.f32.mrb[0].mxu0
      %7049 = vmatprep.mubr.f32.mxu0 0.0
      %7050 = vmatmul.mubr.f32.gmra.mrb[0].mxu0 %v6830
      %v7051 = vpop.f32.mrb[0].mxu0
      %v7052 = vadd.f32 0.0, %v7051
      %v7053 = vpop.f32.mrb[0].mxu0
      %7054 = vmatprep.mubr.f32.mxu0 0.0
      %7055 = vmatmul.mubr.f32.gmra.mrb[0].mxu0 %v6833
      %v7056 = vpop.f32.mrb[0].mxu0
      %v7057 = vadd.f32 0.0, %v7056
      %v7058 = vpop.f32.mrb[0].mxu0
      %7059 = vdwg.mxu0
      %v7060 = vadd.f32 %v6673, %v6902
      %v7061 = vadd.f32 %v6674, %v6907
      %v7062 = vadd.f32 %v6675, %v6912
      %v7063 = vadd.f32 %v6676, %v6917
      %v7064 = vadd.f32 %v6677, %v6922
      %v7065 = vadd.f32 %v6678, %v6927
      %v7066 = vadd.f32 %v6679, %v6932
      %v7067 = vadd.f32 %v6680, %v6937
      %v7068 = vadd.f32 %v6681, %v6942
      %v7069 = vadd.f32 %v6682, %v6947
      %v7070 = vadd.f32 %v6683, %v6952
      %v7071 = vadd.f32 %v6684, %v6957
      %v7072 = vadd.f32 %v6685, %v6962
      %v7073 = vadd.f32 %v6686, %v6967
      %v7074 = vadd.f32 %v6687, %v6972
      %v7075 = vadd.f32 %v6688, %v6977
      %v7076 = vadd.f32 %v6689, %v6982
      %v7077 = vadd.f32 %v6690, %v6987
      %v7078 = vadd.f32 %v6691, %v6992
      %v7079 = vadd.f32 %v6692, %v6997
      %v7080 = vadd.f32 %v6693, %v7002
      %v7081 = vadd.f32 %v6694, %v7007
      %v7082 = vadd.f32 %v6695, %v7012
      %v7083 = vadd.f32 %v6696, %v7017
      %v7084 = vadd.f32 %v6697, %v7022
      %v7085 = vadd.f32 %v6698, %v7027
      %v7086 = vadd.f32 %v6699, %v7032
      %v7087 = vadd.f32 %v6700, %v7037
      %v7088 = vadd.f32 %v6701, %v7042
      %v7089 = vadd.f32 %v6702, %v7047
      %v7090 = vadd.f32 %v6703, %v7052
      %v7091 = vadd.f32 %v6704, %v7057
      %v7092 = vld [vmem:[%s2757 + $0x2] sm:$0xff]
      %v7093 = vld [vmem:[%s2757 + $0xa] sm:$0xff]
      %v7094 = vld [vmem:[%s2757 + $0x1a] sm:$0xff]
      %v7095 = vld [vmem:[%s2757 + $0x22] sm:$0xff]
      %v7096 = vld [vmem:[%s2757 + $0x32] sm:$0xff]
      %v7097 = vld [vmem:[%s2757 + $0x3a] sm:$0xff]
      %v7098 = vld [vmem:[%s2757 + $0x4a] sm:$0xff]
      %v7099 = vld [vmem:[%s2757 + $0x52] sm:$0xff]
      %v7100 = vld [vmem:[%s2757 + $0x62] sm:$0xff]
      %v7101 = vld [vmem:[%s2757 + $0x6a] sm:$0xff]
      %v7102 = vld [vmem:[%s2757 + $0x7a] sm:$0xff]
      %v7103 = vld [vmem:[%s2757 + $0x82] sm:$0xff]
      %v7104 = vld [vmem:[%s2757 + $0x92] sm:$0xff]
      %v7105 = vld [vmem:[%s2757 + $0x9a] sm:$0xff]
      %v7106 = vld [vmem:[%s2757 + $0xaa] sm:$0xff]
      %v7107 = vld [vmem:[%s2757 + $0xb2] sm:$0xff]
      %v7108 = vld [vmem:[%s2757 + $0xc2] sm:$0xff]
      %v7109 = vld [vmem:[%s2757 + $0xca] sm:$0xff]
      %v7110 = vld [vmem:[%s2757 + $0xda] sm:$0xff]
      %v7111 = vld [vmem:[%s2757 + $0xe2] sm:$0xff]
      %v7112 = vld [vmem:[%s2757 + $0xf2] sm:$0xff]
      %v7113 = vld [vmem:[%s2757 + $0xfa] sm:$0xff]
      %v7114 = vld [vmem:[%s2757 + $0x10a] sm:$0xff]
      %v7115 = vld [vmem:[%s2757 + $0x112] sm:$0xff]
      %v7116 = vld [vmem:[%s2757 + $0x122] sm:$0xff]
      %v7117 = vld [vmem:[%s2757 + $0x12a] sm:$0xff]
      %v7118 = vld [vmem:[%s2757 + $0x13a] sm:$0xff]
      %v7119 = vld [vmem:[%s2757 + $0x142] sm:$0xff]
      %v7120 = vld [vmem:[%s2757 + $0x152] sm:$0xff]
      %v7121 = vld [vmem:[%s2757 + $0x15a] sm:$0xff]
      %v7122 = vld [vmem:[%s2757 + $0x16a] sm:$0xff]
      %v7123 = vld [vmem:[%s2757 + $0x172] sm:$0xff]
      %s7124 = scalar_lea.vmem %s6, 64
      %v7125 = vld [vmem:[%s7124] sm:$0xff]
      %v7127 = vsel %vm421, %v7092, 0
      %v7130 = vsel %vm421, %v7093, 0
      %v7133 = vsel %vm421, %v7094, 0
      %v7136 = vsel %vm421, %v7095, 0
      %v7139 = vsel %vm421, %v7096, 0
      %v7142 = vsel %vm421, %v7097, 0
      %v7145 = vsel %vm421, %v7098, 0
      %v7148 = vsel %vm421, %v7099, 0
      %v7151 = vsel %vm421, %v7100, 0
      %v7154 = vsel %vm421, %v7101, 0
      %v7157 = vsel %vm421, %v7102, 0
      %v7160 = vsel %vm421, %v7103, 0
      %v7163 = vsel %vm421, %v7104, 0
      %v7166 = vsel %vm421, %v7105, 0
      %v7169 = vsel %vm421, %v7106, 0
      %v7172 = vsel %vm421, %v7107, 0
      %v7175 = vsel %vm421, %v7108, 0
      %v7178 = vsel %vm421, %v7109, 0
      %v7181 = vsel %vm421, %v7110, 0
      %v7184 = vsel %vm421, %v7111, 0
      %v7187 = vsel %vm421, %v7112, 0
      %v7190 = vsel %vm421, %v7113, 0
      %v7193 = vsel %vm421, %v7114, 0
      %v7196 = vsel %vm421, %v7115, 0
      %v7199 = vsel %vm421, %v7116, 0
      %v7202 = vsel %vm421, %v7117, 0
      %v7205 = vsel %vm421, %v7118, 0
      %v7208 = vsel %vm421, %v7119, 0
      %v7211 = vsel %vm421, %v7120, 0
      %v7214 = vsel %vm421, %v7121, 0
      %v7217 = vsel %vm421, %v7122, 0
      %v7220 = vsel %vm421, %v7123, 0
      %7222 = vmatprep.subr.mxu0 0.0
      %7223 = vmatpush1.msra.mxu0 %v7125
      %7224 = vmatprep.subr.mxu0 0.0
      %7225 = vmatpush1.msra.mxu0 0.0
      %7226 = vmatprep.subr.mxu0 0.0
      %7227 = vmatpush1.msra.mxu0 0.0
      %7228 = vmatprep.subr.mxu0 0.0
      %7229 = vmatpush1.msra.mxu0 0.0
      %7230 = vmatprep.subr.mxu0 0.0
      %7231 = vmatpush1.msra.mxu0 0.0
      %7232 = vmatprep.subr.mxu0 0.0
      %7233 = vmatpush1.msra.mxu0 0.0
      %7234 = vmatprep.subr.mxu0 0.0
      %7235 = vmatpush1.msra.mxu0 0.0
      %7236 = vmatprep.subr.mxu0 0.0
      %7237 = vmatpush1.msra.mxu0 0.0
      %7238 = vmatprep.subr.mxu0 0.0
      %7239 = vmatpush1.msra.mxu0 0.0
      %7240 = vmatprep.subr.mxu0 0.0
      %7241 = vmatpush1.msra.mxu0 0.0
      %7242 = vmatprep.subr.mxu0 0.0
      %7243 = vmatpush1.msra.mxu0 0.0
      %7244 = vmatprep.subr.mxu0 0.0
      %7245 = vmatpush1.msra.mxu0 0.0
      %7246 = vmatprep.subr.mxu0 0.0
      %7247 = vmatpush1.msra.mxu0 0.0
      %7248 = vmatprep.subr.mxu0 0.0
      %7249 = vmatpush1.msra.mxu0 0.0
      %7250 = vmatprep.subr.mxu0 0.0
      %7251 = vmatpush1.msra.mxu0 0.0
      %7252 = vmatprep.subr.mxu0 0.0
      %7253 = vmatpush1.msra.mxu0 0.0
      %7254 = vmatprep.subr.mxu0 0.0
      %7255 = vmatpush1.msra.mxu0 0.0
      %7256 = vmatprep.subr.mxu0 0.0
      %7257 = vmatpush1.msra.mxu0 0.0
      %7258 = vmatprep.subr.mxu0 0.0
      %7259 = vmatpush1.msra.mxu0 0.0
      %7260 = vmatprep.subr.mxu0 0.0
      %7261 = vmatpush1.msra.mxu0 0.0
      %7262 = vmatprep.subr.mxu0 0.0
      %7263 = vmatpush1.msra.mxu0 0.0
      %7264 = vmatprep.subr.mxu0 0.0
      %7265 = vmatpush1.msra.mxu0 0.0
      %7266 = vmatprep.subr.mxu0 0.0
      %7267 = vmatpush1.msra.mxu0 0.0
      %7268 = vmatprep.subr.mxu0 0.0
      %7269 = vmatpush1.msra.mxu0 0.0
      %7270 = vmatprep.subr.mxu0 0.0
      %7271 = vmatpush1.msra.mxu0 0.0
      %7272 = vmatprep.subr.mxu0 0.0
      %7273 = vmatpush1.msra.mxu0 0.0
      %7274 = vmatprep.subr.mxu0 0.0
      %7275 = vmatpush1.msra.mxu0 0.0
      %7276 = vmatprep.subr.mxu0 0.0
      %7277 = vmatpush1.msra.mxu0 0.0
      %7278 = vmatprep.subr.mxu0 0.0
      %7279 = vmatpush1.msra.mxu0 0.0
      %7280 = vmatprep.subr.mxu0 0.0
      %7281 = vmatpush1.msra.mxu0 0.0
      %7282 = vmatprep.subr.mxu0 0.0
      %7283 = vmatpush1.msra.mxu0 0.0
      %7284 = vmatprep.subr.mxu0 0.0
      %7285 = vmatpush1.msra.mxu0 0.0
      %7286 = vmatprep.mubr.f32.mxu0 0.0
      %7287 = vmatmul.mubr.f32.gmra.mrb[0].mxu0 %v7127
      %v7288 = vpop.f32.mrb[0].mxu0
      %v7289 = vadd.f32 0.0, %v7288
      %v7290 = vpop.f32.mrb[0].mxu0
      %7291 = vmatprep.mubr.f32.mxu0 0.0
      %7292 = vmatmul.mubr.f32.gmra.mrb[0].mxu0 %v7130
      %v7293 = vpop.f32.mrb[0].mxu0
      %v7294 = vadd.f32 0.0, %v7293
      %v7295 = vpop.f32.mrb[0].mxu0
      %7296 = vmatprep.mubr.f32.mxu0 0.0
      %7297 = vmatmul.mubr.f32.gmra.mrb[0].mxu0 %v7133
      %v7298 = vpop.f32.mrb[0].mxu0
      %v7299 = vadd.f32 0.0, %v7298
      %v7300 = vpop.f32.mrb[0].mxu0
      %7301 = vmatprep.mubr.f32.mxu0 0.0
      %7302 = vmatmul.mubr.f32.gmra.mrb[0].mxu0 %v7136
      %v7303 = vpop.f32.mrb[0].mxu0
      %v7304 = vadd.f32 0.0, %v7303
      %v7305 = vpop.f32.mrb[0].mxu0
      %7306 = vmatprep.mubr.f32.mxu0 0.0
      %7307 = vmatmul.mubr.f32.gmra.mrb[0].mxu0 %v7139
      %v7308 = vpop.f32.mrb[0].mxu0
      %v7309 = vadd.f32 0.0, %v7308
      %v7310 = vpop.f32.mrb[0].mxu0
      %7311 = vmatprep.mubr.f32.mxu0 0.0
      %7312 = vmatmul.mubr.f32.gmra.mrb[0].mxu0 %v7142
      %v7313 = vpop.f32.mrb[0].mxu0
      %v7314 = vadd.f32 0.0, %v7313
      %v7315 = vpop.f32.mrb[0].mxu0
      %7316 = vmatprep.mubr.f32.mxu0 0.0
      %7317 = vmatmul.mubr.f32.gmra.mrb[0].mxu0 %v7145
      %v7318 = vpop.f32.mrb[0].mxu0
      %v7319 = vadd.f32 0.0, %v7318
      %v7320 = vpop.f32.mrb[0].mxu0
      %7321 = vmatprep.mubr.f32.mxu0 0.0
      %7322 = vmatmul.mubr.f32.gmra.mrb[0].mxu0 %v7148
      %v7323 = vpop.f32.mrb[0].mxu0
      %v7324 = vadd.f32 0.0, %v7323
      %v7325 = vpop.f32.mrb[0].mxu0
      %7326 = vmatprep.mubr.f32.mxu0 0.0
      %7327 = vmatmul.mubr.f32.gmra.mrb[0].mxu0 %v7151
      %v7328 = vpop.f32.mrb[0].mxu0
      %v7329 = vadd.f32 0.0, %v7328
      %v7330 = vpop.f32.mrb[0].mxu0
      %7331 = vmatprep.mubr.f32.mxu0 0.0
      %7332 = vmatmul.mubr.f32.gmra.mrb[0].mxu0 %v7154
      %v7333 = vpop.f32.mrb[0].mxu0
      %v7334 = vadd.f32 0.0, %v7333
      %v7335 = vpop.f32.mrb[0].mxu0
      %7336 = vmatprep.mubr.f32.mxu0 0.0
      %7337 = vmatmul.mubr.f32.gmra.mrb[0].mxu0 %v7157
      %v7338 = vpop.f32.mrb[0].mxu0
      %v7339 = vadd.f32 0.0, %v7338
      %v7340 = vpop.f32.mrb[0].mxu0
      %7341 = vmatprep.mubr.f32.mxu0 0.0
      %7342 = vmatmul.mubr.f32.gmra.mrb[0].mxu0 %v7160
      %v7343 = vpop.f32.mrb[0].mxu0
      %v7344 = vadd.f32 0.0, %v7343
      %v7345 = vpop.f32.mrb[0].mxu0
      %7346 = vmatprep.mubr.f32.mxu0 0.0
      %7347 = vmatmul.mubr.f32.gmra.mrb[0].mxu0 %v7163
      %v7348 = vpop.f32.mrb[0].mxu0
      %v7349 = vadd.f32 0.0, %v7348
      %v7350 = vpop.f32.mrb[0].mxu0
      %7351 = vmatprep.mubr.f32.mxu0 0.0
      %7352 = vmatmul.mubr.f32.gmra.mrb[0].mxu0 %v7166
      %v7353 = vpop.f32.mrb[0].mxu0
      %v7354 = vadd.f32 0.0, %v7353
      %v7355 = vpop.f32.mrb[0].mxu0
      %7356 = vmatprep.mubr.f32.mxu0 0.0
      %7357 = vmatmul.mubr.f32.gmra.mrb[0].mxu0 %v7169
      %v7358 = vpop.f32.mrb[0].mxu0
      %v7359 = vadd.f32 0.0, %v7358
      %v7360 = vpop.f32.mrb[0].mxu0
      %7361 = vmatprep.mubr.f32.mxu0 0.0
      %7362 = vmatmul.mubr.f32.gmra.mrb[0].mxu0 %v7172
      %v7363 = vpop.f32.mrb[0].mxu0
      %v7364 = vadd.f32 0.0, %v7363
      %v7365 = vpop.f32.mrb[0].mxu0
      %7366 = vmatprep.mubr.f32.mxu0 0.0
      %7367 = vmatmul.mubr.f32.gmra.mrb[0].mxu0 %v7175
      %v7368 = vpop.f32.mrb[0].mxu0
      %v7369 = vadd.f32 0.0, %v7368
      %v7370 = vpop.f32.mrb[0].mxu0
      %7371 = vmatprep.mubr.f32.mxu0 0.0
      %7372 = vmatmul.mubr.f32.gmra.mrb[0].mxu0 %v7178
      %v7373 = vpop.f32.mrb[0].mxu0
      %v7374 = vadd.f32 0.0, %v7373
      %v7375 = vpop.f32.mrb[0].mxu0
      %7376 = vmatprep.mubr.f32.mxu0 0.0
      %7377 = vmatmul.mubr.f32.gmra.mrb[0].mxu0 %v7181
      %v7378 = vpop.f32.mrb[0].mxu0
      %v7379 = vadd.f32 0.0, %v7378
      %v7380 = vpop.f32.mrb[0].mxu0
      %7381 = vmatprep.mubr.f32.mxu0 0.0
      %7382 = vmatmul.mubr.f32.gmra.mrb[0].mxu0 %v7184
      %v7383 = vpop.f32.mrb[0].mxu0
      %v7384 = vadd.f32 0.0, %v7383
      %v7385 = vpop.f32.mrb[0].mxu0
      %7386 = vmatprep.mubr.f32.mxu0 0.0
      %7387 = vmatmul.mubr.f32.gmra.mrb[0].mxu0 %v7187
      %v7388 = vpop.f32.mrb[0].mxu0
      %v7389 = vadd.f32 0.0, %v7388
      %v7390 = vpop.f32.mrb[0].mxu0
      %7391 = vmatprep.mubr.f32.mxu0 0.0
      %7392 = vmatmul.mubr.f32.gmra.mrb[0].mxu0 %v7190
      %v7393 = vpop.f32.mrb[0].mxu0
      %v7394 = vadd.f32 0.0, %v7393
      %v7395 = vpop.f32.mrb[0].mxu0
      %7396 = vmatprep.mubr.f32.mxu0 0.0
      %7397 = vmatmul.mubr.f32.gmra.mrb[0].mxu0 %v7193
      %v7398 = vpop.f32.mrb[0].mxu0
      %v7399 = vadd.f32 0.0, %v7398
      %v7400 = vpop.f32.mrb[0].mxu0
      %7401 = vmatprep.mubr.f32.mxu0 0.0
      %7402 = vmatmul.mubr.f32.gmra.mrb[0].mxu0 %v7196
      %v7403 = vpop.f32.mrb[0].mxu0
      %v7404 = vadd.f32 0.0, %v7403
      %v7405 = vpop.f32.mrb[0].mxu0
      %7406 = vmatprep.mubr.f32.mxu0 0.0
      %7407 = vmatmul.mubr.f32.gmra.mrb[0].mxu0 %v7199
      %v7408 = vpop.f32.mrb[0].mxu0
      %v7409 = vadd.f32 0.0, %v7408
      %v7410 = vpop.f32.mrb[0].mxu0
      %7411 = vmatprep.mubr.f32.mxu0 0.0
      %7412 = vmatmul.mubr.f32.gmra.mrb[0].mxu0 %v7202
      %v7413 = vpop.f32.mrb[0].mxu0
      %v7414 = vadd.f32 0.0, %v7413
      %v7415 = vpop.f32.mrb[0].mxu0
      %7416 = vmatprep.mubr.f32.mxu0 0.0
      %7417 = vmatmul.mubr.f32.gmra.mrb[0].mxu0 %v7205
      %v7418 = vpop.f32.mrb[0].mxu0
      %v7419 = vadd.f32 0.0, %v7418
      %v7420 = vpop.f32.mrb[0].mxu0
      %7421 = vmatprep.mubr.f32.mxu0 0.0
      %7422 = vmatmul.mubr.f32.gmra.mrb[0].mxu0 %v7208
      %v7423 = vpop.f32.mrb[0].mxu0
      %v7424 = vadd.f32 0.0, %v7423
      %v7425 = vpop.f32.mrb[0].mxu0
      %7426 = vmatprep.mubr.f32.mxu0 0.0
      %7427 = vmatmul.mubr.f32.gmra.mrb[0].mxu0 %v7211
      %v7428 = vpop.f32.mrb[0].mxu0
      %v7429 = vadd.f32 0.0, %v7428
      %v7430 = vpop.f32.mrb[0].mxu0
      %7431 = vmatprep.mubr.f32.mxu0 0.0
      %7432 = vmatmul.mubr.f32.gmra.mrb[0].mxu0 %v7214
      %v7433 = vpop.f32.mrb[0].mxu0
      %v7434 = vadd.f32 0.0, %v7433
      %v7435 = vpop.f32.mrb[0].mxu0
      %7436 = vmatprep.mubr.f32.mxu0 0.0
      %7437 = vmatmul.mubr.f32.gmra.mrb[0].mxu0 %v7217
      %v7438 = vpop.f32.mrb[0].mxu0
      %v7439 = vadd.f32 0.0, %v7438
      %v7440 = vpop.f32.mrb[0].mxu0
      %7441 = vmatprep.mubr.f32.mxu0 0.0
      %7442 = vmatmul.mubr.f32.gmra.mrb[0].mxu0 %v7220
      %v7443 = vpop.f32.mrb[0].mxu0
      %v7444 = vadd.f32 0.0, %v7443
      %v7445 = vpop.f32.mrb[0].mxu0
      %7446 = vdwg.mxu0
      %v7447 = vadd.f32 %v7060, %v7289
      %v7448 = vadd.f32 %v7061, %v7294
      %v7449 = vadd.f32 %v7062, %v7299
      %v7450 = vadd.f32 %v7063, %v7304
      %v7451 = vadd.f32 %v7064, %v7309
      %v7452 = vadd.f32 %v7065, %v7314
      %v7453 = vadd.f32 %v7066, %v7319
      %v7454 = vadd.f32 %v7067, %v7324
      %v7455 = vadd.f32 %v7068, %v7329
      %v7456 = vadd.f32 %v7069, %v7334
      %v7457 = vadd.f32 %v7070, %v7339
      %v7458 = vadd.f32 %v7071, %v7344
      %v7459 = vadd.f32 %v7072, %v7349
      %v7460 = vadd.f32 %v7073, %v7354
      %v7461 = vadd.f32 %v7074, %v7359
      %v7462 = vadd.f32 %v7075, %v7364
      %v7463 = vadd.f32 %v7076, %v7369
      %v7464 = vadd.f32 %v7077, %v7374
      %v7465 = vadd.f32 %v7078, %v7379
      %v7466 = vadd.f32 %v7079, %v7384
      %v7467 = vadd.f32 %v7080, %v7389
      %v7468 = vadd.f32 %v7081, %v7394
      %v7469 = vadd.f32 %v7082, %v7399
      %v7470 = vadd.f32 %v7083, %v7404
      %v7471 = vadd.f32 %v7084, %v7409
      %v7472 = vadd.f32 %v7085, %v7414
      %v7473 = vadd.f32 %v7086, %v7419
      %v7474 = vadd.f32 %v7087, %v7424
      %v7475 = vadd.f32 %v7088, %v7429
      %v7476 = vadd.f32 %v7089, %v7434
      %v7477 = vadd.f32 %v7090, %v7439
      %v7478 = vadd.f32 %v7091, %v7444
      %v7479 = vadd.f32 %v7447, %v279
      %v7480 = vadd.f32 %v7448, %v280
      %v7481 = vadd.f32 %v7449, %v281
      %v7482 = vadd.f32 %v7450, %v282
      %v7483 = vadd.f32 %v7451, %v283
      %v7484 = vadd.f32 %v7452, %v284
      %v7485 = vadd.f32 %v7453, %v285
      %v7486 = vadd.f32 %v7454, %v286
      %v7487 = vadd.f32 %v7455, %v287
      %v7488 = vadd.f32 %v7456, %v288
      %v7489 = vadd.f32 %v7457, %v289
      %v7490 = vadd.f32 %v7458, %v290
      %v7491 = vadd.f32 %v7459, %v291
      %v7492 = vadd.f32 %v7460, %v292
      %v7493 = vadd.f32 %v7461, %v293
      %v7494 = vadd.f32 %v7462, %v294
      %v7495 = vadd.f32 %v7463, %v295
      %v7496 = vadd.f32 %v7464, %v296
      %v7497 = vadd.f32 %v7465, %v297
      %v7498 = vadd.f32 %v7466, %v298
      %v7499 = vadd.f32 %v7467, %v299
      %v7500 = vadd.f32 %v7468, %v300
      %v7501 = vadd.f32 %v7469, %v301
      %v7502 = vadd.f32 %v7470, %v302
      %v7503 = vadd.f32 %v7471, %v303
      %v7504 = vadd.f32 %v7472, %v304
      %v7505 = vadd.f32 %v7473, %v305
      %v7506 = vadd.f32 %v7474, %v306
      %v7507 = vadd.f32 %v7475, %v307
      %v7508 = vadd.f32 %v7476, %v308
      %v7509 = vadd.f32 %v7477, %v309
      %v7510 = vadd.f32 %v7478, %v310
      %7511 = vst.msk [vmem:[%s278] sm:$0xff] %vm421, %v7479
      %7512 = vst.msk [vmem:[%s278 + $0x8] sm:$0xff] %vm421, %v7480
      %7513 = vst.msk [vmem:[%s278 + $0x10] sm:$0xff] %vm421, %v7481
      %7514 = vst.msk [vmem:[%s278 + $0x18] sm:$0xff] %vm421, %v7482
      %7515 = vst.msk [vmem:[%s278 + $0x20] sm:$0xff] %vm421, %v7483
      %7516 = vst.msk [vmem:[%s278 + $0x28] sm:$0xff] %vm421, %v7484
      %7517 = vst.msk [vmem:[%s278 + $0x30] sm:$0xff] %vm421, %v7485
      %7518 = vst.msk [vmem:[%s278 + $0x38] sm:$0xff] %vm421, %v7486
      %7519 = vst.msk [vmem:[%s278 + $0x40] sm:$0xff] %vm421, %v7487
      %7520 = vst.msk [vmem:[%s278 + $0x48] sm:$0xff] %vm421, %v7488
      %7521 = vst.msk [vmem:[%s278 + $0x50] sm:$0xff] %vm421, %v7489
      %7522 = vst.msk [vmem:[%s278 + $0x58] sm:$0xff] %vm421, %v7490
      %7523 = vst.msk [vmem:[%s278 + $0x60] sm:$0xff] %vm421, %v7491
      %7524 = vst.msk [vmem:[%s278 + $0x68] sm:$0xff] %vm421, %v7492
      %7525 = vst.msk [vmem:[%s278 + $0x70] sm:$0xff] %vm421, %v7493
      %7526 = vst.msk [vmem:[%s278 + $0x78] sm:$0xff] %vm421, %v7494
      %7527 = vst.msk [vmem:[%s278 + $0x80] sm:$0xff] %vm421, %v7495
      %7528 = vst.msk [vmem:[%s278 + $0x88] sm:$0xff] %vm421, %v7496
      %7529 = vst.msk [vmem:[%s278 + $0x90] sm:$0xff] %vm421, %v7497
      %7530 = vst.msk [vmem:[%s278 + $0x98] sm:$0xff] %vm421, %v7498
      %7531 = vst.msk [vmem:[%s278 + $0xa0] sm:$0xff] %vm421, %v7499
      %7532 = vst.msk [vmem:[%s278 + $0xa8] sm:$0xff] %vm421, %v7500
      %7533 = vst.msk [vmem:[%s278 + $0xb0] sm:$0xff] %vm421, %v7501
      %7534 = vst.msk [vmem:[%s278 + $0xb8] sm:$0xff] %vm421, %v7502
      %7535 = vst.msk [vmem:[%s278 + $0xc0] sm:$0xff] %vm421, %v7503
      %7536 = vst.msk [vmem:[%s278 + $0xc8] sm:$0xff] %vm421, %v7504
      %7537 = vst.msk [vmem:[%s278 + $0xd0] sm:$0xff] %vm421, %v7505
      %7538 = vst.msk [vmem:[%s278 + $0xd8] sm:$0xff] %vm421, %v7506
      %7539 = vst.msk [vmem:[%s278 + $0xe0] sm:$0xff] %vm421, %v7507
      %7540 = vst.msk [vmem:[%s278 + $0xe8] sm:$0xff] %vm421, %v7508
      %7541 = vst.msk [vmem:[%s278 + $0xf0] sm:$0xff] %vm421, %v7509
      %7542 = vst.msk [vmem:[%s278 + $0xf8] sm:$0xff] %vm421, %v7510
      %p7543 = scmp.lt.s32.totalorder %s18, 1
      %s7544 = scalar_select %p7543, %s18, 1
      %s7545 = smul.addr %s7544, 32
      %s7546 = smul.addr %s7545, 8
      %s7547 = scalar_lea.vmem %s7, %s7546
      // Predicated region
      $region49: #{tpu_custom_call.1} parent=47 // pred_check
        %p7548 = pneg %p188
      $region50: #{tpu_custom_call.1} parent=47 // pred_check_branch
        %7550 = sbr.rel (%p7548) target = $region52
      $region51: #{tpu_custom_call.1} parent=47 // pred_region
        _
      $region52: #{tpu_custom_call.1} parent=47 // pred_fallthru
        _
    $region48: #{tpu_custom_call.1} parent=5 // pred_fallthru
      _
    %p7551 = scmp.le.s32.totalorder 2, %s13
    // Predicated region
    $region53: #{tpu_custom_call.1} parent=5 // pred_check
      %p7552 = pneg %p7551
    $region54: #{tpu_custom_call.1} parent=5 // pred_check_branch
      %7554 = sbr.rel (%p7552) target = $region56
    $region55: #{tpu_custom_call.1} parent=5 // pred_region
      %s7555 = ssub.s32 %s13, 2
      // Predicated region
      $region57: #{tpu_custom_call.1} parent=55 // pred_check
        %p7556 = pneg %p194
      $region58: #{tpu_custom_call.1} parent=55 // pred_check_branch
        %7558 = sbr.rel (%p7556) target = $region60
      $region59: #{tpu_custom_call.1} parent=55 // pred_region
        %p7559 = scmp.lt.s32.totalorder %s19, 1
        %s7560 = scalar_select %p7559, %s19, 1
        %s7561 = smul.addr %s7560, 32
        %s7562 = smul.addr %s7561, 8
        %s7563 = scalar_lea.vmem %s7, %s7562
      $region60: #{tpu_custom_call.1} parent=55 // pred_fallthru
        _
    $region56: #{tpu_custom_call.1} parent=5 // pred_fallthru
      _
  $region6: #{tpu_custom_call.1} parent=0 // loop_footer
    %s17 = sadd.s32 1, %s13
  $region7: #{tpu_custom_call.1} parent=0 // loop_footer_branch
    %12 = sbr.rel target = $region3
  $region8: #{tpu_custom_call.1} parent=0 // loop_exit
    _

</llo_original>
